<compile_context>
chip_gen: v7x
topology: tpu7x:2x2x1
jax: 0.10.0
libtpu: 0.0.40
codegen_flags: <defaults>
</compile_context>

<pallas_src>
import functools
import math

import jax
import jax.numpy as jnp
from jax.experimental import pallas as pl
from jax.experimental.pallas import tpu as pltpu


def _round_up(x, m):
    return (x + m - 1) // m * m


def _default_vmem_limit():
    # Generation-aware scoped-VMEM cap (~half of physical VMEM: 64 MiB on
    # v5e/v6e, 32 MiB on v7x); conservative fallback if the query fails
    # (e.g. interpret mode without a TPU).
    try:
        return int(pltpu.get_tpu_info().vmem_capacity_bytes) // 2
    except Exception:
        return 32 * 1024 * 1024


_VMEM_LIMIT = _default_vmem_limit()
_VMEM_SPEC = pl.BlockSpec(memory_space=pltpu.MemorySpace.VMEM)


# ----------------------------------------------------------------------------
# Kernel 1: tiled matmul + BN(scale,bias) + ReLU   (7x7/s2 stem conv via im2col)
# ----------------------------------------------------------------------------
def _matmul_bn_act_kernel(a_ref, w_ref, s_ref, b_ref, o_ref, acc_ref, *, relu):
    @pl.when(pl.program_id(1) == 0)
    def _():
        acc_ref[...] = jnp.zeros_like(acc_ref)

    acc_ref[...] += jnp.dot(
        a_ref[...].astype(jnp.bfloat16),
        w_ref[...].astype(jnp.bfloat16),
        preferred_element_type=jnp.float32)

    @pl.when(pl.program_id(1) == pl.num_programs(1) - 1)
    def _():
        out = acc_ref[...] * s_ref[...] + b_ref[...]
        if relu:
            out = jnp.maximum(out, 0.0)
        o_ref[...] = out.astype(o_ref.dtype)


def matmul_bn_act(a, w, scale, bias, relu, out_dtype=jnp.bfloat16):
    """out = act((a @ w) * scale + bias); scale/bias are per output channel."""
    m, k = a.shape
    k2, oc = w.shape
    assert k == k2
    tm_cap = 1024 if _VMEM_LIMIT >= 64 * 1024 * 1024 else 512
    tm = min(tm_cap, _round_up(m, 8))
    tk = k if k <= 512 else 512
    mp = _round_up(m, tm)
    kp = _round_up(k, tk)
    if mp != m or kp != k:
        a = jnp.pad(a, ((0, mp - m), (0, kp - k)))
    if kp != k:
        w = jnp.pad(w, ((0, kp - k), (0, 0)))
    grid = (mp // tm, kp // tk)

    out = pl.pallas_call(
        functools.partial(_matmul_bn_act_kernel, relu=relu),
        out_shape=jax.ShapeDtypeStruct((mp, oc), out_dtype),
        grid=grid,
        in_specs=[
            pl.BlockSpec((tm, tk), lambda i, j: (i, j)),
            pl.BlockSpec((tk, oc), lambda i, j: (j, 0)),
            pl.BlockSpec((1, oc), lambda i, j: (0, 0)),
            pl.BlockSpec((1, oc), lambda i, j: (0, 0)),
        ],
        out_specs=pl.BlockSpec((tm, oc), lambda i, j: (i, 0)),
        scratch_shapes=[pltpu.VMEM((tm, oc), jnp.float32)],
        compiler_params=pltpu.CompilerParams(
            dimension_semantics=("parallel", "arbitrary"),
            vmem_limit_bytes=_VMEM_LIMIT),
        cost_estimate=pl.CostEstimate(
            flops=2 * mp * kp * oc,
            transcendentals=0,
            bytes_accessed=mp * kp * 2 + kp * oc * 2 + mp * oc * 2),
    )(a.astype(jnp.bfloat16), w.astype(jnp.bfloat16),
      scale.reshape(1, oc).astype(jnp.float32),
      bias.reshape(1, oc).astype(jnp.float32))
    return out[:m] if mp != m else out


# ----------------------------------------------------------------------------
# Kernel 2: 2x2 / stride-2 max pool (stem).  Whole batch per invocation; the
# batch is treated as one tall image of height n*h (h even => rows never pair
# across images).
# ----------------------------------------------------------------------------
def _maxpool2x2_kernel(x_ref, o_ref, rr_ref, *, h_tot, w):
    h2, w2 = h_tot // 2, w // 2
    # pair image rows (contiguous sublane slices of the flat (rows, C) ref)
    for i in range(h2):
        r0 = x_ref[pl.ds(2 * i * w, w), :].astype(jnp.float32)
        r1 = x_ref[pl.ds((2 * i + 1) * w, w), :].astype(jnp.float32)
        rr_ref[pl.ds(i * w, w), :] = jnp.maximum(r0, r1)
    # pair columns: with W even, flat-index parity == column parity
    even = rr_ref[pl.ds(0, h2 * w2, 2), :]
    odd = rr_ref[pl.ds(1, h2 * w2, 2), :]
    o_ref[...] = jnp.maximum(even, odd).astype(o_ref.dtype)


def maxpool2x2(x):
    n, h, w, c = x.shape
    assert h % 2 == 0 and w % 2 == 0  # TODO(synk): ceil_mode padding for odd sizes
    h_tot = n * h
    h2, w2 = h // 2, w // 2
    xf = x.reshape(n * h * w, c)
    out = pl.pallas_call(
        functools.partial(_maxpool2x2_kernel, h_tot=h_tot, w=w),
        out_shape=jax.ShapeDtypeStruct((n * h2 * w2, c), x.dtype),
        in_specs=[_VMEM_SPEC],
        out_specs=_VMEM_SPEC,
        scratch_shapes=[pltpu.VMEM(((h_tot // 2) * w, c), jnp.float32)],
        compiler_params=pltpu.CompilerParams(vmem_limit_bytes=_VMEM_LIMIT),
    )(xf)
    return out.reshape(n, h2, w2, c)


# ----------------------------------------------------------------------------
# Kernel 3: one FULL DenseNet-B dense block (all bottleneck layers) per call.
# The growing channel slab is the kernel's VMEM output ref; each layer does
#   1x1 conv + BN + ReLU  ->  scatter into zero-padded spatial scratch
#   -> ONE tap-packed 3x3 matmul (inter -> 9*g)  ->  9 shifted VPU adds
#   -> BN + ReLU  ->  write g new channels into the slab in place.
# ----------------------------------------------------------------------------
def _dense_block_kernel(x_ref, w1_ref, s1_ref, b1_ref, w2_ref, s2_ref, b2_ref,
                        o_ref, pad_ref, y_ref, *, n, h, w, c_in, g, n_layers,
                        wp):
    hw = h * w
    hpwp = (h + 2) * wp
    rows = n * hpwp
    A = rows - (2 * wp + 2)          # length of the shifted tap window
    c_final = c_in + n_layers * g

    # --- initialise the channel slab: copy x, zero the not-yet-written part
    o_ref[:, pl.ds(0, c_in)] = x_ref[...]
    o_ref[:, pl.ds(c_in, c_final - c_in)] = jnp.zeros(
        (n * hw, c_final - c_in), o_ref.dtype)

    # --- zero the padded scratch once; the halo persists across layers since
    #     every layer scatters into exactly the same interior region.
    pad_ref[...] = jnp.zeros_like(pad_ref)

    for l in range(n_layers):
        # 1x1 conv + BN + ReLU.  w1 rows for not-yet-written channels are zero,
        # and those slab channels are zero, so reading the full slab is exact.
        hidden = jnp.dot(o_ref[...], w1_ref[l],
                         preferred_element_type=jnp.float32)
        hidden = jnp.maximum(hidden * s1_ref[l] + b1_ref[l], 0.0)
        hidden = hidden.astype(pad_ref.dtype)
        # TODO(synk): nn.Dropout(use_dropout) is omitted (inference / eval).

        # scatter image rows into the spatially zero-padded scratch (pad = 1)
        for b in range(n):
            for oy in range(h):
                src = b * hw + oy * w
                pad_ref[pl.ds(b * hpwp + (oy + 1) * wp + 1, w), :] = (
                    hidden[src:src + w])

        # 3x3 conv: one tap-packed matmul, then 9 shifted adds (VPU)
        y_ref[...] = jnp.dot(pad_ref[...], w2_ref[l],
                             preferred_element_type=jnp.float32)
        acc = y_ref[pl.ds(0, A), pl.ds(0, g)]
        for tap in range(1, 9):
            dy, dx = tap // 3, tap % 3
            acc = acc + y_ref[pl.ds(dy * wp + dx, A), pl.ds(tap * g, g)]

        # BN + ReLU epilogue, write the g new channels into the slab in place
        feat = jnp.maximum(acc * s2_ref[l] + b2_ref[l], 0.0).astype(o_ref.dtype)
        off = c_in + l * g
        for b in range(n):
            for oy in range(h):
                src = b * hpwp + oy * wp
                o_ref[pl.ds(b * hw + oy * w, w), pl.ds(off, g)] = (
                    feat[src:src + w])


def dense_block_forward(x, p):
    n, h, w, c = x.shape
    assert c == p["c_in"]
    g, n_layers, c_final = p["g"], p["n_layers"], p["c_final"]
    inter = 4 * g
    wp = _round_up(w + 2, 8)          # sublane-aligned dy*wp tap shifts
    rows = n * (h + 2) * wp
    xf = x.reshape(n * h * w, c)

    out = pl.pallas_call(
        functools.partial(_dense_block_kernel, n=n, h=h, w=w, c_in=c, g=g,
                          n_layers=n_layers, wp=wp),
        out_shape=jax.ShapeDtypeStruct((n * h * w, c_final), x.dtype),
        in_specs=[_VMEM_SPEC] * 7,
        out_specs=_VMEM_SPEC,
        scratch_shapes=[
            pltpu.VMEM((rows, inter), jnp.bfloat16),   # zero-padded 1x1 output
            pltpu.VMEM((rows, 9 * g), jnp.float32),    # tap-packed 3x3 result
        ],
        compiler_params=pltpu.CompilerParams(vmem_limit_bytes=_VMEM_LIMIT),
        cost_estimate=pl.CostEstimate(
            flops=2 * n_layers * (n * h * w * c_final * inter
                                  + rows * inter * 9 * g),
            transcendentals=0,
            bytes_accessed=2 * (n * h * w * (c + c_final)
                                + n_layers * (c_final * inter + inter * 9 * g))),
    )(xf, p["w1"], p["s1"], p["b1"], p["w2"], p["s2"], p["b2"])
    return out.reshape(n, h, w, c_final)


# ----------------------------------------------------------------------------
# Kernel 4: fused transition (1x1 conv + BN + ReLU + 2x2 avg-pool), whole batch
# per invocation (batch treated as one tall image; h even => no cross-image
# pairing).
# ----------------------------------------------------------------------------
def _transition_kernel(x_ref, w_ref, s_ref, b_ref, o_ref, rr_ref, *, h_tot, w):
    h2, w2 = h_tot // 2, w // 2
    y = jnp.dot(x_ref[...], w_ref[...], preferred_element_type=jnp.float32)
    y = jnp.maximum(y * s_ref[...] + b_ref[...], 0.0)
    # TODO(synk): nn.Dropout(use_dropout) is omitted (inference / eval).
    for i in range(h2):                       # row pairing on the matmul value
        rr_ref[pl.ds(i * w, w), :] = (y[2 * i * w:(2 * i + 1) * w]
                                      + y[(2 * i + 1) * w:(2 * i + 2) * w])
    even = rr_ref[pl.ds(0, h2 * w2, 2), :]    # column pairing (stride-2 reads)
    odd = rr_ref[pl.ds(1, h2 * w2, 2), :]
    o_ref[...] = ((even + odd) * 0.25).astype(o_ref.dtype)


def transition_forward(x, p):
    n, h, w, c = x.shape
    assert h % 2 == 0 and w % 2 == 0  # TODO(synk): ceil_mode for odd sizes
    oc = p["w"].shape[1]
    h2, w2 = h // 2, w // 2
    h_tot = n * h
    xf = x.reshape(n * h * w, c)
    out = pl.pallas_call(
        functools.partial(_transition_kernel, h_tot=h_tot, w=w),
        out_shape=jax.ShapeDtypeStruct((n * h2 * w2, oc), x.dtype),
        in_specs=[_VMEM_SPEC] * 4,
        out_specs=_VMEM_SPEC,
        scratch_shapes=[pltpu.VMEM(((h_tot // 2) * w, oc), jnp.float32)],
        compiler_params=pltpu.CompilerParams(vmem_limit_bytes=_VMEM_LIMIT),
        cost_estimate=pl.CostEstimate(
            flops=2 * n * h * w * c * oc,
            transcendentals=0,
            bytes_accessed=2 * (n * h * w * c + c * oc + n * h2 * w2 * oc)),
    )(xf, p["w"], p["s"], p["b"])
    return out.reshape(n, h2, w2, oc)


# ----------------------------------------------------------------------------
# Kernel 5: Encoder tail (spatial mean -> Linear -> tanh), fused
# ----------------------------------------------------------------------------
def _encoder_tail_kernel(ctx_ref, w_ref, b_ref, o_ref, *, area):
    ctx = ctx_ref[...].astype(jnp.float32)            # (N, H*W, D): D on lanes
    mean = jnp.sum(ctx, axis=1) * (1.0 / area)        # reduce non-lane axis
    hdn = jnp.dot(mean, w_ref[...], preferred_element_type=jnp.float32)
    o_ref[...] = jnp.tanh(hdn + b_ref[...])


def encoder_tail(ctx_nhwc, w, b):
    """init_state = tanh(Linear(mean_{H,W}(ctx))); w pre-transposed (D, n)."""
    n, h, wd, d = ctx_nhwc.shape
    area = h * wd
    nout = w.shape[1]
    ctx_flat = ctx_nhwc.reshape(n, area, d)
    return pl.pallas_call(
        functools.partial(_encoder_tail_kernel, area=area),
        out_shape=jax.ShapeDtypeStruct((n, nout), jnp.float32),
        in_specs=[_VMEM_SPEC] * 3,
        out_specs=_VMEM_SPEC,
        compiler_params=pltpu.CompilerParams(vmem_limit_bytes=_VMEM_LIMIT),
    )(ctx_flat, w, b.reshape(1, nout))


# ----------------------------------------------------------------------------
# Stem im2col (NHWC).  Only used for the 7x7/s2 stem on a 1-channel input, so
# the patch matrix is ~N*OH*OW*49 elements — negligible HBM traffic.  K is
# padded to 64 columns for dense bf16 sublane packing.
# ----------------------------------------------------------------------------
def im2col_nhwc(x, kh, kw, stride, pad, k_pad_to=None):
    n, h, w, c = x.shape
    xp = jnp.pad(x, ((0, 0), (pad, pad), (pad, pad), (0, 0)))
    oh = (h + 2 * pad - kh) // stride + 1
    ow = (w + 2 * pad - kw) // stride + 1
    cols = []
    for i in range(kh):
        for j in range(kw):
            cols.append(xp[:, i:i + stride * (oh - 1) + 1:stride,
                              j:j + stride * (ow - 1) + 1:stride, :])
    patches = jnp.concatenate(cols, axis=-1)          # (n, oh, ow, kh*kw*c)
    k = kh * kw * c
    mat = patches.reshape(n * oh * ow, k)
    if k_pad_to is not None and k_pad_to > k:
        mat = jnp.pad(mat, ((0, 0), (0, k_pad_to - k)))
    return mat, oh, ow


# ----------------------------------------------------------------------------
# Deterministic parameter initialization (weights stored in kernel layouts)
# ----------------------------------------------------------------------------
def _bn_params(c, eps=1e-5):
    # inference-mode BN with gamma=1, beta=0, running_mean=0, running_var=1,
    # folded into a per-channel (scale, bias), stored 2-D: (1, C)
    gamma = jnp.ones((c,), jnp.float32)
    beta = jnp.zeros((c,), jnp.float32)
    mean = jnp.zeros((c,), jnp.float32)
    var = jnp.ones((c,), jnp.float32)
    scale = gamma / jnp.sqrt(var + eps)
    bias = beta - mean * scale
    return scale.reshape(1, c), bias.reshape(1, c)


def init_encoder_params(key, growth_rate, reduction, n_dense_layers, n_hidden):
    keys = iter(jax.random.split(key, 256))
    g = growth_rate
    inter = 4 * g
    params = {}
    n_channels = 2 * g

    # stem 7x7/s2 conv weight in (KH*KW*IC, OC) matmul layout, K padded 49->64
    w_stem = (jax.random.normal(next(keys), (49, n_channels), jnp.float32)
              / math.sqrt(49))
    params["stem_w"] = jnp.pad(w_stem, ((0, 64 - 49), (0, 0))).astype(jnp.bfloat16)
    params["stem_scale"] = jnp.ones((n_channels,), jnp.float32)
    params["stem_bias"] = jnp.zeros((n_channels,), jnp.float32)

    def make_dense_block(c_in):
        c_final = c_in + n_dense_layers * g
        w1s, w2s, s1s, b1s, s2s, b2s = [], [], [], [], [], []
        c_live = c_in
        for _ in range(n_dense_layers):
            w1 = (jax.random.normal(next(keys), (c_live, inter), jnp.float32)
                  / math.sqrt(c_live))
            # zero rows for the channels this layer does not see yet
            w1 = jnp.pad(w1, ((0, c_final - c_live), (0, 0)))
            w1s.append(w1.astype(jnp.bfloat16))
            # 3x3 conv, tap-packed: columns ordered (dy, dx)-major, g per tap
            w2 = (jax.random.normal(next(keys), (inter, 9 * g), jnp.float32)
                  / math.sqrt(9 * inter))
            w2s.append(w2.astype(jnp.bfloat16))
            s, b = _bn_params(inter); s1s.append(s); b1s.append(b)
            s, b = _bn_params(g); s2s.append(s); b2s.append(b)
            c_live += g
        blk = dict(w1=jnp.stack(w1s), w2=jnp.stack(w2s),
                   s1=jnp.stack(s1s), b1=jnp.stack(b1s),
                   s2=jnp.stack(s2s), b2=jnp.stack(b2s),
                   c_in=c_in, g=g, n_layers=n_dense_layers, c_final=c_final)
        return blk, c_final

    def make_transition(c_in):
        c_out = int(math.floor(c_in * reduction))
        w = (jax.random.normal(next(keys), (c_in, c_out), jnp.float32)
             / math.sqrt(c_in)).astype(jnp.bfloat16)
        s, b = _bn_params(c_out)
        return dict(w=w, s=s, b=b), c_out

    params["dense1"], n_channels = make_dense_block(n_channels)
    params["trans1"], n_channels = make_transition(n_channels)
    params["dense2"], n_channels = make_dense_block(n_channels)
    params["trans2"], n_channels = make_transition(n_channels)
    params["dense3"], n_channels = make_dense_block(n_channels)

    D = n_channels
    params["D"] = D
    # init_hidden Linear stored pre-transposed (D, n): no per-call transpose
    params["init_hidden_w"] = (jax.random.normal(next(keys), (D, n_hidden),
                                                 jnp.float32) / math.sqrt(D))
    params["init_hidden_b"] = jnp.zeros((n_hidden,), jnp.float32)
    return params


# ----------------------------------------------------------------------------
# Forward pass (mirrors Encoder.forward)
# ----------------------------------------------------------------------------
def densenet_forward(params, x_nchw):
    # NCHW -> NHWC once; bf16 activations internally, f32 accumulation.
    x = x_nchw.transpose(0, 2, 3, 1).astype(jnp.bfloat16)
    n = x.shape[0]
    oc = params["stem_w"].shape[1]

    a, oh, ow = im2col_nhwc(x, 7, 7, 2, 3, k_pad_to=64)
    y = matmul_bn_act(a, params["stem_w"], params["stem_scale"],
                      params["stem_bias"], relu=True)
    y = y.reshape(n, oh, ow, oc)
    out = maxpool2x2(y)

    out = dense_block_forward(out, params["dense1"])
    out = transition_forward(out, params["trans1"])
    out = dense_block_forward(out, params["dense2"])
    out = transition_forward(out, params["trans2"])
    out = dense_block_forward(out, params["dense3"])
    return out                                        # NHWC, bf16


def encoder_forward(params, x):
    """Returns (ctx, init_state) like Encoder.forward (ctx is NCHW f32)."""
    ctx_nhwc = densenet_forward(params, x)
    init_state = encoder_tail(ctx_nhwc, params["init_hidden_w"],
                              params["init_hidden_b"])
    ctx = ctx_nhwc.astype(jnp.float32).transpose(0, 3, 1, 2)
    return ctx, init_state


# ----------------------------------------------------------------------------
if __name__ == "__main__":
    GROWTH_RATE = 8
    REDUCTION = 0.5
    N_DENSE_LAYERS = 2   # canonical JSRAN: 16 per block (reduced, synthetic run)
    N_HIDDEN = 16        # params['n'] (decoder hidden size)

    key = jax.random.PRNGKey(0)
    kx, kp = jax.random.split(key)

    # grayscale formula-image batch: (N=2, C=1, H=32, W=32)
    x = jax.random.normal(kx, (2, 1, 32, 32), jnp.float32)
    params = init_encoder_params(kp, GROWTH_RATE, REDUCTION,
                                 N_DENSE_LAYERS, N_HIDDEN)

    fwd = jax.jit(lambda inp: encoder_forward(params, inp))
    ctx, init_state = fwd(x)
    jax.block_until_ready((ctx, init_state))

    assert ctx.shape == (2, params["D"], 2, 2), ctx.shape
    assert ctx.dtype == jnp.float32
    assert init_state.shape == (2, N_HIDDEN), init_state.shape
    assert bool(jnp.all(jnp.isfinite(ctx)))
    assert bool(jnp.all(jnp.isfinite(init_state)))
    print("KERNEL_OK")
</pallas_src>

<mosaic_0001>
module attributes {stable_mosaic.version = 11 : i64} {
  func.func @_matmul_bn_act_kernel(%arg0: i32, %arg1: i32, %arg2: memref<512x64xbf16, #tpu.memory_space<vmem>>, %arg3: memref<64x16xbf16, #tpu.memory_space<vmem>>, %arg4: memref<1x16xf32, #tpu.memory_space<vmem>>, %arg5: memref<1x16xf32, #tpu.memory_space<vmem>>, %arg6: memref<512x16xbf16, #tpu.memory_space<vmem>>, %arg7: memref<512x16xf32, #tpu.memory_space<vmem>>) attributes {dimension_semantics = [#tpu.dimension_semantics<parallel>, #tpu.dimension_semantics<arbitrary>], iteration_bounds = array<i64: 1, 1>, scalar_prefetch = 0 : i64, scratch_operands = 1 : i64, tpu.core_type = #tpu.core_type<tc>, window_params = [{transform_indices = @transform_0, window_bounds = array<i64: 512, 64>}, {transform_indices = @transform_1, window_bounds = array<i64: 64, 16>}, {pipeline_mode = #tpu.pipeline_mode<synchronous>, transform_indices = @transform_2, window_bounds = array<i64: 1, 16>}, {pipeline_mode = #tpu.pipeline_mode<synchronous>, transform_indices = @transform_3, window_bounds = array<i64: 1, 16>}, {transform_indices = @transform_4, window_bounds = array<i64: 512, 16>}]} {
    %c0_i32 = arith.constant 0 : i32
    %0 = arith.cmpi eq, %arg1, %c0_i32 : i32
    %1 = arith.extui %0 : i1 to i32
    %c0_i32_0 = arith.constant 0 : i32
    %2 = arith.cmpi ne, %1, %c0_i32_0 : i32
    scf.if %2 {
      %cst_10 = arith.constant 0.000000e+00 : f32
      %12 = vector.broadcast %cst_10 : f32 to vector<512x16xf32>
      %c0_11 = arith.constant 0 : index
      %c0_12 = arith.constant 0 : index
      %13 = vector.load %arg7[%c0_11, %c0_12] : memref<512x16xf32, #tpu.memory_space<vmem>>, vector<512x16xf32>
      tpu.vector_store %arg7[%c0_11, %c0_12], %12 {strides = array<i32>} : memref<512x16xf32, #tpu.memory_space<vmem>>, vector<512x16xf32>,
    } else {
    }
    %c0 = arith.constant 0 : index
    %c0_1 = arith.constant 0 : index
    %3 = vector.load %arg7[%c0, %c0_1] : memref<512x16xf32, #tpu.memory_space<vmem>>, vector<512x16xf32>
    %c0_2 = arith.constant 0 : index
    %c0_3 = arith.constant 0 : index
    %4 = vector.load %arg2[%c0_2, %c0_3] : memref<512x64xbf16, #tpu.memory_space<vmem>>, vector<512x64xbf16>
    %c0_4 = arith.constant 0 : index
    %c0_5 = arith.constant 0 : index
    %5 = vector.load %arg3[%c0_4, %c0_5] : memref<64x16xbf16, #tpu.memory_space<vmem>>, vector<64x16xbf16>
    %cst = arith.constant dense<0.000000e+00> : vector<512x16xf32>
    %6 = tpu.matmul %4, %5, %cst {dimension_numbers = #tpu.dot_dimension_numbers<[1], [0], [0], [1], [0, 0, 1, 1], [], []>} : vector<512x64xbf16>, vector<64x16xbf16>, vector<512x16xf32> -> vector<512x16xf32>
    %7 = arith.addf %3, %6 : vector<512x16xf32>
    %c0_6 = arith.constant 0 : index
    %c0_7 = arith.constant 0 : index
    %8 = vector.load %arg7[%c0_6, %c0_7] : memref<512x16xf32, #tpu.memory_space<vmem>>, vector<512x16xf32>
    tpu.vector_store %arg7[%c0_6, %c0_7], %7 {strides = array<i32>} : memref<512x16xf32, #tpu.memory_space<vmem>>, vector<512x16xf32>,
    %c0_i32_8 = arith.constant 0 : i32
    %9 = arith.cmpi eq, %arg1, %c0_i32_8 : i32
    %10 = arith.extui %9 : i1 to i32
    %c0_i32_9 = arith.constant 0 : i32
    %11 = arith.cmpi ne, %10, %c0_i32_9 : i32
    scf.if %11 {
      %c0_10 = arith.constant 0 : index
      %c0_11 = arith.constant 0 : index
      %12 = vector.load %arg7[%c0_10, %c0_11] : memref<512x16xf32, #tpu.memory_space<vmem>>, vector<512x16xf32>
      %c0_12 = arith.constant 0 : index
      %c0_13 = arith.constant 0 : index
      %13 = vector.load %arg4[%c0_12, %c0_13] : memref<1x16xf32, #tpu.memory_space<vmem>>, vector<1x16xf32>
      %14 = vector.broadcast %13 : vector<1x16xf32> to vector<512x16xf32>
      %15 = arith.mulf %12, %14 : vector<512x16xf32>
      %c0_14 = arith.constant 0 : index
      %c0_15 = arith.constant 0 : index
      %16 = vector.load %arg5[%c0_14, %c0_15] : memref<1x16xf32, #tpu.memory_space<vmem>>, vector<1x16xf32>
      %17 = vector.broadcast %16 : vector<1x16xf32> to vector<512x16xf32>
      %18 = arith.addf %15, %17 : vector<512x16xf32>
      %cst_16 = arith.constant 0.000000e+00 : f32
      %19 = vector.broadcast %cst_16 : f32 to vector<512x16xf32>
      %20 = arith.maximumf %18, %19 : vector<512x16xf32>
      %21 = arith.truncf %20 : vector<512x16xf32> to vector<512x16xbf16>
      %c0_17 = arith.constant 0 : index
      %c0_18 = arith.constant 0 : index
      %22 = vector.load %arg6[%c0_17, %c0_18] : memref<512x16xbf16, #tpu.memory_space<vmem>>, vector<512x16xbf16>
      tpu.vector_store %arg6[%c0_17, %c0_18], %21 {strides = array<i32>} : memref<512x16xbf16, #tpu.memory_space<vmem>>, vector<512x16xbf16>,
    } else {
    }
    return
  }
  func.func @transform_0(%arg0: i32, %arg1: i32) -> (i32, i32) {
    %c0_i32 = arith.constant 0 : i32
    return %arg0, %arg1 : i32, i32
  }
  func.func @transform_1(%arg0: i32, %arg1: i32) -> (i32, i32) {
    %c0_i32 = arith.constant 0 : i32
    %c0_i32_0 = arith.constant 0 : i32
    return %arg1, %c0_i32 : i32, i32
  }
  func.func @transform_2(%arg0: i32, %arg1: i32) -> (i32, i32) {
    %c0_i32 = arith.constant 0 : i32
    %c0_i32_0 = arith.constant 0 : i32
    %c0_i32_1 = arith.constant 0 : i32
    return %c0_i32, %c0_i32_0 : i32, i32
  }
  func.func @transform_3(%arg0: i32, %arg1: i32) -> (i32, i32) {
    %c0_i32 = arith.constant 0 : i32
    %c0_i32_0 = arith.constant 0 : i32
    %c0_i32_1 = arith.constant 0 : i32
    return %c0_i32, %c0_i32_0 : i32, i32
  }
  func.func @transform_4(%arg0: i32, %arg1: i32) -> (i32, i32) {
    %c0_i32 = arith.constant 0 : i32
    %c0_i32_0 = arith.constant 0 : i32
    return %arg0, %c0_i32 : i32, i32
  }
}

module attributes {stable_mosaic.version = 11 : i64} {
  func.func @_maxpool2x2_kernel(%arg0: memref<512x16xbf16, #tpu.memory_space<vmem>>, %arg1: memref<128x16xbf16, #tpu.memory_space<vmem>>, %arg2: memref<256x16xf32, #tpu.memory_space<vmem>>) attributes {dimension_semantics = [], scalar_prefetch = 0 : i64, scratch_operands = 1 : i64, tpu.core_type = #tpu.core_type<tc>} {
    %c0 = arith.constant 0 : index
    %c0_0 = arith.constant 0 : index
    %0 = vector.load %arg0[%c0, %c0_0] : memref<512x16xbf16, #tpu.memory_space<vmem>>, vector<16x16xbf16>
    %1 = arith.extf %0 : vector<16x16xbf16> to vector<16x16xf32>
    %c16 = arith.constant 16 : index
    %c0_1 = arith.constant 0 : index
    %2 = vector.load %arg0[%c16, %c0_1] : memref<512x16xbf16, #tpu.memory_space<vmem>>, vector<16x16xbf16>
    %3 = arith.extf %2 : vector<16x16xbf16> to vector<16x16xf32>
    %4 = arith.maximumf %1, %3 : vector<16x16xf32>
    %c0_2 = arith.constant 0 : index
    %c0_3 = arith.constant 0 : index
    %5 = vector.load %arg2[%c0_2, %c0_3] : memref<256x16xf32, #tpu.memory_space<vmem>>, vector<16x16xf32>
    tpu.vector_store %arg2[%c0_2, %c0_3], %4 {strides = array<i32>} : memref<256x16xf32, #tpu.memory_space<vmem>>, vector<16x16xf32>,
    %c32 = arith.constant 32 : index
    %c0_4 = arith.constant 0 : index
    %6 = vector.load %arg0[%c32, %c0_4] : memref<512x16xbf16, #tpu.memory_space<vmem>>, vector<16x16xbf16>
    %7 = arith.extf %6 : vector<16x16xbf16> to vector<16x16xf32>
    %c48 = arith.constant 48 : index
    %c0_5 = arith.constant 0 : index
    %8 = vector.load %arg0[%c48, %c0_5] : memref<512x16xbf16, #tpu.memory_space<vmem>>, vector<16x16xbf16>
    %9 = arith.extf %8 : vector<16x16xbf16> to vector<16x16xf32>
    %10 = arith.maximumf %7, %9 : vector<16x16xf32>
    %c16_6 = arith.constant 16 : index
    %c0_7 = arith.constant 0 : index
    %11 = vector.load %arg2[%c16_6, %c0_7] : memref<256x16xf32, #tpu.memory_space<vmem>>, vector<16x16xf32>
    tpu.vector_store %arg2[%c16_6, %c0_7], %10 {strides = array<i32>} : memref<256x16xf32, #tpu.memory_space<vmem>>, vector<16x16xf32>,
    %c64 = arith.constant 64 : index
    %c0_8 = arith.constant 0 : index
    %12 = vector.load %arg0[%c64, %c0_8] : memref<512x16xbf16, #tpu.memory_space<vmem>>, vector<16x16xbf16>
    %13 = arith.extf %12 : vector<16x16xbf16> to vector<16x16xf32>
    %c80 = arith.constant 80 : index
    %c0_9 = arith.constant 0 : index
    %14 = vector.load %arg0[%c80, %c0_9] : memref<512x16xbf16, #tpu.memory_space<vmem>>, vector<16x16xbf16>
    %15 = arith.extf %14 : vector<16x16xbf16> to vector<16x16xf32>
    %16 = arith.maximumf %13, %15 : vector<16x16xf32>
    %c32_10 = arith.constant 32 : index
    %c0_11 = arith.constant 0 : index
    %17 = vector.load %arg2[%c32_10, %c0_11] : memref<256x16xf32, #tpu.memory_space<vmem>>, vector<16x16xf32>
    tpu.vector_store %arg2[%c32_10, %c0_11], %16 {strides = array<i32>} : memref<256x16xf32, #tpu.memory_space<vmem>>, vector<16x16xf32>,
    %c96 = arith.constant 96 : index
    %c0_12 = arith.constant 0 : index
    %18 = vector.load %arg0[%c96, %c0_12] : memref<512x16xbf16, #tpu.memory_space<vmem>>, vector<16x16xbf16>
    %19 = arith.extf %18 : vector<16x16xbf16> to vector<16x16xf32>
    %c112 = arith.constant 112 : index
    %c0_13 = arith.constant 0 : index
    %20 = vector.load %arg0[%c112, %c0_13] : memref<512x16xbf16, #tpu.memory_space<vmem>>, vector<16x16xbf16>
    %21 = arith.extf %20 : vector<16x16xbf16> to vector<16x16xf32>
    %22 = arith.maximumf %19, %21 : vector<16x16xf32>
    %c48_14 = arith.constant 48 : index
    %c0_15 = arith.constant 0 : index
    %23 = vector.load %arg2[%c48_14, %c0_15] : memref<256x16xf32, #tpu.memory_space<vmem>>, vector<16x16xf32>
    tpu.vector_store %arg2[%c48_14, %c0_15], %22 {strides = array<i32>} : memref<256x16xf32, #tpu.memory_space<vmem>>, vector<16x16xf32>,
    %c128 = arith.constant 128 : index
    %c0_16 = arith.constant 0 : index
    %24 = vector.load %arg0[%c128, %c0_16] : memref<512x16xbf16, #tpu.memory_space<vmem>>, vector<16x16xbf16>
    %25 = arith.extf %24 : vector<16x16xbf16> to vector<16x16xf32>
    %c144 = arith.constant 144 : index
    %c0_17 = arith.constant 0 : index
    %26 = vector.load %arg0[%c144, %c0_17] : memref<512x16xbf16, #tpu.memory_space<vmem>>, vector<16x16xbf16>
    %27 = arith.extf %26 : vector<16x16xbf16> to vector<16x16xf32>
    %28 = arith.maximumf %25, %27 : vector<16x16xf32>
    %c64_18 = arith.constant 64 : index
    %c0_19 = arith.constant 0 : index
    %29 = vector.load %arg2[%c64_18, %c0_19] : memref<256x16xf32, #tpu.memory_space<vmem>>, vector<16x16xf32>
    tpu.vector_store %arg2[%c64_18, %c0_19], %28 {strides = array<i32>} : memref<256x16xf32, #tpu.memory_space<vmem>>, vector<16x16xf32>,
    %c160 = arith.constant 160 : index
    %c0_20 = arith.constant 0 : index
    %30 = vector.load %arg0[%c160, %c0_20] : memref<512x16xbf16, #tpu.memory_space<vmem>>, vector<16x16xbf16>
    %31 = arith.extf %30 : vector<16x16xbf16> to vector<16x16xf32>
    %c176 = arith.constant 176 : index
    %c0_21 = arith.constant 0 : index
    %32 = vector.load %arg0[%c176, %c0_21] : memref<512x16xbf16, #tpu.memory_space<vmem>>, vector<16x16xbf16>
    %33 = arith.extf %32 : vector<16x16xbf16> to vector<16x16xf32>
    %34 = arith.maximumf %31, %33 : vector<16x16xf32>
    %c80_22 = arith.constant 80 : index
    %c0_23 = arith.constant 0 : index
    %35 = vector.load %arg2[%c80_22, %c0_23] : memref<256x16xf32, #tpu.memory_space<vmem>>, vector<16x16xf32>
    tpu.vector_store %arg2[%c80_22, %c0_23], %34 {strides = array<i32>} : memref<256x16xf32, #tpu.memory_space<vmem>>, vector<16x16xf32>,
    %c192 = arith.constant 192 : index
    %c0_24 = arith.constant 0 : index
    %36 = vector.load %arg0[%c192, %c0_24] : memref<512x16xbf16, #tpu.memory_space<vmem>>, vector<16x16xbf16>
    %37 = arith.extf %36 : vector<16x16xbf16> to vector<16x16xf32>
    %c208 = arith.constant 208 : index
    %c0_25 = arith.constant 0 : index
    %38 = vector.load %arg0[%c208, %c0_25] : memref<512x16xbf16, #tpu.memory_space<vmem>>, vector<16x16xbf16>
    %39 = arith.extf %38 : vector<16x16xbf16> to vector<16x16xf32>
    %40 = arith.maximumf %37, %39 : vector<16x16xf32>
    %c96_26 = arith.constant 96 : index
    %c0_27 = arith.constant 0 : index
    %41 = vector.load %arg2[%c96_26, %c0_27] : memref<256x16xf32, #tpu.memory_space<vmem>>, vector<16x16xf32>
    tpu.vector_store %arg2[%c96_26, %c0_27], %40 {strides = array<i32>} : memref<256x16xf32, #tpu.memory_space<vmem>>, vector<16x16xf32>,
    %c224 = arith.constant 224 : index
    %c0_28 = arith.constant 0 : index
    %42 = vector.load %arg0[%c224, %c0_28] : memref<512x16xbf16, #tpu.memory_space<vmem>>, vector<16x16xbf16>
    %43 = arith.extf %42 : vector<16x16xbf16> to vector<16x16xf32>
    %c240 = arith.constant 240 : index
    %c0_29 = arith.constant 0 : index
    %44 = vector.load %arg0[%c240, %c0_29] : memref<512x16xbf16, #tpu.memory_space<vmem>>, vector<16x16xbf16>
    %45 = arith.extf %44 : vector<16x16xbf16> to vector<16x16xf32>
    %46 = arith.maximumf %43, %45 : vector<16x16xf32>
    %c112_30 = arith.constant 112 : index
    %c0_31 = arith.constant 0 : index
    %47 = vector.load %arg2[%c112_30, %c0_31] : memref<256x16xf32, #tpu.memory_space<vmem>>, vector<16x16xf32>
    tpu.vector_store %arg2[%c112_30, %c0_31], %46 {strides = array<i32>} : memref<256x16xf32, #tpu.memory_space<vmem>>, vector<16x16xf32>,
    %c256 = arith.constant 256 : index
    %c0_32 = arith.constant 0 : index
    %48 = vector.load %arg0[%c256, %c0_32] : memref<512x16xbf16, #tpu.memory_space<vmem>>, vector<16x16xbf16>
    %49 = arith.extf %48 : vector<16x16xbf16> to vector<16x16xf32>
    %c272 = arith.constant 272 : index
    %c0_33 = arith.constant 0 : index
    %50 = vector.load %arg0[%c272, %c0_33] : memref<512x16xbf16, #tpu.memory_space<vmem>>, vector<16x16xbf16>
    %51 = arith.extf %50 : vector<16x16xbf16> to vector<16x16xf32>
    %52 = arith.maximumf %49, %51 : vector<16x16xf32>
    %c128_34 = arith.constant 128 : index
    %c0_35 = arith.constant 0 : index
    %53 = vector.load %arg2[%c128_34, %c0_35] : memref<256x16xf32, #tpu.memory_space<vmem>>, vector<16x16xf32>
    tpu.vector_store %arg2[%c128_34, %c0_35], %52 {strides = array<i32>} : memref<256x16xf32, #tpu.memory_space<vmem>>, vector<16x16xf32>,
    %c288 = arith.constant 288 : index
    %c0_36 = arith.constant 0 : index
    %54 = vector.load %arg0[%c288, %c0_36] : memref<512x16xbf16, #tpu.memory_space<vmem>>, vector<16x16xbf16>
    %55 = arith.extf %54 : vector<16x16xbf16> to vector<16x16xf32>
    %c304 = arith.constant 304 : index
    %c0_37 = arith.constant 0 : index
    %56 = vector.load %arg0[%c304, %c0_37] : memref<512x16xbf16, #tpu.memory_space<vmem>>, vector<16x16xbf16>
    %57 = arith.extf %56 : vector<16x16xbf16> to vector<16x16xf32>
    %58 = arith.maximumf %55, %57 : vector<16x16xf32>
    %c144_38 = arith.constant 144 : index
    %c0_39 = arith.constant 0 : index
    %59 = vector.load %arg2[%c144_38, %c0_39] : memref<256x16xf32, #tpu.memory_space<vmem>>, vector<16x16xf32>
    tpu.vector_store %arg2[%c144_38, %c0_39], %58 {strides = array<i32>} : memref<256x16xf32, #tpu.memory_space<vmem>>, vector<16x16xf32>,
    %c320 = arith.constant 320 : index
    %c0_40 = arith.constant 0 : index
    %60 = vector.load %arg0[%c320, %c0_40] : memref<512x16xbf16, #tpu.memory_space<vmem>>, vector<16x16xbf16>
    %61 = arith.extf %60 : vector<16x16xbf16> to vector<16x16xf32>
    %c336 = arith.constant 336 : index
    %c0_41 = arith.constant 0 : index
    %62 = vector.load %arg0[%c336, %c0_41] : memref<512x16xbf16, #tpu.memory_space<vmem>>, vector<16x16xbf16>
    %63 = arith.extf %62 : vector<16x16xbf16> to vector<16x16xf32>
    %64 = arith.maximumf %61, %63 : vector<16x16xf32>
    %c160_42 = arith.constant 160 : index
    %c0_43 = arith.constant 0 : index
    %65 = vector.load %arg2[%c160_42, %c0_43] : memref<256x16xf32, #tpu.memory_space<vmem>>, vector<16x16xf32>
    tpu.vector_store %arg2[%c160_42, %c0_43], %64 {strides = array<i32>} : memref<256x16xf32, #tpu.memory_space<vmem>>, vector<16x16xf32>,
    %c352 = arith.constant 352 : index
    %c0_44 = arith.constant 0 : index
    %66 = vector.load %arg0[%c352, %c0_44] : memref<512x16xbf16, #tpu.memory_space<vmem>>, vector<16x16xbf16>
    %67 = arith.extf %66 : vector<16x16xbf16> to vector<16x16xf32>
    %c368 = arith.constant 368 : index
    %c0_45 = arith.constant 0 : index
    %68 = vector.load %arg0[%c368, %c0_45] : memref<512x16xbf16, #tpu.memory_space<vmem>>, vector<16x16xbf16>
    %69 = arith.extf %68 : vector<16x16xbf16> to vector<16x16xf32>
    %70 = arith.maximumf %67, %69 : vector<16x16xf32>
    %c176_46 = arith.constant 176 : index
    %c0_47 = arith.constant 0 : index
    %71 = vector.load %arg2[%c176_46, %c0_47] : memref<256x16xf32, #tpu.memory_space<vmem>>, vector<16x16xf32>
    tpu.vector_store %arg2[%c176_46, %c0_47], %70 {strides = array<i32>} : memref<256x16xf32, #tpu.memory_space<vmem>>, vector<16x16xf32>,
    %c384 = arith.constant 384 : index
    %c0_48 = arith.constant 0 : index
    %72 = vector.load %arg0[%c384, %c0_48] : memref<512x16xbf16, #tpu.memory_space<vmem>>, vector<16x16xbf16>
    %73 = arith.extf %72 : vector<16x16xbf16> to vector<16x16xf32>
    %c400 = arith.constant 400 : index
    %c0_49 = arith.constant 0 : index
    %74 = vector.load %arg0[%c400, %c0_49] : memref<512x16xbf16, #tpu.memory_space<vmem>>, vector<16x16xbf16>
    %75 = arith.extf %74 : vector<16x16xbf16> to vector<16x16xf32>
    %76 = arith.maximumf %73, %75 : vector<16x16xf32>
    %c192_50 = arith.constant 192 : index
    %c0_51 = arith.constant 0 : index
    %77 = vector.load %arg2[%c192_50, %c0_51] : memref<256x16xf32, #tpu.memory_space<vmem>>, vector<16x16xf32>
    tpu.vector_store %arg2[%c192_50, %c0_51], %76 {strides = array<i32>} : memref<256x16xf32, #tpu.memory_space<vmem>>, vector<16x16xf32>,
    %c416 = arith.constant 416 : index
    %c0_52 = arith.constant 0 : index
    %78 = vector.load %arg0[%c416, %c0_52] : memref<512x16xbf16, #tpu.memory_space<vmem>>, vector<16x16xbf16>
    %79 = arith.extf %78 : vector<16x16xbf16> to vector<16x16xf32>
    %c432 = arith.constant 432 : index
    %c0_53 = arith.constant 0 : index
    %80 = vector.load %arg0[%c432, %c0_53] : memref<512x16xbf16, #tpu.memory_space<vmem>>, vector<16x16xbf16>
    %81 = arith.extf %80 : vector<16x16xbf16> to vector<16x16xf32>
    %82 = arith.maximumf %79, %81 : vector<16x16xf32>
    %c208_54 = arith.constant 208 : index
    %c0_55 = arith.constant 0 : index
    %83 = vector.load %arg2[%c208_54, %c0_55] : memref<256x16xf32, #tpu.memory_space<vmem>>, vector<16x16xf32>
    tpu.vector_store %arg2[%c208_54, %c0_55], %82 {strides = array<i32>} : memref<256x16xf32, #tpu.memory_space<vmem>>, vector<16x16xf32>,
    %c448 = arith.constant 448 : index
    %c0_56 = arith.constant 0 : index
    %84 = vector.load %arg0[%c448, %c0_56] : memref<512x16xbf16, #tpu.memory_space<vmem>>, vector<16x16xbf16>
    %85 = arith.extf %84 : vector<16x16xbf16> to vector<16x16xf32>
    %c464 = arith.constant 464 : index
    %c0_57 = arith.constant 0 : index
    %86 = vector.load %arg0[%c464, %c0_57] : memref<512x16xbf16, #tpu.memory_space<vmem>>, vector<16x16xbf16>
    %87 = arith.extf %86 : vector<16x16xbf16> to vector<16x16xf32>
    %88 = arith.maximumf %85, %87 : vector<16x16xf32>
    %c224_58 = arith.constant 224 : index
    %c0_59 = arith.constant 0 : index
    %89 = vector.load %arg2[%c224_58, %c0_59] : memref<256x16xf32, #tpu.memory_space<vmem>>, vector<16x16xf32>
    tpu.vector_store %arg2[%c224_58, %c0_59], %88 {strides = array<i32>} : memref<256x16xf32, #tpu.memory_space<vmem>>, vector<16x16xf32>,
    %c480 = arith.constant 480 : index
    %c0_60 = arith.constant 0 : index
    %90 = vector.load %arg0[%c480, %c0_60] : memref<512x16xbf16, #tpu.memory_space<vmem>>, vector<16x16xbf16>
    %91 = arith.extf %90 : vector<16x16xbf16> to vector<16x16xf32>
    %c496 = arith.constant 496 : index
    %c0_61 = arith.constant 0 : index
    %92 = vector.load %arg0[%c496, %c0_61] : memref<512x16xbf16, #tpu.memory_space<vmem>>, vector<16x16xbf16>
    %93 = arith.extf %92 : vector<16x16xbf16> to vector<16x16xf32>
    %94 = arith.maximumf %91, %93 : vector<16x16xf32>
    %c240_62 = arith.constant 240 : index
    %c0_63 = arith.constant 0 : index
    %95 = vector.load %arg2[%c240_62, %c0_63] : memref<256x16xf32, #tpu.memory_space<vmem>>, vector<16x16xf32>
    tpu.vector_store %arg2[%c240_62, %c0_63], %94 {strides = array<i32>} : memref<256x16xf32, #tpu.memory_space<vmem>>, vector<16x16xf32>,
    %c0_64 = arith.constant 0 : index
    %c0_65 = arith.constant 0 : index
    %96 = tpu.strided_load %arg2[%c0_64, %c0_65] {strides = array<i32: 2, 1>} : memref<256x16xf32, #tpu.memory_space<vmem>>, vector<128x16xf32>
    %c1 = arith.constant 1 : index
    %c0_66 = arith.constant 0 : index
    %97 = tpu.strided_load %arg2[%c1, %c0_66] {strides = array<i32: 2, 1>} : memref<256x16xf32, #tpu.memory_space<vmem>>, vector<128x16xf32>
    %98 = arith.maximumf %96, %97 : vector<128x16xf32>
    %99 = arith.truncf %98 : vector<128x16xf32> to vector<128x16xbf16>
    %c0_67 = arith.constant 0 : index
    %c0_68 = arith.constant 0 : index
    %100 = vector.load %arg1[%c0_67, %c0_68] : memref<128x16xbf16, #tpu.memory_space<vmem>>, vector<128x16xbf16>
    tpu.vector_store %arg1[%c0_67, %c0_68], %99 {strides = array<i32>} : memref<128x16xbf16, #tpu.memory_space<vmem>>, vector<128x16xbf16>,
    return
  }
}

module attributes {stable_mosaic.version = 11 : i64} {
  func.func @_transition_kernel(%arg0: memref<128x32xbf16, #tpu.memory_space<vmem>>, %arg1: memref<32x16xbf16, #tpu.memory_space<vmem>>, %arg2: memref<1x16xf32, #tpu.memory_space<vmem>>, %arg3: memref<1x16xf32, #tpu.memory_space<vmem>>, %arg4: memref<32x16xbf16, #tpu.memory_space<vmem>>, %arg5: memref<64x16xf32, #tpu.memory_space<vmem>>) attributes {dimension_semantics = [], scalar_prefetch = 0 : i64, scratch_operands = 1 : i64, tpu.core_type = #tpu.core_type<tc>} {
    %c0 = arith.constant 0 : index
    %c0_0 = arith.constant 0 : index
    %0 = vector.load %arg0[%c0, %c0_0] : memref<128x32xbf16, #tpu.memory_space<vmem>>, vector<128x32xbf16>
    %c0_1 = arith.constant 0 : index
    %c0_2 = arith.constant 0 : index
    %1 = vector.load %arg1[%c0_1, %c0_2] : memref<32x16xbf16, #tpu.memory_space<vmem>>, vector<32x16xbf16>
    %cst = arith.constant dense<0.000000e+00> : vector<128x16xf32>
    %2 = tpu.matmul %0, %1, %cst {dimension_numbers = #tpu.dot_dimension_numbers<[1], [0], [0], [1], [0, 0, 1, 1], [], []>} : vector<128x32xbf16>, vector<32x16xbf16>, vector<128x16xf32> -> vector<128x16xf32>
    %c0_3 = arith.constant 0 : index
    %c0_4 = arith.constant 0 : index
    %3 = vector.load %arg2[%c0_3, %c0_4] : memref<1x16xf32, #tpu.memory_space<vmem>>, vector<1x16xf32>
    %4 = vector.broadcast %3 : vector<1x16xf32> to vector<128x16xf32>
    %5 = arith.mulf %2, %4 : vector<128x16xf32>
    %c0_5 = arith.constant 0 : index
    %c0_6 = arith.constant 0 : index
    %6 = vector.load %arg3[%c0_5, %c0_6] : memref<1x16xf32, #tpu.memory_space<vmem>>, vector<1x16xf32>
    %7 = vector.broadcast %6 : vector<1x16xf32> to vector<128x16xf32>
    %8 = arith.addf %5, %7 : vector<128x16xf32>
    %cst_7 = arith.constant 0.000000e+00 : f32
    %9 = vector.broadcast %cst_7 : f32 to vector<128x16xf32>
    %10 = arith.maximumf %8, %9 : vector<128x16xf32>
    %11 = vector.extract_strided_slice %10 {offsets = [0, 0], sizes = [8, 16], strides = [1, 1]} : vector<128x16xf32> to vector<8x16xf32>
    %12 = vector.extract_strided_slice %10 {offsets = [8, 0], sizes = [8, 16], strides = [1, 1]} : vector<128x16xf32> to vector<8x16xf32>
    %13 = arith.addf %11, %12 : vector<8x16xf32>
    %c0_8 = arith.constant 0 : index
    %c0_9 = arith.constant 0 : index
    %14 = vector.load %arg5[%c0_8, %c0_9] : memref<64x16xf32, #tpu.memory_space<vmem>>, vector<8x16xf32>
    tpu.vector_store %arg5[%c0_8, %c0_9], %13 {strides = array<i32>} : memref<64x16xf32, #tpu.memory_space<vmem>>, vector<8x16xf32>,
    %15 = vector.extract_strided_slice %10 {offsets = [16, 0], sizes = [8, 16], strides = [1, 1]} : vector<128x16xf32> to vector<8x16xf32>
    %16 = vector.extract_strided_slice %10 {offsets = [24, 0], sizes = [8, 16], strides = [1, 1]} : vector<128x16xf32> to vector<8x16xf32>
    %17 = arith.addf %15, %16 : vector<8x16xf32>
    %c8 = arith.constant 8 : index
    %c0_10 = arith.constant 0 : index
    %18 = vector.load %arg5[%c8, %c0_10] : memref<64x16xf32, #tpu.memory_space<vmem>>, vector<8x16xf32>
    tpu.vector_store %arg5[%c8, %c0_10], %17 {strides = array<i32>} : memref<64x16xf32, #tpu.memory_space<vmem>>, vector<8x16xf32>,
    %19 = vector.extract_strided_slice %10 {offsets = [32, 0], sizes = [8, 16], strides = [1, 1]} : vector<128x16xf32> to vector<8x16xf32>
    %20 = vector.extract_strided_slice %10 {offsets = [40, 0], sizes = [8, 16], strides = [1, 1]} : vector<128x16xf32> to vector<8x16xf32>
    %21 = arith.addf %19, %20 : vector<8x16xf32>
    %c16 = arith.constant 16 : index
    %c0_11 = arith.constant 0 : index
    %22 = vector.load %arg5[%c16, %c0_11] : memref<64x16xf32, #tpu.memory_space<vmem>>, vector<8x16xf32>
    tpu.vector_store %arg5[%c16, %c0_11], %21 {strides = array<i32>} : memref<64x16xf32, #tpu.memory_space<vmem>>, vector<8x16xf32>,
    %23 = vector.extract_strided_slice %10 {offsets = [48, 0], sizes = [8, 16], strides = [1, 1]} : vector<128x16xf32> to vector<8x16xf32>
    %24 = vector.extract_strided_slice %10 {offsets = [56, 0], sizes = [8, 16], strides = [1, 1]} : vector<128x16xf32> to vector<8x16xf32>
    %25 = arith.addf %23, %24 : vector<8x16xf32>
    %c24 = arith.constant 24 : index
    %c0_12 = arith.constant 0 : index
    %26 = vector.load %arg5[%c24, %c0_12] : memref<64x16xf32, #tpu.memory_space<vmem>>, vector<8x16xf32>
    tpu.vector_store %arg5[%c24, %c0_12], %25 {strides = array<i32>} : memref<64x16xf32, #tpu.memory_space<vmem>>, vector<8x16xf32>,
    %27 = vector.extract_strided_slice %10 {offsets = [64, 0], sizes = [8, 16], strides = [1, 1]} : vector<128x16xf32> to vector<8x16xf32>
    %28 = vector.extract_strided_slice %10 {offsets = [72, 0], sizes = [8, 16], strides = [1, 1]} : vector<128x16xf32> to vector<8x16xf32>
    %29 = arith.addf %27, %28 : vector<8x16xf32>
    %c32 = arith.constant 32 : index
    %c0_13 = arith.constant 0 : index
    %30 = vector.load %arg5[%c32, %c0_13] : memref<64x16xf32, #tpu.memory_space<vmem>>, vector<8x16xf32>
    tpu.vector_store %arg5[%c32, %c0_13], %29 {strides = array<i32>} : memref<64x16xf32, #tpu.memory_space<vmem>>, vector<8x16xf32>,
    %31 = vector.extract_strided_slice %10 {offsets = [80, 0], sizes = [8, 16], strides = [1, 1]} : vector<128x16xf32> to vector<8x16xf32>
    %32 = vector.extract_strided_slice %10 {offsets = [88, 0], sizes = [8, 16], strides = [1, 1]} : vector<128x16xf32> to vector<8x16xf32>
    %33 = arith.addf %31, %32 : vector<8x16xf32>
    %c40 = arith.constant 40 : index
    %c0_14 = arith.constant 0 : index
    %34 = vector.load %arg5[%c40, %c0_14] : memref<64x16xf32, #tpu.memory_space<vmem>>, vector<8x16xf32>
    tpu.vector_store %arg5[%c40, %c0_14], %33 {strides = array<i32>} : memref<64x16xf32, #tpu.memory_space<vmem>>, vector<8x16xf32>,
    %35 = vector.extract_strided_slice %10 {offsets = [96, 0], sizes = [8, 16], strides = [1, 1]} : vector<128x16xf32> to vector<8x16xf32>
    %36 = vector.extract_strided_slice %10 {offsets = [104, 0], sizes = [8, 16], strides = [1, 1]} : vector<128x16xf32> to vector<8x16xf32>
    %37 = arith.addf %35, %36 : vector<8x16xf32>
    %c48 = arith.constant 48 : index
    %c0_15 = arith.constant 0 : index
    %38 = vector.load %arg5[%c48, %c0_15] : memref<64x16xf32, #tpu.memory_space<vmem>>, vector<8x16xf32>
    tpu.vector_store %arg5[%c48, %c0_15], %37 {strides = array<i32>} : memref<64x16xf32, #tpu.memory_space<vmem>>, vector<8x16xf32>,
    %39 = vector.extract_strided_slice %10 {offsets = [112, 0], sizes = [8, 16], strides = [1, 1]} : vector<128x16xf32> to vector<8x16xf32>
    %40 = vector.extract_strided_slice %10 {offsets = [120, 0], sizes = [8, 16], strides = [1, 1]} : vector<128x16xf32> to vector<8x16xf32>
    %41 = arith.addf %39, %40 : vector<8x16xf32>
    %c56 = arith.constant 56 : index
    %c0_16 = arith.constant 0 : index
    %42 = vector.load %arg5[%c56, %c0_16] : memref<64x16xf32, #tpu.memory_space<vmem>>, vector<8x16xf32>
    tpu.vector_store %arg5[%c56, %c0_16], %41 {strides = array<i32>} : memref<64x16xf32, #tpu.memory_space<vmem>>, vector<8x16xf32>,
    %c0_17 = arith.constant 0 : index
    %c0_18 = arith.constant 0 : index
    %43 = tpu.strided_load %arg5[%c0_17, %c0_18] {strides = array<i32: 2, 1>} : memref<64x16xf32, #tpu.memory_space<vmem>>, vector<32x16xf32>
    %c1 = arith.constant 1 : index
    %c0_19 = arith.constant 0 : index
    %44 = tpu.strided_load %arg5[%c1, %c0_19] {strides = array<i32: 2, 1>} : memref<64x16xf32, #tpu.memory_space<vmem>>, vector<32x16xf32>
    %45 = arith.addf %43, %44 : vector<32x16xf32>
    %cst_20 = arith.constant 2.500000e-01 : f32
    %46 = vector.broadcast %cst_20 : f32 to vector<32x16xf32>
    %47 = arith.mulf %45, %46 : vector<32x16xf32>
    %48 = arith.truncf %47 : vector<32x16xf32> to vector<32x16xbf16>
    %c0_21 = arith.constant 0 : index
    %c0_22 = arith.constant 0 : index
    %49 = vector.load %arg4[%c0_21, %c0_22] : memref<32x16xbf16, #tpu.memory_space<vmem>>, vector<32x16xbf16>
    tpu.vector_store %arg4[%c0_21, %c0_22], %48 {strides = array<i32>} : memref<32x16xbf16, #tpu.memory_space<vmem>>, vector<32x16xbf16>,
    return
  }
}

module attributes {stable_mosaic.version = 11 : i64} {
  func.func @_dense_block_kernel(%arg0: memref<128x16xbf16, #tpu.memory_space<vmem>>, %arg1: memref<2x32x32xbf16, #tpu.memory_space<vmem>>, %arg2: memref<2x1x32xf32, #tpu.memory_space<vmem>>, %arg3: memref<2x1x32xf32, #tpu.memory_space<vmem>>, %arg4: memref<2x32x72xbf16, #tpu.memory_space<vmem>>, %arg5: memref<2x1x8xf32, #tpu.memory_space<vmem>>, %arg6: memref<2x1x8xf32, #tpu.memory_space<vmem>>, %arg7: memref<128x32xbf16, #tpu.memory_space<vmem>>, %arg8: memref<320x32xbf16, #tpu.memory_space<vmem>>, %arg9: memref<320x72xf32, #tpu.memory_space<vmem>>) attributes {dimension_semantics = [], scalar_prefetch = 0 : i64, scratch_operands = 2 : i64, tpu.core_type = #tpu.core_type<tc>} {
    %c0 = arith.constant 0 : index
    %c0_0 = arith.constant 0 : index
    %0 = vector.load %arg0[%c0, %c0_0] : memref<128x16xbf16, #tpu.memory_space<vmem>>, vector<128x16xbf16>
    %c0_1 = arith.constant 0 : index
    %c0_2 = arith.constant 0 : index
    %1 = vector.load %arg7[%c0_1, %c0_2] : memref<128x32xbf16, #tpu.memory_space<vmem>>, vector<128x16xbf16>
    tpu.vector_store %arg7[%c0_1, %c0_2], %0 {strides = array<i32>} : memref<128x32xbf16, #tpu.memory_space<vmem>>, vector<128x16xbf16>,
    %cst = arith.constant 0.000000e+00 : bf16
    %2 = vector.broadcast %cst : bf16 to vector<128x16xbf16>
    %c0_3 = arith.constant 0 : index
    %c16 = arith.constant 16 : index
    %3 = vector.load %arg7[%c0_3, %c16] : memref<128x32xbf16, #tpu.memory_space<vmem>>, vector<128x16xbf16>
    tpu.vector_store %arg7[%c0_3, %c16], %2 {strides = array<i32>} : memref<128x32xbf16, #tpu.memory_space<vmem>>, vector<128x16xbf16>,
    %cst_4 = arith.constant 0.000000e+00 : bf16
    %4 = vector.broadcast %cst_4 : bf16 to vector<320x32xbf16>
    %c0_5 = arith.constant 0 : index
    %c0_6 = arith.constant 0 : index
    %5 = vector.load %arg8[%c0_5, %c0_6] : memref<320x32xbf16, #tpu.memory_space<vmem>>, vector<320x32xbf16>
    tpu.vector_store %arg8[%c0_5, %c0_6], %4 {strides = array<i32>} : memref<320x32xbf16, #tpu.memory_space<vmem>>, vector<320x32xbf16>,
    %c0_7 = arith.constant 0 : index
    %c0_8 = arith.constant 0 : index
    %6 = vector.load %arg7[%c0_7, %c0_8] : memref<128x32xbf16, #tpu.memory_space<vmem>>, vector<128x32xbf16>
    %c0_9 = arith.constant 0 : index
    %c0_10 = arith.constant 0 : index
    %c0_11 = arith.constant 0 : index
    %7 = vector.load %arg1[%c0_9, %c0_10, %c0_11] : memref<2x32x32xbf16, #tpu.memory_space<vmem>>, vector<1x32x32xbf16>
    %8 = vector.shape_cast %7 : vector<1x32x32xbf16> to vector<32x32xbf16>
    %cst_12 = arith.constant dense<0.000000e+00> : vector<128x32xf32>
    %9 = tpu.matmul %6, %8, %cst_12 {dimension_numbers = #tpu.dot_dimension_numbers<[1], [0], [0], [1], [0, 0, 1, 1], [], []>} : vector<128x32xbf16>, vector<32x32xbf16>, vector<128x32xf32> -> vector<128x32xf32>
    %c0_13 = arith.constant 0 : index
    %c0_14 = arith.constant 0 : index
    %c0_15 = arith.constant 0 : index
    %10 = vector.load %arg2[%c0_13, %c0_14, %c0_15] : memref<2x1x32xf32, #tpu.memory_space<vmem>>, vector<1x1x32xf32>
    %11 = vector.shape_cast %10 : vector<1x1x32xf32> to vector<1x32xf32>
    %12 = vector.broadcast %11 : vector<1x32xf32> to vector<128x32xf32>
    %13 = arith.mulf %9, %12 : vector<128x32xf32>
    %c0_16 = arith.constant 0 : index
    %c0_17 = arith.constant 0 : index
    %c0_18 = arith.constant 0 : index
    %14 = vector.load %arg3[%c0_16, %c0_17, %c0_18] : memref<2x1x32xf32, #tpu.memory_space<vmem>>, vector<1x1x32xf32>
    %15 = vector.shape_cast %14 : vector<1x1x32xf32> to vector<1x32xf32>
    %16 = vector.broadcast %15 : vector<1x32xf32> to vector<128x32xf32>
    %17 = arith.addf %13, %16 : vector<128x32xf32>
    %cst_19 = arith.constant 0.000000e+00 : f32
    %18 = vector.broadcast %cst_19 : f32 to vector<128x32xf32>
    %19 = arith.maximumf %17, %18 : vector<128x32xf32>
    %20 = arith.truncf %19 : vector<128x32xf32> to vector<128x32xbf16>
    %21 = vector.extract_strided_slice %20 {offsets = [0, 0], sizes = [8, 32], strides = [1, 1]} : vector<128x32xbf16> to vector<8x32xbf16>
    %c17 = arith.constant 17 : index
    %c0_20 = arith.constant 0 : index
    %22 = vector.load %arg8[%c17, %c0_20] : memref<320x32xbf16, #tpu.memory_space<vmem>>, vector<8x32xbf16>
    tpu.vector_store %arg8[%c17, %c0_20], %21 {strides = array<i32>} : memref<320x32xbf16, #tpu.memory_space<vmem>>, vector<8x32xbf16>,
    %23 = vector.extract_strided_slice %20 {offsets = [8, 0], sizes = [8, 32], strides = [1, 1]} : vector<128x32xbf16> to vector<8x32xbf16>
    %c33 = arith.constant 33 : index
    %c0_21 = arith.constant 0 : index
    %24 = vector.load %arg8[%c33, %c0_21] : memref<320x32xbf16, #tpu.memory_space<vmem>>, vector<8x32xbf16>
    tpu.vector_store %arg8[%c33, %c0_21], %23 {strides = array<i32>} : memref<320x32xbf16, #tpu.memory_space<vmem>>, vector<8x32xbf16>,
    %25 = vector.extract_strided_slice %20 {offsets = [16, 0], sizes = [8, 32], strides = [1, 1]} : vector<128x32xbf16> to vector<8x32xbf16>
    %c49 = arith.constant 49 : index
    %c0_22 = arith.constant 0 : index
    %26 = vector.load %arg8[%c49, %c0_22] : memref<320x32xbf16, #tpu.memory_space<vmem>>, vector<8x32xbf16>
    tpu.vector_store %arg8[%c49, %c0_22], %25 {strides = array<i32>} : memref<320x32xbf16, #tpu.memory_space<vmem>>, vector<8x32xbf16>,
    %27 = vector.extract_strided_slice %20 {offsets = [24, 0], sizes = [8, 32], strides = [1, 1]} : vector<128x32xbf16> to vector<8x32xbf16>
    %c65 = arith.constant 65 : index
    %c0_23 = arith.constant 0 : index
    %28 = vector.load %arg8[%c65, %c0_23] : memref<320x32xbf16, #tpu.memory_space<vmem>>, vector<8x32xbf16>
    tpu.vector_store %arg8[%c65, %c0_23], %27 {strides = array<i32>} : memref<320x32xbf16, #tpu.memory_space<vmem>>, vector<8x32xbf16>,
    %29 = vector.extract_strided_slice %20 {offsets = [32, 0], sizes = [8, 32], strides = [1, 1]} : vector<128x32xbf16> to vector<8x32xbf16>
    %c81 = arith.constant 81 : index
    %c0_24 = arith.constant 0 : index
    %30 = vector.load %arg8[%c81, %c0_24] : memref<320x32xbf16, #tpu.memory_space<vmem>>, vector<8x32xbf16>
    tpu.vector_store %arg8[%c81, %c0_24], %29 {strides = array<i32>} : memref<320x32xbf16, #tpu.memory_space<vmem>>, vector<8x32xbf16>,
    %31 = vector.extract_strided_slice %20 {offsets = [40, 0], sizes = [8, 32], strides = [1, 1]} : vector<128x32xbf16> to vector<8x32xbf16>
    %c97 = arith.constant 97 : index
    %c0_25 = arith.constant 0 : index
    %32 = vector.load %arg8[%c97, %c0_25] : memref<320x32xbf16, #tpu.memory_space<vmem>>, vector<8x32xbf16>
    tpu.vector_store %arg8[%c97, %c0_25], %31 {strides = array<i32>} : memref<320x32xbf16, #tpu.memory_space<vmem>>, vector<8x32xbf16>,
    %33 = vector.extract_strided_slice %20 {offsets = [48, 0], sizes = [8, 32], strides = [1, 1]} : vector<128x32xbf16> to vector<8x32xbf16>
    %c113 = arith.constant 113 : index
    %c0_26 = arith.constant 0 : index
    %34 = vector.load %arg8[%c113, %c0_26] : memref<320x32xbf16, #tpu.memory_space<vmem>>, vector<8x32xbf16>
    tpu.vector_store %arg8[%c113, %c0_26], %33 {strides = array<i32>} : memref<320x32xbf16, #tpu.memory_space<vmem>>, vector<8x32xbf16>,
    %35 = vector.extract_strided_slice %20 {offsets = [56, 0], sizes = [8, 32], strides = [1, 1]} : vector<128x32xbf16> to vector<8x32xbf16>
    %c129 = arith.constant 129 : index
    %c0_27 = arith.constant 0 : index
    %36 = vector.load %arg8[%c129, %c0_27] : memref<320x32xbf16, #tpu.memory_space<vmem>>, vector<8x32xbf16>
    tpu.vector_store %arg8[%c129, %c0_27], %35 {strides = array<i32>} : memref<320x32xbf16, #tpu.memory_space<vmem>>, vector<8x32xbf16>,
    %37 = vector.extract_strided_slice %20 {offsets = [64, 0], sizes = [8, 32], strides = [1, 1]} : vector<128x32xbf16> to vector<8x32xbf16>
    %c177 = arith.constant 177 : index
    %c0_28 = arith.constant 0 : index
    %38 = vector.load %arg8[%c177, %c0_28] : memref<320x32xbf16, #tpu.memory_space<vmem>>, vector<8x32xbf16>
    tpu.vector_store %arg8[%c177, %c0_28], %37 {strides = array<i32>} : memref<320x32xbf16, #tpu.memory_space<vmem>>, vector<8x32xbf16>,
    %39 = vector.extract_strided_slice %20 {offsets = [72, 0], sizes = [8, 32], strides = [1, 1]} : vector<128x32xbf16> to vector<8x32xbf16>
    %c193 = arith.constant 193 : index
    %c0_29 = arith.constant 0 : index
    %40 = vector.load %arg8[%c193, %c0_29] : memref<320x32xbf16, #tpu.memory_space<vmem>>, vector<8x32xbf16>
    tpu.vector_store %arg8[%c193, %c0_29], %39 {strides = array<i32>} : memref<320x32xbf16, #tpu.memory_space<vmem>>, vector<8x32xbf16>,
    %41 = vector.extract_strided_slice %20 {offsets = [80, 0], sizes = [8, 32], strides = [1, 1]} : vector<128x32xbf16> to vector<8x32xbf16>
    %c209 = arith.constant 209 : index
    %c0_30 = arith.constant 0 : index
    %42 = vector.load %arg8[%c209, %c0_30] : memref<320x32xbf16, #tpu.memory_space<vmem>>, vector<8x32xbf16>
    tpu.vector_store %arg8[%c209, %c0_30], %41 {strides = array<i32>} : memref<320x32xbf16, #tpu.memory_space<vmem>>, vector<8x32xbf16>,
    %43 = vector.extract_strided_slice %20 {offsets = [88, 0], sizes = [8, 32], strides = [1, 1]} : vector<128x32xbf16> to vector<8x32xbf16>
    %c225 = arith.constant 225 : index
    %c0_31 = arith.constant 0 : index
    %44 = vector.load %arg8[%c225, %c0_31] : memref<320x32xbf16, #tpu.memory_space<vmem>>, vector<8x32xbf16>
    tpu.vector_store %arg8[%c225, %c0_31], %43 {strides = array<i32>} : memref<320x32xbf16, #tpu.memory_space<vmem>>, vector<8x32xbf16>,
    %45 = vector.extract_strided_slice %20 {offsets = [96, 0], sizes = [8, 32], strides = [1, 1]} : vector<128x32xbf16> to vector<8x32xbf16>
    %c241 = arith.constant 241 : index
    %c0_32 = arith.constant 0 : index
    %46 = vector.load %arg8[%c241, %c0_32] : memref<320x32xbf16, #tpu.memory_space<vmem>>, vector<8x32xbf16>
    tpu.vector_store %arg8[%c241, %c0_32], %45 {strides = array<i32>} : memref<320x32xbf16, #tpu.memory_space<vmem>>, vector<8x32xbf16>,
    %47 = vector.extract_strided_slice %20 {offsets = [104, 0], sizes = [8, 32], strides = [1, 1]} : vector<128x32xbf16> to vector<8x32xbf16>
    %c257 = arith.constant 257 : index
    %c0_33 = arith.constant 0 : index
    %48 = vector.load %arg8[%c257, %c0_33] : memref<320x32xbf16, #tpu.memory_space<vmem>>, vector<8x32xbf16>
    tpu.vector_store %arg8[%c257, %c0_33], %47 {strides = array<i32>} : memref<320x32xbf16, #tpu.memory_space<vmem>>, vector<8x32xbf16>,
    %49 = vector.extract_strided_slice %20 {offsets = [112, 0], sizes = [8, 32], strides = [1, 1]} : vector<128x32xbf16> to vector<8x32xbf16>
    %c273 = arith.constant 273 : index
    %c0_34 = arith.constant 0 : index
    %50 = vector.load %arg8[%c273, %c0_34] : memref<320x32xbf16, #tpu.memory_space<vmem>>, vector<8x32xbf16>
    tpu.vector_store %arg8[%c273, %c0_34], %49 {strides = array<i32>} : memref<320x32xbf16, #tpu.memory_space<vmem>>, vector<8x32xbf16>,
    %51 = vector.extract_strided_slice %20 {offsets = [120, 0], sizes = [8, 32], strides = [1, 1]} : vector<128x32xbf16> to vector<8x32xbf16>
    %c289 = arith.constant 289 : index
    %c0_35 = arith.constant 0 : index
    %52 = vector.load %arg8[%c289, %c0_35] : memref<320x32xbf16, #tpu.memory_space<vmem>>, vector<8x32xbf16>
    tpu.vector_store %arg8[%c289, %c0_35], %51 {strides = array<i32>} : memref<320x32xbf16, #tpu.memory_space<vmem>>, vector<8x32xbf16>,
    %c0_36 = arith.constant 0 : index
    %c0_37 = arith.constant 0 : index
    %53 = vector.load %arg8[%c0_36, %c0_37] : memref<320x32xbf16, #tpu.memory_space<vmem>>, vector<320x32xbf16>
    %c0_38 = arith.constant 0 : index
    %c0_39 = arith.constant 0 : index
    %c0_40 = arith.constant 0 : index
    %54 = vector.load %arg4[%c0_38, %c0_39, %c0_40] : memref<2x32x72xbf16, #tpu.memory_space<vmem>>, vector<1x32x72xbf16>
    %55 = vector.shape_cast %54 : vector<1x32x72xbf16> to vector<32x72xbf16>
    %cst_41 = arith.constant dense<0.000000e+00> : vector<320x72xf32>
    %56 = tpu.matmul %53, %55, %cst_41 {dimension_numbers = #tpu.dot_dimension_numbers<[1], [0], [0], [1], [0, 0, 1, 1], [], []>} : vector<320x32xbf16>, vector<32x72xbf16>, vector<320x72xf32> -> vector<320x72xf32>
    %c0_42 = arith.constant 0 : index
    %c0_43 = arith.constant 0 : index
    %57 = vector.load %arg9[%c0_42, %c0_43] : memref<320x72xf32, #tpu.memory_space<vmem>>, vector<320x72xf32>
    tpu.vector_store %arg9[%c0_42, %c0_43], %56 {strides = array<i32>} : memref<320x72xf32, #tpu.memory_space<vmem>>, vector<320x72xf32>,
    %c0_44 = arith.constant 0 : index
    %c0_45 = arith.constant 0 : index
    %58 = vector.load %arg9[%c0_44, %c0_45] : memref<320x72xf32, #tpu.memory_space<vmem>>, vector<286x8xf32>
    %c1 = arith.constant 1 : index
    %c8 = arith.constant 8 : index
    %59 = vector.load %arg9[%c1, %c8] : memref<320x72xf32, #tpu.memory_space<vmem>>, vector<286x8xf32>
    %60 = arith.addf %58, %59 : vector<286x8xf32>
    %c2 = arith.constant 2 : index
    %c16_46 = arith.constant 16 : index
    %61 = vector.load %arg9[%c2, %c16_46] : memref<320x72xf32, #tpu.memory_space<vmem>>, vector<286x8xf32>
    %62 = arith.addf %60, %61 : vector<286x8xf32>
    %c16_47 = arith.constant 16 : index
    %c24 = arith.constant 24 : index
    %63 = vector.load %arg9[%c16_47, %c24] : memref<320x72xf32, #tpu.memory_space<vmem>>, vector<286x8xf32>
    %64 = arith.addf %62, %63 : vector<286x8xf32>
    %c17_48 = arith.constant 17 : index
    %c32 = arith.constant 32 : index
    %65 = vector.load %arg9[%c17_48, %c32] : memref<320x72xf32, #tpu.memory_space<vmem>>, vector<286x8xf32>
    %66 = arith.addf %64, %65 : vector<286x8xf32>
    %c18 = arith.constant 18 : index
    %c40 = arith.constant 40 : index
    %67 = vector.load %arg9[%c18, %c40] : memref<320x72xf32, #tpu.memory_space<vmem>>, vector<286x8xf32>
    %68 = arith.addf %66, %67 : vector<286x8xf32>
    %c32_49 = arith.constant 32 : index
    %c48 = arith.constant 48 : index
    %69 = vector.load %arg9[%c32_49, %c48] : memref<320x72xf32, #tpu.memory_space<vmem>>, vector<286x8xf32>
    %70 = arith.addf %68, %69 : vector<286x8xf32>
    %c33_50 = arith.constant 33 : index
    %c56 = arith.constant 56 : index
    %71 = vector.load %arg9[%c33_50, %c56] : memref<320x72xf32, #tpu.memory_space<vmem>>, vector<286x8xf32>
    %72 = arith.addf %70, %71 : vector<286x8xf32>
    %c34 = arith.constant 34 : index
    %c64 = arith.constant 64 : index
    %73 = vector.load %arg9[%c34, %c64] : memref<320x72xf32, #tpu.memory_space<vmem>>, vector<286x8xf32>
    %74 = arith.addf %72, %73 : vector<286x8xf32>
    %c0_51 = arith.constant 0 : index
    %c0_52 = arith.constant 0 : index
    %c0_53 = arith.constant 0 : index
    %75 = vector.load %arg5[%c0_51, %c0_52, %c0_53] : memref<2x1x8xf32, #tpu.memory_space<vmem>>, vector<1x1x8xf32>
    %76 = vector.shape_cast %75 : vector<1x1x8xf32> to vector<1x8xf32>
    %77 = vector.broadcast %76 : vector<1x8xf32> to vector<286x8xf32>
    %78 = arith.mulf %74, %77 : vector<286x8xf32>
    %c0_54 = arith.constant 0 : index
    %c0_55 = arith.constant 0 : index
    %c0_56 = arith.constant 0 : index
    %79 = vector.load %arg6[%c0_54, %c0_55, %c0_56] : memref<2x1x8xf32, #tpu.memory_space<vmem>>, vector<1x1x8xf32>
    %80 = vector.shape_cast %79 : vector<1x1x8xf32> to vector<1x8xf32>
    %81 = vector.broadcast %80 : vector<1x8xf32> to vector<286x8xf32>
    %82 = arith.addf %78, %81 : vector<286x8xf32>
    %cst_57 = arith.constant 0.000000e+00 : f32
    %83 = vector.broadcast %cst_57 : f32 to vector<286x8xf32>
    %84 = arith.maximumf %82, %83 : vector<286x8xf32>
    %85 = arith.truncf %84 : vector<286x8xf32> to vector<286x8xbf16>
    %86 = vector.extract_strided_slice %85 {offsets = [0, 0], sizes = [8, 8], strides = [1, 1]} : vector<286x8xbf16> to vector<8x8xbf16>
    %c0_58 = arith.constant 0 : index
    %c16_59 = arith.constant 16 : index
    %87 = vector.load %arg7[%c0_58, %c16_59] : memref<128x32xbf16, #tpu.memory_space<vmem>>, vector<8x8xbf16>
    tpu.vector_store %arg7[%c0_58, %c16_59], %86 {strides = array<i32>} : memref<128x32xbf16, #tpu.memory_space<vmem>>, vector<8x8xbf16>,
    %88 = vector.extract_strided_slice %85 {offsets = [16, 0], sizes = [8, 8], strides = [1, 1]} : vector<286x8xbf16> to vector<8x8xbf16>
    %c8_60 = arith.constant 8 : index
    %c16_61 = arith.constant 16 : index
    %89 = vector.load %arg7[%c8_60, %c16_61] : memref<128x32xbf16, #tpu.memory_space<vmem>>, vector<8x8xbf16>
    tpu.vector_store %arg7[%c8_60, %c16_61], %88 {strides = array<i32>} : memref<128x32xbf16, #tpu.memory_space<vmem>>, vector<8x8xbf16>,
    %90 = vector.extract_strided_slice %85 {offsets = [32, 0], sizes = [8, 8], strides = [1, 1]} : vector<286x8xbf16> to vector<8x8xbf16>
    %c16_62 = arith.constant 16 : index
    %c16_63 = arith.constant 16 : index
    %91 = vector.load %arg7[%c16_62, %c16_63] : memref<128x32xbf16, #tpu.memory_space<vmem>>, vector<8x8xbf16>
    tpu.vector_store %arg7[%c16_62, %c16_63], %90 {strides = array<i32>} : memref<128x32xbf16, #tpu.memory_space<vmem>>, vector<8x8xbf16>,
    %92 = vector.extract_strided_slice %85 {offsets = [48, 0], sizes = [8, 8], strides = [1, 1]} : vector<286x8xbf16> to vector<8x8xbf16>
    %c24_64 = arith.constant 24 : index
    %c16_65 = arith.constant 16 : index
    %93 = vector.load %arg7[%c24_64, %c16_65] : memref<128x32xbf16, #tpu.memory_space<vmem>>, vector<8x8xbf16>
    tpu.vector_store %arg7[%c24_64, %c16_65], %92 {strides = array<i32>} : memref<128x32xbf16, #tpu.memory_space<vmem>>, vector<8x8xbf16>,
    %94 = vector.extract_strided_slice %85 {offsets = [64, 0], sizes = [8, 8], strides = [1, 1]} : vector<286x8xbf16> to vector<8x8xbf16>
    %c32_66 = arith.constant 32 : index
    %c16_67 = arith.constant 16 : index
    %95 = vector.load %arg7[%c32_66, %c16_67] : memref<128x32xbf16, #tpu.memory_space<vmem>>, vector<8x8xbf16>
    tpu.vector_store %arg7[%c32_66, %c16_67], %94 {strides = array<i32>} : memref<128x32xbf16, #tpu.memory_space<vmem>>, vector<8x8xbf16>,
    %96 = vector.extract_strided_slice %85 {offsets = [80, 0], sizes = [8, 8], strides = [1, 1]} : vector<286x8xbf16> to vector<8x8xbf16>
    %c40_68 = arith.constant 40 : index
    %c16_69 = arith.constant 16 : index
    %97 = vector.load %arg7[%c40_68, %c16_69] : memref<128x32xbf16, #tpu.memory_space<vmem>>, vector<8x8xbf16>
    tpu.vector_store %arg7[%c40_68, %c16_69], %96 {strides = array<i32>} : memref<128x32xbf16, #tpu.memory_space<vmem>>, vector<8x8xbf16>,
    %98 = vector.extract_strided_slice %85 {offsets = [96, 0], sizes = [8, 8], strides = [1, 1]} : vector<286x8xbf16> to vector<8x8xbf16>
    %c48_70 = arith.constant 48 : index
    %c16_71 = arith.constant 16 : index
    %99 = vector.load %arg7[%c48_70, %c16_71] : memref<128x32xbf16, #tpu.memory_space<vmem>>, vector<8x8xbf16>
    tpu.vector_store %arg7[%c48_70, %c16_71], %98 {strides = array<i32>} : memref<128x32xbf16, #tpu.memory_space<vmem>>, vector<8x8xbf16>,
    %100 = vector.extract_strided_slice %85 {offsets = [112, 0], sizes = [8, 8], strides = [1, 1]} : vector<286x8xbf16> to vector<8x8xbf16>
    %c56_72 = arith.constant 56 : index
    %c16_73 = arith.constant 16 : index
    %101 = vector.load %arg7[%c56_72, %c16_73] : memref<128x32xbf16, #tpu.memory_space<vmem>>, vector<8x8xbf16>
    tpu.vector_store %arg7[%c56_72, %c16_73], %100 {strides = array<i32>} : memref<128x32xbf16, #tpu.memory_space<vmem>>, vector<8x8xbf16>,
    %102 = vector.extract_strided_slice %85 {offsets = [160, 0], sizes = [8, 8], strides = [1, 1]} : vector<286x8xbf16> to vector<8x8xbf16>
    %c64_74 = arith.constant 64 : index
    %c16_75 = arith.constant 16 : index
    %103 = vector.load %arg7[%c64_74, %c16_75] : memref<128x32xbf16, #tpu.memory_space<vmem>>, vector<8x8xbf16>
    tpu.vector_store %arg7[%c64_74, %c16_75], %102 {strides = array<i32>} : memref<128x32xbf16, #tpu.memory_space<vmem>>, vector<8x8xbf16>,
    %104 = vector.extract_strided_slice %85 {offsets = [176, 0], sizes = [8, 8], strides = [1, 1]} : vector<286x8xbf16> to vector<8x8xbf16>
    %c72 = arith.constant 72 : index
    %c16_76 = arith.constant 16 : index
    %105 = vector.load %arg7[%c72, %c16_76] : memref<128x32xbf16, #tpu.memory_space<vmem>>, vector<8x8xbf16>
    tpu.vector_store %arg7[%c72, %c16_76], %104 {strides = array<i32>} : memref<128x32xbf16, #tpu.memory_space<vmem>>, vector<8x8xbf16>,
    %106 = vector.extract_strided_slice %85 {offsets = [192, 0], sizes = [8, 8], strides = [1, 1]} : vector<286x8xbf16> to vector<8x8xbf16>
    %c80 = arith.constant 80 : index
    %c16_77 = arith.constant 16 : index
    %107 = vector.load %arg7[%c80, %c16_77] : memref<128x32xbf16, #tpu.memory_space<vmem>>, vector<8x8xbf16>
    tpu.vector_store %arg7[%c80, %c16_77], %106 {strides = array<i32>} : memref<128x32xbf16, #tpu.memory_space<vmem>>, vector<8x8xbf16>,
    %108 = vector.extract_strided_slice %85 {offsets = [208, 0], sizes = [8, 8], strides = [1, 1]} : vector<286x8xbf16> to vector<8x8xbf16>
    %c88 = arith.constant 88 : index
    %c16_78 = arith.constant 16 : index
    %109 = vector.load %arg7[%c88, %c16_78] : memref<128x32xbf16, #tpu.memory_space<vmem>>, vector<8x8xbf16>
    tpu.vector_store %arg7[%c88, %c16_78], %108 {strides = array<i32>} : memref<128x32xbf16, #tpu.memory_space<vmem>>, vector<8x8xbf16>,
    %110 = vector.extract_strided_slice %85 {offsets = [224, 0], sizes = [8, 8], strides = [1, 1]} : vector<286x8xbf16> to vector<8x8xbf16>
    %c96 = arith.constant 96 : index
    %c16_79 = arith.constant 16 : index
    %111 = vector.load %arg7[%c96, %c16_79] : memref<128x32xbf16, #tpu.memory_space<vmem>>, vector<8x8xbf16>
    tpu.vector_store %arg7[%c96, %c16_79], %110 {strides = array<i32>} : memref<128x32xbf16, #tpu.memory_space<vmem>>, vector<8x8xbf16>,
    %112 = vector.extract_strided_slice %85 {offsets = [240, 0], sizes = [8, 8], strides = [1, 1]} : vector<286x8xbf16> to vector<8x8xbf16>
    %c104 = arith.constant 104 : index
    %c16_80 = arith.constant 16 : index
    %113 = vector.load %arg7[%c104, %c16_80] : memref<128x32xbf16, #tpu.memory_space<vmem>>, vector<8x8xbf16>
    tpu.vector_store %arg7[%c104, %c16_80], %112 {strides = array<i32>} : memref<128x32xbf16, #tpu.memory_space<vmem>>, vector<8x8xbf16>,
    %114 = vector.extract_strided_slice %85 {offsets = [256, 0], sizes = [8, 8], strides = [1, 1]} : vector<286x8xbf16> to vector<8x8xbf16>
    %c112 = arith.constant 112 : index
    %c16_81 = arith.constant 16 : index
    %115 = vector.load %arg7[%c112, %c16_81] : memref<128x32xbf16, #tpu.memory_space<vmem>>, vector<8x8xbf16>
    tpu.vector_store %arg7[%c112, %c16_81], %114 {strides = array<i32>} : memref<128x32xbf16, #tpu.memory_space<vmem>>, vector<8x8xbf16>,
    %116 = vector.extract_strided_slice %85 {offsets = [272, 0], sizes = [8, 8], strides = [1, 1]} : vector<286x8xbf16> to vector<8x8xbf16>
    %c120 = arith.constant 120 : index
    %c16_82 = arith.constant 16 : index
    %117 = vector.load %arg7[%c120, %c16_82] : memref<128x32xbf16, #tpu.memory_space<vmem>>, vector<8x8xbf16>
    tpu.vector_store %arg7[%c120, %c16_82], %116 {strides = array<i32>} : memref<128x32xbf16, #tpu.memory_space<vmem>>, vector<8x8xbf16>,
    %c0_83 = arith.constant 0 : index
    %c0_84 = arith.constant 0 : index
    %118 = vector.load %arg7[%c0_83, %c0_84] : memref<128x32xbf16, #tpu.memory_space<vmem>>, vector<128x32xbf16>
    %c1_85 = arith.constant 1 : index
    %c0_86 = arith.constant 0 : index
    %c0_87 = arith.constant 0 : index
    %119 = vector.load %arg1[%c1_85, %c0_86, %c0_87] : memref<2x32x32xbf16, #tpu.memory_space<vmem>>, vector<1x32x32xbf16>
    %120 = vector.shape_cast %119 : vector<1x32x32xbf16> to vector<32x32xbf16>
    %cst_88 = arith.constant dense<0.000000e+00> : vector<128x32xf32>
    %121 = tpu.matmul %118, %120, %cst_88 {dimension_numbers = #tpu.dot_dimension_numbers<[1], [0], [0], [1], [0, 0, 1, 1], [], []>} : vector<128x32xbf16>, vector<32x32xbf16>, vector<128x32xf32> -> vector<128x32xf32>
    %c1_89 = arith.constant 1 : index
    %c0_90 = arith.constant 0 : index
    %c0_91 = arith.constant 0 : index
    %122 = vector.load %arg2[%c1_89, %c0_90, %c0_91] : memref<2x1x32xf32, #tpu.memory_space<vmem>>, vector<1x1x32xf32>
    %123 = vector.shape_cast %122 : vector<1x1x32xf32> to vector<1x32xf32>
    %124 = vector.broadcast %123 : vector<1x32xf32> to vector<128x32xf32>
    %125 = arith.mulf %121, %124 : vector<128x32xf32>
    %c1_92 = arith.constant 1 : index
    %c0_93 = arith.constant 0 : index
    %c0_94 = arith.constant 0 : index
    %126 = vector.load %arg3[%c1_92, %c0_93, %c0_94] : memref<2x1x32xf32, #tpu.memory_space<vmem>>, vector<1x1x32xf32>
    %127 = vector.shape_cast %126 : vector<1x1x32xf32> to vector<1x32xf32>
    %128 = vector.broadcast %127 : vector<1x32xf32> to vector<128x32xf32>
    %129 = arith.addf %125, %128 : vector<128x32xf32>
    %cst_95 = arith.constant 0.000000e+00 : f32
    %130 = vector.broadcast %cst_95 : f32 to vector<128x32xf32>
    %131 = arith.maximumf %129, %130 : vector<128x32xf32>
    %132 = arith.truncf %131 : vector<128x32xf32> to vector<128x32xbf16>
    %133 = vector.extract_strided_slice %132 {offsets = [0, 0], sizes = [8, 32], strides = [1, 1]} : vector<128x32xbf16> to vector<8x32xbf16>
    %c17_96 = arith.constant 17 : index
    %c0_97 = arith.constant 0 : index
    %134 = vector.load %arg8[%c17_96, %c0_97] : memref<320x32xbf16, #tpu.memory_space<vmem>>, vector<8x32xbf16>
    tpu.vector_store %arg8[%c17_96, %c0_97], %133 {strides = array<i32>} : memref<320x32xbf16, #tpu.memory_space<vmem>>, vector<8x32xbf16>,
    %135 = vector.extract_strided_slice %132 {offsets = [8, 0], sizes = [8, 32], strides = [1, 1]} : vector<128x32xbf16> to vector<8x32xbf16>
    %c33_98 = arith.constant 33 : index
    %c0_99 = arith.constant 0 : index
    %136 = vector.load %arg8[%c33_98, %c0_99] : memref<320x32xbf16, #tpu.memory_space<vmem>>, vector<8x32xbf16>
    tpu.vector_store %arg8[%c33_98, %c0_99], %135 {strides = array<i32>} : memref<320x32xbf16, #tpu.memory_space<vmem>>, vector<8x32xbf16>,
    %137 = vector.extract_strided_slice %132 {offsets = [16, 0], sizes = [8, 32], strides = [1, 1]} : vector<128x32xbf16> to vector<8x32xbf16>
    %c49_100 = arith.constant 49 : index
    %c0_101 = arith.constant 0 : index
    %138 = vector.load %arg8[%c49_100, %c0_101] : memref<320x32xbf16, #tpu.memory_space<vmem>>, vector<8x32xbf16>
    tpu.vector_store %arg8[%c49_100, %c0_101], %137 {strides = array<i32>} : memref<320x32xbf16, #tpu.memory_space<vmem>>, vector<8x32xbf16>,
    %139 = vector.extract_strided_slice %132 {offsets = [24, 0], sizes = [8, 32], strides = [1, 1]} : vector<128x32xbf16> to vector<8x32xbf16>
    %c65_102 = arith.constant 65 : index
    %c0_103 = arith.constant 0 : index
    %140 = vector.load %arg8[%c65_102, %c0_103] : memref<320x32xbf16, #tpu.memory_space<vmem>>, vector<8x32xbf16>
    tpu.vector_store %arg8[%c65_102, %c0_103], %139 {strides = array<i32>} : memref<320x32xbf16, #tpu.memory_space<vmem>>, vector<8x32xbf16>,
    %141 = vector.extract_strided_slice %132 {offsets = [32, 0], sizes = [8, 32], strides = [1, 1]} : vector<128x32xbf16> to vector<8x32xbf16>
    %c81_104 = arith.constant 81 : index
    %c0_105 = arith.constant 0 : index
    %142 = vector.load %arg8[%c81_104, %c0_105] : memref<320x32xbf16, #tpu.memory_space<vmem>>, vector<8x32xbf16>
    tpu.vector_store %arg8[%c81_104, %c0_105], %141 {strides = array<i32>} : memref<320x32xbf16, #tpu.memory_space<vmem>>, vector<8x32xbf16>,
    %143 = vector.extract_strided_slice %132 {offsets = [40, 0], sizes = [8, 32], strides = [1, 1]} : vector<128x32xbf16> to vector<8x32xbf16>
    %c97_106 = arith.constant 97 : index
    %c0_107 = arith.constant 0 : index
    %144 = vector.load %arg8[%c97_106, %c0_107] : memref<320x32xbf16, #tpu.memory_space<vmem>>, vector<8x32xbf16>
    tpu.vector_store %arg8[%c97_106, %c0_107], %143 {strides = array<i32>} : memref<320x32xbf16, #tpu.memory_space<vmem>>, vector<8x32xbf16>,
    %145 = vector.extract_strided_slice %132 {offsets = [48, 0], sizes = [8, 32], strides = [1, 1]} : vector<128x32xbf16> to vector<8x32xbf16>
    %c113_108 = arith.constant 113 : index
    %c0_109 = arith.constant 0 : index
    %146 = vector.load %arg8[%c113_108, %c0_109] : memref<320x32xbf16, #tpu.memory_space<vmem>>, vector<8x32xbf16>
    tpu.vector_store %arg8[%c113_108, %c0_109], %145 {strides = array<i32>} : memref<320x32xbf16, #tpu.memory_space<vmem>>, vector<8x32xbf16>,
    %147 = vector.extract_strided_slice %132 {offsets = [56, 0], sizes = [8, 32], strides = [1, 1]} : vector<128x32xbf16> to vector<8x32xbf16>
    %c129_110 = arith.constant 129 : index
    %c0_111 = arith.constant 0 : index
    %148 = vector.load %arg8[%c129_110, %c0_111] : memref<320x32xbf16, #tpu.memory_space<vmem>>, vector<8x32xbf16>
    tpu.vector_store %arg8[%c129_110, %c0_111], %147 {strides = array<i32>} : memref<320x32xbf16, #tpu.memory_space<vmem>>, vector<8x32xbf16>,
    %149 = vector.extract_strided_slice %132 {offsets = [64, 0], sizes = [8, 32], strides = [1, 1]} : vector<128x32xbf16> to vector<8x32xbf16>
    %c177_112 = arith.constant 177 : index
    %c0_113 = arith.constant 0 : index
    %150 = vector.load %arg8[%c177_112, %c0_113] : memref<320x32xbf16, #tpu.memory_space<vmem>>, vector<8x32xbf16>
    tpu.vector_store %arg8[%c177_112, %c0_113], %149 {strides = array<i32>} : memref<320x32xbf16, #tpu.memory_space<vmem>>, vector<8x32xbf16>,
    %151 = vector.extract_strided_slice %132 {offsets = [72, 0], sizes = [8, 32], strides = [1, 1]} : vector<128x32xbf16> to vector<8x32xbf16>
    %c193_114 = arith.constant 193 : index
    %c0_115 = arith.constant 0 : index
    %152 = vector.load %arg8[%c193_114, %c0_115] : memref<320x32xbf16, #tpu.memory_space<vmem>>, vector<8x32xbf16>
    tpu.vector_store %arg8[%c193_114, %c0_115], %151 {strides = array<i32>} : memref<320x32xbf16, #tpu.memory_space<vmem>>, vector<8x32xbf16>,
    %153 = vector.extract_strided_slice %132 {offsets = [80, 0], sizes = [8, 32], strides = [1, 1]} : vector<128x32xbf16> to vector<8x32xbf16>
    %c209_116 = arith.constant 209 : index
    %c0_117 = arith.constant 0 : index
    %154 = vector.load %arg8[%c209_116, %c0_117] : memref<320x32xbf16, #tpu.memory_space<vmem>>, vector<8x32xbf16>
    tpu.vector_store %arg8[%c209_116, %c0_117], %153 {strides = array<i32>} : memref<320x32xbf16, #tpu.memory_space<vmem>>, vector<8x32xbf16>,
    %155 = vector.extract_strided_slice %132 {offsets = [88, 0], sizes = [8, 32], strides = [1, 1]} : vector<128x32xbf16> to vector<8x32xbf16>
    %c225_118 = arith.constant 225 : index
    %c0_119 = arith.constant 0 : index
    %156 = vector.load %arg8[%c225_118, %c0_119] : memref<320x32xbf16, #tpu.memory_space<vmem>>, vector<8x32xbf16>
    tpu.vector_store %arg8[%c225_118, %c0_119], %155 {strides = array<i32>} : memref<320x32xbf16, #tpu.memory_space<vmem>>, vector<8x32xbf16>,
    %157 = vector.extract_strided_slice %132 {offsets = [96, 0], sizes = [8, 32], strides = [1, 1]} : vector<128x32xbf16> to vector<8x32xbf16>
    %c241_120 = arith.constant 241 : index
    %c0_121 = arith.constant 0 : index
    %158 = vector.load %arg8[%c241_120, %c0_121] : memref<320x32xbf16, #tpu.memory_space<vmem>>, vector<8x32xbf16>
    tpu.vector_store %arg8[%c241_120, %c0_121], %157 {strides = array<i32>} : memref<320x32xbf16, #tpu.memory_space<vmem>>, vector<8x32xbf16>,
    %159 = vector.extract_strided_slice %132 {offsets = [104, 0], sizes = [8, 32], strides = [1, 1]} : vector<128x32xbf16> to vector<8x32xbf16>
    %c257_122 = arith.constant 257 : index
    %c0_123 = arith.constant 0 : index
    %160 = vector.load %arg8[%c257_122, %c0_123] : memref<320x32xbf16, #tpu.memory_space<vmem>>, vector<8x32xbf16>
    tpu.vector_store %arg8[%c257_122, %c0_123], %159 {strides = array<i32>} : memref<320x32xbf16, #tpu.memory_space<vmem>>, vector<8x32xbf16>,
    %161 = vector.extract_strided_slice %132 {offsets = [112, 0], sizes = [8, 32], strides = [1, 1]} : vector<128x32xbf16> to vector<8x32xbf16>
    %c273_124 = arith.constant 273 : index
    %c0_125 = arith.constant 0 : index
    %162 = vector.load %arg8[%c273_124, %c0_125] : memref<320x32xbf16, #tpu.memory_space<vmem>>, vector<8x32xbf16>
    tpu.vector_store %arg8[%c273_124, %c0_125], %161 {strides = array<i32>} : memref<320x32xbf16, #tpu.memory_space<vmem>>, vector<8x32xbf16>,
    %163 = vector.extract_strided_slice %132 {offsets = [120, 0], sizes = [8, 32], strides = [1, 1]} : vector<128x32xbf16> to vector<8x32xbf16>
    %c289_126 = arith.constant 289 : index
    %c0_127 = arith.constant 0 : index
    %164 = vector.load %arg8[%c289_126, %c0_127] : memref<320x32xbf16, #tpu.memory_space<vmem>>, vector<8x32xbf16>
    tpu.vector_store %arg8[%c289_126, %c0_127], %163 {strides = array<i32>} : memref<320x32xbf16, #tpu.memory_space<vmem>>, vector<8x32xbf16>,
    %c0_128 = arith.constant 0 : index
    %c0_129 = arith.constant 0 : index
    %165 = vector.load %arg8[%c0_128, %c0_129] : memref<320x32xbf16, #tpu.memory_space<vmem>>, vector<320x32xbf16>
    %c1_130 = arith.constant 1 : index
    %c0_131 = arith.constant 0 : index
    %c0_132 = arith.constant 0 : index
    %166 = vector.load %arg4[%c1_130, %c0_131, %c0_132] : memref<2x32x72xbf16, #tpu.memory_space<vmem>>, vector<1x32x72xbf16>
    %167 = vector.shape_cast %166 : vector<1x32x72xbf16> to vector<32x72xbf16>
    %cst_133 = arith.constant dense<0.000000e+00> : vector<320x72xf32>
    %168 = tpu.matmul %165, %167, %cst_133 {dimension_numbers = #tpu.dot_dimension_numbers<[1], [0], [0], [1], [0, 0, 1, 1], [], []>} : vector<320x32xbf16>, vector<32x72xbf16>, vector<320x72xf32> -> vector<320x72xf32>
    %c0_134 = arith.constant 0 : index
    %c0_135 = arith.constant 0 : index
    %169 = vector.load %arg9[%c0_134, %c0_135] : memref<320x72xf32, #tpu.memory_space<vmem>>, vector<320x72xf32>
    tpu.vector_store %arg9[%c0_134, %c0_135], %168 {strides = array<i32>} : memref<320x72xf32, #tpu.memory_space<vmem>>, vector<320x72xf32>,
    %c0_136 = arith.constant 0 : index
    %c0_137 = arith.constant 0 : index
    %170 = vector.load %arg9[%c0_136, %c0_137] : memref<320x72xf32, #tpu.memory_space<vmem>>, vector<286x8xf32>
    %c1_138 = arith.constant 1 : index
    %c8_139 = arith.constant 8 : index
    %171 = vector.load %arg9[%c1_138, %c8_139] : memref<320x72xf32, #tpu.memory_space<vmem>>, vector<286x8xf32>
    %172 = arith.addf %170, %171 : vector<286x8xf32>
    %c2_140 = arith.constant 2 : index
    %c16_141 = arith.constant 16 : index
    %173 = vector.load %arg9[%c2_140, %c16_141] : memref<320x72xf32, #tpu.memory_space<vmem>>, vector<286x8xf32>
    %174 = arith.addf %172, %173 : vector<286x8xf32>
    %c16_142 = arith.constant 16 : index
    %c24_143 = arith.constant 24 : index
    %175 = vector.load %arg9[%c16_142, %c24_143] : memref<320x72xf32, #tpu.memory_space<vmem>>, vector<286x8xf32>
    %176 = arith.addf %174, %175 : vector<286x8xf32>
    %c17_144 = arith.constant 17 : index
    %c32_145 = arith.constant 32 : index
    %177 = vector.load %arg9[%c17_144, %c32_145] : memref<320x72xf32, #tpu.memory_space<vmem>>, vector<286x8xf32>
    %178 = arith.addf %176, %177 : vector<286x8xf32>
    %c18_146 = arith.constant 18 : index
    %c40_147 = arith.constant 40 : index
    %179 = vector.load %arg9[%c18_146, %c40_147] : memref<320x72xf32, #tpu.memory_space<vmem>>, vector<286x8xf32>
    %180 = arith.addf %178, %179 : vector<286x8xf32>
    %c32_148 = arith.constant 32 : index
    %c48_149 = arith.constant 48 : index
    %181 = vector.load %arg9[%c32_148, %c48_149] : memref<320x72xf32, #tpu.memory_space<vmem>>, vector<286x8xf32>
    %182 = arith.addf %180, %181 : vector<286x8xf32>
    %c33_150 = arith.constant 33 : index
    %c56_151 = arith.constant 56 : index
    %183 = vector.load %arg9[%c33_150, %c56_151] : memref<320x72xf32, #tpu.memory_space<vmem>>, vector<286x8xf32>
    %184 = arith.addf %182, %183 : vector<286x8xf32>
    %c34_152 = arith.constant 34 : index
    %c64_153 = arith.constant 64 : index
    %185 = vector.load %arg9[%c34_152, %c64_153] : memref<320x72xf32, #tpu.memory_space<vmem>>, vector<286x8xf32>
    %186 = arith.addf %184, %185 : vector<286x8xf32>
    %c1_154 = arith.constant 1 : index
    %c0_155 = arith.constant 0 : index
    %c0_156 = arith.constant 0 : index
    %187 = vector.load %arg5[%c1_154, %c0_155, %c0_156] : memref<2x1x8xf32, #tpu.memory_space<vmem>>, vector<1x1x8xf32>
    %188 = vector.shape_cast %187 : vector<1x1x8xf32> to vector<1x8xf32>
    %189 = vector.broadcast %188 : vector<1x8xf32> to vector<286x8xf32>
    %190 = arith.mulf %186, %189 : vector<286x8xf32>
    %c1_157 = arith.constant 1 : index
    %c0_158 = arith.constant 0 : index
    %c0_159 = arith.constant 0 : index
    %191 = vector.load %arg6[%c1_157, %c0_158, %c0_159] : memref<2x1x8xf32, #tpu.memory_space<vmem>>, vector<1x1x8xf32>
    %192 = vector.shape_cast %191 : vector<1x1x8xf32> to vector<1x8xf32>
    %193 = vector.broadcast %192 : vector<1x8xf32> to vector<286x8xf32>
    %194 = arith.addf %190, %193 : vector<286x8xf32>
    %cst_160 = arith.constant 0.000000e+00 : f32
    %195 = vector.broadcast %cst_160 : f32 to vector<286x8xf32>
    %196 = arith.maximumf %194, %195 : vector<286x8xf32>
    %197 = arith.truncf %196 : vector<286x8xf32> to vector<286x8xbf16>
    %198 = vector.extract_strided_slice %197 {offsets = [0, 0], sizes = [8, 8], strides = [1, 1]} : vector<286x8xbf16> to vector<8x8xbf16>
    %c0_161 = arith.constant 0 : index
    %c24_162 = arith.constant 24 : index
    %199 = vector.load %arg7[%c0_161, %c24_162] : memref<128x32xbf16, #tpu.memory_space<vmem>>, vector<8x8xbf16>
    tpu.vector_store %arg7[%c0_161, %c24_162], %198 {strides = array<i32>} : memref<128x32xbf16, #tpu.memory_space<vmem>>, vector<8x8xbf16>,
    %200 = vector.extract_strided_slice %197 {offsets = [16, 0], sizes = [8, 8], strides = [1, 1]} : vector<286x8xbf16> to vector<8x8xbf16>
    %c8_163 = arith.constant 8 : index
    %c24_164 = arith.constant 24 : index
    %201 = vector.load %arg7[%c8_163, %c24_164] : memref<128x32xbf16, #tpu.memory_space<vmem>>, vector<8x8xbf16>
    tpu.vector_store %arg7[%c8_163, %c24_164], %200 {strides = array<i32>} : memref<128x32xbf16, #tpu.memory_space<vmem>>, vector<8x8xbf16>,
    %202 = vector.extract_strided_slice %197 {offsets = [32, 0], sizes = [8, 8], strides = [1, 1]} : vector<286x8xbf16> to vector<8x8xbf16>
    %c16_165 = arith.constant 16 : index
    %c24_166 = arith.constant 24 : index
    %203 = vector.load %arg7[%c16_165, %c24_166] : memref<128x32xbf16, #tpu.memory_space<vmem>>, vector<8x8xbf16>
    tpu.vector_store %arg7[%c16_165, %c24_166], %202 {strides = array<i32>} : memref<128x32xbf16, #tpu.memory_space<vmem>>, vector<8x8xbf16>,
    %204 = vector.extract_strided_slice %197 {offsets = [48, 0], sizes = [8, 8], strides = [1, 1]} : vector<286x8xbf16> to vector<8x8xbf16>
    %c24_167 = arith.constant 24 : index
    %c24_168 = arith.constant 24 : index
    %205 = vector.load %arg7[%c24_167, %c24_168] : memref<128x32xbf16, #tpu.memory_space<vmem>>, vector<8x8xbf16>
    tpu.vector_store %arg7[%c24_167, %c24_168], %204 {strides = array<i32>} : memref<128x32xbf16, #tpu.memory_space<vmem>>, vector<8x8xbf16>,
    %206 = vector.extract_strided_slice %197 {offsets = [64, 0], sizes = [8, 8], strides = [1, 1]} : vector<286x8xbf16> to vector<8x8xbf16>
    %c32_169 = arith.constant 32 : index
    %c24_170 = arith.constant 24 : index
    %207 = vector.load %arg7[%c32_169, %c24_170] : memref<128x32xbf16, #tpu.memory_space<vmem>>, vector<8x8xbf16>
    tpu.vector_store %arg7[%c32_169, %c24_170], %206 {strides = array<i32>} : memref<128x32xbf16, #tpu.memory_space<vmem>>, vector<8x8xbf16>,
    %208 = vector.extract_strided_slice %197 {offsets = [80, 0], sizes = [8, 8], strides = [1, 1]} : vector<286x8xbf16> to vector<8x8xbf16>
    %c40_171 = arith.constant 40 : index
    %c24_172 = arith.constant 24 : index
    %209 = vector.load %arg7[%c40_171, %c24_172] : memref<128x32xbf16, #tpu.memory_space<vmem>>, vector<8x8xbf16>
    tpu.vector_store %arg7[%c40_171, %c24_172], %208 {strides = array<i32>} : memref<128x32xbf16, #tpu.memory_space<vmem>>, vector<8x8xbf16>,
    %210 = vector.extract_strided_slice %197 {offsets = [96, 0], sizes = [8, 8], strides = [1, 1]} : vector<286x8xbf16> to vector<8x8xbf16>
    %c48_173 = arith.constant 48 : index
    %c24_174 = arith.constant 24 : index
    %211 = vector.load %arg7[%c48_173, %c24_174] : memref<128x32xbf16, #tpu.memory_space<vmem>>, vector<8x8xbf16>
    tpu.vector_store %arg7[%c48_173, %c24_174], %210 {strides = array<i32>} : memref<128x32xbf16, #tpu.memory_space<vmem>>, vector<8x8xbf16>,
    %212 = vector.extract_strided_slice %197 {offsets = [112, 0], sizes = [8, 8], strides = [1, 1]} : vector<286x8xbf16> to vector<8x8xbf16>
    %c56_175 = arith.constant 56 : index
    %c24_176 = arith.constant 24 : index
    %213 = vector.load %arg7[%c56_175, %c24_176] : memref<128x32xbf16, #tpu.memory_space<vmem>>, vector<8x8xbf16>
    tpu.vector_store %arg7[%c56_175, %c24_176], %212 {strides = array<i32>} : memref<128x32xbf16, #tpu.memory_space<vmem>>, vector<8x8xbf16>,
    %214 = vector.extract_strided_slice %197 {offsets = [160, 0], sizes = [8, 8], strides = [1, 1]} : vector<286x8xbf16> to vector<8x8xbf16>
    %c64_177 = arith.constant 64 : index
    %c24_178 = arith.constant 24 : index
    %215 = vector.load %arg7[%c64_177, %c24_178] : memref<128x32xbf16, #tpu.memory_space<vmem>>, vector<8x8xbf16>
    tpu.vector_store %arg7[%c64_177, %c24_178], %214 {strides = array<i32>} : memref<128x32xbf16, #tpu.memory_space<vmem>>, vector<8x8xbf16>,
    %216 = vector.extract_strided_slice %197 {offsets = [176, 0], sizes = [8, 8], strides = [1, 1]} : vector<286x8xbf16> to vector<8x8xbf16>
    %c72_179 = arith.constant 72 : index
    %c24_180 = arith.constant 24 : index
    %217 = vector.load %arg7[%c72_179, %c24_180] : memref<128x32xbf16, #tpu.memory_space<vmem>>, vector<8x8xbf16>
    tpu.vector_store %arg7[%c72_179, %c24_180], %216 {strides = array<i32>} : memref<128x32xbf16, #tpu.memory_space<vmem>>, vector<8x8xbf16>,
    %218 = vector.extract_strided_slice %197 {offsets = [192, 0], sizes = [8, 8], strides = [1, 1]} : vector<286x8xbf16> to vector<8x8xbf16>
    %c80_181 = arith.constant 80 : index
    %c24_182 = arith.constant 24 : index
    %219 = vector.load %arg7[%c80_181, %c24_182] : memref<128x32xbf16, #tpu.memory_space<vmem>>, vector<8x8xbf16>
    tpu.vector_store %arg7[%c80_181, %c24_182], %218 {strides = array<i32>} : memref<128x32xbf16, #tpu.memory_space<vmem>>, vector<8x8xbf16>,
    %220 = vector.extract_strided_slice %197 {offsets = [208, 0], sizes = [8, 8], strides = [1, 1]} : vector<286x8xbf16> to vector<8x8xbf16>
    %c88_183 = arith.constant 88 : index
    %c24_184 = arith.constant 24 : index
    %221 = vector.load %arg7[%c88_183, %c24_184] : memref<128x32xbf16, #tpu.memory_space<vmem>>, vector<8x8xbf16>
    tpu.vector_store %arg7[%c88_183, %c24_184], %220 {strides = array<i32>} : memref<128x32xbf16, #tpu.memory_space<vmem>>, vector<8x8xbf16>,
    %222 = vector.extract_strided_slice %197 {offsets = [224, 0], sizes = [8, 8], strides = [1, 1]} : vector<286x8xbf16> to vector<8x8xbf16>
    %c96_185 = arith.constant 96 : index
    %c24_186 = arith.constant 24 : index
    %223 = vector.load %arg7[%c96_185, %c24_186] : memref<128x32xbf16, #tpu.memory_space<vmem>>, vector<8x8xbf16>
    tpu.vector_store %arg7[%c96_185, %c24_186], %222 {strides = array<i32>} : memref<128x32xbf16, #tpu.memory_space<vmem>>, vector<8x8xbf16>,
    %224 = vector.extract_strided_slice %197 {offsets = [240, 0], sizes = [8, 8], strides = [1, 1]} : vector<286x8xbf16> to vector<8x8xbf16>
    %c104_187 = arith.constant 104 : index
    %c24_188 = arith.constant 24 : index
    %225 = vector.load %arg7[%c104_187, %c24_188] : memref<128x32xbf16, #tpu.memory_space<vmem>>, vector<8x8xbf16>
    tpu.vector_store %arg7[%c104_187, %c24_188], %224 {strides = array<i32>} : memref<128x32xbf16, #tpu.memory_space<vmem>>, vector<8x8xbf16>,
    %226 = vector.extract_strided_slice %197 {offsets = [256, 0], sizes = [8, 8], strides = [1, 1]} : vector<286x8xbf16> to vector<8x8xbf16>
    %c112_189 = arith.constant 112 : index
    %c24_190 = arith.constant 24 : index
    %227 = vector.load %arg7[%c112_189, %c24_190] : memref<128x32xbf16, #tpu.memory_space<vmem>>, vector<8x8xbf16>
    tpu.vector_store %arg7[%c112_189, %c24_190], %226 {strides = array<i32>} : memref<128x32xbf16, #tpu.memory_space<vmem>>, vector<8x8xbf16>,
    %228 = vector.extract_strided_slice %197 {offsets = [272, 0], sizes = [8, 8], strides = [1, 1]} : vector<286x8xbf16> to vector<8x8xbf16>
    %c120_191 = arith.constant 120 : index
    %c24_192 = arith.constant 24 : index
    %229 = vector.load %arg7[%c120_191, %c24_192] : memref<128x32xbf16, #tpu.memory_space<vmem>>, vector<8x8xbf16>
    tpu.vector_store %arg7[%c120_191, %c24_192], %228 {strides = array<i32>} : memref<128x32xbf16, #tpu.memory_space<vmem>>, vector<8x8xbf16>,
    return
  }
}

module attributes {stable_mosaic.version = 11 : i64} {
  func.func @_transition_kernel(%arg0: memref<32x32xbf16, #tpu.memory_space<vmem>>, %arg1: memref<32x16xbf16, #tpu.memory_space<vmem>>, %arg2: memref<1x16xf32, #tpu.memory_space<vmem>>, %arg3: memref<1x16xf32, #tpu.memory_space<vmem>>, %arg4: memref<8x16xbf16, #tpu.memory_space<vmem>>, %arg5: memref<16x16xf32, #tpu.memory_space<vmem>>) attributes {dimension_semantics = [], scalar_prefetch = 0 : i64, scratch_operands = 1 : i64, tpu.core_type = #tpu.core_type<tc>} {
    %c0 = arith.constant 0 : index
    %c0_0 = arith.constant 0 : index
    %0 = vector.load %arg0[%c0, %c0_0] : memref<32x32xbf16, #tpu.memory_space<vmem>>, vector<32x32xbf16>
    %c0_1 = arith.constant 0 : index
    %c0_2 = arith.constant 0 : index
    %1 = vector.load %arg1[%c0_1, %c0_2] : memref<32x16xbf16, #tpu.memory_space<vmem>>, vector<32x16xbf16>
    %cst = arith.constant dense<0.000000e+00> : vector<32x16xf32>
    %2 = tpu.matmul %0, %1, %cst {dimension_numbers = #tpu.dot_dimension_numbers<[1], [0], [0], [1], [0, 0, 1, 1], [], []>} : vector<32x32xbf16>, vector<32x16xbf16>, vector<32x16xf32> -> vector<32x16xf32>
    %c0_3 = arith.constant 0 : index
    %c0_4 = arith.constant 0 : index
    %3 = vector.load %arg2[%c0_3, %c0_4] : memref<1x16xf32, #tpu.memory_space<vmem>>, vector<1x16xf32>
    %4 = vector.broadcast %3 : vector<1x16xf32> to vector<32x16xf32>
    %5 = arith.mulf %2, %4 : vector<32x16xf32>
    %c0_5 = arith.constant 0 : index
    %c0_6 = arith.constant 0 : index
    %6 = vector.load %arg3[%c0_5, %c0_6] : memref<1x16xf32, #tpu.memory_space<vmem>>, vector<1x16xf32>
    %7 = vector.broadcast %6 : vector<1x16xf32> to vector<32x16xf32>
    %8 = arith.addf %5, %7 : vector<32x16xf32>
    %cst_7 = arith.constant 0.000000e+00 : f32
    %9 = vector.broadcast %cst_7 : f32 to vector<32x16xf32>
    %10 = arith.maximumf %8, %9 : vector<32x16xf32>
    %11 = vector.extract_strided_slice %10 {offsets = [0, 0], sizes = [4, 16], strides = [1, 1]} : vector<32x16xf32> to vector<4x16xf32>
    %12 = vector.extract_strided_slice %10 {offsets = [4, 0], sizes = [4, 16], strides = [1, 1]} : vector<32x16xf32> to vector<4x16xf32>
    %13 = arith.addf %11, %12 : vector<4x16xf32>
    %c0_8 = arith.constant 0 : index
    %c0_9 = arith.constant 0 : index
    %14 = vector.load %arg5[%c0_8, %c0_9] : memref<16x16xf32, #tpu.memory_space<vmem>>, vector<4x16xf32>
    tpu.vector_store %arg5[%c0_8, %c0_9], %13 {strides = array<i32>} : memref<16x16xf32, #tpu.memory_space<vmem>>, vector<4x16xf32>,
    %15 = vector.extract_strided_slice %10 {offsets = [8, 0], sizes = [4, 16], strides = [1, 1]} : vector<32x16xf32> to vector<4x16xf32>
    %16 = vector.extract_strided_slice %10 {offsets = [12, 0], sizes = [4, 16], strides = [1, 1]} : vector<32x16xf32> to vector<4x16xf32>
    %17 = arith.addf %15, %16 : vector<4x16xf32>
    %c4 = arith.constant 4 : index
    %c0_10 = arith.constant 0 : index
    %18 = vector.load %arg5[%c4, %c0_10] : memref<16x16xf32, #tpu.memory_space<vmem>>, vector<4x16xf32>
    tpu.vector_store %arg5[%c4, %c0_10], %17 {strides = array<i32>} : memref<16x16xf32, #tpu.memory_space<vmem>>, vector<4x16xf32>,
    %19 = vector.extract_strided_slice %10 {offsets = [16, 0], sizes = [4, 16], strides = [1, 1]} : vector<32x16xf32> to vector<4x16xf32>
    %20 = vector.extract_strided_slice %10 {offsets = [20, 0], sizes = [4, 16], strides = [1, 1]} : vector<32x16xf32> to vector<4x16xf32>
    %21 = arith.addf %19, %20 : vector<4x16xf32>
    %c8 = arith.constant 8 : index
    %c0_11 = arith.constant 0 : index
    %22 = vector.load %arg5[%c8, %c0_11] : memref<16x16xf32, #tpu.memory_space<vmem>>, vector<4x16xf32>
    tpu.vector_store %arg5[%c8, %c0_11], %21 {strides = array<i32>} : memref<16x16xf32, #tpu.memory_space<vmem>>, vector<4x16xf32>,
    %23 = vector.extract_strided_slice %10 {offsets = [24, 0], sizes = [4, 16], strides = [1, 1]} : vector<32x16xf32> to vector<4x16xf32>
    %24 = vector.extract_strided_slice %10 {offsets = [28, 0], sizes = [4, 16], strides = [1, 1]} : vector<32x16xf32> to vector<4x16xf32>
    %25 = arith.addf %23, %24 : vector<4x16xf32>
    %c12 = arith.constant 12 : index
    %c0_12 = arith.constant 0 : index
    %26 = vector.load %arg5[%c12, %c0_12] : memref<16x16xf32, #tpu.memory_space<vmem>>, vector<4x16xf32>
    tpu.vector_store %arg5[%c12, %c0_12], %25 {strides = array<i32>} : memref<16x16xf32, #tpu.memory_space<vmem>>, vector<4x16xf32>,
    %c0_13 = arith.constant 0 : index
    %c0_14 = arith.constant 0 : index
    %27 = tpu.strided_load %arg5[%c0_13, %c0_14] {strides = array<i32: 2, 1>} : memref<16x16xf32, #tpu.memory_space<vmem>>, vector<8x16xf32>
    %c1 = arith.constant 1 : index
    %c0_15 = arith.constant 0 : index
    %28 = tpu.strided_load %arg5[%c1, %c0_15] {strides = array<i32: 2, 1>} : memref<16x16xf32, #tpu.memory_space<vmem>>, vector<8x16xf32>
    %29 = arith.addf %27, %28 : vector<8x16xf32>
    %cst_16 = arith.constant 2.500000e-01 : f32
    %30 = vector.broadcast %cst_16 : f32 to vector<8x16xf32>
    %31 = arith.mulf %29, %30 : vector<8x16xf32>
    %32 = arith.truncf %31 : vector<8x16xf32> to vector<8x16xbf16>
    %c0_17 = arith.constant 0 : index
    %c0_18 = arith.constant 0 : index
    %33 = vector.load %arg4[%c0_17, %c0_18] : memref<8x16xbf16, #tpu.memory_space<vmem>>, vector<8x16xbf16>
    tpu.vector_store %arg4[%c0_17, %c0_18], %32 {strides = array<i32>} : memref<8x16xbf16, #tpu.memory_space<vmem>>, vector<8x16xbf16>,
    return
  }
}

module attributes {stable_mosaic.version = 11 : i64} {
  func.func @_dense_block_kernel(%arg0: memref<32x16xbf16, #tpu.memory_space<vmem>>, %arg1: memref<2x32x32xbf16, #tpu.memory_space<vmem>>, %arg2: memref<2x1x32xf32, #tpu.memory_space<vmem>>, %arg3: memref<2x1x32xf32, #tpu.memory_space<vmem>>, %arg4: memref<2x32x72xbf16, #tpu.memory_space<vmem>>, %arg5: memref<2x1x8xf32, #tpu.memory_space<vmem>>, %arg6: memref<2x1x8xf32, #tpu.memory_space<vmem>>, %arg7: memref<32x32xbf16, #tpu.memory_space<vmem>>, %arg8: memref<96x32xbf16, #tpu.memory_space<vmem>>, %arg9: memref<96x72xf32, #tpu.memory_space<vmem>>) attributes {dimension_semantics = [], scalar_prefetch = 0 : i64, scratch_operands = 2 : i64, tpu.core_type = #tpu.core_type<tc>} {
    %c0 = arith.constant 0 : index
    %c0_0 = arith.constant 0 : index
    %0 = vector.load %arg0[%c0, %c0_0] : memref<32x16xbf16, #tpu.memory_space<vmem>>, vector<32x16xbf16>
    %c0_1 = arith.constant 0 : index
    %c0_2 = arith.constant 0 : index
    %1 = vector.load %arg7[%c0_1, %c0_2] : memref<32x32xbf16, #tpu.memory_space<vmem>>, vector<32x16xbf16>
    tpu.vector_store %arg7[%c0_1, %c0_2], %0 {strides = array<i32>} : memref<32x32xbf16, #tpu.memory_space<vmem>>, vector<32x16xbf16>,
    %cst = arith.constant 0.000000e+00 : bf16
    %2 = vector.broadcast %cst : bf16 to vector<32x16xbf16>
    %c0_3 = arith.constant 0 : index
    %c16 = arith.constant 16 : index
    %3 = vector.load %arg7[%c0_3, %c16] : memref<32x32xbf16, #tpu.memory_space<vmem>>, vector<32x16xbf16>
    tpu.vector_store %arg7[%c0_3, %c16], %2 {strides = array<i32>} : memref<32x32xbf16, #tpu.memory_space<vmem>>, vector<32x16xbf16>,
    %cst_4 = arith.constant 0.000000e+00 : bf16
    %4 = vector.broadcast %cst_4 : bf16 to vector<96x32xbf16>
    %c0_5 = arith.constant 0 : index
    %c0_6 = arith.constant 0 : index
    %5 = vector.load %arg8[%c0_5, %c0_6] : memref<96x32xbf16, #tpu.memory_space<vmem>>, vector<96x32xbf16>
    tpu.vector_store %arg8[%c0_5, %c0_6], %4 {strides = array<i32>} : memref<96x32xbf16, #tpu.memory_space<vmem>>, vector<96x32xbf16>,
    %c0_7 = arith.constant 0 : index
    %c0_8 = arith.constant 0 : index
    %6 = vector.load %arg7[%c0_7, %c0_8] : memref<32x32xbf16, #tpu.memory_space<vmem>>, vector<32x32xbf16>
    %c0_9 = arith.constant 0 : index
    %c0_10 = arith.constant 0 : index
    %c0_11 = arith.constant 0 : index
    %7 = vector.load %arg1[%c0_9, %c0_10, %c0_11] : memref<2x32x32xbf16, #tpu.memory_space<vmem>>, vector<1x32x32xbf16>
    %8 = vector.shape_cast %7 : vector<1x32x32xbf16> to vector<32x32xbf16>
    %cst_12 = arith.constant dense<0.000000e+00> : vector<32x32xf32>
    %9 = tpu.matmul %6, %8, %cst_12 {dimension_numbers = #tpu.dot_dimension_numbers<[1], [0], [0], [1], [0, 0, 1, 1], [], []>} : vector<32x32xbf16>, vector<32x32xbf16>, vector<32x32xf32> -> vector<32x32xf32>
    %c0_13 = arith.constant 0 : index
    %c0_14 = arith.constant 0 : index
    %c0_15 = arith.constant 0 : index
    %10 = vector.load %arg2[%c0_13, %c0_14, %c0_15] : memref<2x1x32xf32, #tpu.memory_space<vmem>>, vector<1x1x32xf32>
    %11 = vector.shape_cast %10 : vector<1x1x32xf32> to vector<1x32xf32>
    %12 = vector.broadcast %11 : vector<1x32xf32> to vector<32x32xf32>
    %13 = arith.mulf %9, %12 : vector<32x32xf32>
    %c0_16 = arith.constant 0 : index
    %c0_17 = arith.constant 0 : index
    %c0_18 = arith.constant 0 : index
    %14 = vector.load %arg3[%c0_16, %c0_17, %c0_18] : memref<2x1x32xf32, #tpu.memory_space<vmem>>, vector<1x1x32xf32>
    %15 = vector.shape_cast %14 : vector<1x1x32xf32> to vector<1x32xf32>
    %16 = vector.broadcast %15 : vector<1x32xf32> to vector<32x32xf32>
    %17 = arith.addf %13, %16 : vector<32x32xf32>
    %cst_19 = arith.constant 0.000000e+00 : f32
    %18 = vector.broadcast %cst_19 : f32 to vector<32x32xf32>
    %19 = arith.maximumf %17, %18 : vector<32x32xf32>
    %20 = arith.truncf %19 : vector<32x32xf32> to vector<32x32xbf16>
    %21 = vector.extract_strided_slice %20 {offsets = [0, 0], sizes = [4, 32], strides = [1, 1]} : vector<32x32xbf16> to vector<4x32xbf16>
    %c9 = arith.constant 9 : index
    %c0_20 = arith.constant 0 : index
    %22 = vector.load %arg8[%c9, %c0_20] : memref<96x32xbf16, #tpu.memory_space<vmem>>, vector<4x32xbf16>
    tpu.vector_store %arg8[%c9, %c0_20], %21 {strides = array<i32>} : memref<96x32xbf16, #tpu.memory_space<vmem>>, vector<4x32xbf16>,
    %23 = vector.extract_strided_slice %20 {offsets = [4, 0], sizes = [4, 32], strides = [1, 1]} : vector<32x32xbf16> to vector<4x32xbf16>
    %c17 = arith.constant 17 : index
    %c0_21 = arith.constant 0 : index
    %24 = vector.load %arg8[%c17, %c0_21] : memref<96x32xbf16, #tpu.memory_space<vmem>>, vector<4x32xbf16>
    tpu.vector_store %arg8[%c17, %c0_21], %23 {strides = array<i32>} : memref<96x32xbf16, #tpu.memory_space<vmem>>, vector<4x32xbf16>,
    %25 = vector.extract_strided_slice %20 {offsets = [8, 0], sizes = [4, 32], strides = [1, 1]} : vector<32x32xbf16> to vector<4x32xbf16>
    %c25 = arith.constant 25 : index
    %c0_22 = arith.constant 0 : index
    %26 = vector.load %arg8[%c25, %c0_22] : memref<96x32xbf16, #tpu.memory_space<vmem>>, vector<4x32xbf16>
    tpu.vector_store %arg8[%c25, %c0_22], %25 {strides = array<i32>} : memref<96x32xbf16, #tpu.memory_space<vmem>>, vector<4x32xbf16>,
    %27 = vector.extract_strided_slice %20 {offsets = [12, 0], sizes = [4, 32], strides = [1, 1]} : vector<32x32xbf16> to vector<4x32xbf16>
    %c33 = arith.constant 33 : index
    %c0_23 = arith.constant 0 : index
    %28 = vector.load %arg8[%c33, %c0_23] : memref<96x32xbf16, #tpu.memory_space<vmem>>, vector<4x32xbf16>
    tpu.vector_store %arg8[%c33, %c0_23], %27 {strides = array<i32>} : memref<96x32xbf16, #tpu.memory_space<vmem>>, vector<4x32xbf16>,
    %29 = vector.extract_strided_slice %20 {offsets = [16, 0], sizes = [4, 32], strides = [1, 1]} : vector<32x32xbf16> to vector<4x32xbf16>
    %c57 = arith.constant 57 : index
    %c0_24 = arith.constant 0 : index
    %30 = vector.load %arg8[%c57, %c0_24] : memref<96x32xbf16, #tpu.memory_space<vmem>>, vector<4x32xbf16>
    tpu.vector_store %arg8[%c57, %c0_24], %29 {strides = array<i32>} : memref<96x32xbf16, #tpu.memory_space<vmem>>, vector<4x32xbf16>,
    %31 = vector.extract_strided_slice %20 {offsets = [20, 0], sizes = [4, 32], strides = [1, 1]} : vector<32x32xbf16> to vector<4x32xbf16>
    %c65 = arith.constant 65 : index
    %c0_25 = arith.constant 0 : index
    %32 = vector.load %arg8[%c65, %c0_25] : memref<96x32xbf16, #tpu.memory_space<vmem>>, vector<4x32xbf16>
    tpu.vector_store %arg8[%c65, %c0_25], %31 {strides = array<i32>} : memref<96x32xbf16, #tpu.memory_space<vmem>>, vector<4x32xbf16>,
    %33 = vector.extract_strided_slice %20 {offsets = [24, 0], sizes = [4, 32], strides = [1, 1]} : vector<32x32xbf16> to vector<4x32xbf16>
    %c73 = arith.constant 73 : index
    %c0_26 = arith.constant 0 : index
    %34 = vector.load %arg8[%c73, %c0_26] : memref<96x32xbf16, #tpu.memory_space<vmem>>, vector<4x32xbf16>
    tpu.vector_store %arg8[%c73, %c0_26], %33 {strides = array<i32>} : memref<96x32xbf16, #tpu.memory_space<vmem>>, vector<4x32xbf16>,
    %35 = vector.extract_strided_slice %20 {offsets = [28, 0], sizes = [4, 32], strides = [1, 1]} : vector<32x32xbf16> to vector<4x32xbf16>
    %c81 = arith.constant 81 : index
    %c0_27 = arith.constant 0 : index
    %36 = vector.load %arg8[%c81, %c0_27] : memref<96x32xbf16, #tpu.memory_space<vmem>>, vector<4x32xbf16>
    tpu.vector_store %arg8[%c81, %c0_27], %35 {strides = array<i32>} : memref<96x32xbf16, #tpu.memory_space<vmem>>, vector<4x32xbf16>,
    %c0_28 = arith.constant 0 : index
    %c0_29 = arith.constant 0 : index
    %37 = vector.load %arg8[%c0_28, %c0_29] : memref<96x32xbf16, #tpu.memory_space<vmem>>, vector<96x32xbf16>
    %c0_30 = arith.constant 0 : index
    %c0_31 = arith.constant 0 : index
    %c0_32 = arith.constant 0 : index
    %38 = vector.load %arg4[%c0_30, %c0_31, %c0_32] : memref<2x32x72xbf16, #tpu.memory_space<vmem>>, vector<1x32x72xbf16>
    %39 = vector.shape_cast %38 : vector<1x32x72xbf16> to vector<32x72xbf16>
    %cst_33 = arith.constant dense<0.000000e+00> : vector<96x72xf32>
    %40 = tpu.matmul %37, %39, %cst_33 {dimension_numbers = #tpu.dot_dimension_numbers<[1], [0], [0], [1], [0, 0, 1, 1], [], []>} : vector<96x32xbf16>, vector<32x72xbf16>, vector<96x72xf32> -> vector<96x72xf32>
    %c0_34 = arith.constant 0 : index
    %c0_35 = arith.constant 0 : index
    %41 = vector.load %arg9[%c0_34, %c0_35] : memref<96x72xf32, #tpu.memory_space<vmem>>, vector<96x72xf32>
    tpu.vector_store %arg9[%c0_34, %c0_35], %40 {strides = array<i32>} : memref<96x72xf32, #tpu.memory_space<vmem>>, vector<96x72xf32>,
    %c0_36 = arith.constant 0 : index
    %c0_37 = arith.constant 0 : index
    %42 = vector.load %arg9[%c0_36, %c0_37] : memref<96x72xf32, #tpu.memory_space<vmem>>, vector<78x8xf32>
    %c1 = arith.constant 1 : index
    %c8 = arith.constant 8 : index
    %43 = vector.load %arg9[%c1, %c8] : memref<96x72xf32, #tpu.memory_space<vmem>>, vector<78x8xf32>
    %44 = arith.addf %42, %43 : vector<78x8xf32>
    %c2 = arith.constant 2 : index
    %c16_38 = arith.constant 16 : index
    %45 = vector.load %arg9[%c2, %c16_38] : memref<96x72xf32, #tpu.memory_space<vmem>>, vector<78x8xf32>
    %46 = arith.addf %44, %45 : vector<78x8xf32>
    %c8_39 = arith.constant 8 : index
    %c24 = arith.constant 24 : index
    %47 = vector.load %arg9[%c8_39, %c24] : memref<96x72xf32, #tpu.memory_space<vmem>>, vector<78x8xf32>
    %48 = arith.addf %46, %47 : vector<78x8xf32>
    %c9_40 = arith.constant 9 : index
    %c32 = arith.constant 32 : index
    %49 = vector.load %arg9[%c9_40, %c32] : memref<96x72xf32, #tpu.memory_space<vmem>>, vector<78x8xf32>
    %50 = arith.addf %48, %49 : vector<78x8xf32>
    %c10 = arith.constant 10 : index
    %c40 = arith.constant 40 : index
    %51 = vector.load %arg9[%c10, %c40] : memref<96x72xf32, #tpu.memory_space<vmem>>, vector<78x8xf32>
    %52 = arith.addf %50, %51 : vector<78x8xf32>
    %c16_41 = arith.constant 16 : index
    %c48 = arith.constant 48 : index
    %53 = vector.load %arg9[%c16_41, %c48] : memref<96x72xf32, #tpu.memory_space<vmem>>, vector<78x8xf32>
    %54 = arith.addf %52, %53 : vector<78x8xf32>
    %c17_42 = arith.constant 17 : index
    %c56 = arith.constant 56 : index
    %55 = vector.load %arg9[%c17_42, %c56] : memref<96x72xf32, #tpu.memory_space<vmem>>, vector<78x8xf32>
    %56 = arith.addf %54, %55 : vector<78x8xf32>
    %c18 = arith.constant 18 : index
    %c64 = arith.constant 64 : index
    %57 = vector.load %arg9[%c18, %c64] : memref<96x72xf32, #tpu.memory_space<vmem>>, vector<78x8xf32>
    %58 = arith.addf %56, %57 : vector<78x8xf32>
    %c0_43 = arith.constant 0 : index
    %c0_44 = arith.constant 0 : index
    %c0_45 = arith.constant 0 : index
    %59 = vector.load %arg5[%c0_43, %c0_44, %c0_45] : memref<2x1x8xf32, #tpu.memory_space<vmem>>, vector<1x1x8xf32>
    %60 = vector.shape_cast %59 : vector<1x1x8xf32> to vector<1x8xf32>
    %61 = vector.broadcast %60 : vector<1x8xf32> to vector<78x8xf32>
    %62 = arith.mulf %58, %61 : vector<78x8xf32>
    %c0_46 = arith.constant 0 : index
    %c0_47 = arith.constant 0 : index
    %c0_48 = arith.constant 0 : index
    %63 = vector.load %arg6[%c0_46, %c0_47, %c0_48] : memref<2x1x8xf32, #tpu.memory_space<vmem>>, vector<1x1x8xf32>
    %64 = vector.shape_cast %63 : vector<1x1x8xf32> to vector<1x8xf32>
    %65 = vector.broadcast %64 : vector<1x8xf32> to vector<78x8xf32>
    %66 = arith.addf %62, %65 : vector<78x8xf32>
    %cst_49 = arith.constant 0.000000e+00 : f32
    %67 = vector.broadcast %cst_49 : f32 to vector<78x8xf32>
    %68 = arith.maximumf %66, %67 : vector<78x8xf32>
    %69 = arith.truncf %68 : vector<78x8xf32> to vector<78x8xbf16>
    %70 = vector.extract_strided_slice %69 {offsets = [0, 0], sizes = [4, 8], strides = [1, 1]} : vector<78x8xbf16> to vector<4x8xbf16>
    %c0_50 = arith.constant 0 : index
    %c16_51 = arith.constant 16 : index
    %71 = vector.load %arg7[%c0_50, %c16_51] : memref<32x32xbf16, #tpu.memory_space<vmem>>, vector<4x8xbf16>
    tpu.vector_store %arg7[%c0_50, %c16_51], %70 {strides = array<i32>} : memref<32x32xbf16, #tpu.memory_space<vmem>>, vector<4x8xbf16>,
    %72 = vector.extract_strided_slice %69 {offsets = [8, 0], sizes = [4, 8], strides = [1, 1]} : vector<78x8xbf16> to vector<4x8xbf16>
    %c4 = arith.constant 4 : index
    %c16_52 = arith.constant 16 : index
    %73 = vector.load %arg7[%c4, %c16_52] : memref<32x32xbf16, #tpu.memory_space<vmem>>, vector<4x8xbf16>
    tpu.vector_store %arg7[%c4, %c16_52], %72 {strides = array<i32>} : memref<32x32xbf16, #tpu.memory_space<vmem>>, vector<4x8xbf16>,
    %74 = vector.extract_strided_slice %69 {offsets = [16, 0], sizes = [4, 8], strides = [1, 1]} : vector<78x8xbf16> to vector<4x8xbf16>
    %c8_53 = arith.constant 8 : index
    %c16_54 = arith.constant 16 : index
    %75 = vector.load %arg7[%c8_53, %c16_54] : memref<32x32xbf16, #tpu.memory_space<vmem>>, vector<4x8xbf16>
    tpu.vector_store %arg7[%c8_53, %c16_54], %74 {strides = array<i32>} : memref<32x32xbf16, #tpu.memory_space<vmem>>, vector<4x8xbf16>,
    %76 = vector.extract_strided_slice %69 {offsets = [24, 0], sizes = [4, 8], strides = [1, 1]} : vector<78x8xbf16> to vector<4x8xbf16>
    %c12 = arith.constant 12 : index
    %c16_55 = arith.constant 16 : index
    %77 = vector.load %arg7[%c12, %c16_55] : memref<32x32xbf16, #tpu.memory_space<vmem>>, vector<4x8xbf16>
    tpu.vector_store %arg7[%c12, %c16_55], %76 {strides = array<i32>} : memref<32x32xbf16, #tpu.memory_space<vmem>>, vector<4x8xbf16>,
    %78 = vector.extract_strided_slice %69 {offsets = [48, 0], sizes = [4, 8], strides = [1, 1]} : vector<78x8xbf16> to vector<4x8xbf16>
    %c16_56 = arith.constant 16 : index
    %c16_57 = arith.constant 16 : index
    %79 = vector.load %arg7[%c16_56, %c16_57] : memref<32x32xbf16, #tpu.memory_space<vmem>>, vector<4x8xbf16>
    tpu.vector_store %arg7[%c16_56, %c16_57], %78 {strides = array<i32>} : memref<32x32xbf16, #tpu.memory_space<vmem>>, vector<4x8xbf16>,
    %80 = vector.extract_strided_slice %69 {offsets = [56, 0], sizes = [4, 8], strides = [1, 1]} : vector<78x8xbf16> to vector<4x8xbf16>
    %c20 = arith.constant 20 : index
    %c16_58 = arith.constant 16 : index
    %81 = vector.load %arg7[%c20, %c16_58] : memref<32x32xbf16, #tpu.memory_space<vmem>>, vector<4x8xbf16>
    tpu.vector_store %arg7[%c20, %c16_58], %80 {strides = array<i32>} : memref<32x32xbf16, #tpu.memory_space<vmem>>, vector<4x8xbf16>,
    %82 = vector.extract_strided_slice %69 {offsets = [64, 0], sizes = [4, 8], strides = [1, 1]} : vector<78x8xbf16> to vector<4x8xbf16>
    %c24_59 = arith.constant 24 : index
    %c16_60 = arith.constant 16 : index
    %83 = vector.load %arg7[%c24_59, %c16_60] : memref<32x32xbf16, #tpu.memory_space<vmem>>, vector<4x8xbf16>
    tpu.vector_store %arg7[%c24_59, %c16_60], %82 {strides = array<i32>} : memref<32x32xbf16, #tpu.memory_space<vmem>>, vector<4x8xbf16>,
    %84 = vector.extract_strided_slice %69 {offsets = [72, 0], sizes = [4, 8], strides = [1, 1]} : vector<78x8xbf16> to vector<4x8xbf16>
    %c28 = arith.constant 28 : index
    %c16_61 = arith.constant 16 : index
    %85 = vector.load %arg7[%c28, %c16_61] : memref<32x32xbf16, #tpu.memory_space<vmem>>, vector<4x8xbf16>
    tpu.vector_store %arg7[%c28, %c16_61], %84 {strides = array<i32>} : memref<32x32xbf16, #tpu.memory_space<vmem>>, vector<4x8xbf16>,
    %c0_62 = arith.constant 0 : index
    %c0_63 = arith.constant 0 : index
    %86 = vector.load %arg7[%c0_62, %c0_63] : memref<32x32xbf16, #tpu.memory_space<vmem>>, vector<32x32xbf16>
    %c1_64 = arith.constant 1 : index
    %c0_65 = arith.constant 0 : index
    %c0_66 = arith.constant 0 : index
    %87 = vector.load %arg1[%c1_64, %c0_65, %c0_66] : memref<2x32x32xbf16, #tpu.memory_space<vmem>>, vector<1x32x32xbf16>
    %88 = vector.shape_cast %87 : vector<1x32x32xbf16> to vector<32x32xbf16>
    %cst_67 = arith.constant dense<0.000000e+00> : vector<32x32xf32>
    %89 = tpu.matmul %86, %88, %cst_67 {dimension_numbers = #tpu.dot_dimension_numbers<[1], [0], [0], [1], [0, 0, 1, 1], [], []>} : vector<32x32xbf16>, vector<32x32xbf16>, vector<32x32xf32> -> vector<32x32xf32>
    %c1_68 = arith.constant 1 : index
    %c0_69 = arith.constant 0 : index
    %c0_70 = arith.constant 0 : index
    %90 = vector.load %arg2[%c1_68, %c0_69, %c0_70] : memref<2x1x32xf32, #tpu.memory_space<vmem>>, vector<1x1x32xf32>
    %91 = vector.shape_cast %90 : vector<1x1x32xf32> to vector<1x32xf32>
    %92 = vector.broadcast %91 : vector<1x32xf32> to vector<32x32xf32>
    %93 = arith.mulf %89, %92 : vector<32x32xf32>
    %c1_71 = arith.constant 1 : index
    %c0_72 = arith.constant 0 : index
    %c0_73 = arith.constant 0 : index
    %94 = vector.load %arg3[%c1_71, %c0_72, %c0_73] : memref<2x1x32xf32, #tpu.memory_space<vmem>>, vector<1x1x32xf32>
    %95 = vector.shape_cast %94 : vector<1x1x32xf32> to vector<1x32xf32>
    %96 = vector.broadcast %95 : vector<1x32xf32> to vector<32x32xf32>
    %97 = arith.addf %93, %96 : vector<32x32xf32>
    %cst_74 = arith.constant 0.000000e+00 : f32
    %98 = vector.broadcast %cst_74 : f32 to vector<32x32xf32>
    %99 = arith.maximumf %97, %98 : vector<32x32xf32>
    %100 = arith.truncf %99 : vector<32x32xf32> to vector<32x32xbf16>
    %101 = vector.extract_strided_slice %100 {offsets = [0, 0], sizes = [4, 32], strides = [1, 1]} : vector<32x32xbf16> to vector<4x32xbf16>
    %c9_75 = arith.constant 9 : index
    %c0_76 = arith.constant 0 : index
    %102 = vector.load %arg8[%c9_75, %c0_76] : memref<96x32xbf16, #tpu.memory_space<vmem>>, vector<4x32xbf16>
    tpu.vector_store %arg8[%c9_75, %c0_76], %101 {strides = array<i32>} : memref<96x32xbf16, #tpu.memory_space<vmem>>, vector<4x32xbf16>,
    %103 = vector.extract_strided_slice %100 {offsets = [4, 0], sizes = [4, 32], strides = [1, 1]} : vector<32x32xbf16> to vector<4x32xbf16>
    %c17_77 = arith.constant 17 : index
    %c0_78 = arith.constant 0 : index
    %104 = vector.load %arg8[%c17_77, %c0_78] : memref<96x32xbf16, #tpu.memory_space<vmem>>, vector<4x32xbf16>
    tpu.vector_store %arg8[%c17_77, %c0_78], %103 {strides = array<i32>} : memref<96x32xbf16, #tpu.memory_space<vmem>>, vector<4x32xbf16>,
    %105 = vector.extract_strided_slice %100 {offsets = [8, 0], sizes = [4, 32], strides = [1, 1]} : vector<32x32xbf16> to vector<4x32xbf16>
    %c25_79 = arith.constant 25 : index
    %c0_80 = arith.constant 0 : index
    %106 = vector.load %arg8[%c25_79, %c0_80] : memref<96x32xbf16, #tpu.memory_space<vmem>>, vector<4x32xbf16>
    tpu.vector_store %arg8[%c25_79, %c0_80], %105 {strides = array<i32>} : memref<96x32xbf16, #tpu.memory_space<vmem>>, vector<4x32xbf16>,
    %107 = vector.extract_strided_slice %100 {offsets = [12, 0], sizes = [4, 32], strides = [1, 1]} : vector<32x32xbf16> to vector<4x32xbf16>
    %c33_81 = arith.constant 33 : index
    %c0_82 = arith.constant 0 : index
    %108 = vector.load %arg8[%c33_81, %c0_82] : memref<96x32xbf16, #tpu.memory_space<vmem>>, vector<4x32xbf16>
    tpu.vector_store %arg8[%c33_81, %c0_82], %107 {strides = array<i32>} : memref<96x32xbf16, #tpu.memory_space<vmem>>, vector<4x32xbf16>,
    %109 = vector.extract_strided_slice %100 {offsets = [16, 0], sizes = [4, 32], strides = [1, 1]} : vector<32x32xbf16> to vector<4x32xbf16>
    %c57_83 = arith.constant 57 : index
    %c0_84 = arith.constant 0 : index
    %110 = vector.load %arg8[%c57_83, %c0_84] : memref<96x32xbf16, #tpu.memory_space<vmem>>, vector<4x32xbf16>
    tpu.vector_store %arg8[%c57_83, %c0_84], %109 {strides = array<i32>} : memref<96x32xbf16, #tpu.memory_space<vmem>>, vector<4x32xbf16>,
    %111 = vector.extract_strided_slice %100 {offsets = [20, 0], sizes = [4, 32], strides = [1, 1]} : vector<32x32xbf16> to vector<4x32xbf16>
    %c65_85 = arith.constant 65 : index
    %c0_86 = arith.constant 0 : index
    %112 = vector.load %arg8[%c65_85, %c0_86] : memref<96x32xbf16, #tpu.memory_space<vmem>>, vector<4x32xbf16>
    tpu.vector_store %arg8[%c65_85, %c0_86], %111 {strides = array<i32>} : memref<96x32xbf16, #tpu.memory_space<vmem>>, vector<4x32xbf16>,
    %113 = vector.extract_strided_slice %100 {offsets = [24, 0], sizes = [4, 32], strides = [1, 1]} : vector<32x32xbf16> to vector<4x32xbf16>
    %c73_87 = arith.constant 73 : index
    %c0_88 = arith.constant 0 : index
    %114 = vector.load %arg8[%c73_87, %c0_88] : memref<96x32xbf16, #tpu.memory_space<vmem>>, vector<4x32xbf16>
    tpu.vector_store %arg8[%c73_87, %c0_88], %113 {strides = array<i32>} : memref<96x32xbf16, #tpu.memory_space<vmem>>, vector<4x32xbf16>,
    %115 = vector.extract_strided_slice %100 {offsets = [28, 0], sizes = [4, 32], strides = [1, 1]} : vector<32x32xbf16> to vector<4x32xbf16>
    %c81_89 = arith.constant 81 : index
    %c0_90 = arith.constant 0 : index
    %116 = vector.load %arg8[%c81_89, %c0_90] : memref<96x32xbf16, #tpu.memory_space<vmem>>, vector<4x32xbf16>
    tpu.vector_store %arg8[%c81_89, %c0_90], %115 {strides = array<i32>} : memref<96x32xbf16, #tpu.memory_space<vmem>>, vector<4x32xbf16>,
    %c0_91 = arith.constant 0 : index
    %c0_92 = arith.constant 0 : index
    %117 = vector.load %arg8[%c0_91, %c0_92] : memref<96x32xbf16, #tpu.memory_space<vmem>>, vector<96x32xbf16>
    %c1_93 = arith.constant 1 : index
    %c0_94 = arith.constant 0 : index
    %c0_95 = arith.constant 0 : index
    %118 = vector.load %arg4[%c1_93, %c0_94, %c0_95] : memref<2x32x72xbf16, #tpu.memory_space<vmem>>, vector<1x32x72xbf16>
    %119 = vector.shape_cast %118 : vector<1x32x72xbf16> to vector<32x72xbf16>
    %cst_96 = arith.constant dense<0.000000e+00> : vector<96x72xf32>
    %120 = tpu.matmul %117, %119, %cst_96 {dimension_numbers = #tpu.dot_dimension_numbers<[1], [0], [0], [1], [0, 0, 1, 1], [], []>} : vector<96x32xbf16>, vector<32x72xbf16>, vector<96x72xf32> -> vector<96x72xf32>
    %c0_97 = arith.constant 0 : index
    %c0_98 = arith.constant 0 : index
    %121 = vector.load %arg9[%c0_97, %c0_98] : memref<96x72xf32, #tpu.memory_space<vmem>>, vector<96x72xf32>
    tpu.vector_store %arg9[%c0_97, %c0_98], %120 {strides = array<i32>} : memref<96x72xf32, #tpu.memory_space<vmem>>, vector<96x72xf32>,
    %c0_99 = arith.constant 0 : index
    %c0_100 = arith.constant 0 : index
    %122 = vector.load %arg9[%c0_99, %c0_100] : memref<96x72xf32, #tpu.memory_space<vmem>>, vector<78x8xf32>
    %c1_101 = arith.constant 1 : index
    %c8_102 = arith.constant 8 : index
    %123 = vector.load %arg9[%c1_101, %c8_102] : memref<96x72xf32, #tpu.memory_space<vmem>>, vector<78x8xf32>
    %124 = arith.addf %122, %123 : vector<78x8xf32>
    %c2_103 = arith.constant 2 : index
    %c16_104 = arith.constant 16 : index
    %125 = vector.load %arg9[%c2_103, %c16_104] : memref<96x72xf32, #tpu.memory_space<vmem>>, vector<78x8xf32>
    %126 = arith.addf %124, %125 : vector<78x8xf32>
    %c8_105 = arith.constant 8 : index
    %c24_106 = arith.constant 24 : index
    %127 = vector.load %arg9[%c8_105, %c24_106] : memref<96x72xf32, #tpu.memory_space<vmem>>, vector<78x8xf32>
    %128 = arith.addf %126, %127 : vector<78x8xf32>
    %c9_107 = arith.constant 9 : index
    %c32_108 = arith.constant 32 : index
    %129 = vector.load %arg9[%c9_107, %c32_108] : memref<96x72xf32, #tpu.memory_space<vmem>>, vector<78x8xf32>
    %130 = arith.addf %128, %129 : vector<78x8xf32>
    %c10_109 = arith.constant 10 : index
    %c40_110 = arith.constant 40 : index
    %131 = vector.load %arg9[%c10_109, %c40_110] : memref<96x72xf32, #tpu.memory_space<vmem>>, vector<78x8xf32>
    %132 = arith.addf %130, %131 : vector<78x8xf32>
    %c16_111 = arith.constant 16 : index
    %c48_112 = arith.constant 48 : index
    %133 = vector.load %arg9[%c16_111, %c48_112] : memref<96x72xf32, #tpu.memory_space<vmem>>, vector<78x8xf32>
    %134 = arith.addf %132, %133 : vector<78x8xf32>
    %c17_113 = arith.constant 17 : index
    %c56_114 = arith.constant 56 : index
    %135 = vector.load %arg9[%c17_113, %c56_114] : memref<96x72xf32, #tpu.memory_space<vmem>>, vector<78x8xf32>
    %136 = arith.addf %134, %135 : vector<78x8xf32>
    %c18_115 = arith.constant 18 : index
    %c64_116 = arith.constant 64 : index
    %137 = vector.load %arg9[%c18_115, %c64_116] : memref<96x72xf32, #tpu.memory_space<vmem>>, vector<78x8xf32>
    %138 = arith.addf %136, %137 : vector<78x8xf32>
    %c1_117 = arith.constant 1 : index
    %c0_118 = arith.constant 0 : index
    %c0_119 = arith.constant 0 : index
    %139 = vector.load %arg5[%c1_117, %c0_118, %c0_119] : memref<2x1x8xf32, #tpu.memory_space<vmem>>, vector<1x1x8xf32>
    %140 = vector.shape_cast %139 : vector<1x1x8xf32> to vector<1x8xf32>
    %141 = vector.broadcast %140 : vector<1x8xf32> to vector<78x8xf32>
    %142 = arith.mulf %138, %141 : vector<78x8xf32>
    %c1_120 = arith.constant 1 : index
    %c0_121 = arith.constant 0 : index
    %c0_122 = arith.constant 0 : index
    %143 = vector.load %arg6[%c1_120, %c0_121, %c0_122] : memref<2x1x8xf32, #tpu.memory_space<vmem>>, vector<1x1x8xf32>
    %144 = vector.shape_cast %143 : vector<1x1x8xf32> to vector<1x8xf32>
    %145 = vector.broadcast %144 : vector<1x8xf32> to vector<78x8xf32>
    %146 = arith.addf %142, %145 : vector<78x8xf32>
    %cst_123 = arith.constant 0.000000e+00 : f32
    %147 = vector.broadcast %cst_123 : f32 to vector<78x8xf32>
    %148 = arith.maximumf %146, %147 : vector<78x8xf32>
    %149 = arith.truncf %148 : vector<78x8xf32> to vector<78x8xbf16>
    %150 = vector.extract_strided_slice %149 {offsets = [0, 0], sizes = [4, 8], strides = [1, 1]} : vector<78x8xbf16> to vector<4x8xbf16>
    %c0_124 = arith.constant 0 : index
    %c24_125 = arith.constant 24 : index
    %151 = vector.load %arg7[%c0_124, %c24_125] : memref<32x32xbf16, #tpu.memory_space<vmem>>, vector<4x8xbf16>
    tpu.vector_store %arg7[%c0_124, %c24_125], %150 {strides = array<i32>} : memref<32x32xbf16, #tpu.memory_space<vmem>>, vector<4x8xbf16>,
    %152 = vector.extract_strided_slice %149 {offsets = [8, 0], sizes = [4, 8], strides = [1, 1]} : vector<78x8xbf16> to vector<4x8xbf16>
    %c4_126 = arith.constant 4 : index
    %c24_127 = arith.constant 24 : index
    %153 = vector.load %arg7[%c4_126, %c24_127] : memref<32x32xbf16, #tpu.memory_space<vmem>>, vector<4x8xbf16>
    tpu.vector_store %arg7[%c4_126, %c24_127], %152 {strides = array<i32>} : memref<32x32xbf16, #tpu.memory_space<vmem>>, vector<4x8xbf16>,
    %154 = vector.extract_strided_slice %149 {offsets = [16, 0], sizes = [4, 8], strides = [1, 1]} : vector<78x8xbf16> to vector<4x8xbf16>
    %c8_128 = arith.constant 8 : index
    %c24_129 = arith.constant 24 : index
    %155 = vector.load %arg7[%c8_128, %c24_129] : memref<32x32xbf16, #tpu.memory_space<vmem>>, vector<4x8xbf16>
    tpu.vector_store %arg7[%c8_128, %c24_129], %154 {strides = array<i32>} : memref<32x32xbf16, #tpu.memory_space<vmem>>, vector<4x8xbf16>,
    %156 = vector.extract_strided_slice %149 {offsets = [24, 0], sizes = [4, 8], strides = [1, 1]} : vector<78x8xbf16> to vector<4x8xbf16>
    %c12_130 = arith.constant 12 : index
    %c24_131 = arith.constant 24 : index
    %157 = vector.load %arg7[%c12_130, %c24_131] : memref<32x32xbf16, #tpu.memory_space<vmem>>, vector<4x8xbf16>
    tpu.vector_store %arg7[%c12_130, %c24_131], %156 {strides = array<i32>} : memref<32x32xbf16, #tpu.memory_space<vmem>>, vector<4x8xbf16>,
    %158 = vector.extract_strided_slice %149 {offsets = [48, 0], sizes = [4, 8], strides = [1, 1]} : vector<78x8xbf16> to vector<4x8xbf16>
    %c16_132 = arith.constant 16 : index
    %c24_133 = arith.constant 24 : index
    %159 = vector.load %arg7[%c16_132, %c24_133] : memref<32x32xbf16, #tpu.memory_space<vmem>>, vector<4x8xbf16>
    tpu.vector_store %arg7[%c16_132, %c24_133], %158 {strides = array<i32>} : memref<32x32xbf16, #tpu.memory_space<vmem>>, vector<4x8xbf16>,
    %160 = vector.extract_strided_slice %149 {offsets = [56, 0], sizes = [4, 8], strides = [1, 1]} : vector<78x8xbf16> to vector<4x8xbf16>
    %c20_134 = arith.constant 20 : index
    %c24_135 = arith.constant 24 : index
    %161 = vector.load %arg7[%c20_134, %c24_135] : memref<32x32xbf16, #tpu.memory_space<vmem>>, vector<4x8xbf16>
    tpu.vector_store %arg7[%c20_134, %c24_135], %160 {strides = array<i32>} : memref<32x32xbf16, #tpu.memory_space<vmem>>, vector<4x8xbf16>,
    %162 = vector.extract_strided_slice %149 {offsets = [64, 0], sizes = [4, 8], strides = [1, 1]} : vector<78x8xbf16> to vector<4x8xbf16>
    %c24_136 = arith.constant 24 : index
    %c24_137 = arith.constant 24 : index
    %163 = vector.load %arg7[%c24_136, %c24_137] : memref<32x32xbf16, #tpu.memory_space<vmem>>, vector<4x8xbf16>
    tpu.vector_store %arg7[%c24_136, %c24_137], %162 {strides = array<i32>} : memref<32x32xbf16, #tpu.memory_space<vmem>>, vector<4x8xbf16>,
    %164 = vector.extract_strided_slice %149 {offsets = [72, 0], sizes = [4, 8], strides = [1, 1]} : vector<78x8xbf16> to vector<4x8xbf16>
    %c28_138 = arith.constant 28 : index
    %c24_139 = arith.constant 24 : index
    %165 = vector.load %arg7[%c28_138, %c24_139] : memref<32x32xbf16, #tpu.memory_space<vmem>>, vector<4x8xbf16>
    tpu.vector_store %arg7[%c28_138, %c24_139], %164 {strides = array<i32>} : memref<32x32xbf16, #tpu.memory_space<vmem>>, vector<4x8xbf16>,
    return
  }
}

module attributes {stable_mosaic.version = 11 : i64} {
  func.func @_dense_block_kernel(%arg0: memref<8x16xbf16, #tpu.memory_space<vmem>>, %arg1: memref<2x32x32xbf16, #tpu.memory_space<vmem>>, %arg2: memref<2x1x32xf32, #tpu.memory_space<vmem>>, %arg3: memref<2x1x32xf32, #tpu.memory_space<vmem>>, %arg4: memref<2x32x72xbf16, #tpu.memory_space<vmem>>, %arg5: memref<2x1x8xf32, #tpu.memory_space<vmem>>, %arg6: memref<2x1x8xf32, #tpu.memory_space<vmem>>, %arg7: memref<8x32xbf16, #tpu.memory_space<vmem>>, %arg8: memref<64x32xbf16, #tpu.memory_space<vmem>>, %arg9: memref<64x72xf32, #tpu.memory_space<vmem>>) attributes {dimension_semantics = [], scalar_prefetch = 0 : i64, scratch_operands = 2 : i64, tpu.core_type = #tpu.core_type<tc>} {
    %c0 = arith.constant 0 : index
    %c0_0 = arith.constant 0 : index
    %0 = vector.load %arg0[%c0, %c0_0] : memref<8x16xbf16, #tpu.memory_space<vmem>>, vector<8x16xbf16>
    %c0_1 = arith.constant 0 : index
    %c0_2 = arith.constant 0 : index
    %1 = vector.load %arg7[%c0_1, %c0_2] : memref<8x32xbf16, #tpu.memory_space<vmem>>, vector<8x16xbf16>
    tpu.vector_store %arg7[%c0_1, %c0_2], %0 {strides = array<i32>} : memref<8x32xbf16, #tpu.memory_space<vmem>>, vector<8x16xbf16>,
    %cst = arith.constant 0.000000e+00 : bf16
    %2 = vector.broadcast %cst : bf16 to vector<8x16xbf16>
    %c0_3 = arith.constant 0 : index
    %c16 = arith.constant 16 : index
    %3 = vector.load %arg7[%c0_3, %c16] : memref<8x32xbf16, #tpu.memory_space<vmem>>, vector<8x16xbf16>
    tpu.vector_store %arg7[%c0_3, %c16], %2 {strides = array<i32>} : memref<8x32xbf16, #tpu.memory_space<vmem>>, vector<8x16xbf16>,
    %cst_4 = arith.constant 0.000000e+00 : bf16
    %4 = vector.broadcast %cst_4 : bf16 to vector<64x32xbf16>
    %c0_5 = arith.constant 0 : index
    %c0_6 = arith.constant 0 : index
    %5 = vector.load %arg8[%c0_5, %c0_6] : memref<64x32xbf16, #tpu.memory_space<vmem>>, vector<64x32xbf16>
    tpu.vector_store %arg8[%c0_5, %c0_6], %4 {strides = array<i32>} : memref<64x32xbf16, #tpu.memory_space<vmem>>, vector<64x32xbf16>,
    %c0_7 = arith.constant 0 : index
    %c0_8 = arith.constant 0 : index
    %6 = vector.load %arg7[%c0_7, %c0_8] : memref<8x32xbf16, #tpu.memory_space<vmem>>, vector<8x32xbf16>
    %c0_9 = arith.constant 0 : index
    %c0_10 = arith.constant 0 : index
    %c0_11 = arith.constant 0 : index
    %7 = vector.load %arg1[%c0_9, %c0_10, %c0_11] : memref<2x32x32xbf16, #tpu.memory_space<vmem>>, vector<1x32x32xbf16>
    %8 = vector.shape_cast %7 : vector<1x32x32xbf16> to vector<32x32xbf16>
    %cst_12 = arith.constant dense<0.000000e+00> : vector<8x32xf32>
    %9 = tpu.matmul %6, %8, %cst_12 {dimension_numbers = #tpu.dot_dimension_numbers<[1], [0], [0], [1], [0, 0, 1, 1], [], []>} : vector<8x32xbf16>, vector<32x32xbf16>, vector<8x32xf32> -> vector<8x32xf32>
    %c0_13 = arith.constant 0 : index
    %c0_14 = arith.constant 0 : index
    %c0_15 = arith.constant 0 : index
    %10 = vector.load %arg2[%c0_13, %c0_14, %c0_15] : memref<2x1x32xf32, #tpu.memory_space<vmem>>, vector<1x1x32xf32>
    %11 = vector.shape_cast %10 : vector<1x1x32xf32> to vector<1x32xf32>
    %12 = vector.broadcast %11 : vector<1x32xf32> to vector<8x32xf32>
    %13 = arith.mulf %9, %12 : vector<8x32xf32>
    %c0_16 = arith.constant 0 : index
    %c0_17 = arith.constant 0 : index
    %c0_18 = arith.constant 0 : index
    %14 = vector.load %arg3[%c0_16, %c0_17, %c0_18] : memref<2x1x32xf32, #tpu.memory_space<vmem>>, vector<1x1x32xf32>
    %15 = vector.shape_cast %14 : vector<1x1x32xf32> to vector<1x32xf32>
    %16 = vector.broadcast %15 : vector<1x32xf32> to vector<8x32xf32>
    %17 = arith.addf %13, %16 : vector<8x32xf32>
    %cst_19 = arith.constant 0.000000e+00 : f32
    %18 = vector.broadcast %cst_19 : f32 to vector<8x32xf32>
    %19 = arith.maximumf %17, %18 : vector<8x32xf32>
    %20 = arith.truncf %19 : vector<8x32xf32> to vector<8x32xbf16>
    %21 = vector.extract_strided_slice %20 {offsets = [0, 0], sizes = [2, 32], strides = [1, 1]} : vector<8x32xbf16> to vector<2x32xbf16>
    %c9 = arith.constant 9 : index
    %c0_20 = arith.constant 0 : index
    %22 = vector.load %arg8[%c9, %c0_20] : memref<64x32xbf16, #tpu.memory_space<vmem>>, vector<2x32xbf16>
    tpu.vector_store %arg8[%c9, %c0_20], %21 {strides = array<i32>} : memref<64x32xbf16, #tpu.memory_space<vmem>>, vector<2x32xbf16>,
    %23 = vector.extract_strided_slice %20 {offsets = [2, 0], sizes = [2, 32], strides = [1, 1]} : vector<8x32xbf16> to vector<2x32xbf16>
    %c17 = arith.constant 17 : index
    %c0_21 = arith.constant 0 : index
    %24 = vector.load %arg8[%c17, %c0_21] : memref<64x32xbf16, #tpu.memory_space<vmem>>, vector<2x32xbf16>
    tpu.vector_store %arg8[%c17, %c0_21], %23 {strides = array<i32>} : memref<64x32xbf16, #tpu.memory_space<vmem>>, vector<2x32xbf16>,
    %25 = vector.extract_strided_slice %20 {offsets = [4, 0], sizes = [2, 32], strides = [1, 1]} : vector<8x32xbf16> to vector<2x32xbf16>
    %c41 = arith.constant 41 : index
    %c0_22 = arith.constant 0 : index
    %26 = vector.load %arg8[%c41, %c0_22] : memref<64x32xbf16, #tpu.memory_space<vmem>>, vector<2x32xbf16>
    tpu.vector_store %arg8[%c41, %c0_22], %25 {strides = array<i32>} : memref<64x32xbf16, #tpu.memory_space<vmem>>, vector<2x32xbf16>,
    %27 = vector.extract_strided_slice %20 {offsets = [6, 0], sizes = [2, 32], strides = [1, 1]} : vector<8x32xbf16> to vector<2x32xbf16>
    %c49 = arith.constant 49 : index
    %c0_23 = arith.constant 0 : index
    %28 = vector.load %arg8[%c49, %c0_23] : memref<64x32xbf16, #tpu.memory_space<vmem>>, vector<2x32xbf16>
    tpu.vector_store %arg8[%c49, %c0_23], %27 {strides = array<i32>} : memref<64x32xbf16, #tpu.memory_space<vmem>>, vector<2x32xbf16>,
    %c0_24 = arith.constant 0 : index
    %c0_25 = arith.constant 0 : index
    %29 = vector.load %arg8[%c0_24, %c0_25] : memref<64x32xbf16, #tpu.memory_space<vmem>>, vector<64x32xbf16>
    %c0_26 = arith.constant 0 : index
    %c0_27 = arith.constant 0 : index
    %c0_28 = arith.constant 0 : index
    %30 = vector.load %arg4[%c0_26, %c0_27, %c0_28] : memref<2x32x72xbf16, #tpu.memory_space<vmem>>, vector<1x32x72xbf16>
    %31 = vector.shape_cast %30 : vector<1x32x72xbf16> to vector<32x72xbf16>
    %cst_29 = arith.constant dense<0.000000e+00> : vector<64x72xf32>
    %32 = tpu.matmul %29, %31, %cst_29 {dimension_numbers = #tpu.dot_dimension_numbers<[1], [0], [0], [1], [0, 0, 1, 1], [], []>} : vector<64x32xbf16>, vector<32x72xbf16>, vector<64x72xf32> -> vector<64x72xf32>
    %c0_30 = arith.constant 0 : index
    %c0_31 = arith.constant 0 : index
    %33 = vector.load %arg9[%c0_30, %c0_31] : memref<64x72xf32, #tpu.memory_space<vmem>>, vector<64x72xf32>
    tpu.vector_store %arg9[%c0_30, %c0_31], %32 {strides = array<i32>} : memref<64x72xf32, #tpu.memory_space<vmem>>, vector<64x72xf32>,
    %c0_32 = arith.constant 0 : index
    %c0_33 = arith.constant 0 : index
    %34 = vector.load %arg9[%c0_32, %c0_33] : memref<64x72xf32, #tpu.memory_space<vmem>>, vector<46x8xf32>
    %c1 = arith.constant 1 : index
    %c8 = arith.constant 8 : index
    %35 = vector.load %arg9[%c1, %c8] : memref<64x72xf32, #tpu.memory_space<vmem>>, vector<46x8xf32>
    %36 = arith.addf %34, %35 : vector<46x8xf32>
    %c2 = arith.constant 2 : index
    %c16_34 = arith.constant 16 : index
    %37 = vector.load %arg9[%c2, %c16_34] : memref<64x72xf32, #tpu.memory_space<vmem>>, vector<46x8xf32>
    %38 = arith.addf %36, %37 : vector<46x8xf32>
    %c8_35 = arith.constant 8 : index
    %c24 = arith.constant 24 : index
    %39 = vector.load %arg9[%c8_35, %c24] : memref<64x72xf32, #tpu.memory_space<vmem>>, vector<46x8xf32>
    %40 = arith.addf %38, %39 : vector<46x8xf32>
    %c9_36 = arith.constant 9 : index
    %c32 = arith.constant 32 : index
    %41 = vector.load %arg9[%c9_36, %c32] : memref<64x72xf32, #tpu.memory_space<vmem>>, vector<46x8xf32>
    %42 = arith.addf %40, %41 : vector<46x8xf32>
    %c10 = arith.constant 10 : index
    %c40 = arith.constant 40 : index
    %43 = vector.load %arg9[%c10, %c40] : memref<64x72xf32, #tpu.memory_space<vmem>>, vector<46x8xf32>
    %44 = arith.addf %42, %43 : vector<46x8xf32>
    %c16_37 = arith.constant 16 : index
    %c48 = arith.constant 48 : index
    %45 = vector.load %arg9[%c16_37, %c48] : memref<64x72xf32, #tpu.memory_space<vmem>>, vector<46x8xf32>
    %46 = arith.addf %44, %45 : vector<46x8xf32>
    %c17_38 = arith.constant 17 : index
    %c56 = arith.constant 56 : index
    %47 = vector.load %arg9[%c17_38, %c56] : memref<64x72xf32, #tpu.memory_space<vmem>>, vector<46x8xf32>
    %48 = arith.addf %46, %47 : vector<46x8xf32>
    %c18 = arith.constant 18 : index
    %c64 = arith.constant 64 : index
    %49 = vector.load %arg9[%c18, %c64] : memref<64x72xf32, #tpu.memory_space<vmem>>, vector<46x8xf32>
    %50 = arith.addf %48, %49 : vector<46x8xf32>
    %c0_39 = arith.constant 0 : index
    %c0_40 = arith.constant 0 : index
    %c0_41 = arith.constant 0 : index
    %51 = vector.load %arg5[%c0_39, %c0_40, %c0_41] : memref<2x1x8xf32, #tpu.memory_space<vmem>>, vector<1x1x8xf32>
    %52 = vector.shape_cast %51 : vector<1x1x8xf32> to vector<1x8xf32>
    %53 = vector.broadcast %52 : vector<1x8xf32> to vector<46x8xf32>
    %54 = arith.mulf %50, %53 : vector<46x8xf32>
    %c0_42 = arith.constant 0 : index
    %c0_43 = arith.constant 0 : index
    %c0_44 = arith.constant 0 : index
    %55 = vector.load %arg6[%c0_42, %c0_43, %c0_44] : memref<2x1x8xf32, #tpu.memory_space<vmem>>, vector<1x1x8xf32>
    %56 = vector.shape_cast %55 : vector<1x1x8xf32> to vector<1x8xf32>
    %57 = vector.broadcast %56 : vector<1x8xf32> to vector<46x8xf32>
    %58 = arith.addf %54, %57 : vector<46x8xf32>
    %cst_45 = arith.constant 0.000000e+00 : f32
    %59 = vector.broadcast %cst_45 : f32 to vector<46x8xf32>
    %60 = arith.maximumf %58, %59 : vector<46x8xf32>
    %61 = arith.truncf %60 : vector<46x8xf32> to vector<46x8xbf16>
    %62 = vector.extract_strided_slice %61 {offsets = [0, 0], sizes = [2, 8], strides = [1, 1]} : vector<46x8xbf16> to vector<2x8xbf16>
    %c0_46 = arith.constant 0 : index
    %c16_47 = arith.constant 16 : index
    %63 = vector.load %arg7[%c0_46, %c16_47] : memref<8x32xbf16, #tpu.memory_space<vmem>>, vector<2x8xbf16>
    tpu.vector_store %arg7[%c0_46, %c16_47], %62 {strides = array<i32>} : memref<8x32xbf16, #tpu.memory_space<vmem>>, vector<2x8xbf16>,
    %64 = vector.extract_strided_slice %61 {offsets = [8, 0], sizes = [2, 8], strides = [1, 1]} : vector<46x8xbf16> to vector<2x8xbf16>
    %c2_48 = arith.constant 2 : index
    %c16_49 = arith.constant 16 : index
    %65 = vector.load %arg7[%c2_48, %c16_49] : memref<8x32xbf16, #tpu.memory_space<vmem>>, vector<2x8xbf16>
    tpu.vector_store %arg7[%c2_48, %c16_49], %64 {strides = array<i32>} : memref<8x32xbf16, #tpu.memory_space<vmem>>, vector<2x8xbf16>,
    %66 = vector.extract_strided_slice %61 {offsets = [32, 0], sizes = [2, 8], strides = [1, 1]} : vector<46x8xbf16> to vector<2x8xbf16>
    %c4 = arith.constant 4 : index
    %c16_50 = arith.constant 16 : index
    %67 = vector.load %arg7[%c4, %c16_50] : memref<8x32xbf16, #tpu.memory_space<vmem>>, vector<2x8xbf16>
    tpu.vector_store %arg7[%c4, %c16_50], %66 {strides = array<i32>} : memref<8x32xbf16, #tpu.memory_space<vmem>>, vector<2x8xbf16>,
    %68 = vector.extract_strided_slice %61 {offsets = [40, 0], sizes = [2, 8], strides = [1, 1]} : vector<46x8xbf16> to vector<2x8xbf16>
    %c6 = arith.constant 6 : index
    %c16_51 = arith.constant 16 : index
    %69 = vector.load %arg7[%c6, %c16_51] : memref<8x32xbf16, #tpu.memory_space<vmem>>, vector<2x8xbf16>
    tpu.vector_store %arg7[%c6, %c16_51], %68 {strides = array<i32>} : memref<8x32xbf16, #tpu.memory_space<vmem>>, vector<2x8xbf16>,
    %c0_52 = arith.constant 0 : index
    %c0_53 = arith.constant 0 : index
    %70 = vector.load %arg7[%c0_52, %c0_53] : memref<8x32xbf16, #tpu.memory_space<vmem>>, vector<8x32xbf16>
    %c1_54 = arith.constant 1 : index
    %c0_55 = arith.constant 0 : index
    %c0_56 = arith.constant 0 : index
    %71 = vector.load %arg1[%c1_54, %c0_55, %c0_56] : memref<2x32x32xbf16, #tpu.memory_space<vmem>>, vector<1x32x32xbf16>
    %72 = vector.shape_cast %71 : vector<1x32x32xbf16> to vector<32x32xbf16>
    %cst_57 = arith.constant dense<0.000000e+00> : vector<8x32xf32>
    %73 = tpu.matmul %70, %72, %cst_57 {dimension_numbers = #tpu.dot_dimension_numbers<[1], [0], [0], [1], [0, 0, 1, 1], [], []>} : vector<8x32xbf16>, vector<32x32xbf16>, vector<8x32xf32> -> vector<8x32xf32>
    %c1_58 = arith.constant 1 : index
    %c0_59 = arith.constant 0 : index
    %c0_60 = arith.constant 0 : index
    %74 = vector.load %arg2[%c1_58, %c0_59, %c0_60] : memref<2x1x32xf32, #tpu.memory_space<vmem>>, vector<1x1x32xf32>
    %75 = vector.shape_cast %74 : vector<1x1x32xf32> to vector<1x32xf32>
    %76 = vector.broadcast %75 : vector<1x32xf32> to vector<8x32xf32>
    %77 = arith.mulf %73, %76 : vector<8x32xf32>
    %c1_61 = arith.constant 1 : index
    %c0_62 = arith.constant 0 : index
    %c0_63 = arith.constant 0 : index
    %78 = vector.load %arg3[%c1_61, %c0_62, %c0_63] : memref<2x1x32xf32, #tpu.memory_space<vmem>>, vector<1x1x32xf32>
    %79 = vector.shape_cast %78 : vector<1x1x32xf32> to vector<1x32xf32>
    %80 = vector.broadcast %79 : vector<1x32xf32> to vector<8x32xf32>
    %81 = arith.addf %77, %80 : vector<8x32xf32>
    %cst_64 = arith.constant 0.000000e+00 : f32
    %82 = vector.broadcast %cst_64 : f32 to vector<8x32xf32>
    %83 = arith.maximumf %81, %82 : vector<8x32xf32>
    %84 = arith.truncf %83 : vector<8x32xf32> to vector<8x32xbf16>
    %85 = vector.extract_strided_slice %84 {offsets = [0, 0], sizes = [2, 32], strides = [1, 1]} : vector<8x32xbf16> to vector<2x32xbf16>
    %c9_65 = arith.constant 9 : index
    %c0_66 = arith.constant 0 : index
    %86 = vector.load %arg8[%c9_65, %c0_66] : memref<64x32xbf16, #tpu.memory_space<vmem>>, vector<2x32xbf16>
    tpu.vector_store %arg8[%c9_65, %c0_66], %85 {strides = array<i32>} : memref<64x32xbf16, #tpu.memory_space<vmem>>, vector<2x32xbf16>,
    %87 = vector.extract_strided_slice %84 {offsets = [2, 0], sizes = [2, 32], strides = [1, 1]} : vector<8x32xbf16> to vector<2x32xbf16>
    %c17_67 = arith.constant 17 : index
    %c0_68 = arith.constant 0 : index
    %88 = vector.load %arg8[%c17_67, %c0_68] : memref<64x32xbf16, #tpu.memory_space<vmem>>, vector<2x32xbf16>
    tpu.vector_store %arg8[%c17_67, %c0_68], %87 {strides = array<i32>} : memref<64x32xbf16, #tpu.memory_space<vmem>>, vector<2x32xbf16>,
    %89 = vector.extract_strided_slice %84 {offsets = [4, 0], sizes = [2, 32], strides = [1, 1]} : vector<8x32xbf16> to vector<2x32xbf16>
    %c41_69 = arith.constant 41 : index
    %c0_70 = arith.constant 0 : index
    %90 = vector.load %arg8[%c41_69, %c0_70] : memref<64x32xbf16, #tpu.memory_space<vmem>>, vector<2x32xbf16>
    tpu.vector_store %arg8[%c41_69, %c0_70], %89 {strides = array<i32>} : memref<64x32xbf16, #tpu.memory_space<vmem>>, vector<2x32xbf16>,
    %91 = vector.extract_strided_slice %84 {offsets = [6, 0], sizes = [2, 32], strides = [1, 1]} : vector<8x32xbf16> to vector<2x32xbf16>
    %c49_71 = arith.constant 49 : index
    %c0_72 = arith.constant 0 : index
    %92 = vector.load %arg8[%c49_71, %c0_72] : memref<64x32xbf16, #tpu.memory_space<vmem>>, vector<2x32xbf16>
    tpu.vector_store %arg8[%c49_71, %c0_72], %91 {strides = array<i32>} : memref<64x32xbf16, #tpu.memory_space<vmem>>, vector<2x32xbf16>,
    %c0_73 = arith.constant 0 : index
    %c0_74 = arith.constant 0 : index
    %93 = vector.load %arg8[%c0_73, %c0_74] : memref<64x32xbf16, #tpu.memory_space<vmem>>, vector<64x32xbf16>
    %c1_75 = arith.constant 1 : index
    %c0_76 = arith.constant 0 : index
    %c0_77 = arith.constant 0 : index
    %94 = vector.load %arg4[%c1_75, %c0_76, %c0_77] : memref<2x32x72xbf16, #tpu.memory_space<vmem>>, vector<1x32x72xbf16>
    %95 = vector.shape_cast %94 : vector<1x32x72xbf16> to vector<32x72xbf16>
    %cst_78 = arith.constant dense<0.000000e+00> : vector<64x72xf32>
    %96 = tpu.matmul %93, %95, %cst_78 {dimension_numbers = #tpu.dot_dimension_numbers<[1], [0], [0], [1], [0, 0, 1, 1], [], []>} : vector<64x32xbf16>, vector<32x72xbf16>, vector<64x72xf32> -> vector<64x72xf32>
    %c0_79 = arith.constant 0 : index
    %c0_80 = arith.constant 0 : index
    %97 = vector.load %arg9[%c0_79, %c0_80] : memref<64x72xf32, #tpu.memory_space<vmem>>, vector<64x72xf32>
    tpu.vector_store %arg9[%c0_79, %c0_80], %96 {strides = array<i32>} : memref<64x72xf32, #tpu.memory_space<vmem>>, vector<64x72xf32>,
    %c0_81 = arith.constant 0 : index
    %c0_82 = arith.constant 0 : index
    %98 = vector.load %arg9[%c0_81, %c0_82] : memref<64x72xf32, #tpu.memory_space<vmem>>, vector<46x8xf32>
    %c1_83 = arith.constant 1 : index
    %c8_84 = arith.constant 8 : index
    %99 = vector.load %arg9[%c1_83, %c8_84] : memref<64x72xf32, #tpu.memory_space<vmem>>, vector<46x8xf32>
    %100 = arith.addf %98, %99 : vector<46x8xf32>
    %c2_85 = arith.constant 2 : index
    %c16_86 = arith.constant 16 : index
    %101 = vector.load %arg9[%c2_85, %c16_86] : memref<64x72xf32, #tpu.memory_space<vmem>>, vector<46x8xf32>
    %102 = arith.addf %100, %101 : vector<46x8xf32>
    %c8_87 = arith.constant 8 : index
    %c24_88 = arith.constant 24 : index
    %103 = vector.load %arg9[%c8_87, %c24_88] : memref<64x72xf32, #tpu.memory_space<vmem>>, vector<46x8xf32>
    %104 = arith.addf %102, %103 : vector<46x8xf32>
    %c9_89 = arith.constant 9 : index
    %c32_90 = arith.constant 32 : index
    %105 = vector.load %arg9[%c9_89, %c32_90] : memref<64x72xf32, #tpu.memory_space<vmem>>, vector<46x8xf32>
    %106 = arith.addf %104, %105 : vector<46x8xf32>
    %c10_91 = arith.constant 10 : index
    %c40_92 = arith.constant 40 : index
    %107 = vector.load %arg9[%c10_91, %c40_92] : memref<64x72xf32, #tpu.memory_space<vmem>>, vector<46x8xf32>
    %108 = arith.addf %106, %107 : vector<46x8xf32>
    %c16_93 = arith.constant 16 : index
    %c48_94 = arith.constant 48 : index
    %109 = vector.load %arg9[%c16_93, %c48_94] : memref<64x72xf32, #tpu.memory_space<vmem>>, vector<46x8xf32>
    %110 = arith.addf %108, %109 : vector<46x8xf32>
    %c17_95 = arith.constant 17 : index
    %c56_96 = arith.constant 56 : index
    %111 = vector.load %arg9[%c17_95, %c56_96] : memref<64x72xf32, #tpu.memory_space<vmem>>, vector<46x8xf32>
    %112 = arith.addf %110, %111 : vector<46x8xf32>
    %c18_97 = arith.constant 18 : index
    %c64_98 = arith.constant 64 : index
    %113 = vector.load %arg9[%c18_97, %c64_98] : memref<64x72xf32, #tpu.memory_space<vmem>>, vector<46x8xf32>
    %114 = arith.addf %112, %113 : vector<46x8xf32>
    %c1_99 = arith.constant 1 : index
    %c0_100 = arith.constant 0 : index
    %c0_101 = arith.constant 0 : index
    %115 = vector.load %arg5[%c1_99, %c0_100, %c0_101] : memref<2x1x8xf32, #tpu.memory_space<vmem>>, vector<1x1x8xf32>
    %116 = vector.shape_cast %115 : vector<1x1x8xf32> to vector<1x8xf32>
    %117 = vector.broadcast %116 : vector<1x8xf32> to vector<46x8xf32>
    %118 = arith.mulf %114, %117 : vector<46x8xf32>
    %c1_102 = arith.constant 1 : index
    %c0_103 = arith.constant 0 : index
    %c0_104 = arith.constant 0 : index
    %119 = vector.load %arg6[%c1_102, %c0_103, %c0_104] : memref<2x1x8xf32, #tpu.memory_space<vmem>>, vector<1x1x8xf32>
    %120 = vector.shape_cast %119 : vector<1x1x8xf32> to vector<1x8xf32>
    %121 = vector.broadcast %120 : vector<1x8xf32> to vector<46x8xf32>
    %122 = arith.addf %118, %121 : vector<46x8xf32>
    %cst_105 = arith.constant 0.000000e+00 : f32
    %123 = vector.broadcast %cst_105 : f32 to vector<46x8xf32>
    %124 = arith.maximumf %122, %123 : vector<46x8xf32>
    %125 = arith.truncf %124 : vector<46x8xf32> to vector<46x8xbf16>
    %126 = vector.extract_strided_slice %125 {offsets = [0, 0], sizes = [2, 8], strides = [1, 1]} : vector<46x8xbf16> to vector<2x8xbf16>
    %c0_106 = arith.constant 0 : index
    %c24_107 = arith.constant 24 : index
    %127 = vector.load %arg7[%c0_106, %c24_107] : memref<8x32xbf16, #tpu.memory_space<vmem>>, vector<2x8xbf16>
    tpu.vector_store %arg7[%c0_106, %c24_107], %126 {strides = array<i32>} : memref<8x32xbf16, #tpu.memory_space<vmem>>, vector<2x8xbf16>,
    %128 = vector.extract_strided_slice %125 {offsets = [8, 0], sizes = [2, 8], strides = [1, 1]} : vector<46x8xbf16> to vector<2x8xbf16>
    %c2_108 = arith.constant 2 : index
    %c24_109 = arith.constant 24 : index
    %129 = vector.load %arg7[%c2_108, %c24_109] : memref<8x32xbf16, #tpu.memory_space<vmem>>, vector<2x8xbf16>
    tpu.vector_store %arg7[%c2_108, %c24_109], %128 {strides = array<i32>} : memref<8x32xbf16, #tpu.memory_space<vmem>>, vector<2x8xbf16>,
    %130 = vector.extract_strided_slice %125 {offsets = [32, 0], sizes = [2, 8], strides = [1, 1]} : vector<46x8xbf16> to vector<2x8xbf16>
    %c4_110 = arith.constant 4 : index
    %c24_111 = arith.constant 24 : index
    %131 = vector.load %arg7[%c4_110, %c24_111] : memref<8x32xbf16, #tpu.memory_space<vmem>>, vector<2x8xbf16>
    tpu.vector_store %arg7[%c4_110, %c24_111], %130 {strides = array<i32>} : memref<8x32xbf16, #tpu.memory_space<vmem>>, vector<2x8xbf16>,
    %132 = vector.extract_strided_slice %125 {offsets = [40, 0], sizes = [2, 8], strides = [1, 1]} : vector<46x8xbf16> to vector<2x8xbf16>
    %c6_112 = arith.constant 6 : index
    %c24_113 = arith.constant 24 : index
    %133 = vector.load %arg7[%c6_112, %c24_113] : memref<8x32xbf16, #tpu.memory_space<vmem>>, vector<2x8xbf16>
    tpu.vector_store %arg7[%c6_112, %c24_113], %132 {strides = array<i32>} : memref<8x32xbf16, #tpu.memory_space<vmem>>, vector<2x8xbf16>,
    return
  }
}

module attributes {stable_mosaic.version = 11 : i64} {
  func.func @_encoder_tail_kernel(%arg0: memref<2x4x32xbf16, #tpu.memory_space<vmem>>, %arg1: memref<32x16xf32, #tpu.memory_space<vmem>>, %arg2: memref<1x16xf32, #tpu.memory_space<vmem>>, %arg3: memref<2x16xf32, #tpu.memory_space<vmem>>) attributes {dimension_semantics = [], scalar_prefetch = 0 : i64, scratch_operands = 0 : i64, tpu.core_type = #tpu.core_type<tc>} {
    %c0 = arith.constant 0 : index
    %c0_0 = arith.constant 0 : index
    %c0_1 = arith.constant 0 : index
    %0 = vector.load %arg0[%c0, %c0_0, %c0_1] : memref<2x4x32xbf16, #tpu.memory_space<vmem>>, vector<2x4x32xbf16>
    %1 = arith.extf %0 : vector<2x4x32xbf16> to vector<2x4x32xf32>
    %cst = arith.constant dense<0.000000e+00> : vector<2x32xf32>
    %2 = vector.multi_reduction <add>, %1, %cst [1] : vector<2x4x32xf32> to vector<2x32xf32>
    %cst_2 = arith.constant 2.500000e-01 : f32
    %3 = vector.broadcast %cst_2 : f32 to vector<2x32xf32>
    %4 = arith.mulf %2, %3 : vector<2x32xf32>
    %c0_3 = arith.constant 0 : index
    %c0_4 = arith.constant 0 : index
    %5 = vector.load %arg1[%c0_3, %c0_4] : memref<32x16xf32, #tpu.memory_space<vmem>>, vector<32x16xf32>
    %cst_5 = arith.constant dense<0.000000e+00> : vector<2x16xf32>
    %6 = tpu.matmul %4, %5, %cst_5 {dimension_numbers = #tpu.dot_dimension_numbers<[1], [0], [0], [1], [0, 0, 1, 1], [], []>} : vector<2x32xf32>, vector<32x16xf32>, vector<2x16xf32> -> vector<2x16xf32>
    %c0_6 = arith.constant 0 : index
    %c0_7 = arith.constant 0 : index
    %7 = vector.load %arg2[%c0_6, %c0_7] : memref<1x16xf32, #tpu.memory_space<vmem>>, vector<1x16xf32>
    %8 = vector.broadcast %7 : vector<1x16xf32> to vector<2x16xf32>
    %9 = arith.addf %6, %8 : vector<2x16xf32>
    %10 = math.tanh %9 : vector<2x16xf32>
    %c0_8 = arith.constant 0 : index
    %c0_9 = arith.constant 0 : index
    %11 = vector.load %arg3[%c0_8, %c0_9] : memref<2x16xf32, #tpu.memory_space<vmem>>, vector<2x16xf32>
    tpu.vector_store %arg3[%c0_8, %c0_9], %10 {strides = array<i32>} : memref<2x16xf32, #tpu.memory_space<vmem>>, vector<2x16xf32>,
    return
  }
}

</mosaic_0001>

<llo_original>
// kernel: _lambda_.11
$region0: #{_lambda_.11}
  #allocation0 [shape = 'u32[]', space=smem, size = 0x4, offset = 0x4, fixed_abs, tag = 'smem constant byte address 0x4 - core index']
  #allocation1 [shape = 'u32[144,128]{1,0:T(1,128)}', space=vmem, size = 0x12000, scoped, tag = 'internal scratch']
  #allocation2 [shape = 'f32[64,16]{1,0:T(8,128)}', space=vmem, size = 0x8000, scoped, tag = 'scratch operand']
  %s0 = inlined_call_operand.vmem [shape: bf16[128,32], index: 0, kind: input, shape index: {}]
  %s1 = inlined_call_operand.vmem [shape: bf16[32,16], index: 1, kind: input, shape index: {}]
  %s2 = inlined_call_operand.vmem [shape: f32[1,16], index: 2, kind: input, shape index: {}]
  %s3 = inlined_call_operand.vmem [shape: f32[1,16], index: 3, kind: input, shape index: {}]
  %s4 = inlined_call_operand.vmem [shape: bf16[32,16], index: 4, kind: output, shape index: {}]
  %s5 = sld [smem:[#allocation0]]
  $region26: #{_lambda_.11} parent=0
    _
  %s7 = ssub.s32 1, %s5
  %s8 = scalar_select 0, %s7, %s5
  // Predicated region
  $region2: #{_lambda_.11} parent=0 // pred_check
    _
  $region3: #{_lambda_.11} parent=0 // pred_check_branch
    %10 = sbr.rel (0) target = $region5
  $region4: #{_lambda_.11} parent=0 // pred_region
    _
  $region5: #{_lambda_.11} parent=0 // pred_fallthru
    _
  // Predicated region
  $region6: #{_lambda_.11} parent=0 // pred_check
    _
  $region7: #{_lambda_.11} parent=0 // pred_check_branch
    %12 = sbr.rel (0) target = $region9
  $region8: #{_lambda_.11} parent=0 // pred_region
    _
  $region9: #{_lambda_.11} parent=0 // pred_fallthru
    _
  // Predicated region
  $region10: #{_lambda_.11} parent=0 // pred_check
    _
  $region11: #{_lambda_.11} parent=0 // pred_check_branch
    %14 = sbr.rel (0) target = $region13
  $region12: #{_lambda_.11} parent=0 // pred_region
    _
  $region13: #{_lambda_.11} parent=0 // pred_fallthru
    _
  // Predicated region
  $region14: #{_lambda_.11} parent=0 // pred_check
    _
  $region15: #{_lambda_.11} parent=0 // pred_check_branch
    %16 = sbr.rel (0) target = $region17
  $region16: #{_lambda_.11} parent=0 // pred_region
    _
  $region17: #{_lambda_.11} parent=0 // pred_fallthru
    _
  %v18 = vld [vmem:[%s0] sm:$0xf]
  %v19 = vld [vmem:[%s0 + $0x4] sm:$0xf]
  %v20 = vld [vmem:[%s0 + $0x8] sm:$0xf]
  %v21 = vld [vmem:[%s0 + $0xc] sm:$0xf]
  %v22 = vld [vmem:[%s0 + $0x10] sm:$0xf]
  %v23 = vld [vmem:[%s0 + $0x14] sm:$0xf]
  %v24 = vld [vmem:[%s0 + $0x18] sm:$0xf]
  %v25 = vld [vmem:[%s0 + $0x1c] sm:$0xf]
  %v26 = vld [vmem:[%s0 + $0x20] sm:$0xf]
  %v27 = vld [vmem:[%s0 + $0x24] sm:$0xf]
  %v28 = vld [vmem:[%s0 + $0x28] sm:$0xf]
  %v29 = vld [vmem:[%s0 + $0x2c] sm:$0xf]
  %v30 = vld [vmem:[%s0 + $0x30] sm:$0xf]
  %v31 = vld [vmem:[%s0 + $0x34] sm:$0xf]
  %v32 = vld [vmem:[%s0 + $0x38] sm:$0xf]
  %v33 = vld [vmem:[%s0 + $0x3c] sm:$0xf]
  %v34 = vld [vmem:[%s1] sm:$0xf]
  %v35 = vld [vmem:[%s1 + $0x4] sm:$0xf]
  %v36 = vld [vmem:[%s1 + $0x8] sm:$0xf]
  %v37 = vld [vmem:[%s1 + $0xc] sm:$0xf]
  %v54 = vunpack.c.l.b16 %v18
  %v55 = vunpack.c.l.b16 %v19
  %v56 = vunpack.c.l.b16 %v20
  %v57 = vunpack.c.l.b16 %v21
  %v58 = vunpack.c.l.b16 %v22
  %v59 = vunpack.c.l.b16 %v23
  %v60 = vunpack.c.l.b16 %v24
  %v61 = vunpack.c.l.b16 %v25
  %v62 = vunpack.c.l.b16 %v26
  %v63 = vunpack.c.l.b16 %v27
  %v64 = vunpack.c.l.b16 %v28
  %v65 = vunpack.c.l.b16 %v29
  %v66 = vunpack.c.l.b16 %v30
  %v67 = vunpack.c.l.b16 %v31
  %v68 = vunpack.c.l.b16 %v32
  %v69 = vunpack.c.l.b16 %v33
  %v70 = vpack.c.b16 %v55, %v54
  %v71 = vpack.c.b16 %v57, %v56
  %v72 = vpack.c.b16 %v59, %v58
  %v73 = vpack.c.b16 %v61, %v60
  %v74 = vpack.c.b16 %v63, %v62
  %v75 = vpack.c.b16 %v65, %v64
  %v76 = vpack.c.b16 %v67, %v66
  %v77 = vpack.c.b16 %v69, %v68
  %v82 = vunpack.c.l.b16 %v34
  %v83 = vunpack.c.l.b16 %v35
  %v84 = vunpack.c.l.b16 %v36
  %v85 = vunpack.c.l.b16 %v37
  %v86 = vpack.c.b16 %v83, %v82
  %v87 = vpack.c.b16 %v85, %v84
  %vm90 = vcmask 261120
  %v92 = vsel %vm90, %v70, 0
  %v95 = vsel %vm90, %v71, 0
  %v98 = vsel %vm90, %v72, 0
  %v101 = vsel %vm90, %v73, 0
  %v104 = vsel %vm90, %v74, 0
  %v107 = vsel %vm90, %v75, 0
  %v110 = vsel %vm90, %v76, 0
  %v113 = vsel %vm90, %v77, 0
  %115 = vmatprep.subr.bf16.mxu0 0
  %116 = vmatpush1.bf16.msra.mxu0 %v86
  %117 = vmatprep.subr.bf16.mxu0 0
  %118 = vmatpush1.bf16.msra.mxu0 %v87
  %119 = vmatprep.subr.bf16.mxu0 0
  %120 = vmatpush1.bf16.msra.mxu0 0
  %121 = vmatprep.subr.bf16.mxu0 0
  %122 = vmatpush1.bf16.msra.mxu0 0
  %123 = vmatprep.subr.bf16.mxu0 0
  %124 = vmatpush1.bf16.msra.mxu0 0
  %125 = vmatprep.subr.bf16.mxu0 0
  %126 = vmatpush1.bf16.msra.mxu0 0
  %127 = vmatprep.subr.bf16.mxu0 0
  %128 = vmatpush1.bf16.msra.mxu0 0
  %129 = vmatprep.subr.bf16.mxu0 0
  %130 = vmatpush1.bf16.msra.mxu0 0
  %131 = vmatprep.subr.bf16.mxu0 0
  %132 = vmatpush1.bf16.msra.mxu0 0
  %133 = vmatprep.subr.bf16.mxu0 0
  %134 = vmatpush1.bf16.msra.mxu0 0
  %135 = vmatprep.subr.bf16.mxu0 0
  %136 = vmatpush1.bf16.msra.mxu0 0
  %137 = vmatprep.subr.bf16.mxu0 0
  %138 = vmatpush1.bf16.msra.mxu0 0
  %139 = vmatprep.subr.bf16.mxu0 0
  %140 = vmatpush1.bf16.msra.mxu0 0
  %141 = vmatprep.subr.bf16.mxu0 0
  %142 = vmatpush1.bf16.msra.mxu0 0
  %143 = vmatprep.subr.bf16.mxu0 0
  %144 = vmatpush1.bf16.msra.mxu0 0
  %145 = vmatprep.subr.bf16.mxu0 0
  %146 = vmatpush1.bf16.msra.mxu0 0
  %147 = vmatprep.mubr.bf16.mxu0 0
  %148 = vmatmul.mubr.bf16.gmra.mrb[0].mxu0 %v92
  %v149 = vpop.f32.mrb[0].mxu0
  %v150 = vadd.f32 0.0, %v149
  %v151 = vpop.f32.mrb[0].mxu0
  %v152 = vpop.f32.mrb[0].mxu0
  %v153 = vadd.f32 0.0, %v152
  %v154 = vpop.f32.mrb[0].mxu0
  %155 = vmatprep.mubr.bf16.mxu0 0
  %156 = vmatmul.mubr.bf16.gmra.mrb[0].mxu0 %v95
  %v157 = vpop.f32.mrb[0].mxu0
  %v158 = vadd.f32 0.0, %v157
  %v159 = vpop.f32.mrb[0].mxu0
  %v160 = vpop.f32.mrb[0].mxu0
  %v161 = vadd.f32 0.0, %v160
  %v162 = vpop.f32.mrb[0].mxu0
  %163 = vmatprep.mubr.bf16.mxu0 0
  %164 = vmatmul.mubr.bf16.gmra.mrb[0].mxu0 %v98
  %v165 = vpop.f32.mrb[0].mxu0
  %v166 = vadd.f32 0.0, %v165
  %v167 = vpop.f32.mrb[0].mxu0
  %v168 = vpop.f32.mrb[0].mxu0
  %v169 = vadd.f32 0.0, %v168
  %v170 = vpop.f32.mrb[0].mxu0
  %171 = vmatprep.mubr.bf16.mxu0 0
  %172 = vmatmul.mubr.bf16.gmra.mrb[0].mxu0 %v101
  %v173 = vpop.f32.mrb[0].mxu0
  %v174 = vadd.f32 0.0, %v173
  %v175 = vpop.f32.mrb[0].mxu0
  %v176 = vpop.f32.mrb[0].mxu0
  %v177 = vadd.f32 0.0, %v176
  %v178 = vpop.f32.mrb[0].mxu0
  %179 = vmatprep.mubr.bf16.mxu0 0
  %180 = vmatmul.mubr.bf16.gmra.mrb[0].mxu0 %v104
  %v181 = vpop.f32.mrb[0].mxu0
  %v182 = vadd.f32 0.0, %v181
  %v183 = vpop.f32.mrb[0].mxu0
  %v184 = vpop.f32.mrb[0].mxu0
  %v185 = vadd.f32 0.0, %v184
  %v186 = vpop.f32.mrb[0].mxu0
  %187 = vmatprep.mubr.bf16.mxu0 0
  %188 = vmatmul.mubr.bf16.gmra.mrb[0].mxu0 %v107
  %v189 = vpop.f32.mrb[0].mxu0
  %v190 = vadd.f32 0.0, %v189
  %v191 = vpop.f32.mrb[0].mxu0
  %v192 = vpop.f32.mrb[0].mxu0
  %v193 = vadd.f32 0.0, %v192
  %v194 = vpop.f32.mrb[0].mxu0
  %195 = vmatprep.mubr.bf16.mxu0 0
  %196 = vmatmul.mubr.bf16.gmra.mrb[0].mxu0 %v110
  %v197 = vpop.f32.mrb[0].mxu0
  %v198 = vadd.f32 0.0, %v197
  %v199 = vpop.f32.mrb[0].mxu0
  %v200 = vpop.f32.mrb[0].mxu0
  %v201 = vadd.f32 0.0, %v200
  %v202 = vpop.f32.mrb[0].mxu0
  %203 = vmatprep.mubr.bf16.mxu0 0
  %204 = vmatmul.mubr.bf16.gmra.mrb[0].mxu0 %v113
  %v205 = vpop.f32.mrb[0].mxu0
  %v206 = vadd.f32 0.0, %v205
  %v207 = vpop.f32.mrb[0].mxu0
  %v208 = vpop.f32.mrb[0].mxu0
  %v209 = vadd.f32 0.0, %v208
  %v210 = vpop.f32.mrb[0].mxu0
  %211 = vdwg.mxu0
  %v212 = vld [vmem:[%s2] sm:$0x1]
  %v214 = vlaneseq
  %v215 = vshrl.u32 %v214, 7
  %v216 = vsub.s32 0, %v215
  %v217 = vrot.slane %v212, %v216
  %v219 = vmul.f32 %v150, %v217
  %v220 = vmul.f32 %v153, %v217
  %v221 = vmul.f32 %v158, %v217
  %v222 = vmul.f32 %v161, %v217
  %v223 = vmul.f32 %v166, %v217
  %v224 = vmul.f32 %v169, %v217
  %v225 = vmul.f32 %v174, %v217
  %v226 = vmul.f32 %v177, %v217
  %v227 = vmul.f32 %v182, %v217
  %v228 = vmul.f32 %v185, %v217
  %v229 = vmul.f32 %v190, %v217
  %v230 = vmul.f32 %v193, %v217
  %v231 = vmul.f32 %v198, %v217
  %v232 = vmul.f32 %v201, %v217
  %v233 = vmul.f32 %v206, %v217
  %v234 = vmul.f32 %v209, %v217
  %v235 = vld [vmem:[%s3] sm:$0x1]
  %v237 = vlaneseq
  %v238 = vshrl.u32 %v237, 7
  %v239 = vsub.s32 0, %v238
  %v240 = vrot.slane %v235, %v239
  %v242 = vadd.f32 %v219, %v240
  %v243 = vadd.f32 %v220, %v240
  %v244 = vadd.f32 %v221, %v240
  %v245 = vadd.f32 %v222, %v240
  %v246 = vadd.f32 %v223, %v240
  %v247 = vadd.f32 %v224, %v240
  %v248 = vadd.f32 %v225, %v240
  %v249 = vadd.f32 %v226, %v240
  %v250 = vadd.f32 %v227, %v240
  %v251 = vadd.f32 %v228, %v240
  %v252 = vadd.f32 %v229, %v240
  %v253 = vadd.f32 %v230, %v240
  %v254 = vadd.f32 %v231, %v240
  %v255 = vadd.f32 %v232, %v240
  %v256 = vadd.f32 %v233, %v240
  %v257 = vadd.f32 %v234, %v240
  %v258 = vmax.f32 %v242, 0.0
  %v259 = vmax.f32 %v243, 0.0
  %v260 = vmax.f32 %v244, 0.0
  %v261 = vmax.f32 %v245, 0.0
  %v262 = vmax.f32 %v246, 0.0
  %v263 = vmax.f32 %v247, 0.0
  %v264 = vmax.f32 %v248, 0.0
  %v265 = vmax.f32 %v249, 0.0
  %v266 = vmax.f32 %v250, 0.0
  %v267 = vmax.f32 %v251, 0.0
  %v268 = vmax.f32 %v252, 0.0
  %v269 = vmax.f32 %v253, 0.0
  %v270 = vmax.f32 %v254, 0.0
  %v271 = vmax.f32 %v255, 0.0
  %v272 = vmax.f32 %v256, 0.0
  %v273 = vmax.f32 %v257, 0.0
  %v274 = vadd.f32 %v258, %v259
  %vm275 = vcmask 130048
  %276 = vst.msk [vmem:[#allocation2] sm:$0xff] %vm275, %v274
  %v277 = vadd.f32 %v260, %v261
  %278 = vst.msk [vmem:[#allocation2 + $0x8] sm:$0xff] %vm275, %v277
  %v279 = vadd.f32 %v262, %v263
  %280 = vst.msk [vmem:[#allocation2 + $0x10] sm:$0xff] %vm275, %v279
  %v281 = vadd.f32 %v264, %v265
  %282 = vst.msk [vmem:[#allocation2 + $0x18] sm:$0xff] %vm275, %v281
  %v283 = vadd.f32 %v266, %v267
  %284 = vst.msk [vmem:[#allocation2 + $0x20] sm:$0xff] %vm275, %v283
  %v285 = vadd.f32 %v268, %v269
  %286 = vst.msk [vmem:[#allocation2 + $0x28] sm:$0xff] %vm275, %v285
  %v287 = vadd.f32 %v270, %v271
  %288 = vst.msk [vmem:[#allocation2 + $0x30] sm:$0xff] %vm275, %v287
  %v289 = vadd.f32 %v272, %v273
  %290 = vst.msk [vmem:[#allocation2 + $0x38] sm:$0xff] %vm275, %v289
  %v291 = vld [vmem:[#allocation2] ss:$2 sm:$0xff]
  %s292 = scalar_lea.vmem [#allocation2], 16
  %v293 = vld [vmem:[%s292] ss:$2 sm:$0xff]
  %s294 = scalar_lea.vmem [#allocation2], 32
  %v295 = vld [vmem:[%s294] ss:$2 sm:$0xff]
  %s296 = scalar_lea.vmem [#allocation2], 48
  %v297 = vld [vmem:[%s296] ss:$2 sm:$0xff]
  %s298 = scalar_lea.vmem [#allocation2], 1
  %v299 = vld [vmem:[%s298] ss:$2 sm:$0xff]
  %s300 = scalar_lea.vmem [#allocation2], 17
  %v301 = vld [vmem:[%s300] ss:$2 sm:$0xff]
  %s302 = scalar_lea.vmem [#allocation2], 33
  %v303 = vld [vmem:[%s302] ss:$2 sm:$0xff]
  %s304 = scalar_lea.vmem [#allocation2], 49
  %v305 = vld [vmem:[%s304] ss:$2 sm:$0xff]
  %v306 = vadd.f32 %v291, %v299
  %v307 = vadd.f32 %v293, %v301
  %v308 = vadd.f32 %v295, %v303
  %v309 = vadd.f32 %v297, %v305
  %v310 = vmul.f32 %v306, 0.25
  %v311 = vmul.f32 %v307, 0.25
  %v312 = vmul.f32 %v308, 0.25
  %v313 = vmul.f32 %v309, 0.25
  %v314 = vpack.c.bf16 %v311, %v310
  %v315 = vpack.c.bf16 %v313, %v312
  %v318 = vunpack.c.l.b16 %v314
  %v319 = vunpack.c.h.b16 %v314
  %v320 = vunpack.c.l.b16 %v315
  %v321 = vunpack.c.h.b16 %v315
  %v322 = vpack.c.b16 %v318, %v318
  %v323 = vpack.c.b16 %v319, %v319
  %v324 = vpack.c.b16 %v320, %v320
  %v325 = vpack.c.b16 %v321, %v321
  %vm330 = vcmask 125952
  %331 = vst.msk [vmem:[%s4] sm:$0xf] %vm330, %v322
  %332 = vst.msk [vmem:[%s4 + $0x4] sm:$0xf] %vm330, %v323
  %333 = vst.msk [vmem:[%s4 + $0x8] sm:$0xf] %vm330, %v324
  %334 = vst.msk [vmem:[%s4 + $0xc] sm:$0xf] %vm330, %v325
  // Predicated region
  $region18: #{_lambda_.11} parent=0 // pred_check
    _
  $region19: #{_lambda_.11} parent=0 // pred_check_branch
    %336 = sbr.rel (0) target = $region21
  $region20: #{_lambda_.11} parent=0 // pred_region
    _
  $region21: #{_lambda_.11} parent=0 // pred_fallthru
    _
  // Predicated region
  $region22: #{_lambda_.11} parent=0 // pred_check
    _
  $region23: #{_lambda_.11} parent=0 // pred_check_branch
    %338 = sbr.rel (0) target = $region25
  $region24: #{_lambda_.11} parent=0 // pred_region
    _
  $region25: #{_lambda_.11} parent=0 // pred_fallthru
    _

// kernel: _lambda_.9
$region0: #{_lambda_.9}
  #allocation0 [shape = 'u32[]', space=smem, size = 0x4, offset = 0x4, fixed_abs, tag = 'smem constant byte address 0x4 - core index']
  #allocation1 [shape = 'u32[144,128]{1,0:T(1,128)}', space=vmem, size = 0x12000, scoped, tag = 'internal scratch']
  #allocation2 [shape = 'f32[256,16]{1,0:T(8,128)}', space=vmem, size = 0x20000, scoped, tag = 'scratch operand']
  %s0 = inlined_call_operand.vmem [shape: bf16[512,16], index: 0, kind: input, shape index: {}]
  %s1 = inlined_call_operand.vmem [shape: bf16[128,16], index: 1, kind: output, shape index: {}]
  %s2 = sld [smem:[#allocation0]]
  $region14: #{_lambda_.9} parent=0
    _
  %s4 = ssub.s32 1, %s2
  %s5 = scalar_select 0, %s4, %s2
  // Predicated region
  $region2: #{_lambda_.9} parent=0 // pred_check
    _
  $region3: #{_lambda_.9} parent=0 // pred_check_branch
    %7 = sbr.rel (0) target = $region5
  $region4: #{_lambda_.9} parent=0 // pred_region
    _
  $region5: #{_lambda_.9} parent=0 // pred_fallthru
    _
  %v8 = vld [vmem:[%s0] sm:$0xf]
  %v9 = vld [vmem:[%s0 + $0x4] sm:$0xf]
  %v10 = vunpack.c.l.bf16 %v8
  %v11 = vunpack.c.l.bf16 %v9
  %v12 = vld [vmem:[%s0 + $0x8] sm:$0xf]
  %v13 = vld [vmem:[%s0 + $0xc] sm:$0xf]
  %v14 = vunpack.c.l.bf16 %v12
  %v15 = vunpack.c.l.bf16 %v13
  %v16 = vmax.f32 %v10, %v14
  %v17 = vmax.f32 %v11, %v15
  %vm18 = vcmask 130048
  %19 = vst.msk [vmem:[#allocation2] sm:$0xff] %vm18, %v16
  %20 = vst.msk [vmem:[#allocation2 + $0x8] sm:$0xff] %vm18, %v17
  %v21 = vld [vmem:[%s0 + $0x10] sm:$0xf]
  %v22 = vld [vmem:[%s0 + $0x14] sm:$0xf]
  %v23 = vunpack.c.l.bf16 %v21
  %v24 = vunpack.c.l.bf16 %v22
  %v25 = vld [vmem:[%s0 + $0x18] sm:$0xf]
  %v26 = vld [vmem:[%s0 + $0x1c] sm:$0xf]
  %v27 = vunpack.c.l.bf16 %v25
  %v28 = vunpack.c.l.bf16 %v26
  %v29 = vmax.f32 %v23, %v27
  %v30 = vmax.f32 %v24, %v28
  %31 = vst.msk [vmem:[#allocation2 + $0x10] sm:$0xff] %vm18, %v29
  %32 = vst.msk [vmem:[#allocation2 + $0x18] sm:$0xff] %vm18, %v30
  %v33 = vld [vmem:[%s0 + $0x20] sm:$0xf]
  %v34 = vld [vmem:[%s0 + $0x24] sm:$0xf]
  %v35 = vunpack.c.l.bf16 %v33
  %v36 = vunpack.c.l.bf16 %v34
  %v37 = vld [vmem:[%s0 + $0x28] sm:$0xf]
  %v38 = vld [vmem:[%s0 + $0x2c] sm:$0xf]
  %v39 = vunpack.c.l.bf16 %v37
  %v40 = vunpack.c.l.bf16 %v38
  %v41 = vmax.f32 %v35, %v39
  %v42 = vmax.f32 %v36, %v40
  %43 = vst.msk [vmem:[#allocation2 + $0x20] sm:$0xff] %vm18, %v41
  %44 = vst.msk [vmem:[#allocation2 + $0x28] sm:$0xff] %vm18, %v42
  %v45 = vld [vmem:[%s0 + $0x30] sm:$0xf]
  %v46 = vld [vmem:[%s0 + $0x34] sm:$0xf]
  %v47 = vunpack.c.l.bf16 %v45
  %v48 = vunpack.c.l.bf16 %v46
  %v49 = vld [vmem:[%s0 + $0x38] sm:$0xf]
  %v50 = vld [vmem:[%s0 + $0x3c] sm:$0xf]
  %v51 = vunpack.c.l.bf16 %v49
  %v52 = vunpack.c.l.bf16 %v50
  %v53 = vmax.f32 %v47, %v51
  %v54 = vmax.f32 %v48, %v52
  %55 = vst.msk [vmem:[#allocation2 + $0x30] sm:$0xff] %vm18, %v53
  %56 = vst.msk [vmem:[#allocation2 + $0x38] sm:$0xff] %vm18, %v54
  %v57 = vld [vmem:[%s0 + $0x40] sm:$0xf]
  %v58 = vld [vmem:[%s0 + $0x44] sm:$0xf]
  %v59 = vunpack.c.l.bf16 %v57
  %v60 = vunpack.c.l.bf16 %v58
  %v61 = vld [vmem:[%s0 + $0x48] sm:$0xf]
  %v62 = vld [vmem:[%s0 + $0x4c] sm:$0xf]
  %v63 = vunpack.c.l.bf16 %v61
  %v64 = vunpack.c.l.bf16 %v62
  %v65 = vmax.f32 %v59, %v63
  %v66 = vmax.f32 %v60, %v64
  %67 = vst.msk [vmem:[#allocation2 + $0x40] sm:$0xff] %vm18, %v65
  %68 = vst.msk [vmem:[#allocation2 + $0x48] sm:$0xff] %vm18, %v66
  %v69 = vld [vmem:[%s0 + $0x50] sm:$0xf]
  %v70 = vld [vmem:[%s0 + $0x54] sm:$0xf]
  %v71 = vunpack.c.l.bf16 %v69
  %v72 = vunpack.c.l.bf16 %v70
  %v73 = vld [vmem:[%s0 + $0x58] sm:$0xf]
  %v74 = vld [vmem:[%s0 + $0x5c] sm:$0xf]
  %v75 = vunpack.c.l.bf16 %v73
  %v76 = vunpack.c.l.bf16 %v74
  %v77 = vmax.f32 %v71, %v75
  %v78 = vmax.f32 %v72, %v76
  %79 = vst.msk [vmem:[#allocation2 + $0x50] sm:$0xff] %vm18, %v77
  %80 = vst.msk [vmem:[#allocation2 + $0x58] sm:$0xff] %vm18, %v78
  %v81 = vld [vmem:[%s0 + $0x60] sm:$0xf]
  %v82 = vld [vmem:[%s0 + $0x64] sm:$0xf]
  %v83 = vunpack.c.l.bf16 %v81
  %v84 = vunpack.c.l.bf16 %v82
  %v85 = vld [vmem:[%s0 + $0x68] sm:$0xf]
  %v86 = vld [vmem:[%s0 + $0x6c] sm:$0xf]
  %v87 = vunpack.c.l.bf16 %v85
  %v88 = vunpack.c.l.bf16 %v86
  %v89 = vmax.f32 %v83, %v87
  %v90 = vmax.f32 %v84, %v88
  %91 = vst.msk [vmem:[#allocation2 + $0x60] sm:$0xff] %vm18, %v89
  %92 = vst.msk [vmem:[#allocation2 + $0x68] sm:$0xff] %vm18, %v90
  %v93 = vld [vmem:[%s0 + $0x70] sm:$0xf]
  %v94 = vld [vmem:[%s0 + $0x74] sm:$0xf]
  %v95 = vunpack.c.l.bf16 %v93
  %v96 = vunpack.c.l.bf16 %v94
  %v97 = vld [vmem:[%s0 + $0x78] sm:$0xf]
  %v98 = vld [vmem:[%s0 + $0x7c] sm:$0xf]
  %v99 = vunpack.c.l.bf16 %v97
  %v100 = vunpack.c.l.bf16 %v98
  %v101 = vmax.f32 %v95, %v99
  %v102 = vmax.f32 %v96, %v100
  %103 = vst.msk [vmem:[#allocation2 + $0x70] sm:$0xff] %vm18, %v101
  %104 = vst.msk [vmem:[#allocation2 + $0x78] sm:$0xff] %vm18, %v102
  %v105 = vld [vmem:[%s0 + $0x80] sm:$0xf]
  %v106 = vld [vmem:[%s0 + $0x84] sm:$0xf]
  %v107 = vunpack.c.l.bf16 %v105
  %v108 = vunpack.c.l.bf16 %v106
  %v109 = vld [vmem:[%s0 + $0x88] sm:$0xf]
  %v110 = vld [vmem:[%s0 + $0x8c] sm:$0xf]
  %v111 = vunpack.c.l.bf16 %v109
  %v112 = vunpack.c.l.bf16 %v110
  %v113 = vmax.f32 %v107, %v111
  %v114 = vmax.f32 %v108, %v112
  %115 = vst.msk [vmem:[#allocation2 + $0x80] sm:$0xff] %vm18, %v113
  %116 = vst.msk [vmem:[#allocation2 + $0x88] sm:$0xff] %vm18, %v114
  %v117 = vld [vmem:[%s0 + $0x90] sm:$0xf]
  %v118 = vld [vmem:[%s0 + $0x94] sm:$0xf]
  %v119 = vunpack.c.l.bf16 %v117
  %v120 = vunpack.c.l.bf16 %v118
  %v121 = vld [vmem:[%s0 + $0x98] sm:$0xf]
  %v122 = vld [vmem:[%s0 + $0x9c] sm:$0xf]
  %v123 = vunpack.c.l.bf16 %v121
  %v124 = vunpack.c.l.bf16 %v122
  %v125 = vmax.f32 %v119, %v123
  %v126 = vmax.f32 %v120, %v124
  %127 = vst.msk [vmem:[#allocation2 + $0x90] sm:$0xff] %vm18, %v125
  %128 = vst.msk [vmem:[#allocation2 + $0x98] sm:$0xff] %vm18, %v126
  %v129 = vld [vmem:[%s0 + $0xa0] sm:$0xf]
  %v130 = vld [vmem:[%s0 + $0xa4] sm:$0xf]
  %v131 = vunpack.c.l.bf16 %v129
  %v132 = vunpack.c.l.bf16 %v130
  %v133 = vld [vmem:[%s0 + $0xa8] sm:$0xf]
  %v134 = vld [vmem:[%s0 + $0xac] sm:$0xf]
  %v135 = vunpack.c.l.bf16 %v133
  %v136 = vunpack.c.l.bf16 %v134
  %v137 = vmax.f32 %v131, %v135
  %v138 = vmax.f32 %v132, %v136
  %139 = vst.msk [vmem:[#allocation2 + $0xa0] sm:$0xff] %vm18, %v137
  %140 = vst.msk [vmem:[#allocation2 + $0xa8] sm:$0xff] %vm18, %v138
  %v141 = vld [vmem:[%s0 + $0xb0] sm:$0xf]
  %v142 = vld [vmem:[%s0 + $0xb4] sm:$0xf]
  %v143 = vunpack.c.l.bf16 %v141
  %v144 = vunpack.c.l.bf16 %v142
  %v145 = vld [vmem:[%s0 + $0xb8] sm:$0xf]
  %v146 = vld [vmem:[%s0 + $0xbc] sm:$0xf]
  %v147 = vunpack.c.l.bf16 %v145
  %v148 = vunpack.c.l.bf16 %v146
  %v149 = vmax.f32 %v143, %v147
  %v150 = vmax.f32 %v144, %v148
  %151 = vst.msk [vmem:[#allocation2 + $0xb0] sm:$0xff] %vm18, %v149
  %152 = vst.msk [vmem:[#allocation2 + $0xb8] sm:$0xff] %vm18, %v150
  %v153 = vld [vmem:[%s0 + $0xc0] sm:$0xf]
  %v154 = vld [vmem:[%s0 + $0xc4] sm:$0xf]
  %v155 = vunpack.c.l.bf16 %v153
  %v156 = vunpack.c.l.bf16 %v154
  %v157 = vld [vmem:[%s0 + $0xc8] sm:$0xf]
  %v158 = vld [vmem:[%s0 + $0xcc] sm:$0xf]
  %v159 = vunpack.c.l.bf16 %v157
  %v160 = vunpack.c.l.bf16 %v158
  %v161 = vmax.f32 %v155, %v159
  %v162 = vmax.f32 %v156, %v160
  %163 = vst.msk [vmem:[#allocation2 + $0xc0] sm:$0xff] %vm18, %v161
  %164 = vst.msk [vmem:[#allocation2 + $0xc8] sm:$0xff] %vm18, %v162
  %v165 = vld [vmem:[%s0 + $0xd0] sm:$0xf]
  %v166 = vld [vmem:[%s0 + $0xd4] sm:$0xf]
  %v167 = vunpack.c.l.bf16 %v165
  %v168 = vunpack.c.l.bf16 %v166
  %v169 = vld [vmem:[%s0 + $0xd8] sm:$0xf]
  %v170 = vld [vmem:[%s0 + $0xdc] sm:$0xf]
  %v171 = vunpack.c.l.bf16 %v169
  %v172 = vunpack.c.l.bf16 %v170
  %v173 = vmax.f32 %v167, %v171
  %v174 = vmax.f32 %v168, %v172
  %175 = vst.msk [vmem:[#allocation2 + $0xd0] sm:$0xff] %vm18, %v173
  %176 = vst.msk [vmem:[#allocation2 + $0xd8] sm:$0xff] %vm18, %v174
  %v177 = vld [vmem:[%s0 + $0xe0] sm:$0xf]
  %v178 = vld [vmem:[%s0 + $0xe4] sm:$0xf]
  %v179 = vunpack.c.l.bf16 %v177
  %v180 = vunpack.c.l.bf16 %v178
  %v181 = vld [vmem:[%s0 + $0xe8] sm:$0xf]
  %v182 = vld [vmem:[%s0 + $0xec] sm:$0xf]
  %v183 = vunpack.c.l.bf16 %v181
  %v184 = vunpack.c.l.bf16 %v182
  %v185 = vmax.f32 %v179, %v183
  %v186 = vmax.f32 %v180, %v184
  %187 = vst.msk [vmem:[#allocation2 + $0xe0] sm:$0xff] %vm18, %v185
  %188 = vst.msk [vmem:[#allocation2 + $0xe8] sm:$0xff] %vm18, %v186
  %v189 = vld [vmem:[%s0 + $0xf0] sm:$0xf]
  %v190 = vld [vmem:[%s0 + $0xf4] sm:$0xf]
  %v191 = vunpack.c.l.bf16 %v189
  %v192 = vunpack.c.l.bf16 %v190
  %v193 = vld [vmem:[%s0 + $0xf8] sm:$0xf]
  %v194 = vld [vmem:[%s0 + $0xfc] sm:$0xf]
  %v195 = vunpack.c.l.bf16 %v193
  %v196 = vunpack.c.l.bf16 %v194
  %v197 = vmax.f32 %v191, %v195
  %v198 = vmax.f32 %v192, %v196
  %199 = vst.msk [vmem:[#allocation2 + $0xf0] sm:$0xff] %vm18, %v197
  %200 = vst.msk [vmem:[#allocation2 + $0xf8] sm:$0xff] %vm18, %v198
  %v201 = vld [vmem:[#allocation2] ss:$2 sm:$0xff]
  %s202 = scalar_lea.vmem [#allocation2], 16
  %v203 = vld [vmem:[%s202] ss:$2 sm:$0xff]
  %s204 = scalar_lea.vmem [#allocation2], 32
  %v205 = vld [vmem:[%s204] ss:$2 sm:$0xff]
  %s206 = scalar_lea.vmem [#allocation2], 48
  %v207 = vld [vmem:[%s206] ss:$2 sm:$0xff]
  %s208 = scalar_lea.vmem [#allocation2], 64
  %v209 = vld [vmem:[%s208] ss:$2 sm:$0xff]
  %s210 = scalar_lea.vmem [#allocation2], 80
  %v211 = vld [vmem:[%s210] ss:$2 sm:$0xff]
  %s212 = scalar_lea.vmem [#allocation2], 96
  %v213 = vld [vmem:[%s212] ss:$2 sm:$0xff]
  %s214 = scalar_lea.vmem [#allocation2], 112
  %v215 = vld [vmem:[%s214] ss:$2 sm:$0xff]
  %s216 = scalar_lea.vmem [#allocation2], 128
  %v217 = vld [vmem:[%s216] ss:$2 sm:$0xff]
  %s218 = scalar_lea.vmem [#allocation2], 144
  %v219 = vld [vmem:[%s218] ss:$2 sm:$0xff]
  %s220 = scalar_lea.vmem [#allocation2], 160
  %v221 = vld [vmem:[%s220] ss:$2 sm:$0xff]
  %s222 = scalar_lea.vmem [#allocation2], 176
  %v223 = vld [vmem:[%s222] ss:$2 sm:$0xff]
  %s224 = scalar_lea.vmem [#allocation2], 192
  %v225 = vld [vmem:[%s224] ss:$2 sm:$0xff]
  %s226 = scalar_lea.vmem [#allocation2], 208
  %v227 = vld [vmem:[%s226] ss:$2 sm:$0xff]
  %s228 = scalar_lea.vmem [#allocation2], 224
  %v229 = vld [vmem:[%s228] ss:$2 sm:$0xff]
  %s230 = scalar_lea.vmem [#allocation2], 240
  %v231 = vld [vmem:[%s230] ss:$2 sm:$0xff]
  %s232 = scalar_lea.vmem [#allocation2], 1
  %v233 = vld [vmem:[%s232] ss:$2 sm:$0xff]
  %s234 = scalar_lea.vmem [#allocation2], 17
  %v235 = vld [vmem:[%s234] ss:$2 sm:$0xff]
  %s236 = scalar_lea.vmem [#allocation2], 33
  %v237 = vld [vmem:[%s236] ss:$2 sm:$0xff]
  %s238 = scalar_lea.vmem [#allocation2], 49
  %v239 = vld [vmem:[%s238] ss:$2 sm:$0xff]
  %s240 = scalar_lea.vmem [#allocation2], 65
  %v241 = vld [vmem:[%s240] ss:$2 sm:$0xff]
  %s242 = scalar_lea.vmem [#allocation2], 81
  %v243 = vld [vmem:[%s242] ss:$2 sm:$0xff]
  %s244 = scalar_lea.vmem [#allocation2], 97
  %v245 = vld [vmem:[%s244] ss:$2 sm:$0xff]
  %s246 = scalar_lea.vmem [#allocation2], 113
  %v247 = vld [vmem:[%s246] ss:$2 sm:$0xff]
  %s248 = scalar_lea.vmem [#allocation2], 129
  %v249 = vld [vmem:[%s248] ss:$2 sm:$0xff]
  %s250 = scalar_lea.vmem [#allocation2], 145
  %v251 = vld [vmem:[%s250] ss:$2 sm:$0xff]
  %s252 = scalar_lea.vmem [#allocation2], 161
  %v253 = vld [vmem:[%s252] ss:$2 sm:$0xff]
  %s254 = scalar_lea.vmem [#allocation2], 177
  %v255 = vld [vmem:[%s254] ss:$2 sm:$0xff]
  %s256 = scalar_lea.vmem [#allocation2], 193
  %v257 = vld [vmem:[%s256] ss:$2 sm:$0xff]
  %s258 = scalar_lea.vmem [#allocation2], 209
  %v259 = vld [vmem:[%s258] ss:$2 sm:$0xff]
  %s260 = scalar_lea.vmem [#allocation2], 225
  %v261 = vld [vmem:[%s260] ss:$2 sm:$0xff]
  %s262 = scalar_lea.vmem [#allocation2], 241
  %v263 = vld [vmem:[%s262] ss:$2 sm:$0xff]
  %v264 = vmax.f32 %v201, %v233
  %v265 = vmax.f32 %v203, %v235
  %v266 = vmax.f32 %v205, %v237
  %v267 = vmax.f32 %v207, %v239
  %v268 = vmax.f32 %v209, %v241
  %v269 = vmax.f32 %v211, %v243
  %v270 = vmax.f32 %v213, %v245
  %v271 = vmax.f32 %v215, %v247
  %v272 = vmax.f32 %v217, %v249
  %v273 = vmax.f32 %v219, %v251
  %v274 = vmax.f32 %v221, %v253
  %v275 = vmax.f32 %v223, %v255
  %v276 = vmax.f32 %v225, %v257
  %v277 = vmax.f32 %v227, %v259
  %v278 = vmax.f32 %v229, %v261
  %v279 = vmax.f32 %v231, %v263
  %v280 = vpack.c.bf16 %v265, %v264
  %v281 = vpack.c.bf16 %v267, %v266
  %v282 = vpack.c.bf16 %v269, %v268
  %v283 = vpack.c.bf16 %v271, %v270
  %v284 = vpack.c.bf16 %v273, %v272
  %v285 = vpack.c.bf16 %v275, %v274
  %v286 = vpack.c.bf16 %v277, %v276
  %v287 = vpack.c.bf16 %v279, %v278
  %v296 = vunpack.c.l.b16 %v280
  %v297 = vunpack.c.h.b16 %v280
  %v298 = vunpack.c.l.b16 %v281
  %v299 = vunpack.c.h.b16 %v281
  %v300 = vunpack.c.l.b16 %v282
  %v301 = vunpack.c.h.b16 %v282
  %v302 = vunpack.c.l.b16 %v283
  %v303 = vunpack.c.h.b16 %v283
  %v304 = vunpack.c.l.b16 %v284
  %v305 = vunpack.c.h.b16 %v284
  %v306 = vunpack.c.l.b16 %v285
  %v307 = vunpack.c.h.b16 %v285
  %v308 = vunpack.c.l.b16 %v286
  %v309 = vunpack.c.h.b16 %v286
  %v310 = vunpack.c.l.b16 %v287
  %v311 = vunpack.c.h.b16 %v287
  %v312 = vpack.c.b16 %v296, %v296
  %v313 = vpack.c.b16 %v297, %v297
  %v314 = vpack.c.b16 %v298, %v298
  %v315 = vpack.c.b16 %v299, %v299
  %v316 = vpack.c.b16 %v300, %v300
  %v317 = vpack.c.b16 %v301, %v301
  %v318 = vpack.c.b16 %v302, %v302
  %v319 = vpack.c.b16 %v303, %v303
  %v320 = vpack.c.b16 %v304, %v304
  %v321 = vpack.c.b16 %v305, %v305
  %v322 = vpack.c.b16 %v306, %v306
  %v323 = vpack.c.b16 %v307, %v307
  %v324 = vpack.c.b16 %v308, %v308
  %v325 = vpack.c.b16 %v309, %v309
  %v326 = vpack.c.b16 %v310, %v310
  %v327 = vpack.c.b16 %v311, %v311
  %vm344 = vcmask 125952
  %345 = vst.msk [vmem:[%s1] sm:$0xf] %vm344, %v312
  %346 = vst.msk [vmem:[%s1 + $0x4] sm:$0xf] %vm344, %v313
  %347 = vst.msk [vmem:[%s1 + $0x8] sm:$0xf] %vm344, %v314
  %348 = vst.msk [vmem:[%s1 + $0xc] sm:$0xf] %vm344, %v315
  %349 = vst.msk [vmem:[%s1 + $0x10] sm:$0xf] %vm344, %v316
  %350 = vst.msk [vmem:[%s1 + $0x14] sm:$0xf] %vm344, %v317
  %351 = vst.msk [vmem:[%s1 + $0x18] sm:$0xf] %vm344, %v318
  %352 = vst.msk [vmem:[%s1 + $0x1c] sm:$0xf] %vm344, %v319
  %353 = vst.msk [vmem:[%s1 + $0x20] sm:$0xf] %vm344, %v320
  %354 = vst.msk [vmem:[%s1 + $0x24] sm:$0xf] %vm344, %v321
  %355 = vst.msk [vmem:[%s1 + $0x28] sm:$0xf] %vm344, %v322
  %356 = vst.msk [vmem:[%s1 + $0x2c] sm:$0xf] %vm344, %v323
  %357 = vst.msk [vmem:[%s1 + $0x30] sm:$0xf] %vm344, %v324
  %358 = vst.msk [vmem:[%s1 + $0x34] sm:$0xf] %vm344, %v325
  %359 = vst.msk [vmem:[%s1 + $0x38] sm:$0xf] %vm344, %v326
  %360 = vst.msk [vmem:[%s1 + $0x3c] sm:$0xf] %vm344, %v327
  // Predicated region
  $region6: #{_lambda_.9} parent=0 // pred_check
    _
  $region7: #{_lambda_.9} parent=0 // pred_check_branch
    %362 = sbr.rel (0) target = $region9
  $region8: #{_lambda_.9} parent=0 // pred_region
    _
  $region9: #{_lambda_.9} parent=0 // pred_fallthru
    _
  // Predicated region
  $region10: #{_lambda_.9} parent=0 // pred_check
    _
  $region11: #{_lambda_.9} parent=0 // pred_check_branch
    %364 = sbr.rel (0) target = $region13
  $region12: #{_lambda_.9} parent=0 // pred_region
    _
  $region13: #{_lambda_.9} parent=0 // pred_fallthru
    _

// kernel: _lambda_.8
$region0: #{_lambda_.8}
  #allocation0 [shape = 'u32[]', space=smem, size = 0x4, offset = 0x4, fixed_abs, tag = 'smem constant byte address 0x4 - core index']
  #allocation1 [shape = 'u32[144,128]{1,0:T(1,128)}', space=vmem, size = 0x12000, scoped, tag = 'internal scratch']
  #allocation2 [shape = 'f32[512,16]{1,0:T(8,128)}', space=vmem, size = 0x40000, scoped, tag = 'scratch operand']
  %s0 = inlined_call_operand.vmem [shape: bf16[512,64], index: 0, kind: input, shape index: {}]
  %s1 = inlined_call_operand.vmem [shape: bf16[64,16], index: 1, kind: input, shape index: {}]
  %s2 = inlined_call_operand.vmem [shape: f32[1,16], index: 2, kind: input, shape index: {}]
  %s3 = inlined_call_operand.vmem [shape: f32[1,16], index: 3, kind: input, shape index: {}]
  %s4 = inlined_call_operand.vmem [shape: bf16[512,16], index: 4, kind: output, shape index: {}]
  %s5 = sld [smem:[#allocation0]]
  $region34: #{_lambda_.8} parent=0
    _
  %s7 = ssub.s32 1, %s5
  %s8 = scalar_select 0, %s7, %s5
  // Predicated region
  $region2: #{_lambda_.8} parent=0 // pred_check
    _
  $region3: #{_lambda_.8} parent=0 // pred_check_branch
    %10 = sbr.rel (0) target = $region5
  $region4: #{_lambda_.8} parent=0 // pred_region
    _
  $region5: #{_lambda_.8} parent=0 // pred_fallthru
    _
  // Predicated region
  $region6: #{_lambda_.8} parent=0 // pred_check
    _
  $region7: #{_lambda_.8} parent=0 // pred_check_branch
    %12 = sbr.rel (0) target = $region9
  $region8: #{_lambda_.8} parent=0 // pred_region
    _
  $region9: #{_lambda_.8} parent=0 // pred_fallthru
    _
  // Predicated region
  $region10: #{_lambda_.8} parent=0 // pred_check
    _
  $region11: #{_lambda_.8} parent=0 // pred_check_branch
    %14 = sbr.rel (0) target = $region13
  $region12: #{_lambda_.8} parent=0 // pred_region
    _
  $region13: #{_lambda_.8} parent=0 // pred_fallthru
    _
  // Predicated region
  $region14: #{_lambda_.8} parent=0 // pred_check
    _
  $region15: #{_lambda_.8} parent=0 // pred_check_branch
    %16 = sbr.rel (0) target = $region17
  $region16: #{_lambda_.8} parent=0 // pred_region
    _
  $region17: #{_lambda_.8} parent=0 // pred_fallthru
    _
  %p18 = scmp.eq.s32.totalorder 0, 0
  // Predicated region
  $region18: #{_lambda_.8} parent=0 // pred_check
    %p19 = pneg %p18
  $region19: #{_lambda_.8} parent=0 // pred_check_branch
    %21 = sbr.rel (%p19) target = $region21
  $region20: #{_lambda_.8} parent=0 // pred_region
    %vm22 = vcmask 130048
    %23 = vst.msk [vmem:[#allocation2] sm:$0xff] %vm22, 0.0
    %24 = vst.msk [vmem:[#allocation2 + $0x8] sm:$0xff] %vm22, 0.0
    %25 = vst.msk [vmem:[#allocation2 + $0x10] sm:$0xff] %vm22, 0.0
    %26 = vst.msk [vmem:[#allocation2 + $0x18] sm:$0xff] %vm22, 0.0
    %27 = vst.msk [vmem:[#allocation2 + $0x20] sm:$0xff] %vm22, 0.0
    %28 = vst.msk [vmem:[#allocation2 + $0x28] sm:$0xff] %vm22, 0.0
    %29 = vst.msk [vmem:[#allocation2 + $0x30] sm:$0xff] %vm22, 0.0
    %30 = vst.msk [vmem:[#allocation2 + $0x38] sm:$0xff] %vm22, 0.0
    %31 = vst.msk [vmem:[#allocation2 + $0x40] sm:$0xff] %vm22, 0.0
    %32 = vst.msk [vmem:[#allocation2 + $0x48] sm:$0xff] %vm22, 0.0
    %33 = vst.msk [vmem:[#allocation2 + $0x50] sm:$0xff] %vm22, 0.0
    %34 = vst.msk [vmem:[#allocation2 + $0x58] sm:$0xff] %vm22, 0.0
    %35 = vst.msk [vmem:[#allocation2 + $0x60] sm:$0xff] %vm22, 0.0
    %36 = vst.msk [vmem:[#allocation2 + $0x68] sm:$0xff] %vm22, 0.0
    %37 = vst.msk [vmem:[#allocation2 + $0x70] sm:$0xff] %vm22, 0.0
    %38 = vst.msk [vmem:[#allocation2 + $0x78] sm:$0xff] %vm22, 0.0
    %39 = vst.msk [vmem:[#allocation2 + $0x80] sm:$0xff] %vm22, 0.0
    %40 = vst.msk [vmem:[#allocation2 + $0x88] sm:$0xff] %vm22, 0.0
    %41 = vst.msk [vmem:[#allocation2 + $0x90] sm:$0xff] %vm22, 0.0
    %42 = vst.msk [vmem:[#allocation2 + $0x98] sm:$0xff] %vm22, 0.0
    %43 = vst.msk [vmem:[#allocation2 + $0xa0] sm:$0xff] %vm22, 0.0
    %44 = vst.msk [vmem:[#allocation2 + $0xa8] sm:$0xff] %vm22, 0.0
    %45 = vst.msk [vmem:[#allocation2 + $0xb0] sm:$0xff] %vm22, 0.0
    %46 = vst.msk [vmem:[#allocation2 + $0xb8] sm:$0xff] %vm22, 0.0
    %47 = vst.msk [vmem:[#allocation2 + $0xc0] sm:$0xff] %vm22, 0.0
    %48 = vst.msk [vmem:[#allocation2 + $0xc8] sm:$0xff] %vm22, 0.0
    %49 = vst.msk [vmem:[#allocation2 + $0xd0] sm:$0xff] %vm22, 0.0
    %50 = vst.msk [vmem:[#allocation2 + $0xd8] sm:$0xff] %vm22, 0.0
    %51 = vst.msk [vmem:[#allocation2 + $0xe0] sm:$0xff] %vm22, 0.0
    %52 = vst.msk [vmem:[#allocation2 + $0xe8] sm:$0xff] %vm22, 0.0
    %53 = vst.msk [vmem:[#allocation2 + $0xf0] sm:$0xff] %vm22, 0.0
    %54 = vst.msk [vmem:[#allocation2 + $0xf8] sm:$0xff] %vm22, 0.0
    %55 = vst.msk [vmem:[#allocation2 + $0x100] sm:$0xff] %vm22, 0.0
    %56 = vst.msk [vmem:[#allocation2 + $0x108] sm:$0xff] %vm22, 0.0
    %57 = vst.msk [vmem:[#allocation2 + $0x110] sm:$0xff] %vm22, 0.0
    %58 = vst.msk [vmem:[#allocation2 + $0x118] sm:$0xff] %vm22, 0.0
    %59 = vst.msk [vmem:[#allocation2 + $0x120] sm:$0xff] %vm22, 0.0
    %60 = vst.msk [vmem:[#allocation2 + $0x128] sm:$0xff] %vm22, 0.0
    %61 = vst.msk [vmem:[#allocation2 + $0x130] sm:$0xff] %vm22, 0.0
    %62 = vst.msk [vmem:[#allocation2 + $0x138] sm:$0xff] %vm22, 0.0
    %63 = vst.msk [vmem:[#allocation2 + $0x140] sm:$0xff] %vm22, 0.0
    %64 = vst.msk [vmem:[#allocation2 + $0x148] sm:$0xff] %vm22, 0.0
    %65 = vst.msk [vmem:[#allocation2 + $0x150] sm:$0xff] %vm22, 0.0
    %66 = vst.msk [vmem:[#allocation2 + $0x158] sm:$0xff] %vm22, 0.0
    %67 = vst.msk [vmem:[#allocation2 + $0x160] sm:$0xff] %vm22, 0.0
    %68 = vst.msk [vmem:[#allocation2 + $0x168] sm:$0xff] %vm22, 0.0
    %69 = vst.msk [vmem:[#allocation2 + $0x170] sm:$0xff] %vm22, 0.0
    %70 = vst.msk [vmem:[#allocation2 + $0x178] sm:$0xff] %vm22, 0.0
    %71 = vst.msk [vmem:[#allocation2 + $0x180] sm:$0xff] %vm22, 0.0
    %72 = vst.msk [vmem:[#allocation2 + $0x188] sm:$0xff] %vm22, 0.0
    %73 = vst.msk [vmem:[#allocation2 + $0x190] sm:$0xff] %vm22, 0.0
    %74 = vst.msk [vmem:[#allocation2 + $0x198] sm:$0xff] %vm22, 0.0
    %75 = vst.msk [vmem:[#allocation2 + $0x1a0] sm:$0xff] %vm22, 0.0
    %76 = vst.msk [vmem:[#allocation2 + $0x1a8] sm:$0xff] %vm22, 0.0
    %77 = vst.msk [vmem:[#allocation2 + $0x1b0] sm:$0xff] %vm22, 0.0
    %78 = vst.msk [vmem:[#allocation2 + $0x1b8] sm:$0xff] %vm22, 0.0
    %79 = vst.msk [vmem:[#allocation2 + $0x1c0] sm:$0xff] %vm22, 0.0
    %80 = vst.msk [vmem:[#allocation2 + $0x1c8] sm:$0xff] %vm22, 0.0
    %81 = vst.msk [vmem:[#allocation2 + $0x1d0] sm:$0xff] %vm22, 0.0
    %82 = vst.msk [vmem:[#allocation2 + $0x1d8] sm:$0xff] %vm22, 0.0
    %83 = vst.msk [vmem:[#allocation2 + $0x1e0] sm:$0xff] %vm22, 0.0
    %84 = vst.msk [vmem:[#allocation2 + $0x1e8] sm:$0xff] %vm22, 0.0
    %85 = vst.msk [vmem:[#allocation2 + $0x1f0] sm:$0xff] %vm22, 0.0
    %86 = vst.msk [vmem:[#allocation2 + $0x1f8] sm:$0xff] %vm22, 0.0
  $region21: #{_lambda_.8} parent=0 // pred_fallthru
    _
  %v87 = vld [vmem:[#allocation2] sm:$0xff]
  %v88 = vld [vmem:[#allocation2 + $0x8] sm:$0xff]
  %v89 = vld [vmem:[#allocation2 + $0x10] sm:$0xff]
  %v90 = vld [vmem:[#allocation2 + $0x18] sm:$0xff]
  %v91 = vld [vmem:[#allocation2 + $0x20] sm:$0xff]
  %v92 = vld [vmem:[#allocation2 + $0x28] sm:$0xff]
  %v93 = vld [vmem:[#allocation2 + $0x30] sm:$0xff]
  %v94 = vld [vmem:[#allocation2 + $0x38] sm:$0xff]
  %v95 = vld [vmem:[#allocation2 + $0x40] sm:$0xff]
  %v96 = vld [vmem:[#allocation2 + $0x48] sm:$0xff]
  %v97 = vld [vmem:[#allocation2 + $0x50] sm:$0xff]
  %v98 = vld [vmem:[#allocation2 + $0x58] sm:$0xff]
  %v99 = vld [vmem:[#allocation2 + $0x60] sm:$0xff]
  %v100 = vld [vmem:[#allocation2 + $0x68] sm:$0xff]
  %v101 = vld [vmem:[#allocation2 + $0x70] sm:$0xff]
  %v102 = vld [vmem:[#allocation2 + $0x78] sm:$0xff]
  %v103 = vld [vmem:[#allocation2 + $0x80] sm:$0xff]
  %v104 = vld [vmem:[#allocation2 + $0x88] sm:$0xff]
  %v105 = vld [vmem:[#allocation2 + $0x90] sm:$0xff]
  %v106 = vld [vmem:[#allocation2 + $0x98] sm:$0xff]
  %v107 = vld [vmem:[#allocation2 + $0xa0] sm:$0xff]
  %v108 = vld [vmem:[#allocation2 + $0xa8] sm:$0xff]
  %v109 = vld [vmem:[#allocation2 + $0xb0] sm:$0xff]
  %v110 = vld [vmem:[#allocation2 + $0xb8] sm:$0xff]
  %v111 = vld [vmem:[#allocation2 + $0xc0] sm:$0xff]
  %v112 = vld [vmem:[#allocation2 + $0xc8] sm:$0xff]
  %v113 = vld [vmem:[#allocation2 + $0xd0] sm:$0xff]
  %v114 = vld [vmem:[#allocation2 + $0xd8] sm:$0xff]
  %v115 = vld [vmem:[#allocation2 + $0xe0] sm:$0xff]
  %v116 = vld [vmem:[#allocation2 + $0xe8] sm:$0xff]
  %v117 = vld [vmem:[#allocation2 + $0xf0] sm:$0xff]
  %v118 = vld [vmem:[#allocation2 + $0xf8] sm:$0xff]
  %v119 = vld [vmem:[#allocation2 + $0x100] sm:$0xff]
  %v120 = vld [vmem:[#allocation2 + $0x108] sm:$0xff]
  %v121 = vld [vmem:[#allocation2 + $0x110] sm:$0xff]
  %v122 = vld [vmem:[#allocation2 + $0x118] sm:$0xff]
  %v123 = vld [vmem:[#allocation2 + $0x120] sm:$0xff]
  %v124 = vld [vmem:[#allocation2 + $0x128] sm:$0xff]
  %v125 = vld [vmem:[#allocation2 + $0x130] sm:$0xff]
  %v126 = vld [vmem:[#allocation2 + $0x138] sm:$0xff]
  %v127 = vld [vmem:[#allocation2 + $0x140] sm:$0xff]
  %v128 = vld [vmem:[#allocation2 + $0x148] sm:$0xff]
  %v129 = vld [vmem:[#allocation2 + $0x150] sm:$0xff]
  %v130 = vld [vmem:[#allocation2 + $0x158] sm:$0xff]
  %v131 = vld [vmem:[#allocation2 + $0x160] sm:$0xff]
  %v132 = vld [vmem:[#allocation2 + $0x168] sm:$0xff]
  %v133 = vld [vmem:[#allocation2 + $0x170] sm:$0xff]
  %v134 = vld [vmem:[#allocation2 + $0x178] sm:$0xff]
  %v135 = vld [vmem:[#allocation2 + $0x180] sm:$0xff]
  %v136 = vld [vmem:[#allocation2 + $0x188] sm:$0xff]
  %v137 = vld [vmem:[#allocation2 + $0x190] sm:$0xff]
  %v138 = vld [vmem:[#allocation2 + $0x198] sm:$0xff]
  %v139 = vld [vmem:[#allocation2 + $0x1a0] sm:$0xff]
  %v140 = vld [vmem:[#allocation2 + $0x1a8] sm:$0xff]
  %v141 = vld [vmem:[#allocation2 + $0x1b0] sm:$0xff]
  %v142 = vld [vmem:[#allocation2 + $0x1b8] sm:$0xff]
  %v143 = vld [vmem:[#allocation2 + $0x1c0] sm:$0xff]
  %v144 = vld [vmem:[#allocation2 + $0x1c8] sm:$0xff]
  %v145 = vld [vmem:[#allocation2 + $0x1d0] sm:$0xff]
  %v146 = vld [vmem:[#allocation2 + $0x1d8] sm:$0xff]
  %v147 = vld [vmem:[#allocation2 + $0x1e0] sm:$0xff]
  %v148 = vld [vmem:[#allocation2 + $0x1e8] sm:$0xff]
  %v149 = vld [vmem:[#allocation2 + $0x1f0] sm:$0xff]
  %v150 = vld [vmem:[#allocation2 + $0x1f8] sm:$0xff]
  %v151 = vld [vmem:[%s0] sm:$0xf]
  %v152 = vld [vmem:[%s0 + $0x4] sm:$0xf]
  %v153 = vld [vmem:[%s0 + $0x8] sm:$0xf]
  %v154 = vld [vmem:[%s0 + $0xc] sm:$0xf]
  %v155 = vld [vmem:[%s0 + $0x10] sm:$0xf]
  %v156 = vld [vmem:[%s0 + $0x14] sm:$0xf]
  %v157 = vld [vmem:[%s0 + $0x18] sm:$0xf]
  %v158 = vld [vmem:[%s0 + $0x1c] sm:$0xf]
  %v159 = vld [vmem:[%s0 + $0x20] sm:$0xf]
  %v160 = vld [vmem:[%s0 + $0x24] sm:$0xf]
  %v161 = vld [vmem:[%s0 + $0x28] sm:$0xf]
  %v162 = vld [vmem:[%s0 + $0x2c] sm:$0xf]
  %v163 = vld [vmem:[%s0 + $0x30] sm:$0xf]
  %v164 = vld [vmem:[%s0 + $0x34] sm:$0xf]
  %v165 = vld [vmem:[%s0 + $0x38] sm:$0xf]
  %v166 = vld [vmem:[%s0 + $0x3c] sm:$0xf]
  %v167 = vld [vmem:[%s0 + $0x40] sm:$0xf]
  %v168 = vld [vmem:[%s0 + $0x44] sm:$0xf]
  %v169 = vld [vmem:[%s0 + $0x48] sm:$0xf]
  %v170 = vld [vmem:[%s0 + $0x4c] sm:$0xf]
  %v171 = vld [vmem:[%s0 + $0x50] sm:$0xf]
  %v172 = vld [vmem:[%s0 + $0x54] sm:$0xf]
  %v173 = vld [vmem:[%s0 + $0x58] sm:$0xf]
  %v174 = vld [vmem:[%s0 + $0x5c] sm:$0xf]
  %v175 = vld [vmem:[%s0 + $0x60] sm:$0xf]
  %v176 = vld [vmem:[%s0 + $0x64] sm:$0xf]
  %v177 = vld [vmem:[%s0 + $0x68] sm:$0xf]
  %v178 = vld [vmem:[%s0 + $0x6c] sm:$0xf]
  %v179 = vld [vmem:[%s0 + $0x70] sm:$0xf]
  %v180 = vld [vmem:[%s0 + $0x74] sm:$0xf]
  %v181 = vld [vmem:[%s0 + $0x78] sm:$0xf]
  %v182 = vld [vmem:[%s0 + $0x7c] sm:$0xf]
  %v183 = vld [vmem:[%s0 + $0x80] sm:$0xf]
  %v184 = vld [vmem:[%s0 + $0x84] sm:$0xf]
  %v185 = vld [vmem:[%s0 + $0x88] sm:$0xf]
  %v186 = vld [vmem:[%s0 + $0x8c] sm:$0xf]
  %v187 = vld [vmem:[%s0 + $0x90] sm:$0xf]
  %v188 = vld [vmem:[%s0 + $0x94] sm:$0xf]
  %v189 = vld [vmem:[%s0 + $0x98] sm:$0xf]
  %v190 = vld [vmem:[%s0 + $0x9c] sm:$0xf]
  %v191 = vld [vmem:[%s0 + $0xa0] sm:$0xf]
  %v192 = vld [vmem:[%s0 + $0xa4] sm:$0xf]
  %v193 = vld [vmem:[%s0 + $0xa8] sm:$0xf]
  %v194 = vld [vmem:[%s0 + $0xac] sm:$0xf]
  %v195 = vld [vmem:[%s0 + $0xb0] sm:$0xf]
  %v196 = vld [vmem:[%s0 + $0xb4] sm:$0xf]
  %v197 = vld [vmem:[%s0 + $0xb8] sm:$0xf]
  %v198 = vld [vmem:[%s0 + $0xbc] sm:$0xf]
  %v199 = vld [vmem:[%s0 + $0xc0] sm:$0xf]
  %v200 = vld [vmem:[%s0 + $0xc4] sm:$0xf]
  %v201 = vld [vmem:[%s0 + $0xc8] sm:$0xf]
  %v202 = vld [vmem:[%s0 + $0xcc] sm:$0xf]
  %v203 = vld [vmem:[%s0 + $0xd0] sm:$0xf]
  %v204 = vld [vmem:[%s0 + $0xd4] sm:$0xf]
  %v205 = vld [vmem:[%s0 + $0xd8] sm:$0xf]
  %v206 = vld [vmem:[%s0 + $0xdc] sm:$0xf]
  %v207 = vld [vmem:[%s0 + $0xe0] sm:$0xf]
  %v208 = vld [vmem:[%s0 + $0xe4] sm:$0xf]
  %v209 = vld [vmem:[%s0 + $0xe8] sm:$0xf]
  %v210 = vld [vmem:[%s0 + $0xec] sm:$0xf]
  %v211 = vld [vmem:[%s0 + $0xf0] sm:$0xf]
  %v212 = vld [vmem:[%s0 + $0xf4] sm:$0xf]
  %v213 = vld [vmem:[%s0 + $0xf8] sm:$0xf]
  %v214 = vld [vmem:[%s0 + $0xfc] sm:$0xf]
  %v215 = vld [vmem:[%s1] sm:$0xf]
  %v216 = vld [vmem:[%s1 + $0x4] sm:$0xf]
  %v217 = vld [vmem:[%s1 + $0x8] sm:$0xf]
  %v218 = vld [vmem:[%s1 + $0xc] sm:$0xf]
  %v219 = vld [vmem:[%s1 + $0x10] sm:$0xf]
  %v220 = vld [vmem:[%s1 + $0x14] sm:$0xf]
  %v221 = vld [vmem:[%s1 + $0x18] sm:$0xf]
  %v222 = vld [vmem:[%s1 + $0x1c] sm:$0xf]
  %v287 = vunpack.c.l.b16 %v151
  %v288 = vunpack.c.l.b16 %v152
  %v289 = vunpack.c.l.b16 %v153
  %v290 = vunpack.c.l.b16 %v154
  %v291 = vunpack.c.l.b16 %v155
  %v292 = vunpack.c.l.b16 %v156
  %v293 = vunpack.c.l.b16 %v157
  %v294 = vunpack.c.l.b16 %v158
  %v295 = vunpack.c.l.b16 %v159
  %v296 = vunpack.c.l.b16 %v160
  %v297 = vunpack.c.l.b16 %v161
  %v298 = vunpack.c.l.b16 %v162
  %v299 = vunpack.c.l.b16 %v163
  %v300 = vunpack.c.l.b16 %v164
  %v301 = vunpack.c.l.b16 %v165
  %v302 = vunpack.c.l.b16 %v166
  %v303 = vunpack.c.l.b16 %v167
  %v304 = vunpack.c.l.b16 %v168
  %v305 = vunpack.c.l.b16 %v169
  %v306 = vunpack.c.l.b16 %v170
  %v307 = vunpack.c.l.b16 %v171
  %v308 = vunpack.c.l.b16 %v172
  %v309 = vunpack.c.l.b16 %v173
  %v310 = vunpack.c.l.b16 %v174
  %v311 = vunpack.c.l.b16 %v175
  %v312 = vunpack.c.l.b16 %v176
  %v313 = vunpack.c.l.b16 %v177
  %v314 = vunpack.c.l.b16 %v178
  %v315 = vunpack.c.l.b16 %v179
  %v316 = vunpack.c.l.b16 %v180
  %v317 = vunpack.c.l.b16 %v181
  %v318 = vunpack.c.l.b16 %v182
  %v319 = vunpack.c.l.b16 %v183
  %v320 = vunpack.c.l.b16 %v184
  %v321 = vunpack.c.l.b16 %v185
  %v322 = vunpack.c.l.b16 %v186
  %v323 = vunpack.c.l.b16 %v187
  %v324 = vunpack.c.l.b16 %v188
  %v325 = vunpack.c.l.b16 %v189
  %v326 = vunpack.c.l.b16 %v190
  %v327 = vunpack.c.l.b16 %v191
  %v328 = vunpack.c.l.b16 %v192
  %v329 = vunpack.c.l.b16 %v193
  %v330 = vunpack.c.l.b16 %v194
  %v331 = vunpack.c.l.b16 %v195
  %v332 = vunpack.c.l.b16 %v196
  %v333 = vunpack.c.l.b16 %v197
  %v334 = vunpack.c.l.b16 %v198
  %v335 = vunpack.c.l.b16 %v199
  %v336 = vunpack.c.l.b16 %v200
  %v337 = vunpack.c.l.b16 %v201
  %v338 = vunpack.c.l.b16 %v202
  %v339 = vunpack.c.l.b16 %v203
  %v340 = vunpack.c.l.b16 %v204
  %v341 = vunpack.c.l.b16 %v205
  %v342 = vunpack.c.l.b16 %v206
  %v343 = vunpack.c.l.b16 %v207
  %v344 = vunpack.c.l.b16 %v208
  %v345 = vunpack.c.l.b16 %v209
  %v346 = vunpack.c.l.b16 %v210
  %v347 = vunpack.c.l.b16 %v211
  %v348 = vunpack.c.l.b16 %v212
  %v349 = vunpack.c.l.b16 %v213
  %v350 = vunpack.c.l.b16 %v214
  %v351 = vpack.c.b16 %v288, %v287
  %v352 = vpack.c.b16 %v290, %v289
  %v353 = vpack.c.b16 %v292, %v291
  %v354 = vpack.c.b16 %v294, %v293
  %v355 = vpack.c.b16 %v296, %v295
  %v356 = vpack.c.b16 %v298, %v297
  %v357 = vpack.c.b16 %v300, %v299
  %v358 = vpack.c.b16 %v302, %v301
  %v359 = vpack.c.b16 %v304, %v303
  %v360 = vpack.c.b16 %v306, %v305
  %v361 = vpack.c.b16 %v308, %v307
  %v362 = vpack.c.b16 %v310, %v309
  %v363 = vpack.c.b16 %v312, %v311
  %v364 = vpack.c.b16 %v314, %v313
  %v365 = vpack.c.b16 %v316, %v315
  %v366 = vpack.c.b16 %v318, %v317
  %v367 = vpack.c.b16 %v320, %v319
  %v368 = vpack.c.b16 %v322, %v321
  %v369 = vpack.c.b16 %v324, %v323
  %v370 = vpack.c.b16 %v326, %v325
  %v371 = vpack.c.b16 %v328, %v327
  %v372 = vpack.c.b16 %v330, %v329
  %v373 = vpack.c.b16 %v332, %v331
  %v374 = vpack.c.b16 %v334, %v333
  %v375 = vpack.c.b16 %v336, %v335
  %v376 = vpack.c.b16 %v338, %v337
  %v377 = vpack.c.b16 %v340, %v339
  %v378 = vpack.c.b16 %v342, %v341
  %v379 = vpack.c.b16 %v344, %v343
  %v380 = vpack.c.b16 %v346, %v345
  %v381 = vpack.c.b16 %v348, %v347
  %v382 = vpack.c.b16 %v350, %v349
  %v391 = vunpack.c.l.b16 %v215
  %v392 = vunpack.c.l.b16 %v216
  %v393 = vunpack.c.l.b16 %v217
  %v394 = vunpack.c.l.b16 %v218
  %v395 = vunpack.c.l.b16 %v219
  %v396 = vunpack.c.l.b16 %v220
  %v397 = vunpack.c.l.b16 %v221
  %v398 = vunpack.c.l.b16 %v222
  %v399 = vpack.c.b16 %v392, %v391
  %v400 = vpack.c.b16 %v394, %v393
  %v401 = vpack.c.b16 %v396, %v395
  %v402 = vpack.c.b16 %v398, %v397
  %vm407 = vcmask 523264
  %v409 = vsel %vm407, %v351, 0
  %v412 = vsel %vm407, %v352, 0
  %v415 = vsel %vm407, %v353, 0
  %v418 = vsel %vm407, %v354, 0
  %v421 = vsel %vm407, %v355, 0
  %v424 = vsel %vm407, %v356, 0
  %v427 = vsel %vm407, %v357, 0
  %v430 = vsel %vm407, %v358, 0
  %v433 = vsel %vm407, %v359, 0
  %v436 = vsel %vm407, %v360, 0
  %v439 = vsel %vm407, %v361, 0
  %v442 = vsel %vm407, %v362, 0
  %v445 = vsel %vm407, %v363, 0
  %v448 = vsel %vm407, %v364, 0
  %v451 = vsel %vm407, %v365, 0
  %v454 = vsel %vm407, %v366, 0
  %v457 = vsel %vm407, %v367, 0
  %v460 = vsel %vm407, %v368, 0
  %v463 = vsel %vm407, %v369, 0
  %v466 = vsel %vm407, %v370, 0
  %v469 = vsel %vm407, %v371, 0
  %v472 = vsel %vm407, %v372, 0
  %v475 = vsel %vm407, %v373, 0
  %v478 = vsel %vm407, %v374, 0
  %v481 = vsel %vm407, %v375, 0
  %v484 = vsel %vm407, %v376, 0
  %v487 = vsel %vm407, %v377, 0
  %v490 = vsel %vm407, %v378, 0
  %v493 = vsel %vm407, %v379, 0
  %v496 = vsel %vm407, %v380, 0
  %v499 = vsel %vm407, %v381, 0
  %v502 = vsel %vm407, %v382, 0
  %504 = vmatprep.subr.bf16.mxu0 0
  %505 = vmatpush1.bf16.msra.mxu0 %v399
  %506 = vmatprep.subr.bf16.mxu0 0
  %507 = vmatpush1.bf16.msra.mxu0 %v400
  %508 = vmatprep.subr.bf16.mxu0 0
  %509 = vmatpush1.bf16.msra.mxu0 %v401
  %510 = vmatprep.subr.bf16.mxu0 0
  %511 = vmatpush1.bf16.msra.mxu0 %v402
  %512 = vmatprep.subr.bf16.mxu0 0
  %513 = vmatpush1.bf16.msra.mxu0 0
  %514 = vmatprep.subr.bf16.mxu0 0
  %515 = vmatpush1.bf16.msra.mxu0 0
  %516 = vmatprep.subr.bf16.mxu0 0
  %517 = vmatpush1.bf16.msra.mxu0 0
  %518 = vmatprep.subr.bf16.mxu0 0
  %519 = vmatpush1.bf16.msra.mxu0 0
  %520 = vmatprep.subr.bf16.mxu0 0
  %521 = vmatpush1.bf16.msra.mxu0 0
  %522 = vmatprep.subr.bf16.mxu0 0
  %523 = vmatpush1.bf16.msra.mxu0 0
  %524 = vmatprep.subr.bf16.mxu0 0
  %525 = vmatpush1.bf16.msra.mxu0 0
  %526 = vmatprep.subr.bf16.mxu0 0
  %527 = vmatpush1.bf16.msra.mxu0 0
  %528 = vmatprep.subr.bf16.mxu0 0
  %529 = vmatpush1.bf16.msra.mxu0 0
  %530 = vmatprep.subr.bf16.mxu0 0
  %531 = vmatpush1.bf16.msra.mxu0 0
  %532 = vmatprep.subr.bf16.mxu0 0
  %533 = vmatpush1.bf16.msra.mxu0 0
  %534 = vmatprep.subr.bf16.mxu0 0
  %535 = vmatpush1.bf16.msra.mxu0 0
  %536 = vmatprep.mubr.bf16.mxu0 0
  %537 = vmatmul.mubr.bf16.gmra.mrb[0].mxu0 %v409
  %v538 = vpop.f32.mrb[0].mxu0
  %v539 = vadd.f32 0.0, %v538
  %v540 = vpop.f32.mrb[0].mxu0
  %v541 = vpop.f32.mrb[0].mxu0
  %v542 = vadd.f32 0.0, %v541
  %v543 = vpop.f32.mrb[0].mxu0
  %544 = vmatprep.mubr.bf16.mxu0 0
  %545 = vmatmul.mubr.bf16.gmra.mrb[0].mxu0 %v412
  %v546 = vpop.f32.mrb[0].mxu0
  %v547 = vadd.f32 0.0, %v546
  %v548 = vpop.f32.mrb[0].mxu0
  %v549 = vpop.f32.mrb[0].mxu0
  %v550 = vadd.f32 0.0, %v549
  %v551 = vpop.f32.mrb[0].mxu0
  %552 = vmatprep.mubr.bf16.mxu0 0
  %553 = vmatmul.mubr.bf16.gmra.mrb[0].mxu0 %v415
  %v554 = vpop.f32.mrb[0].mxu0
  %v555 = vadd.f32 0.0, %v554
  %v556 = vpop.f32.mrb[0].mxu0
  %v557 = vpop.f32.mrb[0].mxu0
  %v558 = vadd.f32 0.0, %v557
  %v559 = vpop.f32.mrb[0].mxu0
  %560 = vmatprep.mubr.bf16.mxu0 0
  %561 = vmatmul.mubr.bf16.gmra.mrb[0].mxu0 %v418
  %v562 = vpop.f32.mrb[0].mxu0
  %v563 = vadd.f32 0.0, %v562
  %v564 = vpop.f32.mrb[0].mxu0
  %v565 = vpop.f32.mrb[0].mxu0
  %v566 = vadd.f32 0.0, %v565
  %v567 = vpop.f32.mrb[0].mxu0
  %568 = vmatprep.mubr.bf16.mxu0 0
  %569 = vmatmul.mubr.bf16.gmra.mrb[0].mxu0 %v421
  %v570 = vpop.f32.mrb[0].mxu0
  %v571 = vadd.f32 0.0, %v570
  %v572 = vpop.f32.mrb[0].mxu0
  %v573 = vpop.f32.mrb[0].mxu0
  %v574 = vadd.f32 0.0, %v573
  %v575 = vpop.f32.mrb[0].mxu0
  %576 = vmatprep.mubr.bf16.mxu0 0
  %577 = vmatmul.mubr.bf16.gmra.mrb[0].mxu0 %v424
  %v578 = vpop.f32.mrb[0].mxu0
  %v579 = vadd.f32 0.0, %v578
  %v580 = vpop.f32.mrb[0].mxu0
  %v581 = vpop.f32.mrb[0].mxu0
  %v582 = vadd.f32 0.0, %v581
  %v583 = vpop.f32.mrb[0].mxu0
  %584 = vmatprep.mubr.bf16.mxu0 0
  %585 = vmatmul.mubr.bf16.gmra.mrb[0].mxu0 %v427
  %v586 = vpop.f32.mrb[0].mxu0
  %v587 = vadd.f32 0.0, %v586
  %v588 = vpop.f32.mrb[0].mxu0
  %v589 = vpop.f32.mrb[0].mxu0
  %v590 = vadd.f32 0.0, %v589
  %v591 = vpop.f32.mrb[0].mxu0
  %592 = vmatprep.mubr.bf16.mxu0 0
  %593 = vmatmul.mubr.bf16.gmra.mrb[0].mxu0 %v430
  %v594 = vpop.f32.mrb[0].mxu0
  %v595 = vadd.f32 0.0, %v594
  %v596 = vpop.f32.mrb[0].mxu0
  %v597 = vpop.f32.mrb[0].mxu0
  %v598 = vadd.f32 0.0, %v597
  %v599 = vpop.f32.mrb[0].mxu0
  %600 = vmatprep.mubr.bf16.mxu0 0
  %601 = vmatmul.mubr.bf16.gmra.mrb[0].mxu0 %v433
  %v602 = vpop.f32.mrb[0].mxu0
  %v603 = vadd.f32 0.0, %v602
  %v604 = vpop.f32.mrb[0].mxu0
  %v605 = vpop.f32.mrb[0].mxu0
  %v606 = vadd.f32 0.0, %v605
  %v607 = vpop.f32.mrb[0].mxu0
  %608 = vmatprep.mubr.bf16.mxu0 0
  %609 = vmatmul.mubr.bf16.gmra.mrb[0].mxu0 %v436
  %v610 = vpop.f32.mrb[0].mxu0
  %v611 = vadd.f32 0.0, %v610
  %v612 = vpop.f32.mrb[0].mxu0
  %v613 = vpop.f32.mrb[0].mxu0
  %v614 = vadd.f32 0.0, %v613
  %v615 = vpop.f32.mrb[0].mxu0
  %616 = vmatprep.mubr.bf16.mxu0 0
  %617 = vmatmul.mubr.bf16.gmra.mrb[0].mxu0 %v439
  %v618 = vpop.f32.mrb[0].mxu0
  %v619 = vadd.f32 0.0, %v618
  %v620 = vpop.f32.mrb[0].mxu0
  %v621 = vpop.f32.mrb[0].mxu0
  %v622 = vadd.f32 0.0, %v621
  %v623 = vpop.f32.mrb[0].mxu0
  %624 = vmatprep.mubr.bf16.mxu0 0
  %625 = vmatmul.mubr.bf16.gmra.mrb[0].mxu0 %v442
  %v626 = vpop.f32.mrb[0].mxu0
  %v627 = vadd.f32 0.0, %v626
  %v628 = vpop.f32.mrb[0].mxu0
  %v629 = vpop.f32.mrb[0].mxu0
  %v630 = vadd.f32 0.0, %v629
  %v631 = vpop.f32.mrb[0].mxu0
  %632 = vmatprep.mubr.bf16.mxu0 0
  %633 = vmatmul.mubr.bf16.gmra.mrb[0].mxu0 %v445
  %v634 = vpop.f32.mrb[0].mxu0
  %v635 = vadd.f32 0.0, %v634
  %v636 = vpop.f32.mrb[0].mxu0
  %v637 = vpop.f32.mrb[0].mxu0
  %v638 = vadd.f32 0.0, %v637
  %v639 = vpop.f32.mrb[0].mxu0
  %640 = vmatprep.mubr.bf16.mxu0 0
  %641 = vmatmul.mubr.bf16.gmra.mrb[0].mxu0 %v448
  %v642 = vpop.f32.mrb[0].mxu0
  %v643 = vadd.f32 0.0, %v642
  %v644 = vpop.f32.mrb[0].mxu0
  %v645 = vpop.f32.mrb[0].mxu0
  %v646 = vadd.f32 0.0, %v645
  %v647 = vpop.f32.mrb[0].mxu0
  %648 = vmatprep.mubr.bf16.mxu0 0
  %649 = vmatmul.mubr.bf16.gmra.mrb[0].mxu0 %v451
  %v650 = vpop.f32.mrb[0].mxu0
  %v651 = vadd.f32 0.0, %v650
  %v652 = vpop.f32.mrb[0].mxu0
  %v653 = vpop.f32.mrb[0].mxu0
  %v654 = vadd.f32 0.0, %v653
  %v655 = vpop.f32.mrb[0].mxu0
  %656 = vmatprep.mubr.bf16.mxu0 0
  %657 = vmatmul.mubr.bf16.gmra.mrb[0].mxu0 %v454
  %v658 = vpop.f32.mrb[0].mxu0
  %v659 = vadd.f32 0.0, %v658
  %v660 = vpop.f32.mrb[0].mxu0
  %v661 = vpop.f32.mrb[0].mxu0
  %v662 = vadd.f32 0.0, %v661
  %v663 = vpop.f32.mrb[0].mxu0
  %664 = vmatprep.mubr.bf16.mxu0 0
  %665 = vmatmul.mubr.bf16.gmra.mrb[0].mxu0 %v457
  %v666 = vpop.f32.mrb[0].mxu0
  %v667 = vadd.f32 0.0, %v666
  %v668 = vpop.f32.mrb[0].mxu0
  %v669 = vpop.f32.mrb[0].mxu0
  %v670 = vadd.f32 0.0, %v669
  %v671 = vpop.f32.mrb[0].mxu0
  %672 = vmatprep.mubr.bf16.mxu0 0
  %673 = vmatmul.mubr.bf16.gmra.mrb[0].mxu0 %v460
  %v674 = vpop.f32.mrb[0].mxu0
  %v675 = vadd.f32 0.0, %v674
  %v676 = vpop.f32.mrb[0].mxu0
  %v677 = vpop.f32.mrb[0].mxu0
  %v678 = vadd.f32 0.0, %v677
  %v679 = vpop.f32.mrb[0].mxu0
  %680 = vmatprep.mubr.bf16.mxu0 0
  %681 = vmatmul.mubr.bf16.gmra.mrb[0].mxu0 %v463
  %v682 = vpop.f32.mrb[0].mxu0
  %v683 = vadd.f32 0.0, %v682
  %v684 = vpop.f32.mrb[0].mxu0
  %v685 = vpop.f32.mrb[0].mxu0
  %v686 = vadd.f32 0.0, %v685
  %v687 = vpop.f32.mrb[0].mxu0
  %688 = vmatprep.mubr.bf16.mxu0 0
  %689 = vmatmul.mubr.bf16.gmra.mrb[0].mxu0 %v466
  %v690 = vpop.f32.mrb[0].mxu0
  %v691 = vadd.f32 0.0, %v690
  %v692 = vpop.f32.mrb[0].mxu0
  %v693 = vpop.f32.mrb[0].mxu0
  %v694 = vadd.f32 0.0, %v693
  %v695 = vpop.f32.mrb[0].mxu0
  %696 = vmatprep.mubr.bf16.mxu0 0
  %697 = vmatmul.mubr.bf16.gmra.mrb[0].mxu0 %v469
  %v698 = vpop.f32.mrb[0].mxu0
  %v699 = vadd.f32 0.0, %v698
  %v700 = vpop.f32.mrb[0].mxu0
  %v701 = vpop.f32.mrb[0].mxu0
  %v702 = vadd.f32 0.0, %v701
  %v703 = vpop.f32.mrb[0].mxu0
  %704 = vmatprep.mubr.bf16.mxu0 0
  %705 = vmatmul.mubr.bf16.gmra.mrb[0].mxu0 %v472
  %v706 = vpop.f32.mrb[0].mxu0
  %v707 = vadd.f32 0.0, %v706
  %v708 = vpop.f32.mrb[0].mxu0
  %v709 = vpop.f32.mrb[0].mxu0
  %v710 = vadd.f32 0.0, %v709
  %v711 = vpop.f32.mrb[0].mxu0
  %712 = vmatprep.mubr.bf16.mxu0 0
  %713 = vmatmul.mubr.bf16.gmra.mrb[0].mxu0 %v475
  %v714 = vpop.f32.mrb[0].mxu0
  %v715 = vadd.f32 0.0, %v714
  %v716 = vpop.f32.mrb[0].mxu0
  %v717 = vpop.f32.mrb[0].mxu0
  %v718 = vadd.f32 0.0, %v717
  %v719 = vpop.f32.mrb[0].mxu0
  %720 = vmatprep.mubr.bf16.mxu0 0
  %721 = vmatmul.mubr.bf16.gmra.mrb[0].mxu0 %v478
  %v722 = vpop.f32.mrb[0].mxu0
  %v723 = vadd.f32 0.0, %v722
  %v724 = vpop.f32.mrb[0].mxu0
  %v725 = vpop.f32.mrb[0].mxu0
  %v726 = vadd.f32 0.0, %v725
  %v727 = vpop.f32.mrb[0].mxu0
  %728 = vmatprep.mubr.bf16.mxu0 0
  %729 = vmatmul.mubr.bf16.gmra.mrb[0].mxu0 %v481
  %v730 = vpop.f32.mrb[0].mxu0
  %v731 = vadd.f32 0.0, %v730
  %v732 = vpop.f32.mrb[0].mxu0
  %v733 = vpop.f32.mrb[0].mxu0
  %v734 = vadd.f32 0.0, %v733
  %v735 = vpop.f32.mrb[0].mxu0
  %736 = vmatprep.mubr.bf16.mxu0 0
  %737 = vmatmul.mubr.bf16.gmra.mrb[0].mxu0 %v484
  %v738 = vpop.f32.mrb[0].mxu0
  %v739 = vadd.f32 0.0, %v738
  %v740 = vpop.f32.mrb[0].mxu0
  %v741 = vpop.f32.mrb[0].mxu0
  %v742 = vadd.f32 0.0, %v741
  %v743 = vpop.f32.mrb[0].mxu0
  %744 = vmatprep.mubr.bf16.mxu0 0
  %745 = vmatmul.mubr.bf16.gmra.mrb[0].mxu0 %v487
  %v746 = vpop.f32.mrb[0].mxu0
  %v747 = vadd.f32 0.0, %v746
  %v748 = vpop.f32.mrb[0].mxu0
  %v749 = vpop.f32.mrb[0].mxu0
  %v750 = vadd.f32 0.0, %v749
  %v751 = vpop.f32.mrb[0].mxu0
  %752 = vmatprep.mubr.bf16.mxu0 0
  %753 = vmatmul.mubr.bf16.gmra.mrb[0].mxu0 %v490
  %v754 = vpop.f32.mrb[0].mxu0
  %v755 = vadd.f32 0.0, %v754
  %v756 = vpop.f32.mrb[0].mxu0
  %v757 = vpop.f32.mrb[0].mxu0
  %v758 = vadd.f32 0.0, %v757
  %v759 = vpop.f32.mrb[0].mxu0
  %760 = vmatprep.mubr.bf16.mxu0 0
  %761 = vmatmul.mubr.bf16.gmra.mrb[0].mxu0 %v493
  %v762 = vpop.f32.mrb[0].mxu0
  %v763 = vadd.f32 0.0, %v762
  %v764 = vpop.f32.mrb[0].mxu0
  %v765 = vpop.f32.mrb[0].mxu0
  %v766 = vadd.f32 0.0, %v765
  %v767 = vpop.f32.mrb[0].mxu0
  %768 = vmatprep.mubr.bf16.mxu0 0
  %769 = vmatmul.mubr.bf16.gmra.mrb[0].mxu0 %v496
  %v770 = vpop.f32.mrb[0].mxu0
  %v771 = vadd.f32 0.0, %v770
  %v772 = vpop.f32.mrb[0].mxu0
  %v773 = vpop.f32.mrb[0].mxu0
  %v774 = vadd.f32 0.0, %v773
  %v775 = vpop.f32.mrb[0].mxu0
  %776 = vmatprep.mubr.bf16.mxu0 0
  %777 = vmatmul.mubr.bf16.gmra.mrb[0].mxu0 %v499
  %v778 = vpop.f32.mrb[0].mxu0
  %v779 = vadd.f32 0.0, %v778
  %v780 = vpop.f32.mrb[0].mxu0
  %v781 = vpop.f32.mrb[0].mxu0
  %v782 = vadd.f32 0.0, %v781
  %v783 = vpop.f32.mrb[0].mxu0
  %784 = vmatprep.mubr.bf16.mxu0 0
  %785 = vmatmul.mubr.bf16.gmra.mrb[0].mxu0 %v502
  %v786 = vpop.f32.mrb[0].mxu0
  %v787 = vadd.f32 0.0, %v786
  %v788 = vpop.f32.mrb[0].mxu0
  %v789 = vpop.f32.mrb[0].mxu0
  %v790 = vadd.f32 0.0, %v789
  %v791 = vpop.f32.mrb[0].mxu0
  %792 = vdwg.mxu0
  %v793 = vadd.f32 %v87, %v539
  %v794 = vadd.f32 %v88, %v542
  %v795 = vadd.f32 %v89, %v547
  %v796 = vadd.f32 %v90, %v550
  %v797 = vadd.f32 %v91, %v555
  %v798 = vadd.f32 %v92, %v558
  %v799 = vadd.f32 %v93, %v563
  %v800 = vadd.f32 %v94, %v566
  %v801 = vadd.f32 %v95, %v571
  %v802 = vadd.f32 %v96, %v574
  %v803 = vadd.f32 %v97, %v579
  %v804 = vadd.f32 %v98, %v582
  %v805 = vadd.f32 %v99, %v587
  %v806 = vadd.f32 %v100, %v590
  %v807 = vadd.f32 %v101, %v595
  %v808 = vadd.f32 %v102, %v598
  %v809 = vadd.f32 %v103, %v603
  %v810 = vadd.f32 %v104, %v606
  %v811 = vadd.f32 %v105, %v611
  %v812 = vadd.f32 %v106, %v614
  %v813 = vadd.f32 %v107, %v619
  %v814 = vadd.f32 %v108, %v622
  %v815 = vadd.f32 %v109, %v627
  %v816 = vadd.f32 %v110, %v630
  %v817 = vadd.f32 %v111, %v635
  %v818 = vadd.f32 %v112, %v638
  %v819 = vadd.f32 %v113, %v643
  %v820 = vadd.f32 %v114, %v646
  %v821 = vadd.f32 %v115, %v651
  %v822 = vadd.f32 %v116, %v654
  %v823 = vadd.f32 %v117, %v659
  %v824 = vadd.f32 %v118, %v662
  %v825 = vadd.f32 %v119, %v667
  %v826 = vadd.f32 %v120, %v670
  %v827 = vadd.f32 %v121, %v675
  %v828 = vadd.f32 %v122, %v678
  %v829 = vadd.f32 %v123, %v683
  %v830 = vadd.f32 %v124, %v686
  %v831 = vadd.f32 %v125, %v691
  %v832 = vadd.f32 %v126, %v694
  %v833 = vadd.f32 %v127, %v699
  %v834 = vadd.f32 %v128, %v702
  %v835 = vadd.f32 %v129, %v707
  %v836 = vadd.f32 %v130, %v710
  %v837 = vadd.f32 %v131, %v715
  %v838 = vadd.f32 %v132, %v718
  %v839 = vadd.f32 %v133, %v723
  %v840 = vadd.f32 %v134, %v726
  %v841 = vadd.f32 %v135, %v731
  %v842 = vadd.f32 %v136, %v734
  %v843 = vadd.f32 %v137, %v739
  %v844 = vadd.f32 %v138, %v742
  %v845 = vadd.f32 %v139, %v747
  %v846 = vadd.f32 %v140, %v750
  %v847 = vadd.f32 %v141, %v755
  %v848 = vadd.f32 %v142, %v758
  %v849 = vadd.f32 %v143, %v763
  %v850 = vadd.f32 %v144, %v766
  %v851 = vadd.f32 %v145, %v771
  %v852 = vadd.f32 %v146, %v774
  %v853 = vadd.f32 %v147, %v779
  %v854 = vadd.f32 %v148, %v782
  %v855 = vadd.f32 %v149, %v787
  %v856 = vadd.f32 %v150, %v790
  %vm857 = vcmask 130048
  %858 = vst.msk [vmem:[#allocation2] sm:$0xff] %vm857, %v793
  %859 = vst.msk [vmem:[#allocation2 + $0x8] sm:$0xff] %vm857, %v794
  %860 = vst.msk [vmem:[#allocation2 + $0x10] sm:$0xff] %vm857, %v795
  %861 = vst.msk [vmem:[#allocation2 + $0x18] sm:$0xff] %vm857, %v796
  %862 = vst.msk [vmem:[#allocation2 + $0x20] sm:$0xff] %vm857, %v797
  %863 = vst.msk [vmem:[#allocation2 + $0x28] sm:$0xff] %vm857, %v798
  %864 = vst.msk [vmem:[#allocation2 + $0x30] sm:$0xff] %vm857, %v799
  %865 = vst.msk [vmem:[#allocation2 + $0x38] sm:$0xff] %vm857, %v800
  %866 = vst.msk [vmem:[#allocation2 + $0x40] sm:$0xff] %vm857, %v801
  %867 = vst.msk [vmem:[#allocation2 + $0x48] sm:$0xff] %vm857, %v802
  %868 = vst.msk [vmem:[#allocation2 + $0x50] sm:$0xff] %vm857, %v803
  %869 = vst.msk [vmem:[#allocation2 + $0x58] sm:$0xff] %vm857, %v804
  %870 = vst.msk [vmem:[#allocation2 + $0x60] sm:$0xff] %vm857, %v805
  %871 = vst.msk [vmem:[#allocation2 + $0x68] sm:$0xff] %vm857, %v806
  %872 = vst.msk [vmem:[#allocation2 + $0x70] sm:$0xff] %vm857, %v807
  %873 = vst.msk [vmem:[#allocation2 + $0x78] sm:$0xff] %vm857, %v808
  %874 = vst.msk [vmem:[#allocation2 + $0x80] sm:$0xff] %vm857, %v809
  %875 = vst.msk [vmem:[#allocation2 + $0x88] sm:$0xff] %vm857, %v810
  %876 = vst.msk [vmem:[#allocation2 + $0x90] sm:$0xff] %vm857, %v811
  %877 = vst.msk [vmem:[#allocation2 + $0x98] sm:$0xff] %vm857, %v812
  %878 = vst.msk [vmem:[#allocation2 + $0xa0] sm:$0xff] %vm857, %v813
  %879 = vst.msk [vmem:[#allocation2 + $0xa8] sm:$0xff] %vm857, %v814
  %880 = vst.msk [vmem:[#allocation2 + $0xb0] sm:$0xff] %vm857, %v815
  %881 = vst.msk [vmem:[#allocation2 + $0xb8] sm:$0xff] %vm857, %v816
  %882 = vst.msk [vmem:[#allocation2 + $0xc0] sm:$0xff] %vm857, %v817
  %883 = vst.msk [vmem:[#allocation2 + $0xc8] sm:$0xff] %vm857, %v818
  %884 = vst.msk [vmem:[#allocation2 + $0xd0] sm:$0xff] %vm857, %v819
  %885 = vst.msk [vmem:[#allocation2 + $0xd8] sm:$0xff] %vm857, %v820
  %886 = vst.msk [vmem:[#allocation2 + $0xe0] sm:$0xff] %vm857, %v821
  %887 = vst.msk [vmem:[#allocation2 + $0xe8] sm:$0xff] %vm857, %v822
  %888 = vst.msk [vmem:[#allocation2 + $0xf0] sm:$0xff] %vm857, %v823
  %889 = vst.msk [vmem:[#allocation2 + $0xf8] sm:$0xff] %vm857, %v824
  %890 = vst.msk [vmem:[#allocation2 + $0x100] sm:$0xff] %vm857, %v825
  %891 = vst.msk [vmem:[#allocation2 + $0x108] sm:$0xff] %vm857, %v826
  %892 = vst.msk [vmem:[#allocation2 + $0x110] sm:$0xff] %vm857, %v827
  %893 = vst.msk [vmem:[#allocation2 + $0x118] sm:$0xff] %vm857, %v828
  %894 = vst.msk [vmem:[#allocation2 + $0x120] sm:$0xff] %vm857, %v829
  %895 = vst.msk [vmem:[#allocation2 + $0x128] sm:$0xff] %vm857, %v830
  %896 = vst.msk [vmem:[#allocation2 + $0x130] sm:$0xff] %vm857, %v831
  %897 = vst.msk [vmem:[#allocation2 + $0x138] sm:$0xff] %vm857, %v832
  %898 = vst.msk [vmem:[#allocation2 + $0x140] sm:$0xff] %vm857, %v833
  %899 = vst.msk [vmem:[#allocation2 + $0x148] sm:$0xff] %vm857, %v834
  %900 = vst.msk [vmem:[#allocation2 + $0x150] sm:$0xff] %vm857, %v835
  %901 = vst.msk [vmem:[#allocation2 + $0x158] sm:$0xff] %vm857, %v836
  %902 = vst.msk [vmem:[#allocation2 + $0x160] sm:$0xff] %vm857, %v837
  %903 = vst.msk [vmem:[#allocation2 + $0x168] sm:$0xff] %vm857, %v838
  %904 = vst.msk [vmem:[#allocation2 + $0x170] sm:$0xff] %vm857, %v839
  %905 = vst.msk [vmem:[#allocation2 + $0x178] sm:$0xff] %vm857, %v840
  %906 = vst.msk [vmem:[#allocation2 + $0x180] sm:$0xff] %vm857, %v841
  %907 = vst.msk [vmem:[#allocation2 + $0x188] sm:$0xff] %vm857, %v842
  %908 = vst.msk [vmem:[#allocation2 + $0x190] sm:$0xff] %vm857, %v843
  %909 = vst.msk [vmem:[#allocation2 + $0x198] sm:$0xff] %vm857, %v844
  %910 = vst.msk [vmem:[#allocation2 + $0x1a0] sm:$0xff] %vm857, %v845
  %911 = vst.msk [vmem:[#allocation2 + $0x1a8] sm:$0xff] %vm857, %v846
  %912 = vst.msk [vmem:[#allocation2 + $0x1b0] sm:$0xff] %vm857, %v847
  %913 = vst.msk [vmem:[#allocation2 + $0x1b8] sm:$0xff] %vm857, %v848
  %914 = vst.msk [vmem:[#allocation2 + $0x1c0] sm:$0xff] %vm857, %v849
  %915 = vst.msk [vmem:[#allocation2 + $0x1c8] sm:$0xff] %vm857, %v850
  %916 = vst.msk [vmem:[#allocation2 + $0x1d0] sm:$0xff] %vm857, %v851
  %917 = vst.msk [vmem:[#allocation2 + $0x1d8] sm:$0xff] %vm857, %v852
  %918 = vst.msk [vmem:[#allocation2 + $0x1e0] sm:$0xff] %vm857, %v853
  %919 = vst.msk [vmem:[#allocation2 + $0x1e8] sm:$0xff] %vm857, %v854
  %920 = vst.msk [vmem:[#allocation2 + $0x1f0] sm:$0xff] %vm857, %v855
  %921 = vst.msk [vmem:[#allocation2 + $0x1f8] sm:$0xff] %vm857, %v856
  // Predicated region
  $region22: #{_lambda_.8} parent=0 // pred_check
    %p922 = pneg %p18
  $region23: #{_lambda_.8} parent=0 // pred_check_branch
    %924 = sbr.rel (%p922) target = $region25
  $region24: #{_lambda_.8} parent=0 // pred_region
    %v925 = vld [vmem:[#allocation2] sm:$0xff]
    %v926 = vld [vmem:[#allocation2 + $0x8] sm:$0xff]
    %v927 = vld [vmem:[#allocation2 + $0x10] sm:$0xff]
    %v928 = vld [vmem:[#allocation2 + $0x18] sm:$0xff]
    %v929 = vld [vmem:[#allocation2 + $0x20] sm:$0xff]
    %v930 = vld [vmem:[#allocation2 + $0x28] sm:$0xff]
    %v931 = vld [vmem:[#allocation2 + $0x30] sm:$0xff]
    %v932 = vld [vmem:[#allocation2 + $0x38] sm:$0xff]
    %v933 = vld [vmem:[#allocation2 + $0x40] sm:$0xff]
    %v934 = vld [vmem:[#allocation2 + $0x48] sm:$0xff]
    %v935 = vld [vmem:[#allocation2 + $0x50] sm:$0xff]
    %v936 = vld [vmem:[#allocation2 + $0x58] sm:$0xff]
    %v937 = vld [vmem:[#allocation2 + $0x60] sm:$0xff]
    %v938 = vld [vmem:[#allocation2 + $0x68] sm:$0xff]
    %v939 = vld [vmem:[#allocation2 + $0x70] sm:$0xff]
    %v940 = vld [vmem:[#allocation2 + $0x78] sm:$0xff]
    %v941 = vld [vmem:[#allocation2 + $0x80] sm:$0xff]
    %v942 = vld [vmem:[#allocation2 + $0x88] sm:$0xff]
    %v943 = vld [vmem:[#allocation2 + $0x90] sm:$0xff]
    %v944 = vld [vmem:[#allocation2 + $0x98] sm:$0xff]
    %v945 = vld [vmem:[#allocation2 + $0xa0] sm:$0xff]
    %v946 = vld [vmem:[#allocation2 + $0xa8] sm:$0xff]
    %v947 = vld [vmem:[#allocation2 + $0xb0] sm:$0xff]
    %v948 = vld [vmem:[#allocation2 + $0xb8] sm:$0xff]
    %v949 = vld [vmem:[#allocation2 + $0xc0] sm:$0xff]
    %v950 = vld [vmem:[#allocation2 + $0xc8] sm:$0xff]
    %v951 = vld [vmem:[#allocation2 + $0xd0] sm:$0xff]
    %v952 = vld [vmem:[#allocation2 + $0xd8] sm:$0xff]
    %v953 = vld [vmem:[#allocation2 + $0xe0] sm:$0xff]
    %v954 = vld [vmem:[#allocation2 + $0xe8] sm:$0xff]
    %v955 = vld [vmem:[#allocation2 + $0xf0] sm:$0xff]
    %v956 = vld [vmem:[#allocation2 + $0xf8] sm:$0xff]
    %v957 = vld [vmem:[#allocation2 + $0x100] sm:$0xff]
    %v958 = vld [vmem:[#allocation2 + $0x108] sm:$0xff]
    %v959 = vld [vmem:[#allocation2 + $0x110] sm:$0xff]
    %v960 = vld [vmem:[#allocation2 + $0x118] sm:$0xff]
    %v961 = vld [vmem:[#allocation2 + $0x120] sm:$0xff]
    %v962 = vld [vmem:[#allocation2 + $0x128] sm:$0xff]
    %v963 = vld [vmem:[#allocation2 + $0x130] sm:$0xff]
    %v964 = vld [vmem:[#allocation2 + $0x138] sm:$0xff]
    %v965 = vld [vmem:[#allocation2 + $0x140] sm:$0xff]
    %v966 = vld [vmem:[#allocation2 + $0x148] sm:$0xff]
    %v967 = vld [vmem:[#allocation2 + $0x150] sm:$0xff]
    %v968 = vld [vmem:[#allocation2 + $0x158] sm:$0xff]
    %v969 = vld [vmem:[#allocation2 + $0x160] sm:$0xff]
    %v970 = vld [vmem:[#allocation2 + $0x168] sm:$0xff]
    %v971 = vld [vmem:[#allocation2 + $0x170] sm:$0xff]
    %v972 = vld [vmem:[#allocation2 + $0x178] sm:$0xff]
    %v973 = vld [vmem:[#allocation2 + $0x180] sm:$0xff]
    %v974 = vld [vmem:[#allocation2 + $0x188] sm:$0xff]
    %v975 = vld [vmem:[#allocation2 + $0x190] sm:$0xff]
    %v976 = vld [vmem:[#allocation2 + $0x198] sm:$0xff]
    %v977 = vld [vmem:[#allocation2 + $0x1a0] sm:$0xff]
    %v978 = vld [vmem:[#allocation2 + $0x1a8] sm:$0xff]
    %v979 = vld [vmem:[#allocation2 + $0x1b0] sm:$0xff]
    %v980 = vld [vmem:[#allocation2 + $0x1b8] sm:$0xff]
    %v981 = vld [vmem:[#allocation2 + $0x1c0] sm:$0xff]
    %v982 = vld [vmem:[#allocation2 + $0x1c8] sm:$0xff]
    %v983 = vld [vmem:[#allocation2 + $0x1d0] sm:$0xff]
    %v984 = vld [vmem:[#allocation2 + $0x1d8] sm:$0xff]
    %v985 = vld [vmem:[#allocation2 + $0x1e0] sm:$0xff]
    %v986 = vld [vmem:[#allocation2 + $0x1e8] sm:$0xff]
    %v987 = vld [vmem:[#allocation2 + $0x1f0] sm:$0xff]
    %v988 = vld [vmem:[#allocation2 + $0x1f8] sm:$0xff]
    %v989 = vld [vmem:[%s2] sm:$0x1]
    %v991 = vlaneseq
    %v992 = vshrl.u32 %v991, 7
    %v993 = vsub.s32 0, %v992
    %v994 = vrot.slane %v989, %v993
    %v996 = vmul.f32 %v925, %v994
    %v997 = vmul.f32 %v926, %v994
    %v998 = vmul.f32 %v927, %v994
    %v999 = vmul.f32 %v928, %v994
    %v1000 = vmul.f32 %v929, %v994
    %v1001 = vmul.f32 %v930, %v994
    %v1002 = vmul.f32 %v931, %v994
    %v1003 = vmul.f32 %v932, %v994
    %v1004 = vmul.f32 %v933, %v994
    %v1005 = vmul.f32 %v934, %v994
    %v1006 = vmul.f32 %v935, %v994
    %v1007 = vmul.f32 %v936, %v994
    %v1008 = vmul.f32 %v937, %v994
    %v1009 = vmul.f32 %v938, %v994
    %v1010 = vmul.f32 %v939, %v994
    %v1011 = vmul.f32 %v940, %v994
    %v1012 = vmul.f32 %v941, %v994
    %v1013 = vmul.f32 %v942, %v994
    %v1014 = vmul.f32 %v943, %v994
    %v1015 = vmul.f32 %v944, %v994
    %v1016 = vmul.f32 %v945, %v994
    %v1017 = vmul.f32 %v946, %v994
    %v1018 = vmul.f32 %v947, %v994
    %v1019 = vmul.f32 %v948, %v994
    %v1020 = vmul.f32 %v949, %v994
    %v1021 = vmul.f32 %v950, %v994
    %v1022 = vmul.f32 %v951, %v994
    %v1023 = vmul.f32 %v952, %v994
    %v1024 = vmul.f32 %v953, %v994
    %v1025 = vmul.f32 %v954, %v994
    %v1026 = vmul.f32 %v955, %v994
    %v1027 = vmul.f32 %v956, %v994
    %v1028 = vmul.f32 %v957, %v994
    %v1029 = vmul.f32 %v958, %v994
    %v1030 = vmul.f32 %v959, %v994
    %v1031 = vmul.f32 %v960, %v994
    %v1032 = vmul.f32 %v961, %v994
    %v1033 = vmul.f32 %v962, %v994
    %v1034 = vmul.f32 %v963, %v994
    %v1035 = vmul.f32 %v964, %v994
    %v1036 = vmul.f32 %v965, %v994
    %v1037 = vmul.f32 %v966, %v994
    %v1038 = vmul.f32 %v967, %v994
    %v1039 = vmul.f32 %v968, %v994
    %v1040 = vmul.f32 %v969, %v994
    %v1041 = vmul.f32 %v970, %v994
    %v1042 = vmul.f32 %v971, %v994
    %v1043 = vmul.f32 %v972, %v994
    %v1044 = vmul.f32 %v973, %v994
    %v1045 = vmul.f32 %v974, %v994
    %v1046 = vmul.f32 %v975, %v994
    %v1047 = vmul.f32 %v976, %v994
    %v1048 = vmul.f32 %v977, %v994
    %v1049 = vmul.f32 %v978, %v994
    %v1050 = vmul.f32 %v979, %v994
    %v1051 = vmul.f32 %v980, %v994
    %v1052 = vmul.f32 %v981, %v994
    %v1053 = vmul.f32 %v982, %v994
    %v1054 = vmul.f32 %v983, %v994
    %v1055 = vmul.f32 %v984, %v994
    %v1056 = vmul.f32 %v985, %v994
    %v1057 = vmul.f32 %v986, %v994
    %v1058 = vmul.f32 %v987, %v994
    %v1059 = vmul.f32 %v988, %v994
    %v1060 = vld [vmem:[%s3] sm:$0x1]
    %v1062 = vlaneseq
    %v1063 = vshrl.u32 %v1062, 7
    %v1064 = vsub.s32 0, %v1063
    %v1065 = vrot.slane %v1060, %v1064
    %v1067 = vadd.f32 %v996, %v1065
    %v1068 = vadd.f32 %v997, %v1065
    %v1069 = vadd.f32 %v998, %v1065
    %v1070 = vadd.f32 %v999, %v1065
    %v1071 = vadd.f32 %v1000, %v1065
    %v1072 = vadd.f32 %v1001, %v1065
    %v1073 = vadd.f32 %v1002, %v1065
    %v1074 = vadd.f32 %v1003, %v1065
    %v1075 = vadd.f32 %v1004, %v1065
    %v1076 = vadd.f32 %v1005, %v1065
    %v1077 = vadd.f32 %v1006, %v1065
    %v1078 = vadd.f32 %v1007, %v1065
    %v1079 = vadd.f32 %v1008, %v1065
    %v1080 = vadd.f32 %v1009, %v1065
    %v1081 = vadd.f32 %v1010, %v1065
    %v1082 = vadd.f32 %v1011, %v1065
    %v1083 = vadd.f32 %v1012, %v1065
    %v1084 = vadd.f32 %v1013, %v1065
    %v1085 = vadd.f32 %v1014, %v1065
    %v1086 = vadd.f32 %v1015, %v1065
    %v1087 = vadd.f32 %v1016, %v1065
    %v1088 = vadd.f32 %v1017, %v1065
    %v1089 = vadd.f32 %v1018, %v1065
    %v1090 = vadd.f32 %v1019, %v1065
    %v1091 = vadd.f32 %v1020, %v1065
    %v1092 = vadd.f32 %v1021, %v1065
    %v1093 = vadd.f32 %v1022, %v1065
    %v1094 = vadd.f32 %v1023, %v1065
    %v1095 = vadd.f32 %v1024, %v1065
    %v1096 = vadd.f32 %v1025, %v1065
    %v1097 = vadd.f32 %v1026, %v1065
    %v1098 = vadd.f32 %v1027, %v1065
    %v1099 = vadd.f32 %v1028, %v1065
    %v1100 = vadd.f32 %v1029, %v1065
    %v1101 = vadd.f32 %v1030, %v1065
    %v1102 = vadd.f32 %v1031, %v1065
    %v1103 = vadd.f32 %v1032, %v1065
    %v1104 = vadd.f32 %v1033, %v1065
    %v1105 = vadd.f32 %v1034, %v1065
    %v1106 = vadd.f32 %v1035, %v1065
    %v1107 = vadd.f32 %v1036, %v1065
    %v1108 = vadd.f32 %v1037, %v1065
    %v1109 = vadd.f32 %v1038, %v1065
    %v1110 = vadd.f32 %v1039, %v1065
    %v1111 = vadd.f32 %v1040, %v1065
    %v1112 = vadd.f32 %v1041, %v1065
    %v1113 = vadd.f32 %v1042, %v1065
    %v1114 = vadd.f32 %v1043, %v1065
    %v1115 = vadd.f32 %v1044, %v1065
    %v1116 = vadd.f32 %v1045, %v1065
    %v1117 = vadd.f32 %v1046, %v1065
    %v1118 = vadd.f32 %v1047, %v1065
    %v1119 = vadd.f32 %v1048, %v1065
    %v1120 = vadd.f32 %v1049, %v1065
    %v1121 = vadd.f32 %v1050, %v1065
    %v1122 = vadd.f32 %v1051, %v1065
    %v1123 = vadd.f32 %v1052, %v1065
    %v1124 = vadd.f32 %v1053, %v1065
    %v1125 = vadd.f32 %v1054, %v1065
    %v1126 = vadd.f32 %v1055, %v1065
    %v1127 = vadd.f32 %v1056, %v1065
    %v1128 = vadd.f32 %v1057, %v1065
    %v1129 = vadd.f32 %v1058, %v1065
    %v1130 = vadd.f32 %v1059, %v1065
    %v1131 = vmax.f32 %v1067, 0.0
    %v1132 = vmax.f32 %v1068, 0.0
    %v1133 = vmax.f32 %v1069, 0.0
    %v1134 = vmax.f32 %v1070, 0.0
    %v1135 = vmax.f32 %v1071, 0.0
    %v1136 = vmax.f32 %v1072, 0.0
    %v1137 = vmax.f32 %v1073, 0.0
    %v1138 = vmax.f32 %v1074, 0.0
    %v1139 = vmax.f32 %v1075, 0.0
    %v1140 = vmax.f32 %v1076, 0.0
    %v1141 = vmax.f32 %v1077, 0.0
    %v1142 = vmax.f32 %v1078, 0.0
    %v1143 = vmax.f32 %v1079, 0.0
    %v1144 = vmax.f32 %v1080, 0.0
    %v1145 = vmax.f32 %v1081, 0.0
    %v1146 = vmax.f32 %v1082, 0.0
    %v1147 = vmax.f32 %v1083, 0.0
    %v1148 = vmax.f32 %v1084, 0.0
    %v1149 = vmax.f32 %v1085, 0.0
    %v1150 = vmax.f32 %v1086, 0.0
    %v1151 = vmax.f32 %v1087, 0.0
    %v1152 = vmax.f32 %v1088, 0.0
    %v1153 = vmax.f32 %v1089, 0.0
    %v1154 = vmax.f32 %v1090, 0.0
    %v1155 = vmax.f32 %v1091, 0.0
    %v1156 = vmax.f32 %v1092, 0.0
    %v1157 = vmax.f32 %v1093, 0.0
    %v1158 = vmax.f32 %v1094, 0.0
    %v1159 = vmax.f32 %v1095, 0.0
    %v1160 = vmax.f32 %v1096, 0.0
    %v1161 = vmax.f32 %v1097, 0.0
    %v1162 = vmax.f32 %v1098, 0.0
    %v1163 = vmax.f32 %v1099, 0.0
    %v1164 = vmax.f32 %v1100, 0.0
    %v1165 = vmax.f32 %v1101, 0.0
    %v1166 = vmax.f32 %v1102, 0.0
    %v1167 = vmax.f32 %v1103, 0.0
    %v1168 = vmax.f32 %v1104, 0.0
    %v1169 = vmax.f32 %v1105, 0.0
    %v1170 = vmax.f32 %v1106, 0.0
    %v1171 = vmax.f32 %v1107, 0.0
    %v1172 = vmax.f32 %v1108, 0.0
    %v1173 = vmax.f32 %v1109, 0.0
    %v1174 = vmax.f32 %v1110, 0.0
    %v1175 = vmax.f32 %v1111, 0.0
    %v1176 = vmax.f32 %v1112, 0.0
    %v1177 = vmax.f32 %v1113, 0.0
    %v1178 = vmax.f32 %v1114, 0.0
    %v1179 = vmax.f32 %v1115, 0.0
    %v1180 = vmax.f32 %v1116, 0.0
    %v1181 = vmax.f32 %v1117, 0.0
    %v1182 = vmax.f32 %v1118, 0.0
    %v1183 = vmax.f32 %v1119, 0.0
    %v1184 = vmax.f32 %v1120, 0.0
    %v1185 = vmax.f32 %v1121, 0.0
    %v1186 = vmax.f32 %v1122, 0.0
    %v1187 = vmax.f32 %v1123, 0.0
    %v1188 = vmax.f32 %v1124, 0.0
    %v1189 = vmax.f32 %v1125, 0.0
    %v1190 = vmax.f32 %v1126, 0.0
    %v1191 = vmax.f32 %v1127, 0.0
    %v1192 = vmax.f32 %v1128, 0.0
    %v1193 = vmax.f32 %v1129, 0.0
    %v1194 = vmax.f32 %v1130, 0.0
    %v1195 = vpack.c.bf16 %v1132, %v1131
    %v1196 = vpack.c.bf16 %v1134, %v1133
    %v1197 = vpack.c.bf16 %v1136, %v1135
    %v1198 = vpack.c.bf16 %v1138, %v1137
    %v1199 = vpack.c.bf16 %v1140, %v1139
    %v1200 = vpack.c.bf16 %v1142, %v1141
    %v1201 = vpack.c.bf16 %v1144, %v1143
    %v1202 = vpack.c.bf16 %v1146, %v1145
    %v1203 = vpack.c.bf16 %v1148, %v1147
    %v1204 = vpack.c.bf16 %v1150, %v1149
    %v1205 = vpack.c.bf16 %v1152, %v1151
    %v1206 = vpack.c.bf16 %v1154, %v1153
    %v1207 = vpack.c.bf16 %v1156, %v1155
    %v1208 = vpack.c.bf16 %v1158, %v1157
    %v1209 = vpack.c.bf16 %v1160, %v1159
    %v1210 = vpack.c.bf16 %v1162, %v1161
    %v1211 = vpack.c.bf16 %v1164, %v1163
    %v1212 = vpack.c.bf16 %v1166, %v1165
    %v1213 = vpack.c.bf16 %v1168, %v1167
    %v1214 = vpack.c.bf16 %v1170, %v1169
    %v1215 = vpack.c.bf16 %v1172, %v1171
    %v1216 = vpack.c.bf16 %v1174, %v1173
    %v1217 = vpack.c.bf16 %v1176, %v1175
    %v1218 = vpack.c.bf16 %v1178, %v1177
    %v1219 = vpack.c.bf16 %v1180, %v1179
    %v1220 = vpack.c.bf16 %v1182, %v1181
    %v1221 = vpack.c.bf16 %v1184, %v1183
    %v1222 = vpack.c.bf16 %v1186, %v1185
    %v1223 = vpack.c.bf16 %v1188, %v1187
    %v1224 = vpack.c.bf16 %v1190, %v1189
    %v1225 = vpack.c.bf16 %v1192, %v1191
    %v1226 = vpack.c.bf16 %v1194, %v1193
    %v1259 = vunpack.c.l.b16 %v1195
    %v1260 = vunpack.c.h.b16 %v1195
    %v1261 = vunpack.c.l.b16 %v1196
    %v1262 = vunpack.c.h.b16 %v1196
    %v1263 = vunpack.c.l.b16 %v1197
    %v1264 = vunpack.c.h.b16 %v1197
    %v1265 = vunpack.c.l.b16 %v1198
    %v1266 = vunpack.c.h.b16 %v1198
    %v1267 = vunpack.c.l.b16 %v1199
    %v1268 = vunpack.c.h.b16 %v1199
    %v1269 = vunpack.c.l.b16 %v1200
    %v1270 = vunpack.c.h.b16 %v1200
    %v1271 = vunpack.c.l.b16 %v1201
    %v1272 = vunpack.c.h.b16 %v1201
    %v1273 = vunpack.c.l.b16 %v1202
    %v1274 = vunpack.c.h.b16 %v1202
    %v1275 = vunpack.c.l.b16 %v1203
    %v1276 = vunpack.c.h.b16 %v1203
    %v1277 = vunpack.c.l.b16 %v1204
    %v1278 = vunpack.c.h.b16 %v1204
    %v1279 = vunpack.c.l.b16 %v1205
    %v1280 = vunpack.c.h.b16 %v1205
    %v1281 = vunpack.c.l.b16 %v1206
    %v1282 = vunpack.c.h.b16 %v1206
    %v1283 = vunpack.c.l.b16 %v1207
    %v1284 = vunpack.c.h.b16 %v1207
    %v1285 = vunpack.c.l.b16 %v1208
    %v1286 = vunpack.c.h.b16 %v1208
    %v1287 = vunpack.c.l.b16 %v1209
    %v1288 = vunpack.c.h.b16 %v1209
    %v1289 = vunpack.c.l.b16 %v1210
    %v1290 = vunpack.c.h.b16 %v1210
    %v1291 = vunpack.c.l.b16 %v1211
    %v1292 = vunpack.c.h.b16 %v1211
    %v1293 = vunpack.c.l.b16 %v1212
    %v1294 = vunpack.c.h.b16 %v1212
    %v1295 = vunpack.c.l.b16 %v1213
    %v1296 = vunpack.c.h.b16 %v1213
    %v1297 = vunpack.c.l.b16 %v1214
    %v1298 = vunpack.c.h.b16 %v1214
    %v1299 = vunpack.c.l.b16 %v1215
    %v1300 = vunpack.c.h.b16 %v1215
    %v1301 = vunpack.c.l.b16 %v1216
    %v1302 = vunpack.c.h.b16 %v1216
    %v1303 = vunpack.c.l.b16 %v1217
    %v1304 = vunpack.c.h.b16 %v1217
    %v1305 = vunpack.c.l.b16 %v1218
    %v1306 = vunpack.c.h.b16 %v1218
    %v1307 = vunpack.c.l.b16 %v1219
    %v1308 = vunpack.c.h.b16 %v1219
    %v1309 = vunpack.c.l.b16 %v1220
    %v1310 = vunpack.c.h.b16 %v1220
    %v1311 = vunpack.c.l.b16 %v1221
    %v1312 = vunpack.c.h.b16 %v1221
    %v1313 = vunpack.c.l.b16 %v1222
    %v1314 = vunpack.c.h.b16 %v1222
    %v1315 = vunpack.c.l.b16 %v1223
    %v1316 = vunpack.c.h.b16 %v1223
    %v1317 = vunpack.c.l.b16 %v1224
    %v1318 = vunpack.c.h.b16 %v1224
    %v1319 = vunpack.c.l.b16 %v1225
    %v1320 = vunpack.c.h.b16 %v1225
    %v1321 = vunpack.c.l.b16 %v1226
    %v1322 = vunpack.c.h.b16 %v1226
    %v1323 = vpack.c.b16 %v1259, %v1259
    %v1324 = vpack.c.b16 %v1260, %v1260
    %v1325 = vpack.c.b16 %v1261, %v1261
    %v1326 = vpack.c.b16 %v1262, %v1262
    %v1327 = vpack.c.b16 %v1263, %v1263
    %v1328 = vpack.c.b16 %v1264, %v1264
    %v1329 = vpack.c.b16 %v1265, %v1265
    %v1330 = vpack.c.b16 %v1266, %v1266
    %v1331 = vpack.c.b16 %v1267, %v1267
    %v1332 = vpack.c.b16 %v1268, %v1268
    %v1333 = vpack.c.b16 %v1269, %v1269
    %v1334 = vpack.c.b16 %v1270, %v1270
    %v1335 = vpack.c.b16 %v1271, %v1271
    %v1336 = vpack.c.b16 %v1272, %v1272
    %v1337 = vpack.c.b16 %v1273, %v1273
    %v1338 = vpack.c.b16 %v1274, %v1274
    %v1339 = vpack.c.b16 %v1275, %v1275
    %v1340 = vpack.c.b16 %v1276, %v1276
    %v1341 = vpack.c.b16 %v1277, %v1277
    %v1342 = vpack.c.b16 %v1278, %v1278
    %v1343 = vpack.c.b16 %v1279, %v1279
    %v1344 = vpack.c.b16 %v1280, %v1280
    %v1345 = vpack.c.b16 %v1281, %v1281
    %v1346 = vpack.c.b16 %v1282, %v1282
    %v1347 = vpack.c.b16 %v1283, %v1283
    %v1348 = vpack.c.b16 %v1284, %v1284
    %v1349 = vpack.c.b16 %v1285, %v1285
    %v1350 = vpack.c.b16 %v1286, %v1286
    %v1351 = vpack.c.b16 %v1287, %v1287
    %v1352 = vpack.c.b16 %v1288, %v1288
    %v1353 = vpack.c.b16 %v1289, %v1289
    %v1354 = vpack.c.b16 %v1290, %v1290
    %v1355 = vpack.c.b16 %v1291, %v1291
    %v1356 = vpack.c.b16 %v1292, %v1292
    %v1357 = vpack.c.b16 %v1293, %v1293
    %v1358 = vpack.c.b16 %v1294, %v1294
    %v1359 = vpack.c.b16 %v1295, %v1295
    %v1360 = vpack.c.b16 %v1296, %v1296
    %v1361 = vpack.c.b16 %v1297, %v1297
    %v1362 = vpack.c.b16 %v1298, %v1298
    %v1363 = vpack.c.b16 %v1299, %v1299
    %v1364 = vpack.c.b16 %v1300, %v1300
    %v1365 = vpack.c.b16 %v1301, %v1301
    %v1366 = vpack.c.b16 %v1302, %v1302
    %v1367 = vpack.c.b16 %v1303, %v1303
    %v1368 = vpack.c.b16 %v1304, %v1304
    %v1369 = vpack.c.b16 %v1305, %v1305
    %v1370 = vpack.c.b16 %v1306, %v1306
    %v1371 = vpack.c.b16 %v1307, %v1307
    %v1372 = vpack.c.b16 %v1308, %v1308
    %v1373 = vpack.c.b16 %v1309, %v1309
    %v1374 = vpack.c.b16 %v1310, %v1310
    %v1375 = vpack.c.b16 %v1311, %v1311
    %v1376 = vpack.c.b16 %v1312, %v1312
    %v1377 = vpack.c.b16 %v1313, %v1313
    %v1378 = vpack.c.b16 %v1314, %v1314
    %v1379 = vpack.c.b16 %v1315, %v1315
    %v1380 = vpack.c.b16 %v1316, %v1316
    %v1381 = vpack.c.b16 %v1317, %v1317
    %v1382 = vpack.c.b16 %v1318, %v1318
    %v1383 = vpack.c.b16 %v1319, %v1319
    %v1384 = vpack.c.b16 %v1320, %v1320
    %v1385 = vpack.c.b16 %v1321, %v1321
    %v1386 = vpack.c.b16 %v1322, %v1322
    %vm1451 = vcmask 125952
    %1452 = vst.msk [vmem:[%s4] sm:$0xf] %vm1451, %v1323
    %1453 = vst.msk [vmem:[%s4 + $0x4] sm:$0xf] %vm1451, %v1324
    %1454 = vst.msk [vmem:[%s4 + $0x8] sm:$0xf] %vm1451, %v1325
    %1455 = vst.msk [vmem:[%s4 + $0xc] sm:$0xf] %vm1451, %v1326
    %1456 = vst.msk [vmem:[%s4 + $0x10] sm:$0xf] %vm1451, %v1327
    %1457 = vst.msk [vmem:[%s4 + $0x14] sm:$0xf] %vm1451, %v1328
    %1458 = vst.msk [vmem:[%s4 + $0x18] sm:$0xf] %vm1451, %v1329
    %1459 = vst.msk [vmem:[%s4 + $0x1c] sm:$0xf] %vm1451, %v1330
    %1460 = vst.msk [vmem:[%s4 + $0x20] sm:$0xf] %vm1451, %v1331
    %1461 = vst.msk [vmem:[%s4 + $0x24] sm:$0xf] %vm1451, %v1332
    %1462 = vst.msk [vmem:[%s4 + $0x28] sm:$0xf] %vm1451, %v1333
    %1463 = vst.msk [vmem:[%s4 + $0x2c] sm:$0xf] %vm1451, %v1334
    %1464 = vst.msk [vmem:[%s4 + $0x30] sm:$0xf] %vm1451, %v1335
    %1465 = vst.msk [vmem:[%s4 + $0x34] sm:$0xf] %vm1451, %v1336
    %1466 = vst.msk [vmem:[%s4 + $0x38] sm:$0xf] %vm1451, %v1337
    %1467 = vst.msk [vmem:[%s4 + $0x3c] sm:$0xf] %vm1451, %v1338
    %1468 = vst.msk [vmem:[%s4 + $0x40] sm:$0xf] %vm1451, %v1339
    %1469 = vst.msk [vmem:[%s4 + $0x44] sm:$0xf] %vm1451, %v1340
    %1470 = vst.msk [vmem:[%s4 + $0x48] sm:$0xf] %vm1451, %v1341
    %1471 = vst.msk [vmem:[%s4 + $0x4c] sm:$0xf] %vm1451, %v1342
    %1472 = vst.msk [vmem:[%s4 + $0x50] sm:$0xf] %vm1451, %v1343
    %1473 = vst.msk [vmem:[%s4 + $0x54] sm:$0xf] %vm1451, %v1344
    %1474 = vst.msk [vmem:[%s4 + $0x58] sm:$0xf] %vm1451, %v1345
    %1475 = vst.msk [vmem:[%s4 + $0x5c] sm:$0xf] %vm1451, %v1346
    %1476 = vst.msk [vmem:[%s4 + $0x60] sm:$0xf] %vm1451, %v1347
    %1477 = vst.msk [vmem:[%s4 + $0x64] sm:$0xf] %vm1451, %v1348
    %1478 = vst.msk [vmem:[%s4 + $0x68] sm:$0xf] %vm1451, %v1349
    %1479 = vst.msk [vmem:[%s4 + $0x6c] sm:$0xf] %vm1451, %v1350
    %1480 = vst.msk [vmem:[%s4 + $0x70] sm:$0xf] %vm1451, %v1351
    %1481 = vst.msk [vmem:[%s4 + $0x74] sm:$0xf] %vm1451, %v1352
    %1482 = vst.msk [vmem:[%s4 + $0x78] sm:$0xf] %vm1451, %v1353
    %1483 = vst.msk [vmem:[%s4 + $0x7c] sm:$0xf] %vm1451, %v1354
    %1484 = vst.msk [vmem:[%s4 + $0x80] sm:$0xf] %vm1451, %v1355
    %1485 = vst.msk [vmem:[%s4 + $0x84] sm:$0xf] %vm1451, %v1356
    %1486 = vst.msk [vmem:[%s4 + $0x88] sm:$0xf] %vm1451, %v1357
    %1487 = vst.msk [vmem:[%s4 + $0x8c] sm:$0xf] %vm1451, %v1358
    %1488 = vst.msk [vmem:[%s4 + $0x90] sm:$0xf] %vm1451, %v1359
    %1489 = vst.msk [vmem:[%s4 + $0x94] sm:$0xf] %vm1451, %v1360
    %1490 = vst.msk [vmem:[%s4 + $0x98] sm:$0xf] %vm1451, %v1361
    %1491 = vst.msk [vmem:[%s4 + $0x9c] sm:$0xf] %vm1451, %v1362
    %1492 = vst.msk [vmem:[%s4 + $0xa0] sm:$0xf] %vm1451, %v1363
    %1493 = vst.msk [vmem:[%s4 + $0xa4] sm:$0xf] %vm1451, %v1364
    %1494 = vst.msk [vmem:[%s4 + $0xa8] sm:$0xf] %vm1451, %v1365
    %1495 = vst.msk [vmem:[%s4 + $0xac] sm:$0xf] %vm1451, %v1366
    %1496 = vst.msk [vmem:[%s4 + $0xb0] sm:$0xf] %vm1451, %v1367
    %1497 = vst.msk [vmem:[%s4 + $0xb4] sm:$0xf] %vm1451, %v1368
    %1498 = vst.msk [vmem:[%s4 + $0xb8] sm:$0xf] %vm1451, %v1369
    %1499 = vst.msk [vmem:[%s4 + $0xbc] sm:$0xf] %vm1451, %v1370
    %1500 = vst.msk [vmem:[%s4 + $0xc0] sm:$0xf] %vm1451, %v1371
    %1501 = vst.msk [vmem:[%s4 + $0xc4] sm:$0xf] %vm1451, %v1372
    %1502 = vst.msk [vmem:[%s4 + $0xc8] sm:$0xf] %vm1451, %v1373
    %1503 = vst.msk [vmem:[%s4 + $0xcc] sm:$0xf] %vm1451, %v1374
    %1504 = vst.msk [vmem:[%s4 + $0xd0] sm:$0xf] %vm1451, %v1375
    %1505 = vst.msk [vmem:[%s4 + $0xd4] sm:$0xf] %vm1451, %v1376
    %1506 = vst.msk [vmem:[%s4 + $0xd8] sm:$0xf] %vm1451, %v1377
    %1507 = vst.msk [vmem:[%s4 + $0xdc] sm:$0xf] %vm1451, %v1378
    %1508 = vst.msk [vmem:[%s4 + $0xe0] sm:$0xf] %vm1451, %v1379
    %1509 = vst.msk [vmem:[%s4 + $0xe4] sm:$0xf] %vm1451, %v1380
    %1510 = vst.msk [vmem:[%s4 + $0xe8] sm:$0xf] %vm1451, %v1381
    %1511 = vst.msk [vmem:[%s4 + $0xec] sm:$0xf] %vm1451, %v1382
    %1512 = vst.msk [vmem:[%s4 + $0xf0] sm:$0xf] %vm1451, %v1383
    %1513 = vst.msk [vmem:[%s4 + $0xf4] sm:$0xf] %vm1451, %v1384
    %1514 = vst.msk [vmem:[%s4 + $0xf8] sm:$0xf] %vm1451, %v1385
    %1515 = vst.msk [vmem:[%s4 + $0xfc] sm:$0xf] %vm1451, %v1386
  $region25: #{_lambda_.8} parent=0 // pred_fallthru
    _
  // Predicated region
  $region26: #{_lambda_.8} parent=0 // pred_check
    _
  $region27: #{_lambda_.8} parent=0 // pred_check_branch
    %1517 = sbr.rel (0) target = $region29
  $region28: #{_lambda_.8} parent=0 // pred_region
    _
  $region29: #{_lambda_.8} parent=0 // pred_fallthru
    _
  // Predicated region
  $region30: #{_lambda_.8} parent=0 // pred_check
    _
  $region31: #{_lambda_.8} parent=0 // pred_check_branch
    %1519 = sbr.rel (0) target = $region33
  $region32: #{_lambda_.8} parent=0 // pred_region
    _
  $region33: #{_lambda_.8} parent=0 // pred_fallthru
    _

// kernel: _lambda_.13
$region0: #{_lambda_.13}
  #allocation0 [shape = 'u32[]', space=smem, size = 0x4, offset = 0x4, fixed_abs, tag = 'smem constant byte address 0x4 - core index']
  #allocation1 [shape = 'u32[144,128]{1,0:T(1,128)}', space=vmem, size = 0x12000, scoped, tag = 'internal scratch']
  #allocation2 [shape = 'f32[16,16]{1,0:T(8,128)}', space=vmem, size = 0x2000, scoped, tag = 'scratch operand']
  %s0 = inlined_call_operand.vmem [shape: bf16[32,32], index: 0, kind: input, shape index: {}]
  %s1 = inlined_call_operand.vmem [shape: bf16[32,16], index: 1, kind: input, shape index: {}]
  %s2 = inlined_call_operand.vmem [shape: f32[1,16], index: 2, kind: input, shape index: {}]
  %s3 = inlined_call_operand.vmem [shape: f32[1,16], index: 3, kind: input, shape index: {}]
  %s4 = inlined_call_operand.vmem [shape: bf16[8,16], index: 4, kind: output, shape index: {}]
  %s5 = sld [smem:[#allocation0]]
  $region26: #{_lambda_.13} parent=0
    _
  %s7 = ssub.s32 1, %s5
  %s8 = scalar_select 0, %s7, %s5
  // Predicated region
  $region2: #{_lambda_.13} parent=0 // pred_check
    _
  $region3: #{_lambda_.13} parent=0 // pred_check_branch
    %10 = sbr.rel (0) target = $region5
  $region4: #{_lambda_.13} parent=0 // pred_region
    _
  $region5: #{_lambda_.13} parent=0 // pred_fallthru
    _
  // Predicated region
  $region6: #{_lambda_.13} parent=0 // pred_check
    _
  $region7: #{_lambda_.13} parent=0 // pred_check_branch
    %12 = sbr.rel (0) target = $region9
  $region8: #{_lambda_.13} parent=0 // pred_region
    _
  $region9: #{_lambda_.13} parent=0 // pred_fallthru
    _
  // Predicated region
  $region10: #{_lambda_.13} parent=0 // pred_check
    _
  $region11: #{_lambda_.13} parent=0 // pred_check_branch
    %14 = sbr.rel (0) target = $region13
  $region12: #{_lambda_.13} parent=0 // pred_region
    _
  $region13: #{_lambda_.13} parent=0 // pred_fallthru
    _
  // Predicated region
  $region14: #{_lambda_.13} parent=0 // pred_check
    _
  $region15: #{_lambda_.13} parent=0 // pred_check_branch
    %16 = sbr.rel (0) target = $region17
  $region16: #{_lambda_.13} parent=0 // pred_region
    _
  $region17: #{_lambda_.13} parent=0 // pred_fallthru
    _
  %v18 = vld [vmem:[%s0] sm:$0xf]
  %v19 = vld [vmem:[%s0 + $0x4] sm:$0xf]
  %v20 = vld [vmem:[%s0 + $0x8] sm:$0xf]
  %v21 = vld [vmem:[%s0 + $0xc] sm:$0xf]
  %v22 = vld [vmem:[%s1] sm:$0xf]
  %v23 = vld [vmem:[%s1 + $0x4] sm:$0xf]
  %v24 = vld [vmem:[%s1 + $0x8] sm:$0xf]
  %v25 = vld [vmem:[%s1 + $0xc] sm:$0xf]
  %v30 = vunpack.c.l.b16 %v18
  %v31 = vunpack.c.l.b16 %v19
  %v32 = vunpack.c.l.b16 %v20
  %v33 = vunpack.c.l.b16 %v21
  %v34 = vpack.c.b16 %v31, %v30
  %v35 = vpack.c.b16 %v33, %v32
  %v40 = vunpack.c.l.b16 %v22
  %v41 = vunpack.c.l.b16 %v23
  %v42 = vunpack.c.l.b16 %v24
  %v43 = vunpack.c.l.b16 %v25
  %v44 = vpack.c.b16 %v41, %v40
  %v45 = vpack.c.b16 %v43, %v42
  %vm48 = vcmask 261120
  %v50 = vsel %vm48, %v34, 0
  %v53 = vsel %vm48, %v35, 0
  %55 = vmatprep.subr.bf16.mxu0 0
  %56 = vmatpush1.bf16.msra.mxu0 %v44
  %57 = vmatprep.subr.bf16.mxu0 0
  %58 = vmatpush1.bf16.msra.mxu0 %v45
  %59 = vmatprep.subr.bf16.mxu0 0
  %60 = vmatpush1.bf16.msra.mxu0 0
  %61 = vmatprep.subr.bf16.mxu0 0
  %62 = vmatpush1.bf16.msra.mxu0 0
  %63 = vmatprep.subr.bf16.mxu0 0
  %64 = vmatpush1.bf16.msra.mxu0 0
  %65 = vmatprep.subr.bf16.mxu0 0
  %66 = vmatpush1.bf16.msra.mxu0 0
  %67 = vmatprep.subr.bf16.mxu0 0
  %68 = vmatpush1.bf16.msra.mxu0 0
  %69 = vmatprep.subr.bf16.mxu0 0
  %70 = vmatpush1.bf16.msra.mxu0 0
  %71 = vmatprep.subr.bf16.mxu0 0
  %72 = vmatpush1.bf16.msra.mxu0 0
  %73 = vmatprep.subr.bf16.mxu0 0
  %74 = vmatpush1.bf16.msra.mxu0 0
  %75 = vmatprep.subr.bf16.mxu0 0
  %76 = vmatpush1.bf16.msra.mxu0 0
  %77 = vmatprep.subr.bf16.mxu0 0
  %78 = vmatpush1.bf16.msra.mxu0 0
  %79 = vmatprep.subr.bf16.mxu0 0
  %80 = vmatpush1.bf16.msra.mxu0 0
  %81 = vmatprep.subr.bf16.mxu0 0
  %82 = vmatpush1.bf16.msra.mxu0 0
  %83 = vmatprep.subr.bf16.mxu0 0
  %84 = vmatpush1.bf16.msra.mxu0 0
  %85 = vmatprep.subr.bf16.mxu0 0
  %86 = vmatpush1.bf16.msra.mxu0 0
  %87 = vmatprep.mubr.bf16.mxu0 0
  %88 = vmatmul.mubr.bf16.gmra.mrb[0].mxu0 %v50
  %v89 = vpop.f32.mrb[0].mxu0
  %v90 = vadd.f32 0.0, %v89
  %v91 = vpop.f32.mrb[0].mxu0
  %v92 = vpop.f32.mrb[0].mxu0
  %v93 = vadd.f32 0.0, %v92
  %v94 = vpop.f32.mrb[0].mxu0
  %95 = vmatprep.mubr.bf16.mxu0 0
  %96 = vmatmul.mubr.bf16.gmra.mrb[0].mxu0 %v53
  %v97 = vpop.f32.mrb[0].mxu0
  %v98 = vadd.f32 0.0, %v97
  %v99 = vpop.f32.mrb[0].mxu0
  %v100 = vpop.f32.mrb[0].mxu0
  %v101 = vadd.f32 0.0, %v100
  %v102 = vpop.f32.mrb[0].mxu0
  %103 = vdwg.mxu0
  %v104 = vld [vmem:[%s2] sm:$0x1]
  %v106 = vlaneseq
  %v107 = vshrl.u32 %v106, 7
  %v108 = vsub.s32 0, %v107
  %v109 = vrot.slane %v104, %v108
  %v111 = vmul.f32 %v90, %v109
  %v112 = vmul.f32 %v93, %v109
  %v113 = vmul.f32 %v98, %v109
  %v114 = vmul.f32 %v101, %v109
  %v115 = vld [vmem:[%s3] sm:$0x1]
  %v117 = vlaneseq
  %v118 = vshrl.u32 %v117, 7
  %v119 = vsub.s32 0, %v118
  %v120 = vrot.slane %v115, %v119
  %v122 = vadd.f32 %v111, %v120
  %v123 = vadd.f32 %v112, %v120
  %v124 = vadd.f32 %v113, %v120
  %v125 = vadd.f32 %v114, %v120
  %v126 = vmax.f32 %v122, 0.0
  %v127 = vmax.f32 %v123, 0.0
  %v128 = vmax.f32 %v124, 0.0
  %v129 = vmax.f32 %v125, 0.0
  %v131 = vrot.slane %v126, 4
  %v133 = vadd.f32 %v126, %v131
  %vm134 = vcmask 125952
  %135 = vst.msk [vmem:[#allocation2] sm:$0xf] %vm134, %v133
  %v137 = vrot.slane %v127, 4
  %v139 = vadd.f32 %v127, %v137
  %140 = vst.msk [vmem:[#allocation2 + $0x4] sm:$0xf] %vm134, %v139
  %v142 = vrot.slane %v128, 4
  %v144 = vadd.f32 %v128, %v142
  %145 = vst.msk [vmem:[#allocation2 + $0x8] sm:$0xf] %vm134, %v144
  %v147 = vrot.slane %v129, 4
  %v149 = vadd.f32 %v129, %v147
  %150 = vst.msk [vmem:[#allocation2 + $0xc] sm:$0xf] %vm134, %v149
  %v151 = vld [vmem:[#allocation2] ss:$2 sm:$0xff]
  %s152 = scalar_lea.vmem [#allocation2], 1
  %v153 = vld [vmem:[%s152] ss:$2 sm:$0xff]
  %v154 = vadd.f32 %v151, %v153
  %v155 = vmul.f32 %v154, 0.25
  %v156 = vpack.c.bf16 %v155, %v155
  %157 = vst.msk [vmem:[%s4] sm:$0xf] %vm134, %v156
  // Predicated region
  $region18: #{_lambda_.13} parent=0 // pred_check
    _
  $region19: #{_lambda_.13} parent=0 // pred_check_branch
    %159 = sbr.rel (0) target = $region21
  $region20: #{_lambda_.13} parent=0 // pred_region
    _
  $region21: #{_lambda_.13} parent=0 // pred_fallthru
    _
  // Predicated region
  $region22: #{_lambda_.13} parent=0 // pred_check
    _
  $region23: #{_lambda_.13} parent=0 // pred_check_branch
    %161 = sbr.rel (0) target = $region25
  $region24: #{_lambda_.13} parent=0 // pred_region
    _
  $region25: #{_lambda_.13} parent=0 // pred_fallthru
    _

// kernel: _lambda_.15
$region0: #{_lambda_.15}
  #allocation0 [shape = 'u32[]', space=smem, size = 0x4, offset = 0x4, fixed_abs, tag = 'smem constant byte address 0x4 - core index']
  #allocation1 [shape = 'u32[144,128]{1,0:T(1,128)}', space=vmem, size = 0x12000, scoped, tag = 'internal scratch']
  %s0 = inlined_call_operand.vmem [shape: bf16[2,4,32], index: 0, kind: input, shape index: {}]
  %s1 = inlined_call_operand.vmem [shape: f32[32,16], index: 1, kind: input, shape index: {}]
  %s2 = inlined_call_operand.vmem [shape: f32[1,16], index: 2, kind: input, shape index: {}]
  %s3 = inlined_call_operand.hbm [shape: f32[2,16], index: 3, kind: output, shape index: {}]
  %s4 = sld [smem:[#allocation0]]
  $region22: #{_lambda_.15} parent=0
    _
  %s6 = ssub.s32 1, %s4
  %s7 = scalar_select 0, %s6, %s4
  $region1: #{_lambda_.15} parent=0
    #allocation2 [shape = 'u8[1024]{0}', space=vmem, size = 0x400, scoped, tag = 'output window, operand 0, single buffered']
    #allocation3 [shape = 's32[1]{0}', space=sflag, size = 0x4, scoped, tag = 'scoped memory for _lambda_.15']
    %8 = vsyncpa [#allocation3], 0
    // Predicated region
    $region2: #{_lambda_.15} parent=1 // pred_check
      _
    $region3: #{_lambda_.15} parent=1 // pred_check_branch
      %10 = sbr.rel (0) target = $region5
    $region4: #{_lambda_.15} parent=1 // pred_region
      _
    $region5: #{_lambda_.15} parent=1 // pred_fallthru
      _
    // Predicated region
    $region6: #{_lambda_.15} parent=1 // pred_check
      _
    $region7: #{_lambda_.15} parent=1 // pred_check_branch
      %12 = sbr.rel (0) target = $region9
    $region8: #{_lambda_.15} parent=1 // pred_region
      _
    $region9: #{_lambda_.15} parent=1 // pred_fallthru
      _
    // Predicated region
    $region10: #{_lambda_.15} parent=1 // pred_check
      _
    $region11: #{_lambda_.15} parent=1 // pred_check_branch
      %14 = sbr.rel (0) target = $region13
    $region12: #{_lambda_.15} parent=1 // pred_region
      _
    $region13: #{_lambda_.15} parent=1 // pred_fallthru
      _
    %v15 = vld [vmem:[%s0] sm:$0x3]
    %v16 = vld [vmem:[%s0 + $0x2] sm:$0x3]
    %v17 = vunpack.c.l.bf16 %v15
    %v18 = vunpack.c.l.bf16 %v16
    %vm19 = vcmask 257024
    %v20 = vsel %vm19, %v17, 0.0
    %v21 = vrot.slane %v20, 4
    %v22 = vadd.f32 %v20, %v21
    %v23 = vrot.slane %v22, 2
    %v24 = vadd.f32 %v22, %v23
    %v25 = vrot.slane %v24, 1
    %v26 = vadd.f32 %v24, %v25
    %v27 = vsel %vm19, %v18, 0.0
    %v28 = vrot.slane %v27, 4
    %v29 = vadd.f32 %v27, %v28
    %v30 = vrot.slane %v29, 2
    %v31 = vadd.f32 %v29, %v30
    %v32 = vrot.slane %v31, 1
    %v33 = vadd.f32 %v31, %v32
    %v34 = vmul.f32 %v26, 0.25
    %v35 = vmul.f32 %v33, 0.25
    %v36 = vld [vmem:[%s1] sm:$0xff]
    %v37 = vld [vmem:[%s1 + $0x8] sm:$0xff]
    %v38 = vld [vmem:[%s1 + $0x10] sm:$0xff]
    %v39 = vld [vmem:[%s1 + $0x18] sm:$0xff]
    %v40 = vld [vmem:[%s2] sm:$0x1]
    %v42 = vlaneseq
    %v43 = vshrl.u32 %v42, 7
    %v44 = vsub.s32 0, %v43
    %v45 = vrot.slane %v40, %v44
    %vm49 = vcmask 1041409
    %v50 = vsel %vm49, %v35, %v34
    %vm51 = vcmask 261120
    %v52 = vsel %vm51, %v50, 0
    %54 = vmatprep.subr.mxu0 0.0
    %55 = vmatpush1.msra.mxu0 %v36
    %56 = vmatprep.subr.mxu0 0.0
    %57 = vmatpush1.msra.mxu0 %v37
    %58 = vmatprep.subr.mxu0 0.0
    %59 = vmatpush1.msra.mxu0 %v38
    %60 = vmatprep.subr.mxu0 0.0
    %61 = vmatpush1.msra.mxu0 %v39
    %62 = vmatprep.subr.mxu0 0.0
    %63 = vmatpush1.msra.mxu0 0.0
    %64 = vmatprep.subr.mxu0 0.0
    %65 = vmatpush1.msra.mxu0 0.0
    %66 = vmatprep.subr.mxu0 0.0
    %67 = vmatpush1.msra.mxu0 0.0
    %68 = vmatprep.subr.mxu0 0.0
    %69 = vmatpush1.msra.mxu0 0.0
    %70 = vmatprep.subr.mxu0 0.0
    %71 = vmatpush1.msra.mxu0 0.0
    %72 = vmatprep.subr.mxu0 0.0
    %73 = vmatpush1.msra.mxu0 0.0
    %74 = vmatprep.subr.mxu0 0.0
    %75 = vmatpush1.msra.mxu0 0.0
    %76 = vmatprep.subr.mxu0 0.0
    %77 = vmatpush1.msra.mxu0 0.0
    %78 = vmatprep.subr.mxu0 0.0
    %79 = vmatpush1.msra.mxu0 0.0
    %80 = vmatprep.subr.mxu0 0.0
    %81 = vmatpush1.msra.mxu0 0.0
    %82 = vmatprep.subr.mxu0 0.0
    %83 = vmatpush1.msra.mxu0 0.0
    %84 = vmatprep.subr.mxu0 0.0
    %85 = vmatpush1.msra.mxu0 0.0
    %86 = vmatprep.subr.mxu0 0.0
    %87 = vmatpush1.msra.mxu0 0.0
    %88 = vmatprep.subr.mxu0 0.0
    %89 = vmatpush1.msra.mxu0 0.0
    %90 = vmatprep.subr.mxu0 0.0
    %91 = vmatpush1.msra.mxu0 0.0
    %92 = vmatprep.subr.mxu0 0.0
    %93 = vmatpush1.msra.mxu0 0.0
    %94 = vmatprep.subr.mxu0 0.0
    %95 = vmatpush1.msra.mxu0 0.0
    %96 = vmatprep.subr.mxu0 0.0
    %97 = vmatpush1.msra.mxu0 0.0
    %98 = vmatprep.subr.mxu0 0.0
    %99 = vmatpush1.msra.mxu0 0.0
    %100 = vmatprep.subr.mxu0 0.0
    %101 = vmatpush1.msra.mxu0 0.0
    %102 = vmatprep.subr.mxu0 0.0
    %103 = vmatpush1.msra.mxu0 0.0
    %104 = vmatprep.subr.mxu0 0.0
    %105 = vmatpush1.msra.mxu0 0.0
    %106 = vmatprep.subr.mxu0 0.0
    %107 = vmatpush1.msra.mxu0 0.0
    %108 = vmatprep.subr.mxu0 0.0
    %109 = vmatpush1.msra.mxu0 0.0
    %110 = vmatprep.subr.mxu0 0.0
    %111 = vmatpush1.msra.mxu0 0.0
    %112 = vmatprep.subr.mxu0 0.0
    %113 = vmatpush1.msra.mxu0 0.0
    %114 = vmatprep.subr.mxu0 0.0
    %115 = vmatpush1.msra.mxu0 0.0
    %116 = vmatprep.subr.mxu0 0.0
    %117 = vmatpush1.msra.mxu0 0.0
    %118 = vmatprep.mubr.f32.mxu0 0.0
    %119 = vmatmul.mubr.f32.gmra.mrb[0].mxu0 %v52
    %v120 = vpop.f32.mrb[0].mxu0
    %v121 = vadd.f32 %v45, %v120
    %v122 = vpop.f32.mrb[0].mxu0
    %123 = vdwg.mxu0
    %v124 = vtanh.pop %v121
    %vm125 = vcmask 123904
    %126 = vst.msk [vmem:[#allocation2] sm:$0x3] %vm125, %v124
    // Predicated region
    $region14: #{_lambda_.15} parent=1 // pred_check
      _
    $region15: #{_lambda_.15} parent=1 // pred_check_branch
      %128 = sbr.rel (0) target = $region17
    $region16: #{_lambda_.15} parent=1 // pred_region
      %s130 = ssub.s32 32, 32
      %131 = vsyncadd [#allocation3], %s130
      %s133 = sshll.u32 [#allocation2], 4
      %s134 = int_to_ptr.vmem [resolvable:$true] %s133
      %136 = dma.vmem_to_hbm [thread:$0]  %s134, 32, %s3, [#allocation3]
    $region17: #{_lambda_.15} parent=1 // pred_fallthru
      _
    // Predicated region
    $region18: #{_lambda_.15} parent=1 // pred_check
      _
    $region19: #{_lambda_.15} parent=1 // pred_check_branch
      %138 = sbr.rel (0) target = $region21
    $region20: #{_lambda_.15} parent=1 // pred_region
      %139 = dma.done [#allocation3], 32
    $region21: #{_lambda_.15} parent=1 // pred_fallthru
      _
    %140 = vsyncpa [#allocation3], 1

// kernel: _lambda_.12
$region0: #{_lambda_.12}
  #allocation0 [shape = 'u32[]', space=smem, size = 0x4, offset = 0x4, fixed_abs, tag = 'smem constant byte address 0x4 - core index']
  #allocation1 [shape = 'u32[144,128]{1,0:T(1,128)}', space=vmem, size = 0x12000, scoped, tag = 'internal scratch']
  #allocation2 [shape = 'bf16[96,32]{1,0:T(16,128)(2,1)}', space=vmem, size = 0x6000, scoped, tag = 'scratch operand']
  #allocation3 [shape = 'f32[96,72]{1,0:T(8,128)}', space=vmem, size = 0xc000, scoped, tag = 'scratch operand']
  %s0 = inlined_call_operand.vmem [shape: bf16[32,16], index: 0, kind: input, shape index: {}]
  %s1 = inlined_call_operand.vmem [shape: bf16[2,32,32], index: 1, kind: input, shape index: {}]
  %s2 = inlined_call_operand.vmem [shape: f32[2,1,32], index: 2, kind: input, shape index: {}]
  %s3 = inlined_call_operand.vmem [shape: f32[2,1,32], index: 3, kind: input, shape index: {}]
  %s4 = inlined_call_operand.vmem [shape: bf16[2,32,72], index: 4, kind: input, shape index: {}]
  %s5 = inlined_call_operand.vmem [shape: f32[2,1,8], index: 5, kind: input, shape index: {}]
  %s6 = inlined_call_operand.vmem [shape: f32[2,1,8], index: 6, kind: input, shape index: {}]
  %s7 = inlined_call_operand.vmem [shape: bf16[32,32], index: 7, kind: output, shape index: {}]
  %s8 = sld [smem:[#allocation0]]
  $region38: #{_lambda_.12} parent=0
    _
  %s10 = ssub.s32 1, %s8
  %s11 = scalar_select 0, %s10, %s8
  // Predicated region
  $region2: #{_lambda_.12} parent=0 // pred_check
    _
  $region3: #{_lambda_.12} parent=0 // pred_check_branch
    %13 = sbr.rel (0) target = $region5
  $region4: #{_lambda_.12} parent=0 // pred_region
    _
  $region5: #{_lambda_.12} parent=0 // pred_fallthru
    _
  // Predicated region
  $region6: #{_lambda_.12} parent=0 // pred_check
    _
  $region7: #{_lambda_.12} parent=0 // pred_check_branch
    %15 = sbr.rel (0) target = $region9
  $region8: #{_lambda_.12} parent=0 // pred_region
    _
  $region9: #{_lambda_.12} parent=0 // pred_fallthru
    _
  // Predicated region
  $region10: #{_lambda_.12} parent=0 // pred_check
    _
  $region11: #{_lambda_.12} parent=0 // pred_check_branch
    %17 = sbr.rel (0) target = $region13
  $region12: #{_lambda_.12} parent=0 // pred_region
    _
  $region13: #{_lambda_.12} parent=0 // pred_fallthru
    _
  // Predicated region
  $region14: #{_lambda_.12} parent=0 // pred_check
    _
  $region15: #{_lambda_.12} parent=0 // pred_check_branch
    %19 = sbr.rel (0) target = $region17
  $region16: #{_lambda_.12} parent=0 // pred_region
    _
  $region17: #{_lambda_.12} parent=0 // pred_fallthru
    _
  // Predicated region
  $region18: #{_lambda_.12} parent=0 // pred_check
    _
  $region19: #{_lambda_.12} parent=0 // pred_check_branch
    %21 = sbr.rel (0) target = $region21
  $region20: #{_lambda_.12} parent=0 // pred_region
    _
  $region21: #{_lambda_.12} parent=0 // pred_fallthru
    _
  // Predicated region
  $region22: #{_lambda_.12} parent=0 // pred_check
    _
  $region23: #{_lambda_.12} parent=0 // pred_check_branch
    %23 = sbr.rel (0) target = $region25
  $region24: #{_lambda_.12} parent=0 // pred_region
    _
  $region25: #{_lambda_.12} parent=0 // pred_fallthru
    _
  // Predicated region
  $region26: #{_lambda_.12} parent=0 // pred_check
    _
  $region27: #{_lambda_.12} parent=0 // pred_check_branch
    %25 = sbr.rel (0) target = $region29
  $region28: #{_lambda_.12} parent=0 // pred_region
    _
  $region29: #{_lambda_.12} parent=0 // pred_fallthru
    _
  %v27 = vld [vmem:[%s0] sm:$0xf]
  %v28 = vld [vmem:[%s0 + $0x4] sm:$0xf]
  %v29 = vld [vmem:[%s0 + $0x8] sm:$0xf]
  %v30 = vld [vmem:[%s0 + $0xc] sm:$0xf]
  %vm31 = vcmask 125952
  %32 = vst.msk [vmem:[%s7] sm:$0xf] %vm31, %v27
  %33 = vst.msk [vmem:[%s7 + $0x4] sm:$0xf] %vm31, %v28
  %34 = vst.msk [vmem:[%s7 + $0x8] sm:$0xf] %vm31, %v29
  %35 = vst.msk [vmem:[%s7 + $0xc] sm:$0xf] %vm31, %v30
  %vm36 = vcmask 257152
  %37 = vst.msk [vmem:[%s7] sm:$0xf] %vm36, 0
  %38 = vst.msk [vmem:[%s7 + $0x4] sm:$0xf] %vm36, 0
  %39 = vst.msk [vmem:[%s7 + $0x8] sm:$0xf] %vm36, 0
  %40 = vst.msk [vmem:[%s7 + $0xc] sm:$0xf] %vm36, 0
  %vm41 = vcmask 261120
  %42 = vst.msk [vmem:[#allocation2] sm:$0xff] %vm41, 0
  %43 = vst.msk [vmem:[#allocation2 + $0x8] sm:$0xff] %vm41, 0
  %44 = vst.msk [vmem:[#allocation2 + $0x10] sm:$0xff] %vm41, 0
  %45 = vst.msk [vmem:[#allocation2 + $0x18] sm:$0xff] %vm41, 0
  %46 = vst.msk [vmem:[#allocation2 + $0x20] sm:$0xff] %vm41, 0
  %47 = vst.msk [vmem:[#allocation2 + $0x28] sm:$0xff] %vm41, 0
  %v48 = vld [vmem:[%s7] sm:$0xf]
  %v49 = vld [vmem:[%s7 + $0x4] sm:$0xf]
  %v50 = vld [vmem:[%s7 + $0x8] sm:$0xf]
  %v51 = vld [vmem:[%s7 + $0xc] sm:$0xf]
  %v52 = vld [vmem:[%s1] sm:$0xf]
  %v53 = vld [vmem:[%s1 + $0x4] sm:$0xf]
  %v54 = vld [vmem:[%s1 + $0x8] sm:$0xf]
  %v55 = vld [vmem:[%s1 + $0xc] sm:$0xf]
  %v60 = vunpack.c.l.b16 %v48
  %v61 = vunpack.c.l.b16 %v49
  %v62 = vunpack.c.l.b16 %v50
  %v63 = vunpack.c.l.b16 %v51
  %v64 = vpack.c.b16 %v61, %v60
  %v65 = vpack.c.b16 %v63, %v62
  %v70 = vunpack.c.l.b16 %v52
  %v71 = vunpack.c.l.b16 %v53
  %v72 = vunpack.c.l.b16 %v54
  %v73 = vunpack.c.l.b16 %v55
  %v74 = vpack.c.b16 %v71, %v70
  %v75 = vpack.c.b16 %v73, %v72
  %v79 = vsel %vm41, %v64, 0
  %v82 = vsel %vm41, %v65, 0
  %84 = vmatprep.subr.bf16.mxu0 0
  %85 = vmatpush1.bf16.msra.mxu0 %v74
  %86 = vmatprep.subr.bf16.mxu0 0
  %87 = vmatpush1.bf16.msra.mxu0 %v75
  %88 = vmatprep.subr.bf16.mxu0 0
  %89 = vmatpush1.bf16.msra.mxu0 0
  %90 = vmatprep.subr.bf16.mxu0 0
  %91 = vmatpush1.bf16.msra.mxu0 0
  %92 = vmatprep.subr.bf16.mxu0 0
  %93 = vmatpush1.bf16.msra.mxu0 0
  %94 = vmatprep.subr.bf16.mxu0 0
  %95 = vmatpush1.bf16.msra.mxu0 0
  %96 = vmatprep.subr.bf16.mxu0 0
  %97 = vmatpush1.bf16.msra.mxu0 0
  %98 = vmatprep.subr.bf16.mxu0 0
  %99 = vmatpush1.bf16.msra.mxu0 0
  %100 = vmatprep.subr.bf16.mxu0 0
  %101 = vmatpush1.bf16.msra.mxu0 0
  %102 = vmatprep.subr.bf16.mxu0 0
  %103 = vmatpush1.bf16.msra.mxu0 0
  %104 = vmatprep.subr.bf16.mxu0 0
  %105 = vmatpush1.bf16.msra.mxu0 0
  %106 = vmatprep.subr.bf16.mxu0 0
  %107 = vmatpush1.bf16.msra.mxu0 0
  %108 = vmatprep.subr.bf16.mxu0 0
  %109 = vmatpush1.bf16.msra.mxu0 0
  %110 = vmatprep.subr.bf16.mxu0 0
  %111 = vmatpush1.bf16.msra.mxu0 0
  %112 = vmatprep.subr.bf16.mxu0 0
  %113 = vmatpush1.bf16.msra.mxu0 0
  %114 = vmatprep.subr.bf16.mxu0 0
  %115 = vmatpush1.bf16.msra.mxu0 0
  %116 = vmatprep.mubr.bf16.mxu0 0
  %117 = vmatmul.mubr.bf16.gmra.mrb[0].mxu0 %v79
  %v118 = vpop.f32.mrb[0].mxu0
  %v119 = vadd.f32 0.0, %v118
  %v120 = vpop.f32.mrb[0].mxu0
  %v121 = vpop.f32.mrb[0].mxu0
  %v122 = vadd.f32 0.0, %v121
  %v123 = vpop.f32.mrb[0].mxu0
  %124 = vmatprep.mubr.bf16.mxu0 0
  %125 = vmatmul.mubr.bf16.gmra.mrb[0].mxu0 %v82
  %v126 = vpop.f32.mrb[0].mxu0
  %v127 = vadd.f32 0.0, %v126
  %v128 = vpop.f32.mrb[0].mxu0
  %v129 = vpop.f32.mrb[0].mxu0
  %v130 = vadd.f32 0.0, %v129
  %v131 = vpop.f32.mrb[0].mxu0
  %132 = vdwg.mxu0
  %v133 = vld [vmem:[%s2] sm:$0x1]
  %v135 = vlaneseq
  %v136 = vshrl.u32 %v135, 7
  %v137 = vsub.s32 0, %v136
  %v138 = vrot.slane %v133, %v137
  %v140 = vmul.f32 %v119, %v138
  %v141 = vmul.f32 %v122, %v138
  %v142 = vmul.f32 %v127, %v138
  %v143 = vmul.f32 %v130, %v138
  %v144 = vld [vmem:[%s3] sm:$0x1]
  %v146 = vlaneseq
  %v147 = vshrl.u32 %v146, 7
  %v148 = vsub.s32 0, %v147
  %v149 = vrot.slane %v144, %v148
  %v151 = vadd.f32 %v140, %v149
  %v152 = vadd.f32 %v141, %v149
  %v153 = vadd.f32 %v142, %v149
  %v154 = vadd.f32 %v143, %v149
  %v155 = vmax.f32 %v151, 0.0
  %v156 = vmax.f32 %v152, 0.0
  %v157 = vmax.f32 %v153, 0.0
  %v158 = vmax.f32 %v154, 0.0
  %v159 = vpack.c.bf16 %v156, %v155
  %v160 = vpack.c.bf16 %v158, %v157
  %v162 = vshrl.u32 %v159, 16
  %v164 = vrot.slane %v162, 3
  %v165 = vshll.u32 %v159, 16
  %v167 = vrot.slane %v165, 4
  %v168 = vor.u32 %v164, %v167
  %vm170 = vcmask 260100
  %vm171 = vsmask.f32 6418
  %vm172 = vmand %vm170, %vm171
  %v173 = vld [vmem:[#allocation2] sm:$0x70]
  %v174 = vsel %vm172, %v168, %v173
  %175 = vst [vmem:[#allocation2] sm:$0x70] %v174
  %v176 = vrot.slane %v162, 1
  %v177 = vrot.slane %v165, 2
  %v178 = vor.u32 %v176, %v177
  %vm180 = vcmask 256000
  %vm181 = vsmask.f32 2306
  %vm182 = vmand %vm180, %vm181
  %v183 = vld [vmem:[#allocation2 + $0x8] sm:$0x7]
  %v184 = vsel %vm182, %v178, %v183
  %185 = vst [vmem:[#allocation2 + $0x8] sm:$0x7] %v184
  %v186 = vrot.slane %v162, 7
  %v187 = vor.u32 %v186, %v165
  %v189 = vld [vmem:[#allocation2 + $0x8] sm:$0x70]
  %v190 = vsel %vm172, %v187, %v189
  %191 = vst [vmem:[#allocation2 + $0x8] sm:$0x70] %v190
  %v192 = vrot.slane %v162, 5
  %v193 = vrot.slane %v165, 6
  %v194 = vor.u32 %v192, %v193
  %v196 = vld [vmem:[#allocation2 + $0x10] sm:$0x7]
  %v197 = vsel %vm182, %v194, %v196
  %198 = vst [vmem:[#allocation2 + $0x10] sm:$0x7] %v197
  %v200 = vshrl.u32 %v160, 16
  %v202 = vrot.slane %v200, 3
  %v203 = vshll.u32 %v160, 16
  %v205 = vrot.slane %v203, 4
  %v206 = vor.u32 %v202, %v205
  %v208 = vld [vmem:[#allocation2 + $0x18] sm:$0x70]
  %v209 = vsel %vm172, %v206, %v208
  %210 = vst [vmem:[#allocation2 + $0x18] sm:$0x70] %v209
  %v211 = vrot.slane %v200, 1
  %v212 = vrot.slane %v203, 2
  %v213 = vor.u32 %v211, %v212
  %v215 = vld [vmem:[#allocation2 + $0x20] sm:$0x7]
  %v216 = vsel %vm182, %v213, %v215
  %217 = vst [vmem:[#allocation2 + $0x20] sm:$0x7] %v216
  %v218 = vrot.slane %v200, 7
  %v219 = vor.u32 %v218, %v203
  %v221 = vld [vmem:[#allocation2 + $0x20] sm:$0x70]
  %v222 = vsel %vm172, %v219, %v221
  %223 = vst [vmem:[#allocation2 + $0x20] sm:$0x70] %v222
  %v224 = vrot.slane %v200, 5
  %v225 = vrot.slane %v203, 6
  %v226 = vor.u32 %v224, %v225
  %v228 = vld [vmem:[#allocation2 + $0x28] sm:$0x7]
  %v229 = vsel %vm182, %v226, %v228
  %230 = vst [vmem:[#allocation2 + $0x28] sm:$0x7] %v229
  %v231 = vld [vmem:[#allocation2] sm:$0xff]
  %v232 = vld [vmem:[#allocation2 + $0x8] sm:$0xff]
  %v233 = vld [vmem:[#allocation2 + $0x10] sm:$0xff]
  %v234 = vld [vmem:[#allocation2 + $0x18] sm:$0xff]
  %v235 = vld [vmem:[#allocation2 + $0x20] sm:$0xff]
  %v236 = vld [vmem:[#allocation2 + $0x28] sm:$0xff]
  %v237 = vld [vmem:[%s4] sm:$0xf]
  %v238 = vld [vmem:[%s4 + $0x4] sm:$0xf]
  %v239 = vld [vmem:[%s4 + $0x8] sm:$0xf]
  %v240 = vld [vmem:[%s4 + $0xc] sm:$0xf]
  %v245 = vunpack.c.l.b16 %v237
  %v246 = vunpack.c.l.b16 %v238
  %v247 = vunpack.c.l.b16 %v239
  %v248 = vunpack.c.l.b16 %v240
  %v249 = vpack.c.b16 %v246, %v245
  %v250 = vpack.c.b16 %v248, %v247
  %v254 = vsel %vm41, %v231, 0
  %v257 = vsel %vm41, %v232, 0
  %v260 = vsel %vm41, %v233, 0
  %v263 = vsel %vm41, %v234, 0
  %v266 = vsel %vm41, %v235, 0
  %v269 = vsel %vm41, %v236, 0
  %271 = vmatprep.subr.bf16.mxu0 0
  %272 = vmatpush1.bf16.msra.mxu0 %v249
  %273 = vmatprep.subr.bf16.mxu0 0
  %274 = vmatpush1.bf16.msra.mxu0 %v250
  %275 = vmatprep.subr.bf16.mxu0 0
  %276 = vmatpush1.bf16.msra.mxu0 0
  %277 = vmatprep.subr.bf16.mxu0 0
  %278 = vmatpush1.bf16.msra.mxu0 0
  %279 = vmatprep.subr.bf16.mxu0 0
  %280 = vmatpush1.bf16.msra.mxu0 0
  %281 = vmatprep.subr.bf16.mxu0 0
  %282 = vmatpush1.bf16.msra.mxu0 0
  %283 = vmatprep.subr.bf16.mxu0 0
  %284 = vmatpush1.bf16.msra.mxu0 0
  %285 = vmatprep.subr.bf16.mxu0 0
  %286 = vmatpush1.bf16.msra.mxu0 0
  %287 = vmatprep.subr.bf16.mxu0 0
  %288 = vmatpush1.bf16.msra.mxu0 0
  %289 = vmatprep.subr.bf16.mxu0 0
  %290 = vmatpush1.bf16.msra.mxu0 0
  %291 = vmatprep.subr.bf16.mxu0 0
  %292 = vmatpush1.bf16.msra.mxu0 0
  %293 = vmatprep.subr.bf16.mxu0 0
  %294 = vmatpush1.bf16.msra.mxu0 0
  %295 = vmatprep.subr.bf16.mxu0 0
  %296 = vmatpush1.bf16.msra.mxu0 0
  %297 = vmatprep.subr.bf16.mxu0 0
  %298 = vmatpush1.bf16.msra.mxu0 0
  %299 = vmatprep.subr.bf16.mxu0 0
  %300 = vmatpush1.bf16.msra.mxu0 0
  %301 = vmatprep.subr.bf16.mxu0 0
  %302 = vmatpush1.bf16.msra.mxu0 0
  %303 = vmatprep.mubr.bf16.mxu0 0
  %304 = vmatmul.mubr.bf16.gmra.mrb[0].mxu0 %v254
  %v305 = vpop.f32.mrb[0].mxu0
  %v306 = vadd.f32 0.0, %v305
  %v307 = vpop.f32.mrb[0].mxu0
  %v308 = vpop.f32.mrb[0].mxu0
  %v309 = vadd.f32 0.0, %v308
  %v310 = vpop.f32.mrb[0].mxu0
  %311 = vmatprep.mubr.bf16.mxu0 0
  %312 = vmatmul.mubr.bf16.gmra.mrb[0].mxu0 %v257
  %v313 = vpop.f32.mrb[0].mxu0
  %v314 = vadd.f32 0.0, %v313
  %v315 = vpop.f32.mrb[0].mxu0
  %v316 = vpop.f32.mrb[0].mxu0
  %v317 = vadd.f32 0.0, %v316
  %v318 = vpop.f32.mrb[0].mxu0
  %319 = vmatprep.mubr.bf16.mxu0 0
  %320 = vmatmul.mubr.bf16.gmra.mrb[0].mxu0 %v260
  %v321 = vpop.f32.mrb[0].mxu0
  %v322 = vadd.f32 0.0, %v321
  %v323 = vpop.f32.mrb[0].mxu0
  %v324 = vpop.f32.mrb[0].mxu0
  %v325 = vadd.f32 0.0, %v324
  %v326 = vpop.f32.mrb[0].mxu0
  %327 = vmatprep.mubr.bf16.mxu0 0
  %328 = vmatmul.mubr.bf16.gmra.mrb[0].mxu0 %v263
  %v329 = vpop.f32.mrb[0].mxu0
  %v330 = vadd.f32 0.0, %v329
  %v331 = vpop.f32.mrb[0].mxu0
  %v332 = vpop.f32.mrb[0].mxu0
  %v333 = vadd.f32 0.0, %v332
  %v334 = vpop.f32.mrb[0].mxu0
  %335 = vmatprep.mubr.bf16.mxu0 0
  %336 = vmatmul.mubr.bf16.gmra.mrb[0].mxu0 %v266
  %v337 = vpop.f32.mrb[0].mxu0
  %v338 = vadd.f32 0.0, %v337
  %v339 = vpop.f32.mrb[0].mxu0
  %v340 = vpop.f32.mrb[0].mxu0
  %v341 = vadd.f32 0.0, %v340
  %v342 = vpop.f32.mrb[0].mxu0
  %343 = vmatprep.mubr.bf16.mxu0 0
  %344 = vmatmul.mubr.bf16.gmra.mrb[0].mxu0 %v269
  %v345 = vpop.f32.mrb[0].mxu0
  %v346 = vadd.f32 0.0, %v345
  %v347 = vpop.f32.mrb[0].mxu0
  %v348 = vpop.f32.mrb[0].mxu0
  %v349 = vadd.f32 0.0, %v348
  %v350 = vpop.f32.mrb[0].mxu0
  %351 = vdwg.mxu0
  %vm352 = vcmask 588800
  %353 = vst.msk [vmem:[#allocation3] sm:$0xff] %vm352, %v306
  %354 = vst.msk [vmem:[#allocation3 + $0x8] sm:$0xff] %vm352, %v309
  %355 = vst.msk [vmem:[#allocation3 + $0x10] sm:$0xff] %vm352, %v314
  %356 = vst.msk [vmem:[#allocation3 + $0x18] sm:$0xff] %vm352, %v317
  %357 = vst.msk [vmem:[#allocation3 + $0x20] sm:$0xff] %vm352, %v322
  %358 = vst.msk [vmem:[#allocation3 + $0x28] sm:$0xff] %vm352, %v325
  %359 = vst.msk [vmem:[#allocation3 + $0x30] sm:$0xff] %vm352, %v330
  %360 = vst.msk [vmem:[#allocation3 + $0x38] sm:$0xff] %vm352, %v333
  %361 = vst.msk [vmem:[#allocation3 + $0x40] sm:$0xff] %vm352, %v338
  %362 = vst.msk [vmem:[#allocation3 + $0x48] sm:$0xff] %vm352, %v341
  %363 = vst.msk [vmem:[#allocation3 + $0x50] sm:$0xff] %vm352, %v346
  %364 = vst.msk [vmem:[#allocation3 + $0x58] sm:$0xff] %vm352, %v349
  %v365 = vld [vmem:[#allocation3] sm:$0xff]
  %v366 = vld [vmem:[#allocation3 + $0x8] sm:$0xff]
  %v367 = vld [vmem:[#allocation3 + $0x10] sm:$0xff]
  %v368 = vld [vmem:[#allocation3 + $0x18] sm:$0xff]
  %v369 = vld [vmem:[#allocation3 + $0x30] sm:$0xff]
  %v370 = vld [vmem:[#allocation3 + $0x38] sm:$0xff]
  %v371 = vld [vmem:[#allocation3 + $0x40] sm:$0xff]
  %v372 = vld [vmem:[#allocation3 + $0x48] sm:$0x3f]
  %v373 = vld [vmem:[#allocation3 + $0x1] sm:$0xff]
  %v374 = vld [vmem:[#allocation3 + $0x9] sm:$0xff]
  %v375 = vld [vmem:[#allocation3 + $0x11] sm:$0xff]
  %v376 = vld [vmem:[#allocation3 + $0x19] sm:$0xff]
  %v377 = vld [vmem:[#allocation3 + $0x31] sm:$0xff]
  %v378 = vld [vmem:[#allocation3 + $0x39] sm:$0xff]
  %v379 = vld [vmem:[#allocation3 + $0x41] sm:$0xff]
  %v380 = vld [vmem:[#allocation3 + $0x49] sm:$0x3f]
  %389 = vrot.lane.b32.xlu0 %v373, 120
  %v390 = vpop.permute.xlu0 %389
  %391 = vrot.lane.b32.xlu0 %v374, 120
  %v392 = vpop.permute.xlu0 %391
  %393 = vrot.lane.b32.xlu0 %v375, 120
  %v394 = vpop.permute.xlu0 %393
  %395 = vrot.lane.b32.xlu0 %v376, 120
  %v396 = vpop.permute.xlu0 %395
  %397 = vrot.lane.b32.xlu0 %v377, 120
  %v398 = vpop.permute.xlu0 %397
  %399 = vrot.lane.b32.xlu0 %v378, 120
  %v400 = vpop.permute.xlu0 %399
  %401 = vrot.lane.b32.xlu0 %v379, 120
  %v402 = vpop.permute.xlu0 %401
  %403 = vrot.lane.b32.xlu0 %v380, 120
  %v404 = vpop.permute.xlu0 %403
  %v413 = vadd.f32 %v365, %v390
  %v414 = vadd.f32 %v366, %v392
  %v415 = vadd.f32 %v367, %v394
  %v416 = vadd.f32 %v368, %v396
  %v417 = vadd.f32 %v369, %v398
  %v418 = vadd.f32 %v370, %v400
  %v419 = vadd.f32 %v371, %v402
  %v420 = vadd.f32 %v372, %v404
  %v421 = vld [vmem:[#allocation3 + $0x2] sm:$0xff]
  %v422 = vld [vmem:[#allocation3 + $0xa] sm:$0xff]
  %v423 = vld [vmem:[#allocation3 + $0x12] sm:$0xff]
  %v424 = vld [vmem:[#allocation3 + $0x1a] sm:$0xff]
  %v425 = vld [vmem:[#allocation3 + $0x32] sm:$0xff]
  %v426 = vld [vmem:[#allocation3 + $0x3a] sm:$0xff]
  %v427 = vld [vmem:[#allocation3 + $0x42] sm:$0xff]
  %v428 = vld [vmem:[#allocation3 + $0x4a] sm:$0x3f]
  %437 = vrot.lane.b32.xlu0 %v421, 112
  %v438 = vpop.permute.xlu0 %437
  %439 = vrot.lane.b32.xlu0 %v422, 112
  %v440 = vpop.permute.xlu0 %439
  %441 = vrot.lane.b32.xlu0 %v423, 112
  %v442 = vpop.permute.xlu0 %441
  %443 = vrot.lane.b32.xlu0 %v424, 112
  %v444 = vpop.permute.xlu0 %443
  %445 = vrot.lane.b32.xlu0 %v425, 112
  %v446 = vpop.permute.xlu0 %445
  %447 = vrot.lane.b32.xlu0 %v426, 112
  %v448 = vpop.permute.xlu0 %447
  %449 = vrot.lane.b32.xlu0 %v427, 112
  %v450 = vpop.permute.xlu0 %449
  %451 = vrot.lane.b32.xlu0 %v428, 112
  %v452 = vpop.permute.xlu0 %451
  %v461 = vadd.f32 %v413, %v438
  %v462 = vadd.f32 %v414, %v440
  %v463 = vadd.f32 %v415, %v442
  %v464 = vadd.f32 %v416, %v444
  %v465 = vadd.f32 %v417, %v446
  %v466 = vadd.f32 %v418, %v448
  %v467 = vadd.f32 %v419, %v450
  %v468 = vadd.f32 %v420, %v452
  %v469 = vld [vmem:[#allocation3 + $0x20] sm:$0xff]
  %v470 = vld [vmem:[#allocation3 + $0x48] sm:$0xff]
  %v471 = vld [vmem:[#allocation3 + $0x50] sm:$0x3f]
  %480 = vrot.lane.b32.xlu0 %v366, 104
  %v481 = vpop.permute.xlu0 %480
  %482 = vrot.lane.b32.xlu0 %v367, 104
  %v483 = vpop.permute.xlu0 %482
  %484 = vrot.lane.b32.xlu0 %v368, 104
  %v485 = vpop.permute.xlu0 %484
  %486 = vrot.lane.b32.xlu0 %v469, 104
  %v487 = vpop.permute.xlu0 %486
  %488 = vrot.lane.b32.xlu0 %v370, 104
  %v489 = vpop.permute.xlu0 %488
  %490 = vrot.lane.b32.xlu0 %v371, 104
  %v491 = vpop.permute.xlu0 %490
  %492 = vrot.lane.b32.xlu0 %v470, 104
  %v493 = vpop.permute.xlu0 %492
  %494 = vrot.lane.b32.xlu0 %v471, 104
  %v495 = vpop.permute.xlu0 %494
  %v504 = vadd.f32 %v461, %v481
  %v505 = vadd.f32 %v462, %v483
  %v506 = vadd.f32 %v463, %v485
  %v507 = vadd.f32 %v464, %v487
  %v508 = vadd.f32 %v465, %v489
  %v509 = vadd.f32 %v466, %v491
  %v510 = vadd.f32 %v467, %v493
  %v511 = vadd.f32 %v468, %v495
  %v512 = vld [vmem:[#allocation3 + $0x21] sm:$0xff]
  %v513 = vld [vmem:[#allocation3 + $0x49] sm:$0xff]
  %v514 = vld [vmem:[#allocation3 + $0x51] sm:$0x3f]
  %518 = vrot.lane.b32.xlu0 %v374, 96
  %v519 = vpop.permute.xlu0 %518
  %520 = vrot.lane.b32.xlu0 %v375, 96
  %v521 = vpop.permute.xlu0 %520
  %522 = vrot.lane.b32.xlu0 %v376, 96
  %v523 = vpop.permute.xlu0 %522
  %524 = vrot.lane.b32.xlu0 %v512, 96
  %v525 = vpop.permute.xlu0 %524
  %526 = vrot.lane.b32.xlu0 %v378, 96
  %v527 = vpop.permute.xlu0 %526
  %528 = vrot.lane.b32.xlu0 %v379, 96
  %v529 = vpop.permute.xlu0 %528
  %530 = vrot.lane.b32.xlu0 %v513, 96
  %v531 = vpop.permute.xlu0 %530
  %532 = vrot.lane.b32.xlu0 %v514, 96
  %v533 = vpop.permute.xlu0 %532
  %v542 = vadd.f32 %v504, %v519
  %v543 = vadd.f32 %v505, %v521
  %v544 = vadd.f32 %v506, %v523
  %v545 = vadd.f32 %v507, %v525
  %v546 = vadd.f32 %v508, %v527
  %v547 = vadd.f32 %v509, %v529
  %v548 = vadd.f32 %v510, %v531
  %v549 = vadd.f32 %v511, %v533
  %v550 = vld [vmem:[#allocation3 + $0x22] sm:$0xff]
  %v551 = vld [vmem:[#allocation3 + $0x4a] sm:$0xff]
  %v552 = vld [vmem:[#allocation3 + $0x52] sm:$0x3f]
  %556 = vrot.lane.b32.xlu0 %v422, 88
  %v557 = vpop.permute.xlu0 %556
  %558 = vrot.lane.b32.xlu0 %v423, 88
  %v559 = vpop.permute.xlu0 %558
  %560 = vrot.lane.b32.xlu0 %v424, 88
  %v561 = vpop.permute.xlu0 %560
  %562 = vrot.lane.b32.xlu0 %v550, 88
  %v563 = vpop.permute.xlu0 %562
  %564 = vrot.lane.b32.xlu0 %v426, 88
  %v565 = vpop.permute.xlu0 %564
  %566 = vrot.lane.b32.xlu0 %v427, 88
  %v567 = vpop.permute.xlu0 %566
  %568 = vrot.lane.b32.xlu0 %v551, 88
  %v569 = vpop.permute.xlu0 %568
  %570 = vrot.lane.b32.xlu0 %v552, 88
  %v571 = vpop.permute.xlu0 %570
  %v580 = vadd.f32 %v542, %v557
  %v581 = vadd.f32 %v543, %v559
  %v582 = vadd.f32 %v544, %v561
  %v583 = vadd.f32 %v545, %v563
  %v584 = vadd.f32 %v546, %v565
  %v585 = vadd.f32 %v547, %v567
  %v586 = vadd.f32 %v548, %v569
  %v587 = vadd.f32 %v549, %v571
  %v588 = vld [vmem:[#allocation3 + $0x28] sm:$0xff]
  %v589 = vld [vmem:[#allocation3 + $0x50] sm:$0xff]
  %v590 = vld [vmem:[#allocation3 + $0x58] sm:$0x3f]
  %594 = vrot.lane.b32.xlu0 %v367, 80
  %v595 = vpop.permute.xlu0 %594
  %596 = vrot.lane.b32.xlu0 %v368, 80
  %v597 = vpop.permute.xlu0 %596
  %598 = vrot.lane.b32.xlu0 %v469, 80
  %v599 = vpop.permute.xlu0 %598
  %600 = vrot.lane.b32.xlu0 %v588, 80
  %v601 = vpop.permute.xlu0 %600
  %602 = vrot.lane.b32.xlu0 %v371, 80
  %v603 = vpop.permute.xlu0 %602
  %604 = vrot.lane.b32.xlu0 %v470, 80
  %v605 = vpop.permute.xlu0 %604
  %606 = vrot.lane.b32.xlu0 %v589, 80
  %v607 = vpop.permute.xlu0 %606
  %608 = vrot.lane.b32.xlu0 %v590, 80
  %v609 = vpop.permute.xlu0 %608
  %v618 = vadd.f32 %v580, %v595
  %v619 = vadd.f32 %v581, %v597
  %v620 = vadd.f32 %v582, %v599
  %v621 = vadd.f32 %v583, %v601
  %v622 = vadd.f32 %v584, %v603
  %v623 = vadd.f32 %v585, %v605
  %v624 = vadd.f32 %v586, %v607
  %v625 = vadd.f32 %v587, %v609
  %v626 = vld [vmem:[#allocation3 + $0x29] sm:$0xff]
  %v627 = vld [vmem:[#allocation3 + $0x51] sm:$0xff]
  %v628 = vld [vmem:[#allocation3 + $0x59] sm:$0x3f]
  %632 = vrot.lane.b32.xlu0 %v375, 72
  %v633 = vpop.permute.xlu0 %632
  %634 = vrot.lane.b32.xlu0 %v376, 72
  %v635 = vpop.permute.xlu0 %634
  %636 = vrot.lane.b32.xlu0 %v512, 72
  %v637 = vpop.permute.xlu0 %636
  %638 = vrot.lane.b32.xlu0 %v626, 72
  %v639 = vpop.permute.xlu0 %638
  %640 = vrot.lane.b32.xlu0 %v379, 72
  %v641 = vpop.permute.xlu0 %640
  %642 = vrot.lane.b32.xlu0 %v513, 72
  %v643 = vpop.permute.xlu0 %642
  %644 = vrot.lane.b32.xlu0 %v627, 72
  %v645 = vpop.permute.xlu0 %644
  %646 = vrot.lane.b32.xlu0 %v628, 72
  %v647 = vpop.permute.xlu0 %646
  %v656 = vadd.f32 %v618, %v633
  %v657 = vadd.f32 %v619, %v635
  %v658 = vadd.f32 %v620, %v637
  %v659 = vadd.f32 %v621, %v639
  %v660 = vadd.f32 %v622, %v641
  %v661 = vadd.f32 %v623, %v643
  %v662 = vadd.f32 %v624, %v645
  %v663 = vadd.f32 %v625, %v647
  %v664 = vld [vmem:[#allocation3 + $0x2a] sm:$0xff]
  %v665 = vld [vmem:[#allocation3 + $0x52] sm:$0xff]
  %v666 = vld [vmem:[#allocation3 + $0x5a] sm:$0x3f]
  %670 = vrot.lane.b32.xlu0 %v423, 64
  %v671 = vpop.permute.xlu0 %670
  %672 = vrot.lane.b32.xlu0 %v424, 64
  %v673 = vpop.permute.xlu0 %672
  %674 = vrot.lane.b32.xlu0 %v550, 64
  %v675 = vpop.permute.xlu0 %674
  %676 = vrot.lane.b32.xlu0 %v664, 64
  %v677 = vpop.permute.xlu0 %676
  %678 = vrot.lane.b32.xlu0 %v427, 64
  %v679 = vpop.permute.xlu0 %678
  %680 = vrot.lane.b32.xlu0 %v551, 64
  %v681 = vpop.permute.xlu0 %680
  %682 = vrot.lane.b32.xlu0 %v665, 64
  %v683 = vpop.permute.xlu0 %682
  %684 = vrot.lane.b32.xlu0 %v666, 64
  %v685 = vpop.permute.xlu0 %684
  %v694 = vadd.f32 %v656, %v671
  %v695 = vadd.f32 %v657, %v673
  %v696 = vadd.f32 %v658, %v675
  %v697 = vadd.f32 %v659, %v677
  %v698 = vadd.f32 %v660, %v679
  %v699 = vadd.f32 %v661, %v681
  %v700 = vadd.f32 %v662, %v683
  %v701 = vadd.f32 %v663, %v685
  %v702 = vld [vmem:[%s5] sm:$0x1]
  %v704 = vlaneseq
  %v705 = vshrl.u32 %v704, 7
  %v706 = vsub.s32 0, %v705
  %v707 = vrot.slane %v702, %v706
  %v709 = vmul.f32 %v694, %v707
  %v710 = vmul.f32 %v695, %v707
  %v711 = vmul.f32 %v696, %v707
  %v712 = vmul.f32 %v697, %v707
  %v713 = vmul.f32 %v698, %v707
  %v714 = vmul.f32 %v699, %v707
  %v715 = vmul.f32 %v700, %v707
  %v716 = vmul.f32 %v701, %v707
  %v717 = vld [vmem:[%s6] sm:$0x1]
  %v719 = vlaneseq
  %v720 = vshrl.u32 %v719, 7
  %v721 = vsub.s32 0, %v720
  %v722 = vrot.slane %v717, %v721
  %v724 = vadd.f32 %v709, %v722
  %v725 = vadd.f32 %v710, %v722
  %v726 = vadd.f32 %v711, %v722
  %v727 = vadd.f32 %v712, %v722
  %v728 = vadd.f32 %v713, %v722
  %v729 = vadd.f32 %v714, %v722
  %v730 = vadd.f32 %v715, %v722
  %v731 = vadd.f32 %v716, %v722
  %v732 = vmax.f32 %v724, 0.0
  %v733 = vmax.f32 %v725, 0.0
  %v734 = vmax.f32 %v726, 0.0
  %v735 = vmax.f32 %v727, 0.0
  %v736 = vmax.f32 %v728, 0.0
  %v737 = vmax.f32 %v729, 0.0
  %v738 = vmax.f32 %v730, 0.0
  %v739 = vmax.f32 %v731, 0.0
  %v740 = vpack.c.bf16 %v733, %v732
  %v741 = vpack.c.bf16 %v735, %v734
  %v742 = vpack.c.bf16 %v737, %v736
  %v743 = vpack.c.bf16 %v739, %v738
  %v745 = vunpack.c.l.b16 %v740
  %v746 = vpack.c.b16 %v745, %v745
  %747 = vrot.lane.b32.xlu0 %v746, 16
  %v748 = vpop.permute.xlu0 %747
  %vm750 = vcmask 189568
  %751 = vst.msk [vmem:[%s7] sm:$0x3] %vm750, %v748
  %v752 = vunpack.c.h.b16 %v740
  %v753 = vpack.c.b16 %v752, %v752
  %v754 = vrot.slane %v753, 6
  %755 = vrot.lane.b32.xlu0 %v754, 16
  %v756 = vpop.permute.xlu0 %755
  %vm758 = vcmask 191618
  %759 = vst.msk [vmem:[%s7] sm:$0xc] %vm758, %v756
  %v761 = vunpack.c.l.b16 %v741
  %v762 = vpack.c.b16 %v761, %v761
  %763 = vrot.lane.b32.xlu0 %v762, 16
  %v764 = vpop.permute.xlu0 %763
  %766 = vst.msk [vmem:[%s7 + $0x4] sm:$0x3] %vm750, %v764
  %v767 = vunpack.c.h.b16 %v741
  %v768 = vpack.c.b16 %v767, %v767
  %v769 = vrot.slane %v768, 6
  %770 = vrot.lane.b32.xlu0 %v769, 16
  %v771 = vpop.permute.xlu0 %770
  %773 = vst.msk [vmem:[%s7 + $0x4] sm:$0xc] %vm758, %v771
  %v775 = vunpack.c.l.b16 %v742
  %v776 = vpack.c.b16 %v775, %v775
  %777 = vrot.lane.b32.xlu0 %v776, 16
  %v778 = vpop.permute.xlu0 %777
  %780 = vst.msk [vmem:[%s7 + $0x8] sm:$0x3] %vm750, %v778
  %v781 = vunpack.c.h.b16 %v742
  %v782 = vpack.c.b16 %v781, %v781
  %v783 = vrot.slane %v782, 6
  %784 = vrot.lane.b32.xlu0 %v783, 16
  %v785 = vpop.permute.xlu0 %784
  %787 = vst.msk [vmem:[%s7 + $0x8] sm:$0xc] %vm758, %v785
  %v789 = vunpack.c.l.b16 %v743
  %v790 = vpack.c.b16 %v789, %v789
  %791 = vrot.lane.b32.xlu0 %v790, 16
  %v792 = vpop.permute.xlu0 %791
  %794 = vst.msk [vmem:[%s7 + $0xc] sm:$0x3] %vm750, %v792
  %v795 = vunpack.c.h.b16 %v743
  %v796 = vpack.c.b16 %v795, %v795
  %v797 = vrot.slane %v796, 6
  %798 = vrot.lane.b32.xlu0 %v797, 16
  %v799 = vpop.permute.xlu0 %798
  %801 = vst.msk [vmem:[%s7 + $0xc] sm:$0xc] %vm758, %v799
  %v802 = vld [vmem:[%s7] sm:$0xf]
  %v803 = vld [vmem:[%s7 + $0x4] sm:$0xf]
  %v804 = vld [vmem:[%s7 + $0x8] sm:$0xf]
  %v805 = vld [vmem:[%s7 + $0xc] sm:$0xf]
  %s806 = scalar_lea.vmem %s1, 16
  %v807 = vld [vmem:[%s806] sm:$0xf]
  %v808 = vld [vmem:[%s806 + $0x4] sm:$0xf]
  %v809 = vld [vmem:[%s806 + $0x8] sm:$0xf]
  %v810 = vld [vmem:[%s806 + $0xc] sm:$0xf]
  %v815 = vunpack.c.l.b16 %v802
  %v816 = vunpack.c.l.b16 %v803
  %v817 = vunpack.c.l.b16 %v804
  %v818 = vunpack.c.l.b16 %v805
  %v819 = vpack.c.b16 %v816, %v815
  %v820 = vpack.c.b16 %v818, %v817
  %v825 = vunpack.c.l.b16 %v807
  %v826 = vunpack.c.l.b16 %v808
  %v827 = vunpack.c.l.b16 %v809
  %v828 = vunpack.c.l.b16 %v810
  %v829 = vpack.c.b16 %v826, %v825
  %v830 = vpack.c.b16 %v828, %v827
  %v834 = vsel %vm41, %v819, 0
  %v837 = vsel %vm41, %v820, 0
  %839 = vmatprep.subr.bf16.mxu0 0
  %840 = vmatpush1.bf16.msra.mxu0 %v829
  %841 = vmatprep.subr.bf16.mxu0 0
  %842 = vmatpush1.bf16.msra.mxu0 %v830
  %843 = vmatprep.subr.bf16.mxu0 0
  %844 = vmatpush1.bf16.msra.mxu0 0
  %845 = vmatprep.subr.bf16.mxu0 0
  %846 = vmatpush1.bf16.msra.mxu0 0
  %847 = vmatprep.subr.bf16.mxu0 0
  %848 = vmatpush1.bf16.msra.mxu0 0
  %849 = vmatprep.subr.bf16.mxu0 0
  %850 = vmatpush1.bf16.msra.mxu0 0
  %851 = vmatprep.subr.bf16.mxu0 0
  %852 = vmatpush1.bf16.msra.mxu0 0
  %853 = vmatprep.subr.bf16.mxu0 0
  %854 = vmatpush1.bf16.msra.mxu0 0
  %855 = vmatprep.subr.bf16.mxu0 0
  %856 = vmatpush1.bf16.msra.mxu0 0
  %857 = vmatprep.subr.bf16.mxu0 0
  %858 = vmatpush1.bf16.msra.mxu0 0
  %859 = vmatprep.subr.bf16.mxu0 0
  %860 = vmatpush1.bf16.msra.mxu0 0
  %861 = vmatprep.subr.bf16.mxu0 0
  %862 = vmatpush1.bf16.msra.mxu0 0
  %863 = vmatprep.subr.bf16.mxu0 0
  %864 = vmatpush1.bf16.msra.mxu0 0
  %865 = vmatprep.subr.bf16.mxu0 0
  %866 = vmatpush1.bf16.msra.mxu0 0
  %867 = vmatprep.subr.bf16.mxu0 0
  %868 = vmatpush1.bf16.msra.mxu0 0
  %869 = vmatprep.subr.bf16.mxu0 0
  %870 = vmatpush1.bf16.msra.mxu0 0
  %871 = vmatprep.mubr.bf16.mxu0 0
  %872 = vmatmul.mubr.bf16.gmra.mrb[0].mxu0 %v834
  %v873 = vpop.f32.mrb[0].mxu0
  %v874 = vadd.f32 0.0, %v873
  %v875 = vpop.f32.mrb[0].mxu0
  %v876 = vpop.f32.mrb[0].mxu0
  %v877 = vadd.f32 0.0, %v876
  %v878 = vpop.f32.mrb[0].mxu0
  %879 = vmatprep.mubr.bf16.mxu0 0
  %880 = vmatmul.mubr.bf16.gmra.mrb[0].mxu0 %v837
  %v881 = vpop.f32.mrb[0].mxu0
  %v882 = vadd.f32 0.0, %v881
  %v883 = vpop.f32.mrb[0].mxu0
  %v884 = vpop.f32.mrb[0].mxu0
  %v885 = vadd.f32 0.0, %v884
  %v886 = vpop.f32.mrb[0].mxu0
  %887 = vdwg.mxu0
  %s888 = scalar_lea.vmem %s2, 1
  %v889 = vld [vmem:[%s888] sm:$0x1]
  %v891 = vlaneseq
  %v892 = vshrl.u32 %v891, 7
  %v893 = vsub.s32 0, %v892
  %v894 = vrot.slane %v889, %v893
  %v896 = vmul.f32 %v874, %v894
  %v897 = vmul.f32 %v877, %v894
  %v898 = vmul.f32 %v882, %v894
  %v899 = vmul.f32 %v885, %v894
  %s900 = scalar_lea.vmem %s3, 1
  %v901 = vld [vmem:[%s900] sm:$0x1]
  %v903 = vlaneseq
  %v904 = vshrl.u32 %v903, 7
  %v905 = vsub.s32 0, %v904
  %v906 = vrot.slane %v901, %v905
  %v908 = vadd.f32 %v896, %v906
  %v909 = vadd.f32 %v897, %v906
  %v910 = vadd.f32 %v898, %v906
  %v911 = vadd.f32 %v899, %v906
  %v912 = vmax.f32 %v908, 0.0
  %v913 = vmax.f32 %v909, 0.0
  %v914 = vmax.f32 %v910, 0.0
  %v915 = vmax.f32 %v911, 0.0
  %v916 = vpack.c.bf16 %v913, %v912
  %v917 = vpack.c.bf16 %v915, %v914
  %v919 = vshrl.u32 %v916, 16
  %v921 = vrot.slane %v919, 3
  %v922 = vshll.u32 %v916, 16
  %v924 = vrot.slane %v922, 4
  %v925 = vor.u32 %v921, %v924
  %v927 = vld [vmem:[#allocation2] sm:$0x70]
  %v928 = vsel %vm172, %v925, %v927
  %929 = vst [vmem:[#allocation2] sm:$0x70] %v928
  %v930 = vrot.slane %v919, 1
  %v931 = vrot.slane %v922, 2
  %v932 = vor.u32 %v930, %v931
  %v934 = vld [vmem:[#allocation2 + $0x8] sm:$0x7]
  %v935 = vsel %vm182, %v932, %v934
  %936 = vst [vmem:[#allocation2 + $0x8] sm:$0x7] %v935
  %v937 = vrot.slane %v919, 7
  %v938 = vor.u32 %v937, %v922
  %v940 = vld [vmem:[#allocation2 + $0x8] sm:$0x70]
  %v941 = vsel %vm172, %v938, %v940
  %942 = vst [vmem:[#allocation2 + $0x8] sm:$0x70] %v941
  %v943 = vrot.slane %v919, 5
  %v944 = vrot.slane %v922, 6
  %v945 = vor.u32 %v943, %v944
  %v947 = vld [vmem:[#allocation2 + $0x10] sm:$0x7]
  %v948 = vsel %vm182, %v945, %v947
  %949 = vst [vmem:[#allocation2 + $0x10] sm:$0x7] %v948
  %v951 = vshrl.u32 %v917, 16
  %v953 = vrot.slane %v951, 3
  %v954 = vshll.u32 %v917, 16
  %v956 = vrot.slane %v954, 4
  %v957 = vor.u32 %v953, %v956
  %v959 = vld [vmem:[#allocation2 + $0x18] sm:$0x70]
  %v960 = vsel %vm172, %v957, %v959
  %961 = vst [vmem:[#allocation2 + $0x18] sm:$0x70] %v960
  %v962 = vrot.slane %v951, 1
  %v963 = vrot.slane %v954, 2
  %v964 = vor.u32 %v962, %v963
  %v966 = vld [vmem:[#allocation2 + $0x20] sm:$0x7]
  %v967 = vsel %vm182, %v964, %v966
  %968 = vst [vmem:[#allocation2 + $0x20] sm:$0x7] %v967
  %v969 = vrot.slane %v951, 7
  %v970 = vor.u32 %v969, %v954
  %v972 = vld [vmem:[#allocation2 + $0x20] sm:$0x70]
  %v973 = vsel %vm172, %v970, %v972
  %974 = vst [vmem:[#allocation2 + $0x20] sm:$0x70] %v973
  %v975 = vrot.slane %v951, 5
  %v976 = vrot.slane %v954, 6
  %v977 = vor.u32 %v975, %v976
  %v979 = vld [vmem:[#allocation2 + $0x28] sm:$0x7]
  %v980 = vsel %vm182, %v977, %v979
  %981 = vst [vmem:[#allocation2 + $0x28] sm:$0x7] %v980
  %v982 = vld [vmem:[#allocation2] sm:$0xff]
  %v983 = vld [vmem:[#allocation2 + $0x8] sm:$0xff]
  %v984 = vld [vmem:[#allocation2 + $0x10] sm:$0xff]
  %v985 = vld [vmem:[#allocation2 + $0x18] sm:$0xff]
  %v986 = vld [vmem:[#allocation2 + $0x20] sm:$0xff]
  %v987 = vld [vmem:[#allocation2 + $0x28] sm:$0xff]
  %s988 = scalar_lea.vmem %s4, 16
  %v989 = vld [vmem:[%s988] sm:$0xf]
  %v990 = vld [vmem:[%s988 + $0x4] sm:$0xf]
  %v991 = vld [vmem:[%s988 + $0x8] sm:$0xf]
  %v992 = vld [vmem:[%s988 + $0xc] sm:$0xf]
  %v997 = vunpack.c.l.b16 %v989
  %v998 = vunpack.c.l.b16 %v990
  %v999 = vunpack.c.l.b16 %v991
  %v1000 = vunpack.c.l.b16 %v992
  %v1001 = vpack.c.b16 %v998, %v997
  %v1002 = vpack.c.b16 %v1000, %v999
  %v1006 = vsel %vm41, %v982, 0
  %v1009 = vsel %vm41, %v983, 0
  %v1012 = vsel %vm41, %v984, 0
  %v1015 = vsel %vm41, %v985, 0
  %v1018 = vsel %vm41, %v986, 0
  %v1021 = vsel %vm41, %v987, 0
  %1023 = vmatprep.subr.bf16.mxu0 0
  %1024 = vmatpush1.bf16.msra.mxu0 %v1001
  %1025 = vmatprep.subr.bf16.mxu0 0
  %1026 = vmatpush1.bf16.msra.mxu0 %v1002
  %1027 = vmatprep.subr.bf16.mxu0 0
  %1028 = vmatpush1.bf16.msra.mxu0 0
  %1029 = vmatprep.subr.bf16.mxu0 0
  %1030 = vmatpush1.bf16.msra.mxu0 0
  %1031 = vmatprep.subr.bf16.mxu0 0
  %1032 = vmatpush1.bf16.msra.mxu0 0
  %1033 = vmatprep.subr.bf16.mxu0 0
  %1034 = vmatpush1.bf16.msra.mxu0 0
  %1035 = vmatprep.subr.bf16.mxu0 0
  %1036 = vmatpush1.bf16.msra.mxu0 0
  %1037 = vmatprep.subr.bf16.mxu0 0
  %1038 = vmatpush1.bf16.msra.mxu0 0
  %1039 = vmatprep.subr.bf16.mxu0 0
  %1040 = vmatpush1.bf16.msra.mxu0 0
  %1041 = vmatprep.subr.bf16.mxu0 0
  %1042 = vmatpush1.bf16.msra.mxu0 0
  %1043 = vmatprep.subr.bf16.mxu0 0
  %1044 = vmatpush1.bf16.msra.mxu0 0
  %1045 = vmatprep.subr.bf16.mxu0 0
  %1046 = vmatpush1.bf16.msra.mxu0 0
  %1047 = vmatprep.subr.bf16.mxu0 0
  %1048 = vmatpush1.bf16.msra.mxu0 0
  %1049 = vmatprep.subr.bf16.mxu0 0
  %1050 = vmatpush1.bf16.msra.mxu0 0
  %1051 = vmatprep.subr.bf16.mxu0 0
  %1052 = vmatpush1.bf16.msra.mxu0 0
  %1053 = vmatprep.subr.bf16.mxu0 0
  %1054 = vmatpush1.bf16.msra.mxu0 0
  %1055 = vmatprep.mubr.bf16.mxu0 0
  %1056 = vmatmul.mubr.bf16.gmra.mrb[0].mxu0 %v1006
  %v1057 = vpop.f32.mrb[0].mxu0
  %v1058 = vadd.f32 0.0, %v1057
  %v1059 = vpop.f32.mrb[0].mxu0
  %v1060 = vpop.f32.mrb[0].mxu0
  %v1061 = vadd.f32 0.0, %v1060
  %v1062 = vpop.f32.mrb[0].mxu0
  %1063 = vmatprep.mubr.bf16.mxu0 0
  %1064 = vmatmul.mubr.bf16.gmra.mrb[0].mxu0 %v1009
  %v1065 = vpop.f32.mrb[0].mxu0
  %v1066 = vadd.f32 0.0, %v1065
  %v1067 = vpop.f32.mrb[0].mxu0
  %v1068 = vpop.f32.mrb[0].mxu0
  %v1069 = vadd.f32 0.0, %v1068
  %v1070 = vpop.f32.mrb[0].mxu0
  %1071 = vmatprep.mubr.bf16.mxu0 0
  %1072 = vmatmul.mubr.bf16.gmra.mrb[0].mxu0 %v1012
  %v1073 = vpop.f32.mrb[0].mxu0
  %v1074 = vadd.f32 0.0, %v1073
  %v1075 = vpop.f32.mrb[0].mxu0
  %v1076 = vpop.f32.mrb[0].mxu0
  %v1077 = vadd.f32 0.0, %v1076
  %v1078 = vpop.f32.mrb[0].mxu0
  %1079 = vmatprep.mubr.bf16.mxu0 0
  %1080 = vmatmul.mubr.bf16.gmra.mrb[0].mxu0 %v1015
  %v1081 = vpop.f32.mrb[0].mxu0
  %v1082 = vadd.f32 0.0, %v1081
  %v1083 = vpop.f32.mrb[0].mxu0
  %v1084 = vpop.f32.mrb[0].mxu0
  %v1085 = vadd.f32 0.0, %v1084
  %v1086 = vpop.f32.mrb[0].mxu0
  %1087 = vmatprep.mubr.bf16.mxu0 0
  %1088 = vmatmul.mubr.bf16.gmra.mrb[0].mxu0 %v1018
  %v1089 = vpop.f32.mrb[0].mxu0
  %v1090 = vadd.f32 0.0, %v1089
  %v1091 = vpop.f32.mrb[0].mxu0
  %v1092 = vpop.f32.mrb[0].mxu0
  %v1093 = vadd.f32 0.0, %v1092
  %v1094 = vpop.f32.mrb[0].mxu0
  %1095 = vmatprep.mubr.bf16.mxu0 0
  %1096 = vmatmul.mubr.bf16.gmra.mrb[0].mxu0 %v1021
  %v1097 = vpop.f32.mrb[0].mxu0
  %v1098 = vadd.f32 0.0, %v1097
  %v1099 = vpop.f32.mrb[0].mxu0
  %v1100 = vpop.f32.mrb[0].mxu0
  %v1101 = vadd.f32 0.0, %v1100
  %v1102 = vpop.f32.mrb[0].mxu0
  %1103 = vdwg.mxu0
  %1104 = vst.msk [vmem:[#allocation3] sm:$0xff] %vm352, %v1058
  %1105 = vst.msk [vmem:[#allocation3 + $0x8] sm:$0xff] %vm352, %v1061
  %1106 = vst.msk [vmem:[#allocation3 + $0x10] sm:$0xff] %vm352, %v1066
  %1107 = vst.msk [vmem:[#allocation3 + $0x18] sm:$0xff] %vm352, %v1069
  %1108 = vst.msk [vmem:[#allocation3 + $0x20] sm:$0xff] %vm352, %v1074
  %1109 = vst.msk [vmem:[#allocation3 + $0x28] sm:$0xff] %vm352, %v1077
  %1110 = vst.msk [vmem:[#allocation3 + $0x30] sm:$0xff] %vm352, %v1082
  %1111 = vst.msk [vmem:[#allocation3 + $0x38] sm:$0xff] %vm352, %v1085
  %1112 = vst.msk [vmem:[#allocation3 + $0x40] sm:$0xff] %vm352, %v1090
  %1113 = vst.msk [vmem:[#allocation3 + $0x48] sm:$0xff] %vm352, %v1093
  %1114 = vst.msk [vmem:[#allocation3 + $0x50] sm:$0xff] %vm352, %v1098
  %1115 = vst.msk [vmem:[#allocation3 + $0x58] sm:$0xff] %vm352, %v1101
  %v1116 = vld [vmem:[#allocation3] sm:$0xff]
  %v1117 = vld [vmem:[#allocation3 + $0x8] sm:$0xff]
  %v1118 = vld [vmem:[#allocation3 + $0x10] sm:$0xff]
  %v1119 = vld [vmem:[#allocation3 + $0x18] sm:$0xff]
  %v1120 = vld [vmem:[#allocation3 + $0x30] sm:$0xff]
  %v1121 = vld [vmem:[#allocation3 + $0x38] sm:$0xff]
  %v1122 = vld [vmem:[#allocation3 + $0x40] sm:$0xff]
  %v1123 = vld [vmem:[#allocation3 + $0x48] sm:$0x3f]
  %v1124 = vld [vmem:[#allocation3 + $0x1] sm:$0xff]
  %v1125 = vld [vmem:[#allocation3 + $0x9] sm:$0xff]
  %v1126 = vld [vmem:[#allocation3 + $0x11] sm:$0xff]
  %v1127 = vld [vmem:[#allocation3 + $0x19] sm:$0xff]
  %v1128 = vld [vmem:[#allocation3 + $0x31] sm:$0xff]
  %v1129 = vld [vmem:[#allocation3 + $0x39] sm:$0xff]
  %v1130 = vld [vmem:[#allocation3 + $0x41] sm:$0xff]
  %v1131 = vld [vmem:[#allocation3 + $0x49] sm:$0x3f]
  %1140 = vrot.lane.b32.xlu0 %v1124, 120
  %v1141 = vpop.permute.xlu0 %1140
  %1142 = vrot.lane.b32.xlu0 %v1125, 120
  %v1143 = vpop.permute.xlu0 %1142
  %1144 = vrot.lane.b32.xlu0 %v1126, 120
  %v1145 = vpop.permute.xlu0 %1144
  %1146 = vrot.lane.b32.xlu0 %v1127, 120
  %v1147 = vpop.permute.xlu0 %1146
  %1148 = vrot.lane.b32.xlu0 %v1128, 120
  %v1149 = vpop.permute.xlu0 %1148
  %1150 = vrot.lane.b32.xlu0 %v1129, 120
  %v1151 = vpop.permute.xlu0 %1150
  %1152 = vrot.lane.b32.xlu0 %v1130, 120
  %v1153 = vpop.permute.xlu0 %1152
  %1154 = vrot.lane.b32.xlu0 %v1131, 120
  %v1155 = vpop.permute.xlu0 %1154
  %v1164 = vadd.f32 %v1116, %v1141
  %v1165 = vadd.f32 %v1117, %v1143
  %v1166 = vadd.f32 %v1118, %v1145
  %v1167 = vadd.f32 %v1119, %v1147
  %v1168 = vadd.f32 %v1120, %v1149
  %v1169 = vadd.f32 %v1121, %v1151
  %v1170 = vadd.f32 %v1122, %v1153
  %v1171 = vadd.f32 %v1123, %v1155
  %v1172 = vld [vmem:[#allocation3 + $0x2] sm:$0xff]
  %v1173 = vld [vmem:[#allocation3 + $0xa] sm:$0xff]
  %v1174 = vld [vmem:[#allocation3 + $0x12] sm:$0xff]
  %v1175 = vld [vmem:[#allocation3 + $0x1a] sm:$0xff]
  %v1176 = vld [vmem:[#allocation3 + $0x32] sm:$0xff]
  %v1177 = vld [vmem:[#allocation3 + $0x3a] sm:$0xff]
  %v1178 = vld [vmem:[#allocation3 + $0x42] sm:$0xff]
  %v1179 = vld [vmem:[#allocation3 + $0x4a] sm:$0x3f]
  %1188 = vrot.lane.b32.xlu0 %v1172, 112
  %v1189 = vpop.permute.xlu0 %1188
  %1190 = vrot.lane.b32.xlu0 %v1173, 112
  %v1191 = vpop.permute.xlu0 %1190
  %1192 = vrot.lane.b32.xlu0 %v1174, 112
  %v1193 = vpop.permute.xlu0 %1192
  %1194 = vrot.lane.b32.xlu0 %v1175, 112
  %v1195 = vpop.permute.xlu0 %1194
  %1196 = vrot.lane.b32.xlu0 %v1176, 112
  %v1197 = vpop.permute.xlu0 %1196
  %1198 = vrot.lane.b32.xlu0 %v1177, 112
  %v1199 = vpop.permute.xlu0 %1198
  %1200 = vrot.lane.b32.xlu0 %v1178, 112
  %v1201 = vpop.permute.xlu0 %1200
  %1202 = vrot.lane.b32.xlu0 %v1179, 112
  %v1203 = vpop.permute.xlu0 %1202
  %v1212 = vadd.f32 %v1164, %v1189
  %v1213 = vadd.f32 %v1165, %v1191
  %v1214 = vadd.f32 %v1166, %v1193
  %v1215 = vadd.f32 %v1167, %v1195
  %v1216 = vadd.f32 %v1168, %v1197
  %v1217 = vadd.f32 %v1169, %v1199
  %v1218 = vadd.f32 %v1170, %v1201
  %v1219 = vadd.f32 %v1171, %v1203
  %v1220 = vld [vmem:[#allocation3 + $0x20] sm:$0xff]
  %v1221 = vld [vmem:[#allocation3 + $0x48] sm:$0xff]
  %v1222 = vld [vmem:[#allocation3 + $0x50] sm:$0x3f]
  %1231 = vrot.lane.b32.xlu0 %v1117, 104
  %v1232 = vpop.permute.xlu0 %1231
  %1233 = vrot.lane.b32.xlu0 %v1118, 104
  %v1234 = vpop.permute.xlu0 %1233
  %1235 = vrot.lane.b32.xlu0 %v1119, 104
  %v1236 = vpop.permute.xlu0 %1235
  %1237 = vrot.lane.b32.xlu0 %v1220, 104
  %v1238 = vpop.permute.xlu0 %1237
  %1239 = vrot.lane.b32.xlu0 %v1121, 104
  %v1240 = vpop.permute.xlu0 %1239
  %1241 = vrot.lane.b32.xlu0 %v1122, 104
  %v1242 = vpop.permute.xlu0 %1241
  %1243 = vrot.lane.b32.xlu0 %v1221, 104
  %v1244 = vpop.permute.xlu0 %1243
  %1245 = vrot.lane.b32.xlu0 %v1222, 104
  %v1246 = vpop.permute.xlu0 %1245
  %v1255 = vadd.f32 %v1212, %v1232
  %v1256 = vadd.f32 %v1213, %v1234
  %v1257 = vadd.f32 %v1214, %v1236
  %v1258 = vadd.f32 %v1215, %v1238
  %v1259 = vadd.f32 %v1216, %v1240
  %v1260 = vadd.f32 %v1217, %v1242
  %v1261 = vadd.f32 %v1218, %v1244
  %v1262 = vadd.f32 %v1219, %v1246
  %v1263 = vld [vmem:[#allocation3 + $0x21] sm:$0xff]
  %v1264 = vld [vmem:[#allocation3 + $0x49] sm:$0xff]
  %v1265 = vld [vmem:[#allocation3 + $0x51] sm:$0x3f]
  %1269 = vrot.lane.b32.xlu0 %v1125, 96
  %v1270 = vpop.permute.xlu0 %1269
  %1271 = vrot.lane.b32.xlu0 %v1126, 96
  %v1272 = vpop.permute.xlu0 %1271
  %1273 = vrot.lane.b32.xlu0 %v1127, 96
  %v1274 = vpop.permute.xlu0 %1273
  %1275 = vrot.lane.b32.xlu0 %v1263, 96
  %v1276 = vpop.permute.xlu0 %1275
  %1277 = vrot.lane.b32.xlu0 %v1129, 96
  %v1278 = vpop.permute.xlu0 %1277
  %1279 = vrot.lane.b32.xlu0 %v1130, 96
  %v1280 = vpop.permute.xlu0 %1279
  %1281 = vrot.lane.b32.xlu0 %v1264, 96
  %v1282 = vpop.permute.xlu0 %1281
  %1283 = vrot.lane.b32.xlu0 %v1265, 96
  %v1284 = vpop.permute.xlu0 %1283
  %v1293 = vadd.f32 %v1255, %v1270
  %v1294 = vadd.f32 %v1256, %v1272
  %v1295 = vadd.f32 %v1257, %v1274
  %v1296 = vadd.f32 %v1258, %v1276
  %v1297 = vadd.f32 %v1259, %v1278
  %v1298 = vadd.f32 %v1260, %v1280
  %v1299 = vadd.f32 %v1261, %v1282
  %v1300 = vadd.f32 %v1262, %v1284
  %v1301 = vld [vmem:[#allocation3 + $0x22] sm:$0xff]
  %v1302 = vld [vmem:[#allocation3 + $0x4a] sm:$0xff]
  %v1303 = vld [vmem:[#allocation3 + $0x52] sm:$0x3f]
  %1307 = vrot.lane.b32.xlu0 %v1173, 88
  %v1308 = vpop.permute.xlu0 %1307
  %1309 = vrot.lane.b32.xlu0 %v1174, 88
  %v1310 = vpop.permute.xlu0 %1309
  %1311 = vrot.lane.b32.xlu0 %v1175, 88
  %v1312 = vpop.permute.xlu0 %1311
  %1313 = vrot.lane.b32.xlu0 %v1301, 88
  %v1314 = vpop.permute.xlu0 %1313
  %1315 = vrot.lane.b32.xlu0 %v1177, 88
  %v1316 = vpop.permute.xlu0 %1315
  %1317 = vrot.lane.b32.xlu0 %v1178, 88
  %v1318 = vpop.permute.xlu0 %1317
  %1319 = vrot.lane.b32.xlu0 %v1302, 88
  %v1320 = vpop.permute.xlu0 %1319
  %1321 = vrot.lane.b32.xlu0 %v1303, 88
  %v1322 = vpop.permute.xlu0 %1321
  %v1331 = vadd.f32 %v1293, %v1308
  %v1332 = vadd.f32 %v1294, %v1310
  %v1333 = vadd.f32 %v1295, %v1312
  %v1334 = vadd.f32 %v1296, %v1314
  %v1335 = vadd.f32 %v1297, %v1316
  %v1336 = vadd.f32 %v1298, %v1318
  %v1337 = vadd.f32 %v1299, %v1320
  %v1338 = vadd.f32 %v1300, %v1322
  %v1339 = vld [vmem:[#allocation3 + $0x28] sm:$0xff]
  %v1340 = vld [vmem:[#allocation3 + $0x50] sm:$0xff]
  %v1341 = vld [vmem:[#allocation3 + $0x58] sm:$0x3f]
  %1345 = vrot.lane.b32.xlu0 %v1118, 80
  %v1346 = vpop.permute.xlu0 %1345
  %1347 = vrot.lane.b32.xlu0 %v1119, 80
  %v1348 = vpop.permute.xlu0 %1347
  %1349 = vrot.lane.b32.xlu0 %v1220, 80
  %v1350 = vpop.permute.xlu0 %1349
  %1351 = vrot.lane.b32.xlu0 %v1339, 80
  %v1352 = vpop.permute.xlu0 %1351
  %1353 = vrot.lane.b32.xlu0 %v1122, 80
  %v1354 = vpop.permute.xlu0 %1353
  %1355 = vrot.lane.b32.xlu0 %v1221, 80
  %v1356 = vpop.permute.xlu0 %1355
  %1357 = vrot.lane.b32.xlu0 %v1340, 80
  %v1358 = vpop.permute.xlu0 %1357
  %1359 = vrot.lane.b32.xlu0 %v1341, 80
  %v1360 = vpop.permute.xlu0 %1359
  %v1369 = vadd.f32 %v1331, %v1346
  %v1370 = vadd.f32 %v1332, %v1348
  %v1371 = vadd.f32 %v1333, %v1350
  %v1372 = vadd.f32 %v1334, %v1352
  %v1373 = vadd.f32 %v1335, %v1354
  %v1374 = vadd.f32 %v1336, %v1356
  %v1375 = vadd.f32 %v1337, %v1358
  %v1376 = vadd.f32 %v1338, %v1360
  %v1377 = vld [vmem:[#allocation3 + $0x29] sm:$0xff]
  %v1378 = vld [vmem:[#allocation3 + $0x51] sm:$0xff]
  %v1379 = vld [vmem:[#allocation3 + $0x59] sm:$0x3f]
  %1383 = vrot.lane.b32.xlu0 %v1126, 72
  %v1384 = vpop.permute.xlu0 %1383
  %1385 = vrot.lane.b32.xlu0 %v1127, 72
  %v1386 = vpop.permute.xlu0 %1385
  %1387 = vrot.lane.b32.xlu0 %v1263, 72
  %v1388 = vpop.permute.xlu0 %1387
  %1389 = vrot.lane.b32.xlu0 %v1377, 72
  %v1390 = vpop.permute.xlu0 %1389
  %1391 = vrot.lane.b32.xlu0 %v1130, 72
  %v1392 = vpop.permute.xlu0 %1391
  %1393 = vrot.lane.b32.xlu0 %v1264, 72
  %v1394 = vpop.permute.xlu0 %1393
  %1395 = vrot.lane.b32.xlu0 %v1378, 72
  %v1396 = vpop.permute.xlu0 %1395
  %1397 = vrot.lane.b32.xlu0 %v1379, 72
  %v1398 = vpop.permute.xlu0 %1397
  %v1407 = vadd.f32 %v1369, %v1384
  %v1408 = vadd.f32 %v1370, %v1386
  %v1409 = vadd.f32 %v1371, %v1388
  %v1410 = vadd.f32 %v1372, %v1390
  %v1411 = vadd.f32 %v1373, %v1392
  %v1412 = vadd.f32 %v1374, %v1394
  %v1413 = vadd.f32 %v1375, %v1396
  %v1414 = vadd.f32 %v1376, %v1398
  %v1415 = vld [vmem:[#allocation3 + $0x2a] sm:$0xff]
  %v1416 = vld [vmem:[#allocation3 + $0x52] sm:$0xff]
  %v1417 = vld [vmem:[#allocation3 + $0x5a] sm:$0x3f]
  %1421 = vrot.lane.b32.xlu0 %v1174, 64
  %v1422 = vpop.permute.xlu0 %1421
  %1423 = vrot.lane.b32.xlu0 %v1175, 64
  %v1424 = vpop.permute.xlu0 %1423
  %1425 = vrot.lane.b32.xlu0 %v1301, 64
  %v1426 = vpop.permute.xlu0 %1425
  %1427 = vrot.lane.b32.xlu0 %v1415, 64
  %v1428 = vpop.permute.xlu0 %1427
  %1429 = vrot.lane.b32.xlu0 %v1178, 64
  %v1430 = vpop.permute.xlu0 %1429
  %1431 = vrot.lane.b32.xlu0 %v1302, 64
  %v1432 = vpop.permute.xlu0 %1431
  %1433 = vrot.lane.b32.xlu0 %v1416, 64
  %v1434 = vpop.permute.xlu0 %1433
  %1435 = vrot.lane.b32.xlu0 %v1417, 64
  %v1436 = vpop.permute.xlu0 %1435
  %v1445 = vadd.f32 %v1407, %v1422
  %v1446 = vadd.f32 %v1408, %v1424
  %v1447 = vadd.f32 %v1409, %v1426
  %v1448 = vadd.f32 %v1410, %v1428
  %v1449 = vadd.f32 %v1411, %v1430
  %v1450 = vadd.f32 %v1412, %v1432
  %v1451 = vadd.f32 %v1413, %v1434
  %v1452 = vadd.f32 %v1414, %v1436
  %s1453 = scalar_lea.vmem %s5, 1
  %v1454 = vld [vmem:[%s1453] sm:$0x1]
  %v1456 = vlaneseq
  %v1457 = vshrl.u32 %v1456, 7
  %v1458 = vsub.s32 0, %v1457
  %v1459 = vrot.slane %v1454, %v1458
  %v1461 = vmul.f32 %v1445, %v1459
  %v1462 = vmul.f32 %v1446, %v1459
  %v1463 = vmul.f32 %v1447, %v1459
  %v1464 = vmul.f32 %v1448, %v1459
  %v1465 = vmul.f32 %v1449, %v1459
  %v1466 = vmul.f32 %v1450, %v1459
  %v1467 = vmul.f32 %v1451, %v1459
  %v1468 = vmul.f32 %v1452, %v1459
  %s1469 = scalar_lea.vmem %s6, 1
  %v1470 = vld [vmem:[%s1469] sm:$0x1]
  %v1472 = vlaneseq
  %v1473 = vshrl.u32 %v1472, 7
  %v1474 = vsub.s32 0, %v1473
  %v1475 = vrot.slane %v1470, %v1474
  %v1477 = vadd.f32 %v1461, %v1475
  %v1478 = vadd.f32 %v1462, %v1475
  %v1479 = vadd.f32 %v1463, %v1475
  %v1480 = vadd.f32 %v1464, %v1475
  %v1481 = vadd.f32 %v1465, %v1475
  %v1482 = vadd.f32 %v1466, %v1475
  %v1483 = vadd.f32 %v1467, %v1475
  %v1484 = vadd.f32 %v1468, %v1475
  %v1485 = vmax.f32 %v1477, 0.0
  %v1486 = vmax.f32 %v1478, 0.0
  %v1487 = vmax.f32 %v1479, 0.0
  %v1488 = vmax.f32 %v1480, 0.0
  %v1489 = vmax.f32 %v1481, 0.0
  %v1490 = vmax.f32 %v1482, 0.0
  %v1491 = vmax.f32 %v1483, 0.0
  %v1492 = vmax.f32 %v1484, 0.0
  %v1493 = vpack.c.bf16 %v1486, %v1485
  %v1494 = vpack.c.bf16 %v1488, %v1487
  %v1495 = vpack.c.bf16 %v1490, %v1489
  %v1496 = vpack.c.bf16 %v1492, %v1491
  %v1498 = vunpack.c.l.b16 %v1493
  %v1499 = vpack.c.b16 %v1498, %v1498
  %1500 = vrot.lane.b32.xlu0 %v1499, 24
  %v1501 = vpop.permute.xlu0 %1500
  %vm1503 = vcmask 255168
  %1504 = vst.msk [vmem:[%s7] sm:$0x3] %vm1503, %v1501
  %v1505 = vunpack.c.h.b16 %v1493
  %v1506 = vpack.c.b16 %v1505, %v1505
  %v1507 = vrot.slane %v1506, 6
  %1508 = vrot.lane.b32.xlu0 %v1507, 24
  %v1509 = vpop.permute.xlu0 %1508
  %vm1511 = vcmask 257218
  %1512 = vst.msk [vmem:[%s7] sm:$0xc] %vm1511, %v1509
  %v1514 = vunpack.c.l.b16 %v1494
  %v1515 = vpack.c.b16 %v1514, %v1514
  %1516 = vrot.lane.b32.xlu0 %v1515, 24
  %v1517 = vpop.permute.xlu0 %1516
  %1519 = vst.msk [vmem:[%s7 + $0x4] sm:$0x3] %vm1503, %v1517
  %v1520 = vunpack.c.h.b16 %v1494
  %v1521 = vpack.c.b16 %v1520, %v1520
  %v1522 = vrot.slane %v1521, 6
  %1523 = vrot.lane.b32.xlu0 %v1522, 24
  %v1524 = vpop.permute.xlu0 %1523
  %1526 = vst.msk [vmem:[%s7 + $0x4] sm:$0xc] %vm1511, %v1524
  %v1528 = vunpack.c.l.b16 %v1495
  %v1529 = vpack.c.b16 %v1528, %v1528
  %1530 = vrot.lane.b32.xlu0 %v1529, 24
  %v1531 = vpop.permute.xlu0 %1530
  %1533 = vst.msk [vmem:[%s7 + $0x8] sm:$0x3] %vm1503, %v1531
  %v1534 = vunpack.c.h.b16 %v1495
  %v1535 = vpack.c.b16 %v1534, %v1534
  %v1536 = vrot.slane %v1535, 6
  %1537 = vrot.lane.b32.xlu0 %v1536, 24
  %v1538 = vpop.permute.xlu0 %1537
  %1540 = vst.msk [vmem:[%s7 + $0x8] sm:$0xc] %vm1511, %v1538
  %v1542 = vunpack.c.l.b16 %v1496
  %v1543 = vpack.c.b16 %v1542, %v1542
  %1544 = vrot.lane.b32.xlu0 %v1543, 24
  %v1545 = vpop.permute.xlu0 %1544
  %1547 = vst.msk [vmem:[%s7 + $0xc] sm:$0x3] %vm1503, %v1545
  %v1548 = vunpack.c.h.b16 %v1496
  %v1549 = vpack.c.b16 %v1548, %v1548
  %v1550 = vrot.slane %v1549, 6
  %1551 = vrot.lane.b32.xlu0 %v1550, 24
  %v1552 = vpop.permute.xlu0 %1551
  %1554 = vst.msk [vmem:[%s7 + $0xc] sm:$0xc] %vm1511, %v1552
  // Predicated region
  $region30: #{_lambda_.12} parent=0 // pred_check
    _
  $region31: #{_lambda_.12} parent=0 // pred_check_branch
    %1556 = sbr.rel (0) target = $region33
  $region32: #{_lambda_.12} parent=0 // pred_region
    _
  $region33: #{_lambda_.12} parent=0 // pred_fallthru
    _
  // Predicated region
  $region34: #{_lambda_.12} parent=0 // pred_check
    _
  $region35: #{_lambda_.12} parent=0 // pred_check_branch
    %1558 = sbr.rel (0) target = $region37
  $region36: #{_lambda_.12} parent=0 // pred_region
    _
  $region37: #{_lambda_.12} parent=0 // pred_fallthru
    _

// kernel: _lambda_.14
$region0: #{_lambda_.14}
  #allocation0 [shape = 'u32[]', space=smem, size = 0x4, offset = 0x4, fixed_abs, tag = 'smem constant byte address 0x4 - core index']
  #allocation1 [shape = 'u32[144,128]{1,0:T(1,128)}', space=vmem, size = 0x12000, scoped, tag = 'internal scratch']
  #allocation2 [shape = 'bf16[64,32]{1,0:T(16,128)(2,1)}', space=vmem, size = 0x4000, scoped, tag = 'scratch operand']
  #allocation3 [shape = 'f32[64,72]{1,0:T(8,128)}', space=vmem, size = 0x8000, scoped, tag = 'scratch operand']
  %s0 = inlined_call_operand.vmem [shape: bf16[8,16], index: 0, kind: input, shape index: {}]
  %s1 = inlined_call_operand.vmem [shape: bf16[2,32,32], index: 1, kind: input, shape index: {}]
  %s2 = inlined_call_operand.vmem [shape: f32[2,1,32], index: 2, kind: input, shape index: {}]
  %s3 = inlined_call_operand.vmem [shape: f32[2,1,32], index: 3, kind: input, shape index: {}]
  %s4 = inlined_call_operand.vmem [shape: bf16[2,32,72], index: 4, kind: input, shape index: {}]
  %s5 = inlined_call_operand.vmem [shape: f32[2,1,8], index: 5, kind: input, shape index: {}]
  %s6 = inlined_call_operand.vmem [shape: f32[2,1,8], index: 6, kind: input, shape index: {}]
  %s7 = inlined_call_operand.vmem [shape: bf16[8,32], index: 7, kind: output, shape index: {}]
  %s8 = sld [smem:[#allocation0]]
  $region38: #{_lambda_.14} parent=0
    _
  %s10 = ssub.s32 1, %s8
  %s11 = scalar_select 0, %s10, %s8
  // Predicated region
  $region2: #{_lambda_.14} parent=0 // pred_check
    _
  $region3: #{_lambda_.14} parent=0 // pred_check_branch
    %13 = sbr.rel (0) target = $region5
  $region4: #{_lambda_.14} parent=0 // pred_region
    _
  $region5: #{_lambda_.14} parent=0 // pred_fallthru
    _
  // Predicated region
  $region6: #{_lambda_.14} parent=0 // pred_check
    _
  $region7: #{_lambda_.14} parent=0 // pred_check_branch
    %15 = sbr.rel (0) target = $region9
  $region8: #{_lambda_.14} parent=0 // pred_region
    _
  $region9: #{_lambda_.14} parent=0 // pred_fallthru
    _
  // Predicated region
  $region10: #{_lambda_.14} parent=0 // pred_check
    _
  $region11: #{_lambda_.14} parent=0 // pred_check_branch
    %17 = sbr.rel (0) target = $region13
  $region12: #{_lambda_.14} parent=0 // pred_region
    _
  $region13: #{_lambda_.14} parent=0 // pred_fallthru
    _
  // Predicated region
  $region14: #{_lambda_.14} parent=0 // pred_check
    _
  $region15: #{_lambda_.14} parent=0 // pred_check_branch
    %19 = sbr.rel (0) target = $region17
  $region16: #{_lambda_.14} parent=0 // pred_region
    _
  $region17: #{_lambda_.14} parent=0 // pred_fallthru
    _
  // Predicated region
  $region18: #{_lambda_.14} parent=0 // pred_check
    _
  $region19: #{_lambda_.14} parent=0 // pred_check_branch
    %21 = sbr.rel (0) target = $region21
  $region20: #{_lambda_.14} parent=0 // pred_region
    _
  $region21: #{_lambda_.14} parent=0 // pred_fallthru
    _
  // Predicated region
  $region22: #{_lambda_.14} parent=0 // pred_check
    _
  $region23: #{_lambda_.14} parent=0 // pred_check_branch
    %23 = sbr.rel (0) target = $region25
  $region24: #{_lambda_.14} parent=0 // pred_region
    _
  $region25: #{_lambda_.14} parent=0 // pred_fallthru
    _
  // Predicated region
  $region26: #{_lambda_.14} parent=0 // pred_check
    _
  $region27: #{_lambda_.14} parent=0 // pred_check_branch
    %25 = sbr.rel (0) target = $region29
  $region28: #{_lambda_.14} parent=0 // pred_region
    _
  $region29: #{_lambda_.14} parent=0 // pred_fallthru
    _
  %v27 = vld [vmem:[%s0] sm:$0xf]
  %vm28 = vcmask 125952
  %29 = vst.msk [vmem:[%s7] sm:$0xf] %vm28, %v27
  %vm30 = vcmask 257152
  %31 = vst.msk [vmem:[%s7] sm:$0xf] %vm30, 0
  %vm32 = vcmask 261120
  %33 = vst.msk [vmem:[#allocation2] sm:$0xff] %vm32, 0
  %34 = vst.msk [vmem:[#allocation2 + $0x8] sm:$0xff] %vm32, 0
  %35 = vst.msk [vmem:[#allocation2 + $0x10] sm:$0xff] %vm32, 0
  %36 = vst.msk [vmem:[#allocation2 + $0x18] sm:$0xff] %vm32, 0
  %v37 = vld [vmem:[%s7] sm:$0xf]
  %v38 = vld [vmem:[%s1] sm:$0xf]
  %v39 = vld [vmem:[%s1 + $0x4] sm:$0xf]
  %v40 = vld [vmem:[%s1 + $0x8] sm:$0xf]
  %v41 = vld [vmem:[%s1 + $0xc] sm:$0xf]
  %v46 = vunpack.c.l.b16 %v38
  %v47 = vunpack.c.l.b16 %v39
  %v48 = vunpack.c.l.b16 %v40
  %v49 = vunpack.c.l.b16 %v41
  %v50 = vpack.c.b16 %v47, %v46
  %v51 = vpack.c.b16 %v49, %v48
  %v55 = vsel %vm32, %v37, 0
  %57 = vmatprep.subr.bf16.mxu0 0
  %58 = vmatpush1.bf16.msra.mxu0 %v50
  %59 = vmatprep.subr.bf16.mxu0 0
  %60 = vmatpush1.bf16.msra.mxu0 %v51
  %61 = vmatprep.subr.bf16.mxu0 0
  %62 = vmatpush1.bf16.msra.mxu0 0
  %63 = vmatprep.subr.bf16.mxu0 0
  %64 = vmatpush1.bf16.msra.mxu0 0
  %65 = vmatprep.subr.bf16.mxu0 0
  %66 = vmatpush1.bf16.msra.mxu0 0
  %67 = vmatprep.subr.bf16.mxu0 0
  %68 = vmatpush1.bf16.msra.mxu0 0
  %69 = vmatprep.subr.bf16.mxu0 0
  %70 = vmatpush1.bf16.msra.mxu0 0
  %71 = vmatprep.subr.bf16.mxu0 0
  %72 = vmatpush1.bf16.msra.mxu0 0
  %73 = vmatprep.subr.bf16.mxu0 0
  %74 = vmatpush1.bf16.msra.mxu0 0
  %75 = vmatprep.subr.bf16.mxu0 0
  %76 = vmatpush1.bf16.msra.mxu0 0
  %77 = vmatprep.subr.bf16.mxu0 0
  %78 = vmatpush1.bf16.msra.mxu0 0
  %79 = vmatprep.subr.bf16.mxu0 0
  %80 = vmatpush1.bf16.msra.mxu0 0
  %81 = vmatprep.subr.bf16.mxu0 0
  %82 = vmatpush1.bf16.msra.mxu0 0
  %83 = vmatprep.subr.bf16.mxu0 0
  %84 = vmatpush1.bf16.msra.mxu0 0
  %85 = vmatprep.subr.bf16.mxu0 0
  %86 = vmatpush1.bf16.msra.mxu0 0
  %87 = vmatprep.subr.bf16.mxu0 0
  %88 = vmatpush1.bf16.msra.mxu0 0
  %89 = vmatprep.mubr.bf16.mxu0 0
  %90 = vmatmul.mubr.bf16.gmra.mrb[0].mxu0 %v55
  %v91 = vpop.f32.mrb[0].mxu0
  %v92 = vadd.f32 0.0, %v91
  %v93 = vpop.f32.mrb[0].mxu0
  %v94 = vpop.f32.mrb[0].mxu0
  %v95 = vpop.f32.mrb[0].mxu0
  %96 = vdwg.mxu0
  %v97 = vld [vmem:[%s2] sm:$0x1]
  %v99 = vlaneseq
  %v100 = vshrl.u32 %v99, 7
  %v101 = vsub.s32 0, %v100
  %v102 = vrot.slane %v97, %v101
  %v104 = vmul.f32 %v92, %v102
  %v105 = vld [vmem:[%s3] sm:$0x1]
  %v107 = vlaneseq
  %v108 = vshrl.u32 %v107, 7
  %v109 = vsub.s32 0, %v108
  %v110 = vrot.slane %v105, %v109
  %v112 = vadd.f32 %v104, %v110
  %v113 = vmax.f32 %v112, 0.0
  %v114 = vpack.c.bf16 %v113, %v113
  %v116 = vshrl.u32 %v114, 16
  %v118 = vrot.slane %v116, 3
  %v119 = vshll.u32 %v114, 16
  %v121 = vrot.slane %v119, 4
  %v122 = vor.u32 %v118, %v121
  %vm124 = vcmask 259076
  %vm125 = vsmask.f32 5394
  %vm126 = vmand %vm124, %vm125
  %v127 = vld [vmem:[#allocation2] sm:$0x30]
  %v128 = vsel %vm126, %v122, %v127
  %129 = vst [vmem:[#allocation2] sm:$0x30] %v128
  %v130 = vrot.slane %v119, 1
  %v131 = vor.u32 %v116, %v130
  %vm133 = vcmask 254976
  %vm134 = vsmask.f32 1282
  %vm135 = vmand %vm133, %vm134
  %v136 = vld [vmem:[#allocation2 + $0x8] sm:$0x3]
  %v137 = vsel %vm135, %v131, %v136
  %138 = vst [vmem:[#allocation2 + $0x8] sm:$0x3] %v137
  %v139 = vrot.slane %v116, 5
  %v140 = vrot.slane %v119, 6
  %v141 = vor.u32 %v139, %v140
  %v143 = vld [vmem:[#allocation2 + $0x10] sm:$0x30]
  %v144 = vsel %vm126, %v141, %v143
  %145 = vst [vmem:[#allocation2 + $0x10] sm:$0x30] %v144
  %v146 = vrot.slane %v116, 2
  %v147 = vrot.slane %v119, 3
  %v148 = vor.u32 %v146, %v147
  %v150 = vld [vmem:[#allocation2 + $0x18] sm:$0x3]
  %v151 = vsel %vm135, %v148, %v150
  %152 = vst [vmem:[#allocation2 + $0x18] sm:$0x3] %v151
  %v153 = vld [vmem:[#allocation2] sm:$0xff]
  %v154 = vld [vmem:[#allocation2 + $0x8] sm:$0xff]
  %v155 = vld [vmem:[#allocation2 + $0x10] sm:$0xff]
  %v156 = vld [vmem:[#allocation2 + $0x18] sm:$0xff]
  %v157 = vld [vmem:[%s4] sm:$0xf]
  %v158 = vld [vmem:[%s4 + $0x4] sm:$0xf]
  %v159 = vld [vmem:[%s4 + $0x8] sm:$0xf]
  %v160 = vld [vmem:[%s4 + $0xc] sm:$0xf]
  %v165 = vunpack.c.l.b16 %v157
  %v166 = vunpack.c.l.b16 %v158
  %v167 = vunpack.c.l.b16 %v159
  %v168 = vunpack.c.l.b16 %v160
  %v169 = vpack.c.b16 %v166, %v165
  %v170 = vpack.c.b16 %v168, %v167
  %v174 = vsel %vm32, %v153, 0
  %v177 = vsel %vm32, %v154, 0
  %v180 = vsel %vm32, %v155, 0
  %v183 = vsel %vm32, %v156, 0
  %185 = vmatprep.subr.bf16.mxu0 0
  %186 = vmatpush1.bf16.msra.mxu0 %v169
  %187 = vmatprep.subr.bf16.mxu0 0
  %188 = vmatpush1.bf16.msra.mxu0 %v170
  %189 = vmatprep.subr.bf16.mxu0 0
  %190 = vmatpush1.bf16.msra.mxu0 0
  %191 = vmatprep.subr.bf16.mxu0 0
  %192 = vmatpush1.bf16.msra.mxu0 0
  %193 = vmatprep.subr.bf16.mxu0 0
  %194 = vmatpush1.bf16.msra.mxu0 0
  %195 = vmatprep.subr.bf16.mxu0 0
  %196 = vmatpush1.bf16.msra.mxu0 0
  %197 = vmatprep.subr.bf16.mxu0 0
  %198 = vmatpush1.bf16.msra.mxu0 0
  %199 = vmatprep.subr.bf16.mxu0 0
  %200 = vmatpush1.bf16.msra.mxu0 0
  %201 = vmatprep.subr.bf16.mxu0 0
  %202 = vmatpush1.bf16.msra.mxu0 0
  %203 = vmatprep.subr.bf16.mxu0 0
  %204 = vmatpush1.bf16.msra.mxu0 0
  %205 = vmatprep.subr.bf16.mxu0 0
  %206 = vmatpush1.bf16.msra.mxu0 0
  %207 = vmatprep.subr.bf16.mxu0 0
  %208 = vmatpush1.bf16.msra.mxu0 0
  %209 = vmatprep.subr.bf16.mxu0 0
  %210 = vmatpush1.bf16.msra.mxu0 0
  %211 = vmatprep.subr.bf16.mxu0 0
  %212 = vmatpush1.bf16.msra.mxu0 0
  %213 = vmatprep.subr.bf16.mxu0 0
  %214 = vmatpush1.bf16.msra.mxu0 0
  %215 = vmatprep.subr.bf16.mxu0 0
  %216 = vmatpush1.bf16.msra.mxu0 0
  %217 = vmatprep.mubr.bf16.mxu0 0
  %218 = vmatmul.mubr.bf16.gmra.mrb[0].mxu0 %v174
  %v219 = vpop.f32.mrb[0].mxu0
  %v220 = vadd.f32 0.0, %v219
  %v221 = vpop.f32.mrb[0].mxu0
  %v222 = vpop.f32.mrb[0].mxu0
  %v223 = vadd.f32 0.0, %v222
  %v224 = vpop.f32.mrb[0].mxu0
  %225 = vmatprep.mubr.bf16.mxu0 0
  %226 = vmatmul.mubr.bf16.gmra.mrb[0].mxu0 %v177
  %v227 = vpop.f32.mrb[0].mxu0
  %v228 = vadd.f32 0.0, %v227
  %v229 = vpop.f32.mrb[0].mxu0
  %v230 = vpop.f32.mrb[0].mxu0
  %v231 = vadd.f32 0.0, %v230
  %v232 = vpop.f32.mrb[0].mxu0
  %233 = vmatprep.mubr.bf16.mxu0 0
  %234 = vmatmul.mubr.bf16.gmra.mrb[0].mxu0 %v180
  %v235 = vpop.f32.mrb[0].mxu0
  %v236 = vadd.f32 0.0, %v235
  %v237 = vpop.f32.mrb[0].mxu0
  %v238 = vpop.f32.mrb[0].mxu0
  %v239 = vadd.f32 0.0, %v238
  %v240 = vpop.f32.mrb[0].mxu0
  %241 = vmatprep.mubr.bf16.mxu0 0
  %242 = vmatmul.mubr.bf16.gmra.mrb[0].mxu0 %v183
  %v243 = vpop.f32.mrb[0].mxu0
  %v244 = vadd.f32 0.0, %v243
  %v245 = vpop.f32.mrb[0].mxu0
  %v246 = vpop.f32.mrb[0].mxu0
  %v247 = vadd.f32 0.0, %v246
  %v248 = vpop.f32.mrb[0].mxu0
  %249 = vdwg.mxu0
  %vm250 = vcmask 588800
  %251 = vst.msk [vmem:[#allocation3] sm:$0xff] %vm250, %v220
  %252 = vst.msk [vmem:[#allocation3 + $0x8] sm:$0xff] %vm250, %v223
  %253 = vst.msk [vmem:[#allocation3 + $0x10] sm:$0xff] %vm250, %v228
  %254 = vst.msk [vmem:[#allocation3 + $0x18] sm:$0xff] %vm250, %v231
  %255 = vst.msk [vmem:[#allocation3 + $0x20] sm:$0xff] %vm250, %v236
  %256 = vst.msk [vmem:[#allocation3 + $0x28] sm:$0xff] %vm250, %v239
  %257 = vst.msk [vmem:[#allocation3 + $0x30] sm:$0xff] %vm250, %v244
  %258 = vst.msk [vmem:[#allocation3 + $0x38] sm:$0xff] %vm250, %v247
  %v259 = vld [vmem:[#allocation3] sm:$0xff]
  %v260 = vld [vmem:[#allocation3 + $0x8] sm:$0xff]
  %v261 = vld [vmem:[#allocation3 + $0x20] sm:$0xff]
  %v262 = vld [vmem:[#allocation3 + $0x28] sm:$0x3f]
  %v263 = vld [vmem:[#allocation3 + $0x1] sm:$0xff]
  %v264 = vld [vmem:[#allocation3 + $0x9] sm:$0xff]
  %v265 = vld [vmem:[#allocation3 + $0x21] sm:$0xff]
  %v266 = vld [vmem:[#allocation3 + $0x29] sm:$0x3f]
  %271 = vrot.lane.b32.xlu0 %v263, 120
  %v272 = vpop.permute.xlu0 %271
  %273 = vrot.lane.b32.xlu0 %v264, 120
  %v274 = vpop.permute.xlu0 %273
  %275 = vrot.lane.b32.xlu0 %v265, 120
  %v276 = vpop.permute.xlu0 %275
  %277 = vrot.lane.b32.xlu0 %v266, 120
  %v278 = vpop.permute.xlu0 %277
  %v283 = vadd.f32 %v259, %v272
  %v284 = vadd.f32 %v260, %v274
  %v285 = vadd.f32 %v261, %v276
  %v286 = vadd.f32 %v262, %v278
  %v287 = vld [vmem:[#allocation3 + $0x2] sm:$0xff]
  %v288 = vld [vmem:[#allocation3 + $0xa] sm:$0xff]
  %v289 = vld [vmem:[#allocation3 + $0x22] sm:$0xff]
  %v290 = vld [vmem:[#allocation3 + $0x2a] sm:$0x3f]
  %295 = vrot.lane.b32.xlu0 %v287, 112
  %v296 = vpop.permute.xlu0 %295
  %297 = vrot.lane.b32.xlu0 %v288, 112
  %v298 = vpop.permute.xlu0 %297
  %299 = vrot.lane.b32.xlu0 %v289, 112
  %v300 = vpop.permute.xlu0 %299
  %301 = vrot.lane.b32.xlu0 %v290, 112
  %v302 = vpop.permute.xlu0 %301
  %v307 = vadd.f32 %v283, %v296
  %v308 = vadd.f32 %v284, %v298
  %v309 = vadd.f32 %v285, %v300
  %v310 = vadd.f32 %v286, %v302
  %v311 = vld [vmem:[#allocation3 + $0x10] sm:$0xff]
  %v312 = vld [vmem:[#allocation3 + $0x28] sm:$0xff]
  %v313 = vld [vmem:[#allocation3 + $0x30] sm:$0x3f]
  %318 = vrot.lane.b32.xlu0 %v260, 104
  %v319 = vpop.permute.xlu0 %318
  %320 = vrot.lane.b32.xlu0 %v311, 104
  %v321 = vpop.permute.xlu0 %320
  %322 = vrot.lane.b32.xlu0 %v312, 104
  %v323 = vpop.permute.xlu0 %322
  %324 = vrot.lane.b32.xlu0 %v313, 104
  %v325 = vpop.permute.xlu0 %324
  %v330 = vadd.f32 %v307, %v319
  %v331 = vadd.f32 %v308, %v321
  %v332 = vadd.f32 %v309, %v323
  %v333 = vadd.f32 %v310, %v325
  %v334 = vld [vmem:[#allocation3 + $0x11] sm:$0xff]
  %v335 = vld [vmem:[#allocation3 + $0x29] sm:$0xff]
  %v336 = vld [vmem:[#allocation3 + $0x31] sm:$0x3f]
  %340 = vrot.lane.b32.xlu0 %v264, 96
  %v341 = vpop.permute.xlu0 %340
  %342 = vrot.lane.b32.xlu0 %v334, 96
  %v343 = vpop.permute.xlu0 %342
  %344 = vrot.lane.b32.xlu0 %v335, 96
  %v345 = vpop.permute.xlu0 %344
  %346 = vrot.lane.b32.xlu0 %v336, 96
  %v347 = vpop.permute.xlu0 %346
  %v352 = vadd.f32 %v330, %v341
  %v353 = vadd.f32 %v331, %v343
  %v354 = vadd.f32 %v332, %v345
  %v355 = vadd.f32 %v333, %v347
  %v356 = vld [vmem:[#allocation3 + $0x12] sm:$0xff]
  %v357 = vld [vmem:[#allocation3 + $0x2a] sm:$0xff]
  %v358 = vld [vmem:[#allocation3 + $0x32] sm:$0x3f]
  %362 = vrot.lane.b32.xlu0 %v288, 88
  %v363 = vpop.permute.xlu0 %362
  %364 = vrot.lane.b32.xlu0 %v356, 88
  %v365 = vpop.permute.xlu0 %364
  %366 = vrot.lane.b32.xlu0 %v357, 88
  %v367 = vpop.permute.xlu0 %366
  %368 = vrot.lane.b32.xlu0 %v358, 88
  %v369 = vpop.permute.xlu0 %368
  %v374 = vadd.f32 %v352, %v363
  %v375 = vadd.f32 %v353, %v365
  %v376 = vadd.f32 %v354, %v367
  %v377 = vadd.f32 %v355, %v369
  %v378 = vld [vmem:[#allocation3 + $0x18] sm:$0xff]
  %v379 = vld [vmem:[#allocation3 + $0x30] sm:$0xff]
  %v380 = vld [vmem:[#allocation3 + $0x38] sm:$0x3f]
  %384 = vrot.lane.b32.xlu0 %v311, 80
  %v385 = vpop.permute.xlu0 %384
  %386 = vrot.lane.b32.xlu0 %v378, 80
  %v387 = vpop.permute.xlu0 %386
  %388 = vrot.lane.b32.xlu0 %v379, 80
  %v389 = vpop.permute.xlu0 %388
  %390 = vrot.lane.b32.xlu0 %v380, 80
  %v391 = vpop.permute.xlu0 %390
  %v396 = vadd.f32 %v374, %v385
  %v397 = vadd.f32 %v375, %v387
  %v398 = vadd.f32 %v376, %v389
  %v399 = vadd.f32 %v377, %v391
  %v400 = vld [vmem:[#allocation3 + $0x19] sm:$0xff]
  %v401 = vld [vmem:[#allocation3 + $0x31] sm:$0xff]
  %v402 = vld [vmem:[#allocation3 + $0x39] sm:$0x3f]
  %406 = vrot.lane.b32.xlu0 %v334, 72
  %v407 = vpop.permute.xlu0 %406
  %408 = vrot.lane.b32.xlu0 %v400, 72
  %v409 = vpop.permute.xlu0 %408
  %410 = vrot.lane.b32.xlu0 %v401, 72
  %v411 = vpop.permute.xlu0 %410
  %412 = vrot.lane.b32.xlu0 %v402, 72
  %v413 = vpop.permute.xlu0 %412
  %v418 = vadd.f32 %v396, %v407
  %v419 = vadd.f32 %v397, %v409
  %v420 = vadd.f32 %v398, %v411
  %v421 = vadd.f32 %v399, %v413
  %v422 = vld [vmem:[#allocation3 + $0x1a] sm:$0xff]
  %v423 = vld [vmem:[#allocation3 + $0x32] sm:$0xff]
  %v424 = vld [vmem:[#allocation3 + $0x3a] sm:$0x3f]
  %428 = vrot.lane.b32.xlu0 %v356, 64
  %v429 = vpop.permute.xlu0 %428
  %430 = vrot.lane.b32.xlu0 %v422, 64
  %v431 = vpop.permute.xlu0 %430
  %432 = vrot.lane.b32.xlu0 %v423, 64
  %v433 = vpop.permute.xlu0 %432
  %434 = vrot.lane.b32.xlu0 %v424, 64
  %v435 = vpop.permute.xlu0 %434
  %v440 = vadd.f32 %v418, %v429
  %v441 = vadd.f32 %v419, %v431
  %v442 = vadd.f32 %v420, %v433
  %v443 = vadd.f32 %v421, %v435
  %v444 = vld [vmem:[%s5] sm:$0x1]
  %v446 = vlaneseq
  %v447 = vshrl.u32 %v446, 7
  %v448 = vsub.s32 0, %v447
  %v449 = vrot.slane %v444, %v448
  %v451 = vmul.f32 %v440, %v449
  %v452 = vmul.f32 %v441, %v449
  %v453 = vmul.f32 %v442, %v449
  %v454 = vmul.f32 %v443, %v449
  %v455 = vld [vmem:[%s6] sm:$0x1]
  %v457 = vlaneseq
  %v458 = vshrl.u32 %v457, 7
  %v459 = vsub.s32 0, %v458
  %v460 = vrot.slane %v455, %v459
  %v462 = vadd.f32 %v451, %v460
  %v463 = vadd.f32 %v452, %v460
  %v464 = vadd.f32 %v453, %v460
  %v465 = vadd.f32 %v454, %v460
  %v466 = vmax.f32 %v462, 0.0
  %v467 = vmax.f32 %v463, 0.0
  %v468 = vmax.f32 %v464, 0.0
  %v469 = vmax.f32 %v465, 0.0
  %v470 = vpack.c.bf16 %v467, %v466
  %v471 = vpack.c.bf16 %v469, %v468
  %v473 = vunpack.c.l.b16 %v470
  %v474 = vpack.c.b16 %v473, %v473
  %475 = vrot.lane.b32.xlu0 %v474, 16
  %v476 = vpop.permute.xlu0 %475
  %vm478 = vcmask 188544
  %479 = vst.msk [vmem:[%s7] sm:$0x1] %vm478, %v476
  %v480 = vunpack.c.h.b16 %v470
  %v481 = vpack.c.b16 %v480, %v480
  %v482 = vrot.slane %v481, 7
  %483 = vrot.lane.b32.xlu0 %v482, 16
  %v484 = vpop.permute.xlu0 %483
  %vm486 = vcmask 189569
  %487 = vst.msk [vmem:[%s7] sm:$0x2] %vm486, %v484
  %v489 = vunpack.c.l.b16 %v471
  %v490 = vpack.c.b16 %v489, %v489
  %v491 = vrot.slane %v490, 6
  %492 = vrot.lane.b32.xlu0 %v491, 16
  %v493 = vpop.permute.xlu0 %492
  %vm495 = vcmask 190594
  %496 = vst.msk [vmem:[%s7] sm:$0x4] %vm495, %v493
  %v497 = vunpack.c.h.b16 %v471
  %v498 = vpack.c.b16 %v497, %v497
  %v499 = vrot.slane %v498, 5
  %500 = vrot.lane.b32.xlu0 %v499, 16
  %v501 = vpop.permute.xlu0 %500
  %vm503 = vcmask 191619
  %504 = vst.msk [vmem:[%s7] sm:$0x8] %vm503, %v501
  %v505 = vld [vmem:[%s7] sm:$0xf]
  %s506 = scalar_lea.vmem %s1, 16
  %v507 = vld [vmem:[%s506] sm:$0xf]
  %v508 = vld [vmem:[%s506 + $0x4] sm:$0xf]
  %v509 = vld [vmem:[%s506 + $0x8] sm:$0xf]
  %v510 = vld [vmem:[%s506 + $0xc] sm:$0xf]
  %v515 = vunpack.c.l.b16 %v507
  %v516 = vunpack.c.l.b16 %v508
  %v517 = vunpack.c.l.b16 %v509
  %v518 = vunpack.c.l.b16 %v510
  %v519 = vpack.c.b16 %v516, %v515
  %v520 = vpack.c.b16 %v518, %v517
  %v524 = vsel %vm32, %v505, 0
  %526 = vmatprep.subr.bf16.mxu0 0
  %527 = vmatpush1.bf16.msra.mxu0 %v519
  %528 = vmatprep.subr.bf16.mxu0 0
  %529 = vmatpush1.bf16.msra.mxu0 %v520
  %530 = vmatprep.subr.bf16.mxu0 0
  %531 = vmatpush1.bf16.msra.mxu0 0
  %532 = vmatprep.subr.bf16.mxu0 0
  %533 = vmatpush1.bf16.msra.mxu0 0
  %534 = vmatprep.subr.bf16.mxu0 0
  %535 = vmatpush1.bf16.msra.mxu0 0
  %536 = vmatprep.subr.bf16.mxu0 0
  %537 = vmatpush1.bf16.msra.mxu0 0
  %538 = vmatprep.subr.bf16.mxu0 0
  %539 = vmatpush1.bf16.msra.mxu0 0
  %540 = vmatprep.subr.bf16.mxu0 0
  %541 = vmatpush1.bf16.msra.mxu0 0
  %542 = vmatprep.subr.bf16.mxu0 0
  %543 = vmatpush1.bf16.msra.mxu0 0
  %544 = vmatprep.subr.bf16.mxu0 0
  %545 = vmatpush1.bf16.msra.mxu0 0
  %546 = vmatprep.subr.bf16.mxu0 0
  %547 = vmatpush1.bf16.msra.mxu0 0
  %548 = vmatprep.subr.bf16.mxu0 0
  %549 = vmatpush1.bf16.msra.mxu0 0
  %550 = vmatprep.subr.bf16.mxu0 0
  %551 = vmatpush1.bf16.msra.mxu0 0
  %552 = vmatprep.subr.bf16.mxu0 0
  %553 = vmatpush1.bf16.msra.mxu0 0
  %554 = vmatprep.subr.bf16.mxu0 0
  %555 = vmatpush1.bf16.msra.mxu0 0
  %556 = vmatprep.subr.bf16.mxu0 0
  %557 = vmatpush1.bf16.msra.mxu0 0
  %558 = vmatprep.mubr.bf16.mxu0 0
  %559 = vmatmul.mubr.bf16.gmra.mrb[0].mxu0 %v524
  %v560 = vpop.f32.mrb[0].mxu0
  %v561 = vadd.f32 0.0, %v560
  %v562 = vpop.f32.mrb[0].mxu0
  %v563 = vpop.f32.mrb[0].mxu0
  %v564 = vpop.f32.mrb[0].mxu0
  %565 = vdwg.mxu0
  %s566 = scalar_lea.vmem %s2, 1
  %v567 = vld [vmem:[%s566] sm:$0x1]
  %v569 = vlaneseq
  %v570 = vshrl.u32 %v569, 7
  %v571 = vsub.s32 0, %v570
  %v572 = vrot.slane %v567, %v571
  %v574 = vmul.f32 %v561, %v572
  %s575 = scalar_lea.vmem %s3, 1
  %v576 = vld [vmem:[%s575] sm:$0x1]
  %v578 = vlaneseq
  %v579 = vshrl.u32 %v578, 7
  %v580 = vsub.s32 0, %v579
  %v581 = vrot.slane %v576, %v580
  %v583 = vadd.f32 %v574, %v581
  %v584 = vmax.f32 %v583, 0.0
  %v585 = vpack.c.bf16 %v584, %v584
  %v587 = vshrl.u32 %v585, 16
  %v589 = vrot.slane %v587, 3
  %v590 = vshll.u32 %v585, 16
  %v592 = vrot.slane %v590, 4
  %v593 = vor.u32 %v589, %v592
  %v595 = vld [vmem:[#allocation2] sm:$0x30]
  %v596 = vsel %vm126, %v593, %v595
  %597 = vst [vmem:[#allocation2] sm:$0x30] %v596
  %v598 = vrot.slane %v590, 1
  %v599 = vor.u32 %v587, %v598
  %v601 = vld [vmem:[#allocation2 + $0x8] sm:$0x3]
  %v602 = vsel %vm135, %v599, %v601
  %603 = vst [vmem:[#allocation2 + $0x8] sm:$0x3] %v602
  %v604 = vrot.slane %v587, 5
  %v605 = vrot.slane %v590, 6
  %v606 = vor.u32 %v604, %v605
  %v608 = vld [vmem:[#allocation2 + $0x10] sm:$0x30]
  %v609 = vsel %vm126, %v606, %v608
  %610 = vst [vmem:[#allocation2 + $0x10] sm:$0x30] %v609
  %v611 = vrot.slane %v587, 2
  %v612 = vrot.slane %v590, 3
  %v613 = vor.u32 %v611, %v612
  %v615 = vld [vmem:[#allocation2 + $0x18] sm:$0x3]
  %v616 = vsel %vm135, %v613, %v615
  %617 = vst [vmem:[#allocation2 + $0x18] sm:$0x3] %v616
  %v618 = vld [vmem:[#allocation2] sm:$0xff]
  %v619 = vld [vmem:[#allocation2 + $0x8] sm:$0xff]
  %v620 = vld [vmem:[#allocation2 + $0x10] sm:$0xff]
  %v621 = vld [vmem:[#allocation2 + $0x18] sm:$0xff]
  %s622 = scalar_lea.vmem %s4, 16
  %v623 = vld [vmem:[%s622] sm:$0xf]
  %v624 = vld [vmem:[%s622 + $0x4] sm:$0xf]
  %v625 = vld [vmem:[%s622 + $0x8] sm:$0xf]
  %v626 = vld [vmem:[%s622 + $0xc] sm:$0xf]
  %v631 = vunpack.c.l.b16 %v623
  %v632 = vunpack.c.l.b16 %v624
  %v633 = vunpack.c.l.b16 %v625
  %v634 = vunpack.c.l.b16 %v626
  %v635 = vpack.c.b16 %v632, %v631
  %v636 = vpack.c.b16 %v634, %v633
  %v640 = vsel %vm32, %v618, 0
  %v643 = vsel %vm32, %v619, 0
  %v646 = vsel %vm32, %v620, 0
  %v649 = vsel %vm32, %v621, 0
  %651 = vmatprep.subr.bf16.mxu0 0
  %652 = vmatpush1.bf16.msra.mxu0 %v635
  %653 = vmatprep.subr.bf16.mxu0 0
  %654 = vmatpush1.bf16.msra.mxu0 %v636
  %655 = vmatprep.subr.bf16.mxu0 0
  %656 = vmatpush1.bf16.msra.mxu0 0
  %657 = vmatprep.subr.bf16.mxu0 0
  %658 = vmatpush1.bf16.msra.mxu0 0
  %659 = vmatprep.subr.bf16.mxu0 0
  %660 = vmatpush1.bf16.msra.mxu0 0
  %661 = vmatprep.subr.bf16.mxu0 0
  %662 = vmatpush1.bf16.msra.mxu0 0
  %663 = vmatprep.subr.bf16.mxu0 0
  %664 = vmatpush1.bf16.msra.mxu0 0
  %665 = vmatprep.subr.bf16.mxu0 0
  %666 = vmatpush1.bf16.msra.mxu0 0
  %667 = vmatprep.subr.bf16.mxu0 0
  %668 = vmatpush1.bf16.msra.mxu0 0
  %669 = vmatprep.subr.bf16.mxu0 0
  %670 = vmatpush1.bf16.msra.mxu0 0
  %671 = vmatprep.subr.bf16.mxu0 0
  %672 = vmatpush1.bf16.msra.mxu0 0
  %673 = vmatprep.subr.bf16.mxu0 0
  %674 = vmatpush1.bf16.msra.mxu0 0
  %675 = vmatprep.subr.bf16.mxu0 0
  %676 = vmatpush1.bf16.msra.mxu0 0
  %677 = vmatprep.subr.bf16.mxu0 0
  %678 = vmatpush1.bf16.msra.mxu0 0
  %679 = vmatprep.subr.bf16.mxu0 0
  %680 = vmatpush1.bf16.msra.mxu0 0
  %681 = vmatprep.subr.bf16.mxu0 0
  %682 = vmatpush1.bf16.msra.mxu0 0
  %683 = vmatprep.mubr.bf16.mxu0 0
  %684 = vmatmul.mubr.bf16.gmra.mrb[0].mxu0 %v640
  %v685 = vpop.f32.mrb[0].mxu0
  %v686 = vadd.f32 0.0, %v685
  %v687 = vpop.f32.mrb[0].mxu0
  %v688 = vpop.f32.mrb[0].mxu0
  %v689 = vadd.f32 0.0, %v688
  %v690 = vpop.f32.mrb[0].mxu0
  %691 = vmatprep.mubr.bf16.mxu0 0
  %692 = vmatmul.mubr.bf16.gmra.mrb[0].mxu0 %v643
  %v693 = vpop.f32.mrb[0].mxu0
  %v694 = vadd.f32 0.0, %v693
  %v695 = vpop.f32.mrb[0].mxu0
  %v696 = vpop.f32.mrb[0].mxu0
  %v697 = vadd.f32 0.0, %v696
  %v698 = vpop.f32.mrb[0].mxu0
  %699 = vmatprep.mubr.bf16.mxu0 0
  %700 = vmatmul.mubr.bf16.gmra.mrb[0].mxu0 %v646
  %v701 = vpop.f32.mrb[0].mxu0
  %v702 = vadd.f32 0.0, %v701
  %v703 = vpop.f32.mrb[0].mxu0
  %v704 = vpop.f32.mrb[0].mxu0
  %v705 = vadd.f32 0.0, %v704
  %v706 = vpop.f32.mrb[0].mxu0
  %707 = vmatprep.mubr.bf16.mxu0 0
  %708 = vmatmul.mubr.bf16.gmra.mrb[0].mxu0 %v649
  %v709 = vpop.f32.mrb[0].mxu0
  %v710 = vadd.f32 0.0, %v709
  %v711 = vpop.f32.mrb[0].mxu0
  %v712 = vpop.f32.mrb[0].mxu0
  %v713 = vadd.f32 0.0, %v712
  %v714 = vpop.f32.mrb[0].mxu0
  %715 = vdwg.mxu0
  %716 = vst.msk [vmem:[#allocation3] sm:$0xff] %vm250, %v686
  %717 = vst.msk [vmem:[#allocation3 + $0x8] sm:$0xff] %vm250, %v689
  %718 = vst.msk [vmem:[#allocation3 + $0x10] sm:$0xff] %vm250, %v694
  %719 = vst.msk [vmem:[#allocation3 + $0x18] sm:$0xff] %vm250, %v697
  %720 = vst.msk [vmem:[#allocation3 + $0x20] sm:$0xff] %vm250, %v702
  %721 = vst.msk [vmem:[#allocation3 + $0x28] sm:$0xff] %vm250, %v705
  %722 = vst.msk [vmem:[#allocation3 + $0x30] sm:$0xff] %vm250, %v710
  %723 = vst.msk [vmem:[#allocation3 + $0x38] sm:$0xff] %vm250, %v713
  %v724 = vld [vmem:[#allocation3] sm:$0xff]
  %v725 = vld [vmem:[#allocation3 + $0x8] sm:$0xff]
  %v726 = vld [vmem:[#allocation3 + $0x20] sm:$0xff]
  %v727 = vld [vmem:[#allocation3 + $0x28] sm:$0x3f]
  %v728 = vld [vmem:[#allocation3 + $0x1] sm:$0xff]
  %v729 = vld [vmem:[#allocation3 + $0x9] sm:$0xff]
  %v730 = vld [vmem:[#allocation3 + $0x21] sm:$0xff]
  %v731 = vld [vmem:[#allocation3 + $0x29] sm:$0x3f]
  %736 = vrot.lane.b32.xlu0 %v728, 120
  %v737 = vpop.permute.xlu0 %736
  %738 = vrot.lane.b32.xlu0 %v729, 120
  %v739 = vpop.permute.xlu0 %738
  %740 = vrot.lane.b32.xlu0 %v730, 120
  %v741 = vpop.permute.xlu0 %740
  %742 = vrot.lane.b32.xlu0 %v731, 120
  %v743 = vpop.permute.xlu0 %742
  %v748 = vadd.f32 %v724, %v737
  %v749 = vadd.f32 %v725, %v739
  %v750 = vadd.f32 %v726, %v741
  %v751 = vadd.f32 %v727, %v743
  %v752 = vld [vmem:[#allocation3 + $0x2] sm:$0xff]
  %v753 = vld [vmem:[#allocation3 + $0xa] sm:$0xff]
  %v754 = vld [vmem:[#allocation3 + $0x22] sm:$0xff]
  %v755 = vld [vmem:[#allocation3 + $0x2a] sm:$0x3f]
  %760 = vrot.lane.b32.xlu0 %v752, 112
  %v761 = vpop.permute.xlu0 %760
  %762 = vrot.lane.b32.xlu0 %v753, 112
  %v763 = vpop.permute.xlu0 %762
  %764 = vrot.lane.b32.xlu0 %v754, 112
  %v765 = vpop.permute.xlu0 %764
  %766 = vrot.lane.b32.xlu0 %v755, 112
  %v767 = vpop.permute.xlu0 %766
  %v772 = vadd.f32 %v748, %v761
  %v773 = vadd.f32 %v749, %v763
  %v774 = vadd.f32 %v750, %v765
  %v775 = vadd.f32 %v751, %v767
  %v776 = vld [vmem:[#allocation3 + $0x10] sm:$0xff]
  %v777 = vld [vmem:[#allocation3 + $0x28] sm:$0xff]
  %v778 = vld [vmem:[#allocation3 + $0x30] sm:$0x3f]
  %783 = vrot.lane.b32.xlu0 %v725, 104
  %v784 = vpop.permute.xlu0 %783
  %785 = vrot.lane.b32.xlu0 %v776, 104
  %v786 = vpop.permute.xlu0 %785
  %787 = vrot.lane.b32.xlu0 %v777, 104
  %v788 = vpop.permute.xlu0 %787
  %789 = vrot.lane.b32.xlu0 %v778, 104
  %v790 = vpop.permute.xlu0 %789
  %v795 = vadd.f32 %v772, %v784
  %v796 = vadd.f32 %v773, %v786
  %v797 = vadd.f32 %v774, %v788
  %v798 = vadd.f32 %v775, %v790
  %v799 = vld [vmem:[#allocation3 + $0x11] sm:$0xff]
  %v800 = vld [vmem:[#allocation3 + $0x29] sm:$0xff]
  %v801 = vld [vmem:[#allocation3 + $0x31] sm:$0x3f]
  %805 = vrot.lane.b32.xlu0 %v729, 96
  %v806 = vpop.permute.xlu0 %805
  %807 = vrot.lane.b32.xlu0 %v799, 96
  %v808 = vpop.permute.xlu0 %807
  %809 = vrot.lane.b32.xlu0 %v800, 96
  %v810 = vpop.permute.xlu0 %809
  %811 = vrot.lane.b32.xlu0 %v801, 96
  %v812 = vpop.permute.xlu0 %811
  %v817 = vadd.f32 %v795, %v806
  %v818 = vadd.f32 %v796, %v808
  %v819 = vadd.f32 %v797, %v810
  %v820 = vadd.f32 %v798, %v812
  %v821 = vld [vmem:[#allocation3 + $0x12] sm:$0xff]
  %v822 = vld [vmem:[#allocation3 + $0x2a] sm:$0xff]
  %v823 = vld [vmem:[#allocation3 + $0x32] sm:$0x3f]
  %827 = vrot.lane.b32.xlu0 %v753, 88
  %v828 = vpop.permute.xlu0 %827
  %829 = vrot.lane.b32.xlu0 %v821, 88
  %v830 = vpop.permute.xlu0 %829
  %831 = vrot.lane.b32.xlu0 %v822, 88
  %v832 = vpop.permute.xlu0 %831
  %833 = vrot.lane.b32.xlu0 %v823, 88
  %v834 = vpop.permute.xlu0 %833
  %v839 = vadd.f32 %v817, %v828
  %v840 = vadd.f32 %v818, %v830
  %v841 = vadd.f32 %v819, %v832
  %v842 = vadd.f32 %v820, %v834
  %v843 = vld [vmem:[#allocation3 + $0x18] sm:$0xff]
  %v844 = vld [vmem:[#allocation3 + $0x30] sm:$0xff]
  %v845 = vld [vmem:[#allocation3 + $0x38] sm:$0x3f]
  %849 = vrot.lane.b32.xlu0 %v776, 80
  %v850 = vpop.permute.xlu0 %849
  %851 = vrot.lane.b32.xlu0 %v843, 80
  %v852 = vpop.permute.xlu0 %851
  %853 = vrot.lane.b32.xlu0 %v844, 80
  %v854 = vpop.permute.xlu0 %853
  %855 = vrot.lane.b32.xlu0 %v845, 80
  %v856 = vpop.permute.xlu0 %855
  %v861 = vadd.f32 %v839, %v850
  %v862 = vadd.f32 %v840, %v852
  %v863 = vadd.f32 %v841, %v854
  %v864 = vadd.f32 %v842, %v856
  %v865 = vld [vmem:[#allocation3 + $0x19] sm:$0xff]
  %v866 = vld [vmem:[#allocation3 + $0x31] sm:$0xff]
  %v867 = vld [vmem:[#allocation3 + $0x39] sm:$0x3f]
  %871 = vrot.lane.b32.xlu0 %v799, 72
  %v872 = vpop.permute.xlu0 %871
  %873 = vrot.lane.b32.xlu0 %v865, 72
  %v874 = vpop.permute.xlu0 %873
  %875 = vrot.lane.b32.xlu0 %v866, 72
  %v876 = vpop.permute.xlu0 %875
  %877 = vrot.lane.b32.xlu0 %v867, 72
  %v878 = vpop.permute.xlu0 %877
  %v883 = vadd.f32 %v861, %v872
  %v884 = vadd.f32 %v862, %v874
  %v885 = vadd.f32 %v863, %v876
  %v886 = vadd.f32 %v864, %v878
  %v887 = vld [vmem:[#allocation3 + $0x1a] sm:$0xff]
  %v888 = vld [vmem:[#allocation3 + $0x32] sm:$0xff]
  %v889 = vld [vmem:[#allocation3 + $0x3a] sm:$0x3f]
  %893 = vrot.lane.b32.xlu0 %v821, 64
  %v894 = vpop.permute.xlu0 %893
  %895 = vrot.lane.b32.xlu0 %v887, 64
  %v896 = vpop.permute.xlu0 %895
  %897 = vrot.lane.b32.xlu0 %v888, 64
  %v898 = vpop.permute.xlu0 %897
  %899 = vrot.lane.b32.xlu0 %v889, 64
  %v900 = vpop.permute.xlu0 %899
  %v905 = vadd.f32 %v883, %v894
  %v906 = vadd.f32 %v884, %v896
  %v907 = vadd.f32 %v885, %v898
  %v908 = vadd.f32 %v886, %v900
  %s909 = scalar_lea.vmem %s5, 1
  %v910 = vld [vmem:[%s909] sm:$0x1]
  %v912 = vlaneseq
  %v913 = vshrl.u32 %v912, 7
  %v914 = vsub.s32 0, %v913
  %v915 = vrot.slane %v910, %v914
  %v917 = vmul.f32 %v905, %v915
  %v918 = vmul.f32 %v906, %v915
  %v919 = vmul.f32 %v907, %v915
  %v920 = vmul.f32 %v908, %v915
  %s921 = scalar_lea.vmem %s6, 1
  %v922 = vld [vmem:[%s921] sm:$0x1]
  %v924 = vlaneseq
  %v925 = vshrl.u32 %v924, 7
  %v926 = vsub.s32 0, %v925
  %v927 = vrot.slane %v922, %v926
  %v929 = vadd.f32 %v917, %v927
  %v930 = vadd.f32 %v918, %v927
  %v931 = vadd.f32 %v919, %v927
  %v932 = vadd.f32 %v920, %v927
  %v933 = vmax.f32 %v929, 0.0
  %v934 = vmax.f32 %v930, 0.0
  %v935 = vmax.f32 %v931, 0.0
  %v936 = vmax.f32 %v932, 0.0
  %v937 = vpack.c.bf16 %v934, %v933
  %v938 = vpack.c.bf16 %v936, %v935
  %v940 = vunpack.c.l.b16 %v937
  %v941 = vpack.c.b16 %v940, %v940
  %942 = vrot.lane.b32.xlu0 %v941, 24
  %v943 = vpop.permute.xlu0 %942
  %vm945 = vcmask 254144
  %946 = vst.msk [vmem:[%s7] sm:$0x1] %vm945, %v943
  %v947 = vunpack.c.h.b16 %v937
  %v948 = vpack.c.b16 %v947, %v947
  %v949 = vrot.slane %v948, 7
  %950 = vrot.lane.b32.xlu0 %v949, 24
  %v951 = vpop.permute.xlu0 %950
  %vm953 = vcmask 255169
  %954 = vst.msk [vmem:[%s7] sm:$0x2] %vm953, %v951
  %v956 = vunpack.c.l.b16 %v938
  %v957 = vpack.c.b16 %v956, %v956
  %v958 = vrot.slane %v957, 6
  %959 = vrot.lane.b32.xlu0 %v958, 24
  %v960 = vpop.permute.xlu0 %959
  %vm962 = vcmask 256194
  %963 = vst.msk [vmem:[%s7] sm:$0x4] %vm962, %v960
  %v964 = vunpack.c.h.b16 %v938
  %v965 = vpack.c.b16 %v964, %v964
  %v966 = vrot.slane %v965, 5
  %967 = vrot.lane.b32.xlu0 %v966, 24
  %v968 = vpop.permute.xlu0 %967
  %vm970 = vcmask 257219
  %971 = vst.msk [vmem:[%s7] sm:$0x8] %vm970, %v968
  // Predicated region
  $region30: #{_lambda_.14} parent=0 // pred_check
    _
  $region31: #{_lambda_.14} parent=0 // pred_check_branch
    %973 = sbr.rel (0) target = $region33
  $region32: #{_lambda_.14} parent=0 // pred_region
    _
  $region33: #{_lambda_.14} parent=0 // pred_fallthru
    _
  // Predicated region
  $region34: #{_lambda_.14} parent=0 // pred_check
    _
  $region35: #{_lambda_.14} parent=0 // pred_check_branch
    %975 = sbr.rel (0) target = $region37
  $region36: #{_lambda_.14} parent=0 // pred_region
    _
  $region37: #{_lambda_.14} parent=0 // pred_fallthru
    _

// kernel: _lambda_.10
$region0: #{_lambda_.10}
  #allocation0 [shape = 'u32[]', space=smem, size = 0x4, offset = 0x4, fixed_abs, tag = 'smem constant byte address 0x4 - core index']
  #allocation1 [shape = 'u32[144,128]{1,0:T(1,128)}', space=vmem, size = 0x12000, scoped, tag = 'internal scratch']
  #allocation2 [shape = 'bf16[320,32]{1,0:T(16,128)(2,1)}', space=vmem, size = 0x14000, scoped, tag = 'scratch operand']
  #allocation3 [shape = 'f32[320,72]{1,0:T(8,128)}', space=vmem, size = 0x28000, scoped, tag = 'scratch operand']
  %s0 = inlined_call_operand.vmem [shape: bf16[128,16], index: 0, kind: input, shape index: {}]
  %s1 = inlined_call_operand.vmem [shape: bf16[2,32,32], index: 1, kind: input, shape index: {}]
  %s2 = inlined_call_operand.vmem [shape: f32[2,1,32], index: 2, kind: input, shape index: {}]
  %s3 = inlined_call_operand.vmem [shape: f32[2,1,32], index: 3, kind: input, shape index: {}]
  %s4 = inlined_call_operand.vmem [shape: bf16[2,32,72], index: 4, kind: input, shape index: {}]
  %s5 = inlined_call_operand.vmem [shape: f32[2,1,8], index: 5, kind: input, shape index: {}]
  %s6 = inlined_call_operand.vmem [shape: f32[2,1,8], index: 6, kind: input, shape index: {}]
  %s7 = inlined_call_operand.vmem [shape: bf16[128,32], index: 7, kind: output, shape index: {}]
  %s8 = sld [smem:[#allocation0]]
  $region38: #{_lambda_.10} parent=0
    _
  %s10 = ssub.s32 1, %s8
  %s11 = scalar_select 0, %s10, %s8
  // Predicated region
  $region2: #{_lambda_.10} parent=0 // pred_check
    _
  $region3: #{_lambda_.10} parent=0 // pred_check_branch
    %13 = sbr.rel (0) target = $region5
  $region4: #{_lambda_.10} parent=0 // pred_region
    _
  $region5: #{_lambda_.10} parent=0 // pred_fallthru
    _
  // Predicated region
  $region6: #{_lambda_.10} parent=0 // pred_check
    _
  $region7: #{_lambda_.10} parent=0 // pred_check_branch
    %15 = sbr.rel (0) target = $region9
  $region8: #{_lambda_.10} parent=0 // pred_region
    _
  $region9: #{_lambda_.10} parent=0 // pred_fallthru
    _
  // Predicated region
  $region10: #{_lambda_.10} parent=0 // pred_check
    _
  $region11: #{_lambda_.10} parent=0 // pred_check_branch
    %17 = sbr.rel (0) target = $region13
  $region12: #{_lambda_.10} parent=0 // pred_region
    _
  $region13: #{_lambda_.10} parent=0 // pred_fallthru
    _
  // Predicated region
  $region14: #{_lambda_.10} parent=0 // pred_check
    _
  $region15: #{_lambda_.10} parent=0 // pred_check_branch
    %19 = sbr.rel (0) target = $region17
  $region16: #{_lambda_.10} parent=0 // pred_region
    _
  $region17: #{_lambda_.10} parent=0 // pred_fallthru
    _
  // Predicated region
  $region18: #{_lambda_.10} parent=0 // pred_check
    _
  $region19: #{_lambda_.10} parent=0 // pred_check_branch
    %21 = sbr.rel (0) target = $region21
  $region20: #{_lambda_.10} parent=0 // pred_region
    _
  $region21: #{_lambda_.10} parent=0 // pred_fallthru
    _
  // Predicated region
  $region22: #{_lambda_.10} parent=0 // pred_check
    _
  $region23: #{_lambda_.10} parent=0 // pred_check_branch
    %23 = sbr.rel (0) target = $region25
  $region24: #{_lambda_.10} parent=0 // pred_region
    _
  $region25: #{_lambda_.10} parent=0 // pred_fallthru
    _
  // Predicated region
  $region26: #{_lambda_.10} parent=0 // pred_check
    _
  $region27: #{_lambda_.10} parent=0 // pred_check_branch
    %25 = sbr.rel (0) target = $region29
  $region28: #{_lambda_.10} parent=0 // pred_region
    _
  $region29: #{_lambda_.10} parent=0 // pred_fallthru
    _
  %v27 = vld [vmem:[%s0] sm:$0xf]
  %v28 = vld [vmem:[%s0 + $0x4] sm:$0xf]
  %v29 = vld [vmem:[%s0 + $0x8] sm:$0xf]
  %v30 = vld [vmem:[%s0 + $0xc] sm:$0xf]
  %v31 = vld [vmem:[%s0 + $0x10] sm:$0xf]
  %v32 = vld [vmem:[%s0 + $0x14] sm:$0xf]
  %v33 = vld [vmem:[%s0 + $0x18] sm:$0xf]
  %v34 = vld [vmem:[%s0 + $0x1c] sm:$0xf]
  %v35 = vld [vmem:[%s0 + $0x20] sm:$0xf]
  %v36 = vld [vmem:[%s0 + $0x24] sm:$0xf]
  %v37 = vld [vmem:[%s0 + $0x28] sm:$0xf]
  %v38 = vld [vmem:[%s0 + $0x2c] sm:$0xf]
  %v39 = vld [vmem:[%s0 + $0x30] sm:$0xf]
  %v40 = vld [vmem:[%s0 + $0x34] sm:$0xf]
  %v41 = vld [vmem:[%s0 + $0x38] sm:$0xf]
  %v42 = vld [vmem:[%s0 + $0x3c] sm:$0xf]
  %vm43 = vcmask 125952
  %44 = vst.msk [vmem:[%s7] sm:$0xf] %vm43, %v27
  %45 = vst.msk [vmem:[%s7 + $0x4] sm:$0xf] %vm43, %v28
  %46 = vst.msk [vmem:[%s7 + $0x8] sm:$0xf] %vm43, %v29
  %47 = vst.msk [vmem:[%s7 + $0xc] sm:$0xf] %vm43, %v30
  %48 = vst.msk [vmem:[%s7 + $0x10] sm:$0xf] %vm43, %v31
  %49 = vst.msk [vmem:[%s7 + $0x14] sm:$0xf] %vm43, %v32
  %50 = vst.msk [vmem:[%s7 + $0x18] sm:$0xf] %vm43, %v33
  %51 = vst.msk [vmem:[%s7 + $0x1c] sm:$0xf] %vm43, %v34
  %52 = vst.msk [vmem:[%s7 + $0x20] sm:$0xf] %vm43, %v35
  %53 = vst.msk [vmem:[%s7 + $0x24] sm:$0xf] %vm43, %v36
  %54 = vst.msk [vmem:[%s7 + $0x28] sm:$0xf] %vm43, %v37
  %55 = vst.msk [vmem:[%s7 + $0x2c] sm:$0xf] %vm43, %v38
  %56 = vst.msk [vmem:[%s7 + $0x30] sm:$0xf] %vm43, %v39
  %57 = vst.msk [vmem:[%s7 + $0x34] sm:$0xf] %vm43, %v40
  %58 = vst.msk [vmem:[%s7 + $0x38] sm:$0xf] %vm43, %v41
  %59 = vst.msk [vmem:[%s7 + $0x3c] sm:$0xf] %vm43, %v42
  %vm60 = vcmask 257152
  %61 = vst.msk [vmem:[%s7] sm:$0xf] %vm60, 0
  %62 = vst.msk [vmem:[%s7 + $0x4] sm:$0xf] %vm60, 0
  %63 = vst.msk [vmem:[%s7 + $0x8] sm:$0xf] %vm60, 0
  %64 = vst.msk [vmem:[%s7 + $0xc] sm:$0xf] %vm60, 0
  %65 = vst.msk [vmem:[%s7 + $0x10] sm:$0xf] %vm60, 0
  %66 = vst.msk [vmem:[%s7 + $0x14] sm:$0xf] %vm60, 0
  %67 = vst.msk [vmem:[%s7 + $0x18] sm:$0xf] %vm60, 0
  %68 = vst.msk [vmem:[%s7 + $0x1c] sm:$0xf] %vm60, 0
  %69 = vst.msk [vmem:[%s7 + $0x20] sm:$0xf] %vm60, 0
  %70 = vst.msk [vmem:[%s7 + $0x24] sm:$0xf] %vm60, 0
  %71 = vst.msk [vmem:[%s7 + $0x28] sm:$0xf] %vm60, 0
  %72 = vst.msk [vmem:[%s7 + $0x2c] sm:$0xf] %vm60, 0
  %73 = vst.msk [vmem:[%s7 + $0x30] sm:$0xf] %vm60, 0
  %74 = vst.msk [vmem:[%s7 + $0x34] sm:$0xf] %vm60, 0
  %75 = vst.msk [vmem:[%s7 + $0x38] sm:$0xf] %vm60, 0
  %76 = vst.msk [vmem:[%s7 + $0x3c] sm:$0xf] %vm60, 0
  %vm77 = vcmask 261120
  %78 = vst.msk [vmem:[#allocation2] sm:$0xff] %vm77, 0
  %79 = vst.msk [vmem:[#allocation2 + $0x8] sm:$0xff] %vm77, 0
  %80 = vst.msk [vmem:[#allocation2 + $0x10] sm:$0xff] %vm77, 0
  %81 = vst.msk [vmem:[#allocation2 + $0x18] sm:$0xff] %vm77, 0
  %82 = vst.msk [vmem:[#allocation2 + $0x20] sm:$0xff] %vm77, 0
  %83 = vst.msk [vmem:[#allocation2 + $0x28] sm:$0xff] %vm77, 0
  %84 = vst.msk [vmem:[#allocation2 + $0x30] sm:$0xff] %vm77, 0
  %85 = vst.msk [vmem:[#allocation2 + $0x38] sm:$0xff] %vm77, 0
  %86 = vst.msk [vmem:[#allocation2 + $0x40] sm:$0xff] %vm77, 0
  %87 = vst.msk [vmem:[#allocation2 + $0x48] sm:$0xff] %vm77, 0
  %88 = vst.msk [vmem:[#allocation2 + $0x50] sm:$0xff] %vm77, 0
  %89 = vst.msk [vmem:[#allocation2 + $0x58] sm:$0xff] %vm77, 0
  %90 = vst.msk [vmem:[#allocation2 + $0x60] sm:$0xff] %vm77, 0
  %91 = vst.msk [vmem:[#allocation2 + $0x68] sm:$0xff] %vm77, 0
  %92 = vst.msk [vmem:[#allocation2 + $0x70] sm:$0xff] %vm77, 0
  %93 = vst.msk [vmem:[#allocation2 + $0x78] sm:$0xff] %vm77, 0
  %94 = vst.msk [vmem:[#allocation2 + $0x80] sm:$0xff] %vm77, 0
  %95 = vst.msk [vmem:[#allocation2 + $0x88] sm:$0xff] %vm77, 0
  %96 = vst.msk [vmem:[#allocation2 + $0x90] sm:$0xff] %vm77, 0
  %97 = vst.msk [vmem:[#allocation2 + $0x98] sm:$0xff] %vm77, 0
  %v98 = vld [vmem:[%s7] sm:$0xf]
  %v99 = vld [vmem:[%s7 + $0x4] sm:$0xf]
  %v100 = vld [vmem:[%s7 + $0x8] sm:$0xf]
  %v101 = vld [vmem:[%s7 + $0xc] sm:$0xf]
  %v102 = vld [vmem:[%s7 + $0x10] sm:$0xf]
  %v103 = vld [vmem:[%s7 + $0x14] sm:$0xf]
  %v104 = vld [vmem:[%s7 + $0x18] sm:$0xf]
  %v105 = vld [vmem:[%s7 + $0x1c] sm:$0xf]
  %v106 = vld [vmem:[%s7 + $0x20] sm:$0xf]
  %v107 = vld [vmem:[%s7 + $0x24] sm:$0xf]
  %v108 = vld [vmem:[%s7 + $0x28] sm:$0xf]
  %v109 = vld [vmem:[%s7 + $0x2c] sm:$0xf]
  %v110 = vld [vmem:[%s7 + $0x30] sm:$0xf]
  %v111 = vld [vmem:[%s7 + $0x34] sm:$0xf]
  %v112 = vld [vmem:[%s7 + $0x38] sm:$0xf]
  %v113 = vld [vmem:[%s7 + $0x3c] sm:$0xf]
  %v114 = vld [vmem:[%s1] sm:$0xf]
  %v115 = vld [vmem:[%s1 + $0x4] sm:$0xf]
  %v116 = vld [vmem:[%s1 + $0x8] sm:$0xf]
  %v117 = vld [vmem:[%s1 + $0xc] sm:$0xf]
  %v134 = vunpack.c.l.b16 %v98
  %v135 = vunpack.c.l.b16 %v99
  %v136 = vunpack.c.l.b16 %v100
  %v137 = vunpack.c.l.b16 %v101
  %v138 = vunpack.c.l.b16 %v102
  %v139 = vunpack.c.l.b16 %v103
  %v140 = vunpack.c.l.b16 %v104
  %v141 = vunpack.c.l.b16 %v105
  %v142 = vunpack.c.l.b16 %v106
  %v143 = vunpack.c.l.b16 %v107
  %v144 = vunpack.c.l.b16 %v108
  %v145 = vunpack.c.l.b16 %v109
  %v146 = vunpack.c.l.b16 %v110
  %v147 = vunpack.c.l.b16 %v111
  %v148 = vunpack.c.l.b16 %v112
  %v149 = vunpack.c.l.b16 %v113
  %v150 = vpack.c.b16 %v135, %v134
  %v151 = vpack.c.b16 %v137, %v136
  %v152 = vpack.c.b16 %v139, %v138
  %v153 = vpack.c.b16 %v141, %v140
  %v154 = vpack.c.b16 %v143, %v142
  %v155 = vpack.c.b16 %v145, %v144
  %v156 = vpack.c.b16 %v147, %v146
  %v157 = vpack.c.b16 %v149, %v148
  %v162 = vunpack.c.l.b16 %v114
  %v163 = vunpack.c.l.b16 %v115
  %v164 = vunpack.c.l.b16 %v116
  %v165 = vunpack.c.l.b16 %v117
  %v166 = vpack.c.b16 %v163, %v162
  %v167 = vpack.c.b16 %v165, %v164
  %v171 = vsel %vm77, %v150, 0
  %v174 = vsel %vm77, %v151, 0
  %v177 = vsel %vm77, %v152, 0
  %v180 = vsel %vm77, %v153, 0
  %v183 = vsel %vm77, %v154, 0
  %v186 = vsel %vm77, %v155, 0
  %v189 = vsel %vm77, %v156, 0
  %v192 = vsel %vm77, %v157, 0
  %194 = vmatprep.subr.bf16.mxu0 0
  %195 = vmatpush1.bf16.msra.mxu0 %v166
  %196 = vmatprep.subr.bf16.mxu0 0
  %197 = vmatpush1.bf16.msra.mxu0 %v167
  %198 = vmatprep.subr.bf16.mxu0 0
  %199 = vmatpush1.bf16.msra.mxu0 0
  %200 = vmatprep.subr.bf16.mxu0 0
  %201 = vmatpush1.bf16.msra.mxu0 0
  %202 = vmatprep.subr.bf16.mxu0 0
  %203 = vmatpush1.bf16.msra.mxu0 0
  %204 = vmatprep.subr.bf16.mxu0 0
  %205 = vmatpush1.bf16.msra.mxu0 0
  %206 = vmatprep.subr.bf16.mxu0 0
  %207 = vmatpush1.bf16.msra.mxu0 0
  %208 = vmatprep.subr.bf16.mxu0 0
  %209 = vmatpush1.bf16.msra.mxu0 0
  %210 = vmatprep.subr.bf16.mxu0 0
  %211 = vmatpush1.bf16.msra.mxu0 0
  %212 = vmatprep.subr.bf16.mxu0 0
  %213 = vmatpush1.bf16.msra.mxu0 0
  %214 = vmatprep.subr.bf16.mxu0 0
  %215 = vmatpush1.bf16.msra.mxu0 0
  %216 = vmatprep.subr.bf16.mxu0 0
  %217 = vmatpush1.bf16.msra.mxu0 0
  %218 = vmatprep.subr.bf16.mxu0 0
  %219 = vmatpush1.bf16.msra.mxu0 0
  %220 = vmatprep.subr.bf16.mxu0 0
  %221 = vmatpush1.bf16.msra.mxu0 0
  %222 = vmatprep.subr.bf16.mxu0 0
  %223 = vmatpush1.bf16.msra.mxu0 0
  %224 = vmatprep.subr.bf16.mxu0 0
  %225 = vmatpush1.bf16.msra.mxu0 0
  %226 = vmatprep.mubr.bf16.mxu0 0
  %227 = vmatmul.mubr.bf16.gmra.mrb[0].mxu0 %v171
  %v228 = vpop.f32.mrb[0].mxu0
  %v229 = vadd.f32 0.0, %v228
  %v230 = vpop.f32.mrb[0].mxu0
  %v231 = vpop.f32.mrb[0].mxu0
  %v232 = vadd.f32 0.0, %v231
  %v233 = vpop.f32.mrb[0].mxu0
  %234 = vmatprep.mubr.bf16.mxu0 0
  %235 = vmatmul.mubr.bf16.gmra.mrb[0].mxu0 %v174
  %v236 = vpop.f32.mrb[0].mxu0
  %v237 = vadd.f32 0.0, %v236
  %v238 = vpop.f32.mrb[0].mxu0
  %v239 = vpop.f32.mrb[0].mxu0
  %v240 = vadd.f32 0.0, %v239
  %v241 = vpop.f32.mrb[0].mxu0
  %242 = vmatprep.mubr.bf16.mxu0 0
  %243 = vmatmul.mubr.bf16.gmra.mrb[0].mxu0 %v177
  %v244 = vpop.f32.mrb[0].mxu0
  %v245 = vadd.f32 0.0, %v244
  %v246 = vpop.f32.mrb[0].mxu0
  %v247 = vpop.f32.mrb[0].mxu0
  %v248 = vadd.f32 0.0, %v247
  %v249 = vpop.f32.mrb[0].mxu0
  %250 = vmatprep.mubr.bf16.mxu0 0
  %251 = vmatmul.mubr.bf16.gmra.mrb[0].mxu0 %v180
  %v252 = vpop.f32.mrb[0].mxu0
  %v253 = vadd.f32 0.0, %v252
  %v254 = vpop.f32.mrb[0].mxu0
  %v255 = vpop.f32.mrb[0].mxu0
  %v256 = vadd.f32 0.0, %v255
  %v257 = vpop.f32.mrb[0].mxu0
  %258 = vmatprep.mubr.bf16.mxu0 0
  %259 = vmatmul.mubr.bf16.gmra.mrb[0].mxu0 %v183
  %v260 = vpop.f32.mrb[0].mxu0
  %v261 = vadd.f32 0.0, %v260
  %v262 = vpop.f32.mrb[0].mxu0
  %v263 = vpop.f32.mrb[0].mxu0
  %v264 = vadd.f32 0.0, %v263
  %v265 = vpop.f32.mrb[0].mxu0
  %266 = vmatprep.mubr.bf16.mxu0 0
  %267 = vmatmul.mubr.bf16.gmra.mrb[0].mxu0 %v186
  %v268 = vpop.f32.mrb[0].mxu0
  %v269 = vadd.f32 0.0, %v268
  %v270 = vpop.f32.mrb[0].mxu0
  %v271 = vpop.f32.mrb[0].mxu0
  %v272 = vadd.f32 0.0, %v271
  %v273 = vpop.f32.mrb[0].mxu0
  %274 = vmatprep.mubr.bf16.mxu0 0
  %275 = vmatmul.mubr.bf16.gmra.mrb[0].mxu0 %v189
  %v276 = vpop.f32.mrb[0].mxu0
  %v277 = vadd.f32 0.0, %v276
  %v278 = vpop.f32.mrb[0].mxu0
  %v279 = vpop.f32.mrb[0].mxu0
  %v280 = vadd.f32 0.0, %v279
  %v281 = vpop.f32.mrb[0].mxu0
  %282 = vmatprep.mubr.bf16.mxu0 0
  %283 = vmatmul.mubr.bf16.gmra.mrb[0].mxu0 %v192
  %v284 = vpop.f32.mrb[0].mxu0
  %v285 = vadd.f32 0.0, %v284
  %v286 = vpop.f32.mrb[0].mxu0
  %v287 = vpop.f32.mrb[0].mxu0
  %v288 = vadd.f32 0.0, %v287
  %v289 = vpop.f32.mrb[0].mxu0
  %290 = vdwg.mxu0
  %v291 = vld [vmem:[%s2] sm:$0x1]
  %v293 = vlaneseq
  %v294 = vshrl.u32 %v293, 7
  %v295 = vsub.s32 0, %v294
  %v296 = vrot.slane %v291, %v295
  %v298 = vmul.f32 %v229, %v296
  %v299 = vmul.f32 %v232, %v296
  %v300 = vmul.f32 %v237, %v296
  %v301 = vmul.f32 %v240, %v296
  %v302 = vmul.f32 %v245, %v296
  %v303 = vmul.f32 %v248, %v296
  %v304 = vmul.f32 %v253, %v296
  %v305 = vmul.f32 %v256, %v296
  %v306 = vmul.f32 %v261, %v296
  %v307 = vmul.f32 %v264, %v296
  %v308 = vmul.f32 %v269, %v296
  %v309 = vmul.f32 %v272, %v296
  %v310 = vmul.f32 %v277, %v296
  %v311 = vmul.f32 %v280, %v296
  %v312 = vmul.f32 %v285, %v296
  %v313 = vmul.f32 %v288, %v296
  %v314 = vld [vmem:[%s3] sm:$0x1]
  %v316 = vlaneseq
  %v317 = vshrl.u32 %v316, 7
  %v318 = vsub.s32 0, %v317
  %v319 = vrot.slane %v314, %v318
  %v321 = vadd.f32 %v298, %v319
  %v322 = vadd.f32 %v299, %v319
  %v323 = vadd.f32 %v300, %v319
  %v324 = vadd.f32 %v301, %v319
  %v325 = vadd.f32 %v302, %v319
  %v326 = vadd.f32 %v303, %v319
  %v327 = vadd.f32 %v304, %v319
  %v328 = vadd.f32 %v305, %v319
  %v329 = vadd.f32 %v306, %v319
  %v330 = vadd.f32 %v307, %v319
  %v331 = vadd.f32 %v308, %v319
  %v332 = vadd.f32 %v309, %v319
  %v333 = vadd.f32 %v310, %v319
  %v334 = vadd.f32 %v311, %v319
  %v335 = vadd.f32 %v312, %v319
  %v336 = vadd.f32 %v313, %v319
  %v337 = vmax.f32 %v321, 0.0
  %v338 = vmax.f32 %v322, 0.0
  %v339 = vmax.f32 %v323, 0.0
  %v340 = vmax.f32 %v324, 0.0
  %v341 = vmax.f32 %v325, 0.0
  %v342 = vmax.f32 %v326, 0.0
  %v343 = vmax.f32 %v327, 0.0
  %v344 = vmax.f32 %v328, 0.0
  %v345 = vmax.f32 %v329, 0.0
  %v346 = vmax.f32 %v330, 0.0
  %v347 = vmax.f32 %v331, 0.0
  %v348 = vmax.f32 %v332, 0.0
  %v349 = vmax.f32 %v333, 0.0
  %v350 = vmax.f32 %v334, 0.0
  %v351 = vmax.f32 %v335, 0.0
  %v352 = vmax.f32 %v336, 0.0
  %v353 = vpack.c.bf16 %v338, %v337
  %v354 = vpack.c.bf16 %v340, %v339
  %v355 = vpack.c.bf16 %v342, %v341
  %v356 = vpack.c.bf16 %v344, %v343
  %v357 = vpack.c.bf16 %v346, %v345
  %v358 = vpack.c.bf16 %v348, %v347
  %v359 = vpack.c.bf16 %v350, %v349
  %v360 = vpack.c.bf16 %v352, %v351
  %v362 = vshrl.u32 %v353, 16
  %v364 = vrot.slane %v362, 7
  %v365 = vshll.u32 %v353, 16
  %v367 = vor.u32 %v364, %v365
  %vm369 = vcmask 258048
  %vm370 = vsmask.f32 4354
  %vm371 = vmand %vm369, %vm370
  %v372 = vld [vmem:[#allocation2 + $0x8] sm:$0x1f]
  %v373 = vsel %vm371, %v367, %v372
  %374 = vst [vmem:[#allocation2 + $0x8] sm:$0x1f] %v373
  %v375 = vrot.slane %v362, 3
  %v376 = vrot.slane %v365, 4
  %v377 = vor.u32 %v375, %v376
  %v379 = vld [vmem:[#allocation2 + $0x10] sm:$0x1f]
  %v380 = vsel %vm371, %v377, %v379
  %381 = vst [vmem:[#allocation2 + $0x10] sm:$0x1f] %v380
  %v383 = vshrl.u32 %v354, 16
  %v385 = vrot.slane %v383, 7
  %v386 = vshll.u32 %v354, 16
  %v388 = vor.u32 %v385, %v386
  %v390 = vld [vmem:[#allocation2 + $0x18] sm:$0x1f]
  %v391 = vsel %vm371, %v388, %v390
  %392 = vst [vmem:[#allocation2 + $0x18] sm:$0x1f] %v391
  %v393 = vrot.slane %v383, 3
  %v394 = vrot.slane %v386, 4
  %v395 = vor.u32 %v393, %v394
  %v397 = vld [vmem:[#allocation2 + $0x20] sm:$0x1f]
  %v398 = vsel %vm371, %v395, %v397
  %399 = vst [vmem:[#allocation2 + $0x20] sm:$0x1f] %v398
  %v401 = vshrl.u32 %v355, 16
  %v403 = vrot.slane %v401, 7
  %v404 = vshll.u32 %v355, 16
  %v406 = vor.u32 %v403, %v404
  %v408 = vld [vmem:[#allocation2 + $0x28] sm:$0x1f]
  %v409 = vsel %vm371, %v406, %v408
  %410 = vst [vmem:[#allocation2 + $0x28] sm:$0x1f] %v409
  %v411 = vrot.slane %v401, 3
  %v412 = vrot.slane %v404, 4
  %v413 = vor.u32 %v411, %v412
  %v415 = vld [vmem:[#allocation2 + $0x30] sm:$0x1f]
  %v416 = vsel %vm371, %v413, %v415
  %417 = vst [vmem:[#allocation2 + $0x30] sm:$0x1f] %v416
  %v419 = vshrl.u32 %v356, 16
  %v421 = vrot.slane %v419, 7
  %v422 = vshll.u32 %v356, 16
  %v424 = vor.u32 %v421, %v422
  %v426 = vld [vmem:[#allocation2 + $0x38] sm:$0x1f]
  %v427 = vsel %vm371, %v424, %v426
  %428 = vst [vmem:[#allocation2 + $0x38] sm:$0x1f] %v427
  %v429 = vrot.slane %v419, 3
  %v430 = vrot.slane %v422, 4
  %v431 = vor.u32 %v429, %v430
  %v433 = vld [vmem:[#allocation2 + $0x40] sm:$0x1f]
  %v434 = vsel %vm371, %v431, %v433
  %435 = vst [vmem:[#allocation2 + $0x40] sm:$0x1f] %v434
  %v437 = vshrl.u32 %v357, 16
  %v439 = vrot.slane %v437, 7
  %v440 = vshll.u32 %v357, 16
  %v442 = vor.u32 %v439, %v440
  %v444 = vld [vmem:[#allocation2 + $0x58] sm:$0x1f]
  %v445 = vsel %vm371, %v442, %v444
  %446 = vst [vmem:[#allocation2 + $0x58] sm:$0x1f] %v445
  %v447 = vrot.slane %v437, 3
  %v448 = vrot.slane %v440, 4
  %v449 = vor.u32 %v447, %v448
  %v451 = vld [vmem:[#allocation2 + $0x60] sm:$0x1f]
  %v452 = vsel %vm371, %v449, %v451
  %453 = vst [vmem:[#allocation2 + $0x60] sm:$0x1f] %v452
  %v455 = vshrl.u32 %v358, 16
  %v457 = vrot.slane %v455, 7
  %v458 = vshll.u32 %v358, 16
  %v460 = vor.u32 %v457, %v458
  %v462 = vld [vmem:[#allocation2 + $0x68] sm:$0x1f]
  %v463 = vsel %vm371, %v460, %v462
  %464 = vst [vmem:[#allocation2 + $0x68] sm:$0x1f] %v463
  %v465 = vrot.slane %v455, 3
  %v466 = vrot.slane %v458, 4
  %v467 = vor.u32 %v465, %v466
  %v469 = vld [vmem:[#allocation2 + $0x70] sm:$0x1f]
  %v470 = vsel %vm371, %v467, %v469
  %471 = vst [vmem:[#allocation2 + $0x70] sm:$0x1f] %v470
  %v473 = vshrl.u32 %v359, 16
  %v475 = vrot.slane %v473, 7
  %v476 = vshll.u32 %v359, 16
  %v478 = vor.u32 %v475, %v476
  %v480 = vld [vmem:[#allocation2 + $0x78] sm:$0x1f]
  %v481 = vsel %vm371, %v478, %v480
  %482 = vst [vmem:[#allocation2 + $0x78] sm:$0x1f] %v481
  %v483 = vrot.slane %v473, 3
  %v484 = vrot.slane %v476, 4
  %v485 = vor.u32 %v483, %v484
  %v487 = vld [vmem:[#allocation2 + $0x80] sm:$0x1f]
  %v488 = vsel %vm371, %v485, %v487
  %489 = vst [vmem:[#allocation2 + $0x80] sm:$0x1f] %v488
  %v491 = vshrl.u32 %v360, 16
  %v493 = vrot.slane %v491, 7
  %v494 = vshll.u32 %v360, 16
  %v496 = vor.u32 %v493, %v494
  %v498 = vld [vmem:[#allocation2 + $0x88] sm:$0x1f]
  %v499 = vsel %vm371, %v496, %v498
  %500 = vst [vmem:[#allocation2 + $0x88] sm:$0x1f] %v499
  %v501 = vrot.slane %v491, 3
  %v502 = vrot.slane %v494, 4
  %v503 = vor.u32 %v501, %v502
  %v505 = vld [vmem:[#allocation2 + $0x90] sm:$0x1f]
  %v506 = vsel %vm371, %v503, %v505
  %507 = vst [vmem:[#allocation2 + $0x90] sm:$0x1f] %v506
  %v508 = vld [vmem:[#allocation2] sm:$0xff]
  %v509 = vld [vmem:[#allocation2 + $0x8] sm:$0xff]
  %v510 = vld [vmem:[#allocation2 + $0x10] sm:$0xff]
  %v511 = vld [vmem:[#allocation2 + $0x18] sm:$0xff]
  %v512 = vld [vmem:[#allocation2 + $0x20] sm:$0xff]
  %v513 = vld [vmem:[#allocation2 + $0x28] sm:$0xff]
  %v514 = vld [vmem:[#allocation2 + $0x30] sm:$0xff]
  %v515 = vld [vmem:[#allocation2 + $0x38] sm:$0xff]
  %v516 = vld [vmem:[#allocation2 + $0x40] sm:$0xff]
  %v517 = vld [vmem:[#allocation2 + $0x48] sm:$0xff]
  %v518 = vld [vmem:[#allocation2 + $0x50] sm:$0xff]
  %v519 = vld [vmem:[#allocation2 + $0x58] sm:$0xff]
  %v520 = vld [vmem:[#allocation2 + $0x60] sm:$0xff]
  %v521 = vld [vmem:[#allocation2 + $0x68] sm:$0xff]
  %v522 = vld [vmem:[#allocation2 + $0x70] sm:$0xff]
  %v523 = vld [vmem:[#allocation2 + $0x78] sm:$0xff]
  %v524 = vld [vmem:[#allocation2 + $0x80] sm:$0xff]
  %v525 = vld [vmem:[#allocation2 + $0x88] sm:$0xff]
  %v526 = vld [vmem:[#allocation2 + $0x90] sm:$0xff]
  %v527 = vld [vmem:[#allocation2 + $0x98] sm:$0xff]
  %v528 = vld [vmem:[%s4] sm:$0xf]
  %v529 = vld [vmem:[%s4 + $0x4] sm:$0xf]
  %v530 = vld [vmem:[%s4 + $0x8] sm:$0xf]
  %v531 = vld [vmem:[%s4 + $0xc] sm:$0xf]
  %v536 = vunpack.c.l.b16 %v528
  %v537 = vunpack.c.l.b16 %v529
  %v538 = vunpack.c.l.b16 %v530
  %v539 = vunpack.c.l.b16 %v531
  %v540 = vpack.c.b16 %v537, %v536
  %v541 = vpack.c.b16 %v539, %v538
  %v545 = vsel %vm77, %v508, 0
  %v548 = vsel %vm77, %v509, 0
  %v551 = vsel %vm77, %v510, 0
  %v554 = vsel %vm77, %v511, 0
  %v557 = vsel %vm77, %v512, 0
  %v560 = vsel %vm77, %v513, 0
  %v563 = vsel %vm77, %v514, 0
  %v566 = vsel %vm77, %v515, 0
  %v569 = vsel %vm77, %v516, 0
  %v572 = vsel %vm77, %v517, 0
  %v575 = vsel %vm77, %v518, 0
  %v578 = vsel %vm77, %v519, 0
  %v581 = vsel %vm77, %v520, 0
  %v584 = vsel %vm77, %v521, 0
  %v587 = vsel %vm77, %v522, 0
  %v590 = vsel %vm77, %v523, 0
  %v593 = vsel %vm77, %v524, 0
  %v596 = vsel %vm77, %v525, 0
  %v599 = vsel %vm77, %v526, 0
  %v602 = vsel %vm77, %v527, 0
  %604 = vmatprep.subr.bf16.mxu0 0
  %605 = vmatpush1.bf16.msra.mxu0 %v540
  %606 = vmatprep.subr.bf16.mxu0 0
  %607 = vmatpush1.bf16.msra.mxu0 %v541
  %608 = vmatprep.subr.bf16.mxu0 0
  %609 = vmatpush1.bf16.msra.mxu0 0
  %610 = vmatprep.subr.bf16.mxu0 0
  %611 = vmatpush1.bf16.msra.mxu0 0
  %612 = vmatprep.subr.bf16.mxu0 0
  %613 = vmatpush1.bf16.msra.mxu0 0
  %614 = vmatprep.subr.bf16.mxu0 0
  %615 = vmatpush1.bf16.msra.mxu0 0
  %616 = vmatprep.subr.bf16.mxu0 0
  %617 = vmatpush1.bf16.msra.mxu0 0
  %618 = vmatprep.subr.bf16.mxu0 0
  %619 = vmatpush1.bf16.msra.mxu0 0
  %620 = vmatprep.subr.bf16.mxu0 0
  %621 = vmatpush1.bf16.msra.mxu0 0
  %622 = vmatprep.subr.bf16.mxu0 0
  %623 = vmatpush1.bf16.msra.mxu0 0
  %624 = vmatprep.subr.bf16.mxu0 0
  %625 = vmatpush1.bf16.msra.mxu0 0
  %626 = vmatprep.subr.bf16.mxu0 0
  %627 = vmatpush1.bf16.msra.mxu0 0
  %628 = vmatprep.subr.bf16.mxu0 0
  %629 = vmatpush1.bf16.msra.mxu0 0
  %630 = vmatprep.subr.bf16.mxu0 0
  %631 = vmatpush1.bf16.msra.mxu0 0
  %632 = vmatprep.subr.bf16.mxu0 0
  %633 = vmatpush1.bf16.msra.mxu0 0
  %634 = vmatprep.subr.bf16.mxu0 0
  %635 = vmatpush1.bf16.msra.mxu0 0
  %636 = vmatprep.mubr.bf16.mxu0 0
  %637 = vmatmul.mubr.bf16.gmra.mrb[0].mxu0 %v545
  %v638 = vpop.f32.mrb[0].mxu0
  %v639 = vadd.f32 0.0, %v638
  %v640 = vpop.f32.mrb[0].mxu0
  %v641 = vpop.f32.mrb[0].mxu0
  %v642 = vadd.f32 0.0, %v641
  %v643 = vpop.f32.mrb[0].mxu0
  %644 = vmatprep.mubr.bf16.mxu0 0
  %645 = vmatmul.mubr.bf16.gmra.mrb[0].mxu0 %v548
  %v646 = vpop.f32.mrb[0].mxu0
  %v647 = vadd.f32 0.0, %v646
  %v648 = vpop.f32.mrb[0].mxu0
  %v649 = vpop.f32.mrb[0].mxu0
  %v650 = vadd.f32 0.0, %v649
  %v651 = vpop.f32.mrb[0].mxu0
  %652 = vmatprep.mubr.bf16.mxu0 0
  %653 = vmatmul.mubr.bf16.gmra.mrb[0].mxu0 %v551
  %v654 = vpop.f32.mrb[0].mxu0
  %v655 = vadd.f32 0.0, %v654
  %v656 = vpop.f32.mrb[0].mxu0
  %v657 = vpop.f32.mrb[0].mxu0
  %v658 = vadd.f32 0.0, %v657
  %v659 = vpop.f32.mrb[0].mxu0
  %660 = vmatprep.mubr.bf16.mxu0 0
  %661 = vmatmul.mubr.bf16.gmra.mrb[0].mxu0 %v554
  %v662 = vpop.f32.mrb[0].mxu0
  %v663 = vadd.f32 0.0, %v662
  %v664 = vpop.f32.mrb[0].mxu0
  %v665 = vpop.f32.mrb[0].mxu0
  %v666 = vadd.f32 0.0, %v665
  %v667 = vpop.f32.mrb[0].mxu0
  %668 = vmatprep.mubr.bf16.mxu0 0
  %669 = vmatmul.mubr.bf16.gmra.mrb[0].mxu0 %v557
  %v670 = vpop.f32.mrb[0].mxu0
  %v671 = vadd.f32 0.0, %v670
  %v672 = vpop.f32.mrb[0].mxu0
  %v673 = vpop.f32.mrb[0].mxu0
  %v674 = vadd.f32 0.0, %v673
  %v675 = vpop.f32.mrb[0].mxu0
  %676 = vmatprep.mubr.bf16.mxu0 0
  %677 = vmatmul.mubr.bf16.gmra.mrb[0].mxu0 %v560
  %v678 = vpop.f32.mrb[0].mxu0
  %v679 = vadd.f32 0.0, %v678
  %v680 = vpop.f32.mrb[0].mxu0
  %v681 = vpop.f32.mrb[0].mxu0
  %v682 = vadd.f32 0.0, %v681
  %v683 = vpop.f32.mrb[0].mxu0
  %684 = vmatprep.mubr.bf16.mxu0 0
  %685 = vmatmul.mubr.bf16.gmra.mrb[0].mxu0 %v563
  %v686 = vpop.f32.mrb[0].mxu0
  %v687 = vadd.f32 0.0, %v686
  %v688 = vpop.f32.mrb[0].mxu0
  %v689 = vpop.f32.mrb[0].mxu0
  %v690 = vadd.f32 0.0, %v689
  %v691 = vpop.f32.mrb[0].mxu0
  %692 = vmatprep.mubr.bf16.mxu0 0
  %693 = vmatmul.mubr.bf16.gmra.mrb[0].mxu0 %v566
  %v694 = vpop.f32.mrb[0].mxu0
  %v695 = vadd.f32 0.0, %v694
  %v696 = vpop.f32.mrb[0].mxu0
  %v697 = vpop.f32.mrb[0].mxu0
  %v698 = vadd.f32 0.0, %v697
  %v699 = vpop.f32.mrb[0].mxu0
  %700 = vmatprep.mubr.bf16.mxu0 0
  %701 = vmatmul.mubr.bf16.gmra.mrb[0].mxu0 %v569
  %v702 = vpop.f32.mrb[0].mxu0
  %v703 = vadd.f32 0.0, %v702
  %v704 = vpop.f32.mrb[0].mxu0
  %v705 = vpop.f32.mrb[0].mxu0
  %v706 = vadd.f32 0.0, %v705
  %v707 = vpop.f32.mrb[0].mxu0
  %708 = vmatprep.mubr.bf16.mxu0 0
  %709 = vmatmul.mubr.bf16.gmra.mrb[0].mxu0 %v572
  %v710 = vpop.f32.mrb[0].mxu0
  %v711 = vadd.f32 0.0, %v710
  %v712 = vpop.f32.mrb[0].mxu0
  %v713 = vpop.f32.mrb[0].mxu0
  %v714 = vadd.f32 0.0, %v713
  %v715 = vpop.f32.mrb[0].mxu0
  %716 = vmatprep.mubr.bf16.mxu0 0
  %717 = vmatmul.mubr.bf16.gmra.mrb[0].mxu0 %v575
  %v718 = vpop.f32.mrb[0].mxu0
  %v719 = vadd.f32 0.0, %v718
  %v720 = vpop.f32.mrb[0].mxu0
  %v721 = vpop.f32.mrb[0].mxu0
  %v722 = vadd.f32 0.0, %v721
  %v723 = vpop.f32.mrb[0].mxu0
  %724 = vmatprep.mubr.bf16.mxu0 0
  %725 = vmatmul.mubr.bf16.gmra.mrb[0].mxu0 %v578
  %v726 = vpop.f32.mrb[0].mxu0
  %v727 = vadd.f32 0.0, %v726
  %v728 = vpop.f32.mrb[0].mxu0
  %v729 = vpop.f32.mrb[0].mxu0
  %v730 = vadd.f32 0.0, %v729
  %v731 = vpop.f32.mrb[0].mxu0
  %732 = vmatprep.mubr.bf16.mxu0 0
  %733 = vmatmul.mubr.bf16.gmra.mrb[0].mxu0 %v581
  %v734 = vpop.f32.mrb[0].mxu0
  %v735 = vadd.f32 0.0, %v734
  %v736 = vpop.f32.mrb[0].mxu0
  %v737 = vpop.f32.mrb[0].mxu0
  %v738 = vadd.f32 0.0, %v737
  %v739 = vpop.f32.mrb[0].mxu0
  %740 = vmatprep.mubr.bf16.mxu0 0
  %741 = vmatmul.mubr.bf16.gmra.mrb[0].mxu0 %v584
  %v742 = vpop.f32.mrb[0].mxu0
  %v743 = vadd.f32 0.0, %v742
  %v744 = vpop.f32.mrb[0].mxu0
  %v745 = vpop.f32.mrb[0].mxu0
  %v746 = vadd.f32 0.0, %v745
  %v747 = vpop.f32.mrb[0].mxu0
  %748 = vmatprep.mubr.bf16.mxu0 0
  %749 = vmatmul.mubr.bf16.gmra.mrb[0].mxu0 %v587
  %v750 = vpop.f32.mrb[0].mxu0
  %v751 = vadd.f32 0.0, %v750
  %v752 = vpop.f32.mrb[0].mxu0
  %v753 = vpop.f32.mrb[0].mxu0
  %v754 = vadd.f32 0.0, %v753
  %v755 = vpop.f32.mrb[0].mxu0
  %756 = vmatprep.mubr.bf16.mxu0 0
  %757 = vmatmul.mubr.bf16.gmra.mrb[0].mxu0 %v590
  %v758 = vpop.f32.mrb[0].mxu0
  %v759 = vadd.f32 0.0, %v758
  %v760 = vpop.f32.mrb[0].mxu0
  %v761 = vpop.f32.mrb[0].mxu0
  %v762 = vadd.f32 0.0, %v761
  %v763 = vpop.f32.mrb[0].mxu0
  %764 = vmatprep.mubr.bf16.mxu0 0
  %765 = vmatmul.mubr.bf16.gmra.mrb[0].mxu0 %v593
  %v766 = vpop.f32.mrb[0].mxu0
  %v767 = vadd.f32 0.0, %v766
  %v768 = vpop.f32.mrb[0].mxu0
  %v769 = vpop.f32.mrb[0].mxu0
  %v770 = vadd.f32 0.0, %v769
  %v771 = vpop.f32.mrb[0].mxu0
  %772 = vmatprep.mubr.bf16.mxu0 0
  %773 = vmatmul.mubr.bf16.gmra.mrb[0].mxu0 %v596
  %v774 = vpop.f32.mrb[0].mxu0
  %v775 = vadd.f32 0.0, %v774
  %v776 = vpop.f32.mrb[0].mxu0
  %v777 = vpop.f32.mrb[0].mxu0
  %v778 = vadd.f32 0.0, %v777
  %v779 = vpop.f32.mrb[0].mxu0
  %780 = vmatprep.mubr.bf16.mxu0 0
  %781 = vmatmul.mubr.bf16.gmra.mrb[0].mxu0 %v599
  %v782 = vpop.f32.mrb[0].mxu0
  %v783 = vadd.f32 0.0, %v782
  %v784 = vpop.f32.mrb[0].mxu0
  %v785 = vpop.f32.mrb[0].mxu0
  %v786 = vadd.f32 0.0, %v785
  %v787 = vpop.f32.mrb[0].mxu0
  %788 = vmatprep.mubr.bf16.mxu0 0
  %789 = vmatmul.mubr.bf16.gmra.mrb[0].mxu0 %v602
  %v790 = vpop.f32.mrb[0].mxu0
  %v791 = vadd.f32 0.0, %v790
  %v792 = vpop.f32.mrb[0].mxu0
  %v793 = vpop.f32.mrb[0].mxu0
  %v794 = vadd.f32 0.0, %v793
  %v795 = vpop.f32.mrb[0].mxu0
  %796 = vdwg.mxu0
  %vm797 = vcmask 588800
  %798 = vst.msk [vmem:[#allocation3] sm:$0xff] %vm797, %v639
  %799 = vst.msk [vmem:[#allocation3 + $0x8] sm:$0xff] %vm797, %v642
  %800 = vst.msk [vmem:[#allocation3 + $0x10] sm:$0xff] %vm797, %v647
  %801 = vst.msk [vmem:[#allocation3 + $0x18] sm:$0xff] %vm797, %v650
  %802 = vst.msk [vmem:[#allocation3 + $0x20] sm:$0xff] %vm797, %v655
  %803 = vst.msk [vmem:[#allocation3 + $0x28] sm:$0xff] %vm797, %v658
  %804 = vst.msk [vmem:[#allocation3 + $0x30] sm:$0xff] %vm797, %v663
  %805 = vst.msk [vmem:[#allocation3 + $0x38] sm:$0xff] %vm797, %v666
  %806 = vst.msk [vmem:[#allocation3 + $0x40] sm:$0xff] %vm797, %v671
  %807 = vst.msk [vmem:[#allocation3 + $0x48] sm:$0xff] %vm797, %v674
  %808 = vst.msk [vmem:[#allocation3 + $0x50] sm:$0xff] %vm797, %v679
  %809 = vst.msk [vmem:[#allocation3 + $0x58] sm:$0xff] %vm797, %v682
  %810 = vst.msk [vmem:[#allocation3 + $0x60] sm:$0xff] %vm797, %v687
  %811 = vst.msk [vmem:[#allocation3 + $0x68] sm:$0xff] %vm797, %v690
  %812 = vst.msk [vmem:[#allocation3 + $0x70] sm:$0xff] %vm797, %v695
  %813 = vst.msk [vmem:[#allocation3 + $0x78] sm:$0xff] %vm797, %v698
  %814 = vst.msk [vmem:[#allocation3 + $0x80] sm:$0xff] %vm797, %v703
  %815 = vst.msk [vmem:[#allocation3 + $0x88] sm:$0xff] %vm797, %v706
  %816 = vst.msk [vmem:[#allocation3 + $0x90] sm:$0xff] %vm797, %v711
  %817 = vst.msk [vmem:[#allocation3 + $0x98] sm:$0xff] %vm797, %v714
  %818 = vst.msk [vmem:[#allocation3 + $0xa0] sm:$0xff] %vm797, %v719
  %819 = vst.msk [vmem:[#allocation3 + $0xa8] sm:$0xff] %vm797, %v722
  %820 = vst.msk [vmem:[#allocation3 + $0xb0] sm:$0xff] %vm797, %v727
  %821 = vst.msk [vmem:[#allocation3 + $0xb8] sm:$0xff] %vm797, %v730
  %822 = vst.msk [vmem:[#allocation3 + $0xc0] sm:$0xff] %vm797, %v735
  %823 = vst.msk [vmem:[#allocation3 + $0xc8] sm:$0xff] %vm797, %v738
  %824 = vst.msk [vmem:[#allocation3 + $0xd0] sm:$0xff] %vm797, %v743
  %825 = vst.msk [vmem:[#allocation3 + $0xd8] sm:$0xff] %vm797, %v746
  %826 = vst.msk [vmem:[#allocation3 + $0xe0] sm:$0xff] %vm797, %v751
  %827 = vst.msk [vmem:[#allocation3 + $0xe8] sm:$0xff] %vm797, %v754
  %828 = vst.msk [vmem:[#allocation3 + $0xf0] sm:$0xff] %vm797, %v759
  %829 = vst.msk [vmem:[#allocation3 + $0xf8] sm:$0xff] %vm797, %v762
  %830 = vst.msk [vmem:[#allocation3 + $0x100] sm:$0xff] %vm797, %v767
  %831 = vst.msk [vmem:[#allocation3 + $0x108] sm:$0xff] %vm797, %v770
  %832 = vst.msk [vmem:[#allocation3 + $0x110] sm:$0xff] %vm797, %v775
  %833 = vst.msk [vmem:[#allocation3 + $0x118] sm:$0xff] %vm797, %v778
  %834 = vst.msk [vmem:[#allocation3 + $0x120] sm:$0xff] %vm797, %v783
  %835 = vst.msk [vmem:[#allocation3 + $0x128] sm:$0xff] %vm797, %v786
  %836 = vst.msk [vmem:[#allocation3 + $0x130] sm:$0xff] %vm797, %v791
  %837 = vst.msk [vmem:[#allocation3 + $0x138] sm:$0xff] %vm797, %v794
  %v838 = vld [vmem:[#allocation3] sm:$0xff]
  %v839 = vld [vmem:[#allocation3 + $0x8] sm:$0xff]
  %v840 = vld [vmem:[#allocation3 + $0x10] sm:$0xff]
  %v841 = vld [vmem:[#allocation3 + $0x18] sm:$0xff]
  %v842 = vld [vmem:[#allocation3 + $0x20] sm:$0xff]
  %v843 = vld [vmem:[#allocation3 + $0x28] sm:$0xff]
  %v844 = vld [vmem:[#allocation3 + $0x30] sm:$0xff]
  %v845 = vld [vmem:[#allocation3 + $0x38] sm:$0xff]
  %v846 = vld [vmem:[#allocation3 + $0x40] sm:$0xff]
  %v847 = vld [vmem:[#allocation3 + $0x48] sm:$0xff]
  %v848 = vld [vmem:[#allocation3 + $0x50] sm:$0xff]
  %v849 = vld [vmem:[#allocation3 + $0x58] sm:$0xff]
  %v850 = vld [vmem:[#allocation3 + $0x60] sm:$0xff]
  %v851 = vld [vmem:[#allocation3 + $0x68] sm:$0xff]
  %v852 = vld [vmem:[#allocation3 + $0x70] sm:$0xff]
  %v853 = vld [vmem:[#allocation3 + $0x78] sm:$0xff]
  %v854 = vld [vmem:[#allocation3 + $0xa0] sm:$0xff]
  %v855 = vld [vmem:[#allocation3 + $0xa8] sm:$0xff]
  %v856 = vld [vmem:[#allocation3 + $0xb0] sm:$0xff]
  %v857 = vld [vmem:[#allocation3 + $0xb8] sm:$0xff]
  %v858 = vld [vmem:[#allocation3 + $0xc0] sm:$0xff]
  %v859 = vld [vmem:[#allocation3 + $0xc8] sm:$0xff]
  %v860 = vld [vmem:[#allocation3 + $0xd0] sm:$0xff]
  %v861 = vld [vmem:[#allocation3 + $0xd8] sm:$0xff]
  %v862 = vld [vmem:[#allocation3 + $0xe0] sm:$0xff]
  %v863 = vld [vmem:[#allocation3 + $0xe8] sm:$0xff]
  %v864 = vld [vmem:[#allocation3 + $0xf0] sm:$0xff]
  %v865 = vld [vmem:[#allocation3 + $0xf8] sm:$0xff]
  %v866 = vld [vmem:[#allocation3 + $0x100] sm:$0xff]
  %v867 = vld [vmem:[#allocation3 + $0x108] sm:$0xff]
  %v868 = vld [vmem:[#allocation3 + $0x110] sm:$0xff]
  %v869 = vld [vmem:[#allocation3 + $0x118] sm:$0x3f]
  %v870 = vld [vmem:[#allocation3 + $0x1] sm:$0xff]
  %v871 = vld [vmem:[#allocation3 + $0x9] sm:$0xff]
  %v872 = vld [vmem:[#allocation3 + $0x11] sm:$0xff]
  %v873 = vld [vmem:[#allocation3 + $0x19] sm:$0xff]
  %v874 = vld [vmem:[#allocation3 + $0x21] sm:$0xff]
  %v875 = vld [vmem:[#allocation3 + $0x29] sm:$0xff]
  %v876 = vld [vmem:[#allocation3 + $0x31] sm:$0xff]
  %v877 = vld [vmem:[#allocation3 + $0x39] sm:$0xff]
  %v878 = vld [vmem:[#allocation3 + $0x41] sm:$0xff]
  %v879 = vld [vmem:[#allocation3 + $0x49] sm:$0xff]
  %v880 = vld [vmem:[#allocation3 + $0x51] sm:$0xff]
  %v881 = vld [vmem:[#allocation3 + $0x59] sm:$0xff]
  %v882 = vld [vmem:[#allocation3 + $0x61] sm:$0xff]
  %v883 = vld [vmem:[#allocation3 + $0x69] sm:$0xff]
  %v884 = vld [vmem:[#allocation3 + $0x71] sm:$0xff]
  %v885 = vld [vmem:[#allocation3 + $0x79] sm:$0xff]
  %v886 = vld [vmem:[#allocation3 + $0xa1] sm:$0xff]
  %v887 = vld [vmem:[#allocation3 + $0xa9] sm:$0xff]
  %v888 = vld [vmem:[#allocation3 + $0xb1] sm:$0xff]
  %v889 = vld [vmem:[#allocation3 + $0xb9] sm:$0xff]
  %v890 = vld [vmem:[#allocation3 + $0xc1] sm:$0xff]
  %v891 = vld [vmem:[#allocation3 + $0xc9] sm:$0xff]
  %v892 = vld [vmem:[#allocation3 + $0xd1] sm:$0xff]
  %v893 = vld [vmem:[#allocation3 + $0xd9] sm:$0xff]
  %v894 = vld [vmem:[#allocation3 + $0xe1] sm:$0xff]
  %v895 = vld [vmem:[#allocation3 + $0xe9] sm:$0xff]
  %v896 = vld [vmem:[#allocation3 + $0xf1] sm:$0xff]
  %v897 = vld [vmem:[#allocation3 + $0xf9] sm:$0xff]
  %v898 = vld [vmem:[#allocation3 + $0x101] sm:$0xff]
  %v899 = vld [vmem:[#allocation3 + $0x109] sm:$0xff]
  %v900 = vld [vmem:[#allocation3 + $0x111] sm:$0xff]
  %v901 = vld [vmem:[#allocation3 + $0x119] sm:$0x3f]
  %934 = vrot.lane.b32.xlu0 %v870, 120
  %v935 = vpop.permute.xlu0 %934
  %936 = vrot.lane.b32.xlu0 %v871, 120
  %v937 = vpop.permute.xlu0 %936
  %938 = vrot.lane.b32.xlu0 %v872, 120
  %v939 = vpop.permute.xlu0 %938
  %940 = vrot.lane.b32.xlu0 %v873, 120
  %v941 = vpop.permute.xlu0 %940
  %942 = vrot.lane.b32.xlu0 %v874, 120
  %v943 = vpop.permute.xlu0 %942
  %944 = vrot.lane.b32.xlu0 %v875, 120
  %v945 = vpop.permute.xlu0 %944
  %946 = vrot.lane.b32.xlu0 %v876, 120
  %v947 = vpop.permute.xlu0 %946
  %948 = vrot.lane.b32.xlu0 %v877, 120
  %v949 = vpop.permute.xlu0 %948
  %950 = vrot.lane.b32.xlu0 %v878, 120
  %v951 = vpop.permute.xlu0 %950
  %952 = vrot.lane.b32.xlu0 %v879, 120
  %v953 = vpop.permute.xlu0 %952
  %954 = vrot.lane.b32.xlu0 %v880, 120
  %v955 = vpop.permute.xlu0 %954
  %956 = vrot.lane.b32.xlu0 %v881, 120
  %v957 = vpop.permute.xlu0 %956
  %958 = vrot.lane.b32.xlu0 %v882, 120
  %v959 = vpop.permute.xlu0 %958
  %960 = vrot.lane.b32.xlu0 %v883, 120
  %v961 = vpop.permute.xlu0 %960
  %962 = vrot.lane.b32.xlu0 %v884, 120
  %v963 = vpop.permute.xlu0 %962
  %964 = vrot.lane.b32.xlu0 %v885, 120
  %v965 = vpop.permute.xlu0 %964
  %966 = vrot.lane.b32.xlu0 %v886, 120
  %v967 = vpop.permute.xlu0 %966
  %968 = vrot.lane.b32.xlu0 %v887, 120
  %v969 = vpop.permute.xlu0 %968
  %970 = vrot.lane.b32.xlu0 %v888, 120
  %v971 = vpop.permute.xlu0 %970
  %972 = vrot.lane.b32.xlu0 %v889, 120
  %v973 = vpop.permute.xlu0 %972
  %974 = vrot.lane.b32.xlu0 %v890, 120
  %v975 = vpop.permute.xlu0 %974
  %976 = vrot.lane.b32.xlu0 %v891, 120
  %v977 = vpop.permute.xlu0 %976
  %978 = vrot.lane.b32.xlu0 %v892, 120
  %v979 = vpop.permute.xlu0 %978
  %980 = vrot.lane.b32.xlu0 %v893, 120
  %v981 = vpop.permute.xlu0 %980
  %982 = vrot.lane.b32.xlu0 %v894, 120
  %v983 = vpop.permute.xlu0 %982
  %984 = vrot.lane.b32.xlu0 %v895, 120
  %v985 = vpop.permute.xlu0 %984
  %986 = vrot.lane.b32.xlu0 %v896, 120
  %v987 = vpop.permute.xlu0 %986
  %988 = vrot.lane.b32.xlu0 %v897, 120
  %v989 = vpop.permute.xlu0 %988
  %990 = vrot.lane.b32.xlu0 %v898, 120
  %v991 = vpop.permute.xlu0 %990
  %992 = vrot.lane.b32.xlu0 %v899, 120
  %v993 = vpop.permute.xlu0 %992
  %994 = vrot.lane.b32.xlu0 %v900, 120
  %v995 = vpop.permute.xlu0 %994
  %996 = vrot.lane.b32.xlu0 %v901, 120
  %v997 = vpop.permute.xlu0 %996
  %v1030 = vadd.f32 %v838, %v935
  %v1031 = vadd.f32 %v839, %v937
  %v1032 = vadd.f32 %v840, %v939
  %v1033 = vadd.f32 %v841, %v941
  %v1034 = vadd.f32 %v842, %v943
  %v1035 = vadd.f32 %v843, %v945
  %v1036 = vadd.f32 %v844, %v947
  %v1037 = vadd.f32 %v845, %v949
  %v1038 = vadd.f32 %v846, %v951
  %v1039 = vadd.f32 %v847, %v953
  %v1040 = vadd.f32 %v848, %v955
  %v1041 = vadd.f32 %v849, %v957
  %v1042 = vadd.f32 %v850, %v959
  %v1043 = vadd.f32 %v851, %v961
  %v1044 = vadd.f32 %v852, %v963
  %v1045 = vadd.f32 %v853, %v965
  %v1046 = vadd.f32 %v854, %v967
  %v1047 = vadd.f32 %v855, %v969
  %v1048 = vadd.f32 %v856, %v971
  %v1049 = vadd.f32 %v857, %v973
  %v1050 = vadd.f32 %v858, %v975
  %v1051 = vadd.f32 %v859, %v977
  %v1052 = vadd.f32 %v860, %v979
  %v1053 = vadd.f32 %v861, %v981
  %v1054 = vadd.f32 %v862, %v983
  %v1055 = vadd.f32 %v863, %v985
  %v1056 = vadd.f32 %v864, %v987
  %v1057 = vadd.f32 %v865, %v989
  %v1058 = vadd.f32 %v866, %v991
  %v1059 = vadd.f32 %v867, %v993
  %v1060 = vadd.f32 %v868, %v995
  %v1061 = vadd.f32 %v869, %v997
  %v1062 = vld [vmem:[#allocation3 + $0x2] sm:$0xff]
  %v1063 = vld [vmem:[#allocation3 + $0xa] sm:$0xff]
  %v1064 = vld [vmem:[#allocation3 + $0x12] sm:$0xff]
  %v1065 = vld [vmem:[#allocation3 + $0x1a] sm:$0xff]
  %v1066 = vld [vmem:[#allocation3 + $0x22] sm:$0xff]
  %v1067 = vld [vmem:[#allocation3 + $0x2a] sm:$0xff]
  %v1068 = vld [vmem:[#allocation3 + $0x32] sm:$0xff]
  %v1069 = vld [vmem:[#allocation3 + $0x3a] sm:$0xff]
  %v1070 = vld [vmem:[#allocation3 + $0x42] sm:$0xff]
  %v1071 = vld [vmem:[#allocation3 + $0x4a] sm:$0xff]
  %v1072 = vld [vmem:[#allocation3 + $0x52] sm:$0xff]
  %v1073 = vld [vmem:[#allocation3 + $0x5a] sm:$0xff]
  %v1074 = vld [vmem:[#allocation3 + $0x62] sm:$0xff]
  %v1075 = vld [vmem:[#allocation3 + $0x6a] sm:$0xff]
  %v1076 = vld [vmem:[#allocation3 + $0x72] sm:$0xff]
  %v1077 = vld [vmem:[#allocation3 + $0x7a] sm:$0xff]
  %v1078 = vld [vmem:[#allocation3 + $0xa2] sm:$0xff]
  %v1079 = vld [vmem:[#allocation3 + $0xaa] sm:$0xff]
  %v1080 = vld [vmem:[#allocation3 + $0xb2] sm:$0xff]
  %v1081 = vld [vmem:[#allocation3 + $0xba] sm:$0xff]
  %v1082 = vld [vmem:[#allocation3 + $0xc2] sm:$0xff]
  %v1083 = vld [vmem:[#allocation3 + $0xca] sm:$0xff]
  %v1084 = vld [vmem:[#allocation3 + $0xd2] sm:$0xff]
  %v1085 = vld [vmem:[#allocation3 + $0xda] sm:$0xff]
  %v1086 = vld [vmem:[#allocation3 + $0xe2] sm:$0xff]
  %v1087 = vld [vmem:[#allocation3 + $0xea] sm:$0xff]
  %v1088 = vld [vmem:[#allocation3 + $0xf2] sm:$0xff]
  %v1089 = vld [vmem:[#allocation3 + $0xfa] sm:$0xff]
  %v1090 = vld [vmem:[#allocation3 + $0x102] sm:$0xff]
  %v1091 = vld [vmem:[#allocation3 + $0x10a] sm:$0xff]
  %v1092 = vld [vmem:[#allocation3 + $0x112] sm:$0xff]
  %v1093 = vld [vmem:[#allocation3 + $0x11a] sm:$0x3f]
  %1126 = vrot.lane.b32.xlu0 %v1062, 112
  %v1127 = vpop.permute.xlu0 %1126
  %1128 = vrot.lane.b32.xlu0 %v1063, 112
  %v1129 = vpop.permute.xlu0 %1128
  %1130 = vrot.lane.b32.xlu0 %v1064, 112
  %v1131 = vpop.permute.xlu0 %1130
  %1132 = vrot.lane.b32.xlu0 %v1065, 112
  %v1133 = vpop.permute.xlu0 %1132
  %1134 = vrot.lane.b32.xlu0 %v1066, 112
  %v1135 = vpop.permute.xlu0 %1134
  %1136 = vrot.lane.b32.xlu0 %v1067, 112
  %v1137 = vpop.permute.xlu0 %1136
  %1138 = vrot.lane.b32.xlu0 %v1068, 112
  %v1139 = vpop.permute.xlu0 %1138
  %1140 = vrot.lane.b32.xlu0 %v1069, 112
  %v1141 = vpop.permute.xlu0 %1140
  %1142 = vrot.lane.b32.xlu0 %v1070, 112
  %v1143 = vpop.permute.xlu0 %1142
  %1144 = vrot.lane.b32.xlu0 %v1071, 112
  %v1145 = vpop.permute.xlu0 %1144
  %1146 = vrot.lane.b32.xlu0 %v1072, 112
  %v1147 = vpop.permute.xlu0 %1146
  %1148 = vrot.lane.b32.xlu0 %v1073, 112
  %v1149 = vpop.permute.xlu0 %1148
  %1150 = vrot.lane.b32.xlu0 %v1074, 112
  %v1151 = vpop.permute.xlu0 %1150
  %1152 = vrot.lane.b32.xlu0 %v1075, 112
  %v1153 = vpop.permute.xlu0 %1152
  %1154 = vrot.lane.b32.xlu0 %v1076, 112
  %v1155 = vpop.permute.xlu0 %1154
  %1156 = vrot.lane.b32.xlu0 %v1077, 112
  %v1157 = vpop.permute.xlu0 %1156
  %1158 = vrot.lane.b32.xlu0 %v1078, 112
  %v1159 = vpop.permute.xlu0 %1158
  %1160 = vrot.lane.b32.xlu0 %v1079, 112
  %v1161 = vpop.permute.xlu0 %1160
  %1162 = vrot.lane.b32.xlu0 %v1080, 112
  %v1163 = vpop.permute.xlu0 %1162
  %1164 = vrot.lane.b32.xlu0 %v1081, 112
  %v1165 = vpop.permute.xlu0 %1164
  %1166 = vrot.lane.b32.xlu0 %v1082, 112
  %v1167 = vpop.permute.xlu0 %1166
  %1168 = vrot.lane.b32.xlu0 %v1083, 112
  %v1169 = vpop.permute.xlu0 %1168
  %1170 = vrot.lane.b32.xlu0 %v1084, 112
  %v1171 = vpop.permute.xlu0 %1170
  %1172 = vrot.lane.b32.xlu0 %v1085, 112
  %v1173 = vpop.permute.xlu0 %1172
  %1174 = vrot.lane.b32.xlu0 %v1086, 112
  %v1175 = vpop.permute.xlu0 %1174
  %1176 = vrot.lane.b32.xlu0 %v1087, 112
  %v1177 = vpop.permute.xlu0 %1176
  %1178 = vrot.lane.b32.xlu0 %v1088, 112
  %v1179 = vpop.permute.xlu0 %1178
  %1180 = vrot.lane.b32.xlu0 %v1089, 112
  %v1181 = vpop.permute.xlu0 %1180
  %1182 = vrot.lane.b32.xlu0 %v1090, 112
  %v1183 = vpop.permute.xlu0 %1182
  %1184 = vrot.lane.b32.xlu0 %v1091, 112
  %v1185 = vpop.permute.xlu0 %1184
  %1186 = vrot.lane.b32.xlu0 %v1092, 112
  %v1187 = vpop.permute.xlu0 %1186
  %1188 = vrot.lane.b32.xlu0 %v1093, 112
  %v1189 = vpop.permute.xlu0 %1188
  %v1222 = vadd.f32 %v1030, %v1127
  %v1223 = vadd.f32 %v1031, %v1129
  %v1224 = vadd.f32 %v1032, %v1131
  %v1225 = vadd.f32 %v1033, %v1133
  %v1226 = vadd.f32 %v1034, %v1135
  %v1227 = vadd.f32 %v1035, %v1137
  %v1228 = vadd.f32 %v1036, %v1139
  %v1229 = vadd.f32 %v1037, %v1141
  %v1230 = vadd.f32 %v1038, %v1143
  %v1231 = vadd.f32 %v1039, %v1145
  %v1232 = vadd.f32 %v1040, %v1147
  %v1233 = vadd.f32 %v1041, %v1149
  %v1234 = vadd.f32 %v1042, %v1151
  %v1235 = vadd.f32 %v1043, %v1153
  %v1236 = vadd.f32 %v1044, %v1155
  %v1237 = vadd.f32 %v1045, %v1157
  %v1238 = vadd.f32 %v1046, %v1159
  %v1239 = vadd.f32 %v1047, %v1161
  %v1240 = vadd.f32 %v1048, %v1163
  %v1241 = vadd.f32 %v1049, %v1165
  %v1242 = vadd.f32 %v1050, %v1167
  %v1243 = vadd.f32 %v1051, %v1169
  %v1244 = vadd.f32 %v1052, %v1171
  %v1245 = vadd.f32 %v1053, %v1173
  %v1246 = vadd.f32 %v1054, %v1175
  %v1247 = vadd.f32 %v1055, %v1177
  %v1248 = vadd.f32 %v1056, %v1179
  %v1249 = vadd.f32 %v1057, %v1181
  %v1250 = vadd.f32 %v1058, %v1183
  %v1251 = vadd.f32 %v1059, %v1185
  %v1252 = vadd.f32 %v1060, %v1187
  %v1253 = vadd.f32 %v1061, %v1189
  %v1254 = vld [vmem:[#allocation3 + $0x80] sm:$0xff]
  %v1255 = vld [vmem:[#allocation3 + $0x88] sm:$0xff]
  %v1256 = vld [vmem:[#allocation3 + $0x118] sm:$0xff]
  %v1257 = vld [vmem:[#allocation3 + $0x120] sm:$0xff]
  %v1258 = vld [vmem:[#allocation3 + $0x128] sm:$0x3f]
  %1291 = vrot.lane.b32.xlu0 %v840, 104
  %v1292 = vpop.permute.xlu0 %1291
  %1293 = vrot.lane.b32.xlu0 %v841, 104
  %v1294 = vpop.permute.xlu0 %1293
  %1295 = vrot.lane.b32.xlu0 %v842, 104
  %v1296 = vpop.permute.xlu0 %1295
  %1297 = vrot.lane.b32.xlu0 %v843, 104
  %v1298 = vpop.permute.xlu0 %1297
  %1299 = vrot.lane.b32.xlu0 %v844, 104
  %v1300 = vpop.permute.xlu0 %1299
  %1301 = vrot.lane.b32.xlu0 %v845, 104
  %v1302 = vpop.permute.xlu0 %1301
  %1303 = vrot.lane.b32.xlu0 %v846, 104
  %v1304 = vpop.permute.xlu0 %1303
  %1305 = vrot.lane.b32.xlu0 %v847, 104
  %v1306 = vpop.permute.xlu0 %1305
  %1307 = vrot.lane.b32.xlu0 %v848, 104
  %v1308 = vpop.permute.xlu0 %1307
  %1309 = vrot.lane.b32.xlu0 %v849, 104
  %v1310 = vpop.permute.xlu0 %1309
  %1311 = vrot.lane.b32.xlu0 %v850, 104
  %v1312 = vpop.permute.xlu0 %1311
  %1313 = vrot.lane.b32.xlu0 %v851, 104
  %v1314 = vpop.permute.xlu0 %1313
  %1315 = vrot.lane.b32.xlu0 %v852, 104
  %v1316 = vpop.permute.xlu0 %1315
  %1317 = vrot.lane.b32.xlu0 %v853, 104
  %v1318 = vpop.permute.xlu0 %1317
  %1319 = vrot.lane.b32.xlu0 %v1254, 104
  %v1320 = vpop.permute.xlu0 %1319
  %1321 = vrot.lane.b32.xlu0 %v1255, 104
  %v1322 = vpop.permute.xlu0 %1321
  %1323 = vrot.lane.b32.xlu0 %v856, 104
  %v1324 = vpop.permute.xlu0 %1323
  %1325 = vrot.lane.b32.xlu0 %v857, 104
  %v1326 = vpop.permute.xlu0 %1325
  %1327 = vrot.lane.b32.xlu0 %v858, 104
  %v1328 = vpop.permute.xlu0 %1327
  %1329 = vrot.lane.b32.xlu0 %v859, 104
  %v1330 = vpop.permute.xlu0 %1329
  %1331 = vrot.lane.b32.xlu0 %v860, 104
  %v1332 = vpop.permute.xlu0 %1331
  %1333 = vrot.lane.b32.xlu0 %v861, 104
  %v1334 = vpop.permute.xlu0 %1333
  %1335 = vrot.lane.b32.xlu0 %v862, 104
  %v1336 = vpop.permute.xlu0 %1335
  %1337 = vrot.lane.b32.xlu0 %v863, 104
  %v1338 = vpop.permute.xlu0 %1337
  %1339 = vrot.lane.b32.xlu0 %v864, 104
  %v1340 = vpop.permute.xlu0 %1339
  %1341 = vrot.lane.b32.xlu0 %v865, 104
  %v1342 = vpop.permute.xlu0 %1341
  %1343 = vrot.lane.b32.xlu0 %v866, 104
  %v1344 = vpop.permute.xlu0 %1343
  %1345 = vrot.lane.b32.xlu0 %v867, 104
  %v1346 = vpop.permute.xlu0 %1345
  %1347 = vrot.lane.b32.xlu0 %v868, 104
  %v1348 = vpop.permute.xlu0 %1347
  %1349 = vrot.lane.b32.xlu0 %v1256, 104
  %v1350 = vpop.permute.xlu0 %1349
  %1351 = vrot.lane.b32.xlu0 %v1257, 104
  %v1352 = vpop.permute.xlu0 %1351
  %1353 = vrot.lane.b32.xlu0 %v1258, 104
  %v1354 = vpop.permute.xlu0 %1353
  %v1387 = vadd.f32 %v1222, %v1292
  %v1388 = vadd.f32 %v1223, %v1294
  %v1389 = vadd.f32 %v1224, %v1296
  %v1390 = vadd.f32 %v1225, %v1298
  %v1391 = vadd.f32 %v1226, %v1300
  %v1392 = vadd.f32 %v1227, %v1302
  %v1393 = vadd.f32 %v1228, %v1304
  %v1394 = vadd.f32 %v1229, %v1306
  %v1395 = vadd.f32 %v1230, %v1308
  %v1396 = vadd.f32 %v1231, %v1310
  %v1397 = vadd.f32 %v1232, %v1312
  %v1398 = vadd.f32 %v1233, %v1314
  %v1399 = vadd.f32 %v1234, %v1316
  %v1400 = vadd.f32 %v1235, %v1318
  %v1401 = vadd.f32 %v1236, %v1320
  %v1402 = vadd.f32 %v1237, %v1322
  %v1403 = vadd.f32 %v1238, %v1324
  %v1404 = vadd.f32 %v1239, %v1326
  %v1405 = vadd.f32 %v1240, %v1328
  %v1406 = vadd.f32 %v1241, %v1330
  %v1407 = vadd.f32 %v1242, %v1332
  %v1408 = vadd.f32 %v1243, %v1334
  %v1409 = vadd.f32 %v1244, %v1336
  %v1410 = vadd.f32 %v1245, %v1338
  %v1411 = vadd.f32 %v1246, %v1340
  %v1412 = vadd.f32 %v1247, %v1342
  %v1413 = vadd.f32 %v1248, %v1344
  %v1414 = vadd.f32 %v1249, %v1346
  %v1415 = vadd.f32 %v1250, %v1348
  %v1416 = vadd.f32 %v1251, %v1350
  %v1417 = vadd.f32 %v1252, %v1352
  %v1418 = vadd.f32 %v1253, %v1354
  %v1419 = vld [vmem:[#allocation3 + $0x81] sm:$0xff]
  %v1420 = vld [vmem:[#allocation3 + $0x89] sm:$0xff]
  %v1421 = vld [vmem:[#allocation3 + $0x119] sm:$0xff]
  %v1422 = vld [vmem:[#allocation3 + $0x121] sm:$0xff]
  %v1423 = vld [vmem:[#allocation3 + $0x129] sm:$0x3f]
  %1429 = vrot.lane.b32.xlu0 %v872, 96
  %v1430 = vpop.permute.xlu0 %1429
  %1431 = vrot.lane.b32.xlu0 %v873, 96
  %v1432 = vpop.permute.xlu0 %1431
  %1433 = vrot.lane.b32.xlu0 %v874, 96
  %v1434 = vpop.permute.xlu0 %1433
  %1435 = vrot.lane.b32.xlu0 %v875, 96
  %v1436 = vpop.permute.xlu0 %1435
  %1437 = vrot.lane.b32.xlu0 %v876, 96
  %v1438 = vpop.permute.xlu0 %1437
  %1439 = vrot.lane.b32.xlu0 %v877, 96
  %v1440 = vpop.permute.xlu0 %1439
  %1441 = vrot.lane.b32.xlu0 %v878, 96
  %v1442 = vpop.permute.xlu0 %1441
  %1443 = vrot.lane.b32.xlu0 %v879, 96
  %v1444 = vpop.permute.xlu0 %1443
  %1445 = vrot.lane.b32.xlu0 %v880, 96
  %v1446 = vpop.permute.xlu0 %1445
  %1447 = vrot.lane.b32.xlu0 %v881, 96
  %v1448 = vpop.permute.xlu0 %1447
  %1449 = vrot.lane.b32.xlu0 %v882, 96
  %v1450 = vpop.permute.xlu0 %1449
  %1451 = vrot.lane.b32.xlu0 %v883, 96
  %v1452 = vpop.permute.xlu0 %1451
  %1453 = vrot.lane.b32.xlu0 %v884, 96
  %v1454 = vpop.permute.xlu0 %1453
  %1455 = vrot.lane.b32.xlu0 %v885, 96
  %v1456 = vpop.permute.xlu0 %1455
  %1457 = vrot.lane.b32.xlu0 %v1419, 96
  %v1458 = vpop.permute.xlu0 %1457
  %1459 = vrot.lane.b32.xlu0 %v1420, 96
  %v1460 = vpop.permute.xlu0 %1459
  %1461 = vrot.lane.b32.xlu0 %v888, 96
  %v1462 = vpop.permute.xlu0 %1461
  %1463 = vrot.lane.b32.xlu0 %v889, 96
  %v1464 = vpop.permute.xlu0 %1463
  %1465 = vrot.lane.b32.xlu0 %v890, 96
  %v1466 = vpop.permute.xlu0 %1465
  %1467 = vrot.lane.b32.xlu0 %v891, 96
  %v1468 = vpop.permute.xlu0 %1467
  %1469 = vrot.lane.b32.xlu0 %v892, 96
  %v1470 = vpop.permute.xlu0 %1469
  %1471 = vrot.lane.b32.xlu0 %v893, 96
  %v1472 = vpop.permute.xlu0 %1471
  %1473 = vrot.lane.b32.xlu0 %v894, 96
  %v1474 = vpop.permute.xlu0 %1473
  %1475 = vrot.lane.b32.xlu0 %v895, 96
  %v1476 = vpop.permute.xlu0 %1475
  %1477 = vrot.lane.b32.xlu0 %v896, 96
  %v1478 = vpop.permute.xlu0 %1477
  %1479 = vrot.lane.b32.xlu0 %v897, 96
  %v1480 = vpop.permute.xlu0 %1479
  %1481 = vrot.lane.b32.xlu0 %v898, 96
  %v1482 = vpop.permute.xlu0 %1481
  %1483 = vrot.lane.b32.xlu0 %v899, 96
  %v1484 = vpop.permute.xlu0 %1483
  %1485 = vrot.lane.b32.xlu0 %v900, 96
  %v1486 = vpop.permute.xlu0 %1485
  %1487 = vrot.lane.b32.xlu0 %v1421, 96
  %v1488 = vpop.permute.xlu0 %1487
  %1489 = vrot.lane.b32.xlu0 %v1422, 96
  %v1490 = vpop.permute.xlu0 %1489
  %1491 = vrot.lane.b32.xlu0 %v1423, 96
  %v1492 = vpop.permute.xlu0 %1491
  %v1525 = vadd.f32 %v1387, %v1430
  %v1526 = vadd.f32 %v1388, %v1432
  %v1527 = vadd.f32 %v1389, %v1434
  %v1528 = vadd.f32 %v1390, %v1436
  %v1529 = vadd.f32 %v1391, %v1438
  %v1530 = vadd.f32 %v1392, %v1440
  %v1531 = vadd.f32 %v1393, %v1442
  %v1532 = vadd.f32 %v1394, %v1444
  %v1533 = vadd.f32 %v1395, %v1446
  %v1534 = vadd.f32 %v1396, %v1448
  %v1535 = vadd.f32 %v1397, %v1450
  %v1536 = vadd.f32 %v1398, %v1452
  %v1537 = vadd.f32 %v1399, %v1454
  %v1538 = vadd.f32 %v1400, %v1456
  %v1539 = vadd.f32 %v1401, %v1458
  %v1540 = vadd.f32 %v1402, %v1460
  %v1541 = vadd.f32 %v1403, %v1462
  %v1542 = vadd.f32 %v1404, %v1464
  %v1543 = vadd.f32 %v1405, %v1466
  %v1544 = vadd.f32 %v1406, %v1468
  %v1545 = vadd.f32 %v1407, %v1470
  %v1546 = vadd.f32 %v1408, %v1472
  %v1547 = vadd.f32 %v1409, %v1474
  %v1548 = vadd.f32 %v1410, %v1476
  %v1549 = vadd.f32 %v1411, %v1478
  %v1550 = vadd.f32 %v1412, %v1480
  %v1551 = vadd.f32 %v1413, %v1482
  %v1552 = vadd.f32 %v1414, %v1484
  %v1553 = vadd.f32 %v1415, %v1486
  %v1554 = vadd.f32 %v1416, %v1488
  %v1555 = vadd.f32 %v1417, %v1490
  %v1556 = vadd.f32 %v1418, %v1492
  %v1557 = vld [vmem:[#allocation3 + $0x82] sm:$0xff]
  %v1558 = vld [vmem:[#allocation3 + $0x8a] sm:$0xff]
  %v1559 = vld [vmem:[#allocation3 + $0x11a] sm:$0xff]
  %v1560 = vld [vmem:[#allocation3 + $0x122] sm:$0xff]
  %v1561 = vld [vmem:[#allocation3 + $0x12a] sm:$0x3f]
  %1567 = vrot.lane.b32.xlu0 %v1064, 88
  %v1568 = vpop.permute.xlu0 %1567
  %1569 = vrot.lane.b32.xlu0 %v1065, 88
  %v1570 = vpop.permute.xlu0 %1569
  %1571 = vrot.lane.b32.xlu0 %v1066, 88
  %v1572 = vpop.permute.xlu0 %1571
  %1573 = vrot.lane.b32.xlu0 %v1067, 88
  %v1574 = vpop.permute.xlu0 %1573
  %1575 = vrot.lane.b32.xlu0 %v1068, 88
  %v1576 = vpop.permute.xlu0 %1575
  %1577 = vrot.lane.b32.xlu0 %v1069, 88
  %v1578 = vpop.permute.xlu0 %1577
  %1579 = vrot.lane.b32.xlu0 %v1070, 88
  %v1580 = vpop.permute.xlu0 %1579
  %1581 = vrot.lane.b32.xlu0 %v1071, 88
  %v1582 = vpop.permute.xlu0 %1581
  %1583 = vrot.lane.b32.xlu0 %v1072, 88
  %v1584 = vpop.permute.xlu0 %1583
  %1585 = vrot.lane.b32.xlu0 %v1073, 88
  %v1586 = vpop.permute.xlu0 %1585
  %1587 = vrot.lane.b32.xlu0 %v1074, 88
  %v1588 = vpop.permute.xlu0 %1587
  %1589 = vrot.lane.b32.xlu0 %v1075, 88
  %v1590 = vpop.permute.xlu0 %1589
  %1591 = vrot.lane.b32.xlu0 %v1076, 88
  %v1592 = vpop.permute.xlu0 %1591
  %1593 = vrot.lane.b32.xlu0 %v1077, 88
  %v1594 = vpop.permute.xlu0 %1593
  %1595 = vrot.lane.b32.xlu0 %v1557, 88
  %v1596 = vpop.permute.xlu0 %1595
  %1597 = vrot.lane.b32.xlu0 %v1558, 88
  %v1598 = vpop.permute.xlu0 %1597
  %1599 = vrot.lane.b32.xlu0 %v1080, 88
  %v1600 = vpop.permute.xlu0 %1599
  %1601 = vrot.lane.b32.xlu0 %v1081, 88
  %v1602 = vpop.permute.xlu0 %1601
  %1603 = vrot.lane.b32.xlu0 %v1082, 88
  %v1604 = vpop.permute.xlu0 %1603
  %1605 = vrot.lane.b32.xlu0 %v1083, 88
  %v1606 = vpop.permute.xlu0 %1605
  %1607 = vrot.lane.b32.xlu0 %v1084, 88
  %v1608 = vpop.permute.xlu0 %1607
  %1609 = vrot.lane.b32.xlu0 %v1085, 88
  %v1610 = vpop.permute.xlu0 %1609
  %1611 = vrot.lane.b32.xlu0 %v1086, 88
  %v1612 = vpop.permute.xlu0 %1611
  %1613 = vrot.lane.b32.xlu0 %v1087, 88
  %v1614 = vpop.permute.xlu0 %1613
  %1615 = vrot.lane.b32.xlu0 %v1088, 88
  %v1616 = vpop.permute.xlu0 %1615
  %1617 = vrot.lane.b32.xlu0 %v1089, 88
  %v1618 = vpop.permute.xlu0 %1617
  %1619 = vrot.lane.b32.xlu0 %v1090, 88
  %v1620 = vpop.permute.xlu0 %1619
  %1621 = vrot.lane.b32.xlu0 %v1091, 88
  %v1622 = vpop.permute.xlu0 %1621
  %1623 = vrot.lane.b32.xlu0 %v1092, 88
  %v1624 = vpop.permute.xlu0 %1623
  %1625 = vrot.lane.b32.xlu0 %v1559, 88
  %v1626 = vpop.permute.xlu0 %1625
  %1627 = vrot.lane.b32.xlu0 %v1560, 88
  %v1628 = vpop.permute.xlu0 %1627
  %1629 = vrot.lane.b32.xlu0 %v1561, 88
  %v1630 = vpop.permute.xlu0 %1629
  %v1663 = vadd.f32 %v1525, %v1568
  %v1664 = vadd.f32 %v1526, %v1570
  %v1665 = vadd.f32 %v1527, %v1572
  %v1666 = vadd.f32 %v1528, %v1574
  %v1667 = vadd.f32 %v1529, %v1576
  %v1668 = vadd.f32 %v1530, %v1578
  %v1669 = vadd.f32 %v1531, %v1580
  %v1670 = vadd.f32 %v1532, %v1582
  %v1671 = vadd.f32 %v1533, %v1584
  %v1672 = vadd.f32 %v1534, %v1586
  %v1673 = vadd.f32 %v1535, %v1588
  %v1674 = vadd.f32 %v1536, %v1590
  %v1675 = vadd.f32 %v1537, %v1592
  %v1676 = vadd.f32 %v1538, %v1594
  %v1677 = vadd.f32 %v1539, %v1596
  %v1678 = vadd.f32 %v1540, %v1598
  %v1679 = vadd.f32 %v1541, %v1600
  %v1680 = vadd.f32 %v1542, %v1602
  %v1681 = vadd.f32 %v1543, %v1604
  %v1682 = vadd.f32 %v1544, %v1606
  %v1683 = vadd.f32 %v1545, %v1608
  %v1684 = vadd.f32 %v1546, %v1610
  %v1685 = vadd.f32 %v1547, %v1612
  %v1686 = vadd.f32 %v1548, %v1614
  %v1687 = vadd.f32 %v1549, %v1616
  %v1688 = vadd.f32 %v1550, %v1618
  %v1689 = vadd.f32 %v1551, %v1620
  %v1690 = vadd.f32 %v1552, %v1622
  %v1691 = vadd.f32 %v1553, %v1624
  %v1692 = vadd.f32 %v1554, %v1626
  %v1693 = vadd.f32 %v1555, %v1628
  %v1694 = vadd.f32 %v1556, %v1630
  %v1695 = vld [vmem:[#allocation3 + $0x90] sm:$0xff]
  %v1696 = vld [vmem:[#allocation3 + $0x98] sm:$0xff]
  %v1697 = vld [vmem:[#allocation3 + $0x128] sm:$0xff]
  %v1698 = vld [vmem:[#allocation3 + $0x130] sm:$0xff]
  %v1699 = vld [vmem:[#allocation3 + $0x138] sm:$0x3f]
  %1705 = vrot.lane.b32.xlu0 %v842, 80
  %v1706 = vpop.permute.xlu0 %1705
  %1707 = vrot.lane.b32.xlu0 %v843, 80
  %v1708 = vpop.permute.xlu0 %1707
  %1709 = vrot.lane.b32.xlu0 %v844, 80
  %v1710 = vpop.permute.xlu0 %1709
  %1711 = vrot.lane.b32.xlu0 %v845, 80
  %v1712 = vpop.permute.xlu0 %1711
  %1713 = vrot.lane.b32.xlu0 %v846, 80
  %v1714 = vpop.permute.xlu0 %1713
  %1715 = vrot.lane.b32.xlu0 %v847, 80
  %v1716 = vpop.permute.xlu0 %1715
  %1717 = vrot.lane.b32.xlu0 %v848, 80
  %v1718 = vpop.permute.xlu0 %1717
  %1719 = vrot.lane.b32.xlu0 %v849, 80
  %v1720 = vpop.permute.xlu0 %1719
  %1721 = vrot.lane.b32.xlu0 %v850, 80
  %v1722 = vpop.permute.xlu0 %1721
  %1723 = vrot.lane.b32.xlu0 %v851, 80
  %v1724 = vpop.permute.xlu0 %1723
  %1725 = vrot.lane.b32.xlu0 %v852, 80
  %v1726 = vpop.permute.xlu0 %1725
  %1727 = vrot.lane.b32.xlu0 %v853, 80
  %v1728 = vpop.permute.xlu0 %1727
  %1729 = vrot.lane.b32.xlu0 %v1254, 80
  %v1730 = vpop.permute.xlu0 %1729
  %1731 = vrot.lane.b32.xlu0 %v1255, 80
  %v1732 = vpop.permute.xlu0 %1731
  %1733 = vrot.lane.b32.xlu0 %v1695, 80
  %v1734 = vpop.permute.xlu0 %1733
  %1735 = vrot.lane.b32.xlu0 %v1696, 80
  %v1736 = vpop.permute.xlu0 %1735
  %1737 = vrot.lane.b32.xlu0 %v858, 80
  %v1738 = vpop.permute.xlu0 %1737
  %1739 = vrot.lane.b32.xlu0 %v859, 80
  %v1740 = vpop.permute.xlu0 %1739
  %1741 = vrot.lane.b32.xlu0 %v860, 80
  %v1742 = vpop.permute.xlu0 %1741
  %1743 = vrot.lane.b32.xlu0 %v861, 80
  %v1744 = vpop.permute.xlu0 %1743
  %1745 = vrot.lane.b32.xlu0 %v862, 80
  %v1746 = vpop.permute.xlu0 %1745
  %1747 = vrot.lane.b32.xlu0 %v863, 80
  %v1748 = vpop.permute.xlu0 %1747
  %1749 = vrot.lane.b32.xlu0 %v864, 80
  %v1750 = vpop.permute.xlu0 %1749
  %1751 = vrot.lane.b32.xlu0 %v865, 80
  %v1752 = vpop.permute.xlu0 %1751
  %1753 = vrot.lane.b32.xlu0 %v866, 80
  %v1754 = vpop.permute.xlu0 %1753
  %1755 = vrot.lane.b32.xlu0 %v867, 80
  %v1756 = vpop.permute.xlu0 %1755
  %1757 = vrot.lane.b32.xlu0 %v868, 80
  %v1758 = vpop.permute.xlu0 %1757
  %1759 = vrot.lane.b32.xlu0 %v1256, 80
  %v1760 = vpop.permute.xlu0 %1759
  %1761 = vrot.lane.b32.xlu0 %v1257, 80
  %v1762 = vpop.permute.xlu0 %1761
  %1763 = vrot.lane.b32.xlu0 %v1697, 80
  %v1764 = vpop.permute.xlu0 %1763
  %1765 = vrot.lane.b32.xlu0 %v1698, 80
  %v1766 = vpop.permute.xlu0 %1765
  %1767 = vrot.lane.b32.xlu0 %v1699, 80
  %v1768 = vpop.permute.xlu0 %1767
  %v1801 = vadd.f32 %v1663, %v1706
  %v1802 = vadd.f32 %v1664, %v1708
  %v1803 = vadd.f32 %v1665, %v1710
  %v1804 = vadd.f32 %v1666, %v1712
  %v1805 = vadd.f32 %v1667, %v1714
  %v1806 = vadd.f32 %v1668, %v1716
  %v1807 = vadd.f32 %v1669, %v1718
  %v1808 = vadd.f32 %v1670, %v1720
  %v1809 = vadd.f32 %v1671, %v1722
  %v1810 = vadd.f32 %v1672, %v1724
  %v1811 = vadd.f32 %v1673, %v1726
  %v1812 = vadd.f32 %v1674, %v1728
  %v1813 = vadd.f32 %v1675, %v1730
  %v1814 = vadd.f32 %v1676, %v1732
  %v1815 = vadd.f32 %v1677, %v1734
  %v1816 = vadd.f32 %v1678, %v1736
  %v1817 = vadd.f32 %v1679, %v1738
  %v1818 = vadd.f32 %v1680, %v1740
  %v1819 = vadd.f32 %v1681, %v1742
  %v1820 = vadd.f32 %v1682, %v1744
  %v1821 = vadd.f32 %v1683, %v1746
  %v1822 = vadd.f32 %v1684, %v1748
  %v1823 = vadd.f32 %v1685, %v1750
  %v1824 = vadd.f32 %v1686, %v1752
  %v1825 = vadd.f32 %v1687, %v1754
  %v1826 = vadd.f32 %v1688, %v1756
  %v1827 = vadd.f32 %v1689, %v1758
  %v1828 = vadd.f32 %v1690, %v1760
  %v1829 = vadd.f32 %v1691, %v1762
  %v1830 = vadd.f32 %v1692, %v1764
  %v1831 = vadd.f32 %v1693, %v1766
  %v1832 = vadd.f32 %v1694, %v1768
  %v1833 = vld [vmem:[#allocation3 + $0x91] sm:$0xff]
  %v1834 = vld [vmem:[#allocation3 + $0x99] sm:$0xff]
  %v1835 = vld [vmem:[#allocation3 + $0x129] sm:$0xff]
  %v1836 = vld [vmem:[#allocation3 + $0x131] sm:$0xff]
  %v1837 = vld [vmem:[#allocation3 + $0x139] sm:$0x3f]
  %1843 = vrot.lane.b32.xlu0 %v874, 72
  %v1844 = vpop.permute.xlu0 %1843
  %1845 = vrot.lane.b32.xlu0 %v875, 72
  %v1846 = vpop.permute.xlu0 %1845
  %1847 = vrot.lane.b32.xlu0 %v876, 72
  %v1848 = vpop.permute.xlu0 %1847
  %1849 = vrot.lane.b32.xlu0 %v877, 72
  %v1850 = vpop.permute.xlu0 %1849
  %1851 = vrot.lane.b32.xlu0 %v878, 72
  %v1852 = vpop.permute.xlu0 %1851
  %1853 = vrot.lane.b32.xlu0 %v879, 72
  %v1854 = vpop.permute.xlu0 %1853
  %1855 = vrot.lane.b32.xlu0 %v880, 72
  %v1856 = vpop.permute.xlu0 %1855
  %1857 = vrot.lane.b32.xlu0 %v881, 72
  %v1858 = vpop.permute.xlu0 %1857
  %1859 = vrot.lane.b32.xlu0 %v882, 72
  %v1860 = vpop.permute.xlu0 %1859
  %1861 = vrot.lane.b32.xlu0 %v883, 72
  %v1862 = vpop.permute.xlu0 %1861
  %1863 = vrot.lane.b32.xlu0 %v884, 72
  %v1864 = vpop.permute.xlu0 %1863
  %1865 = vrot.lane.b32.xlu0 %v885, 72
  %v1866 = vpop.permute.xlu0 %1865
  %1867 = vrot.lane.b32.xlu0 %v1419, 72
  %v1868 = vpop.permute.xlu0 %1867
  %1869 = vrot.lane.b32.xlu0 %v1420, 72
  %v1870 = vpop.permute.xlu0 %1869
  %1871 = vrot.lane.b32.xlu0 %v1833, 72
  %v1872 = vpop.permute.xlu0 %1871
  %1873 = vrot.lane.b32.xlu0 %v1834, 72
  %v1874 = vpop.permute.xlu0 %1873
  %1875 = vrot.lane.b32.xlu0 %v890, 72
  %v1876 = vpop.permute.xlu0 %1875
  %1877 = vrot.lane.b32.xlu0 %v891, 72
  %v1878 = vpop.permute.xlu0 %1877
  %1879 = vrot.lane.b32.xlu0 %v892, 72
  %v1880 = vpop.permute.xlu0 %1879
  %1881 = vrot.lane.b32.xlu0 %v893, 72
  %v1882 = vpop.permute.xlu0 %1881
  %1883 = vrot.lane.b32.xlu0 %v894, 72
  %v1884 = vpop.permute.xlu0 %1883
  %1885 = vrot.lane.b32.xlu0 %v895, 72
  %v1886 = vpop.permute.xlu0 %1885
  %1887 = vrot.lane.b32.xlu0 %v896, 72
  %v1888 = vpop.permute.xlu0 %1887
  %1889 = vrot.lane.b32.xlu0 %v897, 72
  %v1890 = vpop.permute.xlu0 %1889
  %1891 = vrot.lane.b32.xlu0 %v898, 72
  %v1892 = vpop.permute.xlu0 %1891
  %1893 = vrot.lane.b32.xlu0 %v899, 72
  %v1894 = vpop.permute.xlu0 %1893
  %1895 = vrot.lane.b32.xlu0 %v900, 72
  %v1896 = vpop.permute.xlu0 %1895
  %1897 = vrot.lane.b32.xlu0 %v1421, 72
  %v1898 = vpop.permute.xlu0 %1897
  %1899 = vrot.lane.b32.xlu0 %v1422, 72
  %v1900 = vpop.permute.xlu0 %1899
  %1901 = vrot.lane.b32.xlu0 %v1835, 72
  %v1902 = vpop.permute.xlu0 %1901
  %1903 = vrot.lane.b32.xlu0 %v1836, 72
  %v1904 = vpop.permute.xlu0 %1903
  %1905 = vrot.lane.b32.xlu0 %v1837, 72
  %v1906 = vpop.permute.xlu0 %1905
  %v1939 = vadd.f32 %v1801, %v1844
  %v1940 = vadd.f32 %v1802, %v1846
  %v1941 = vadd.f32 %v1803, %v1848
  %v1942 = vadd.f32 %v1804, %v1850
  %v1943 = vadd.f32 %v1805, %v1852
  %v1944 = vadd.f32 %v1806, %v1854
  %v1945 = vadd.f32 %v1807, %v1856
  %v1946 = vadd.f32 %v1808, %v1858
  %v1947 = vadd.f32 %v1809, %v1860
  %v1948 = vadd.f32 %v1810, %v1862
  %v1949 = vadd.f32 %v1811, %v1864
  %v1950 = vadd.f32 %v1812, %v1866
  %v1951 = vadd.f32 %v1813, %v1868
  %v1952 = vadd.f32 %v1814, %v1870
  %v1953 = vadd.f32 %v1815, %v1872
  %v1954 = vadd.f32 %v1816, %v1874
  %v1955 = vadd.f32 %v1817, %v1876
  %v1956 = vadd.f32 %v1818, %v1878
  %v1957 = vadd.f32 %v1819, %v1880
  %v1958 = vadd.f32 %v1820, %v1882
  %v1959 = vadd.f32 %v1821, %v1884
  %v1960 = vadd.f32 %v1822, %v1886
  %v1961 = vadd.f32 %v1823, %v1888
  %v1962 = vadd.f32 %v1824, %v1890
  %v1963 = vadd.f32 %v1825, %v1892
  %v1964 = vadd.f32 %v1826, %v1894
  %v1965 = vadd.f32 %v1827, %v1896
  %v1966 = vadd.f32 %v1828, %v1898
  %v1967 = vadd.f32 %v1829, %v1900
  %v1968 = vadd.f32 %v1830, %v1902
  %v1969 = vadd.f32 %v1831, %v1904
  %v1970 = vadd.f32 %v1832, %v1906
  %v1971 = vld [vmem:[#allocation3 + $0x92] sm:$0xff]
  %v1972 = vld [vmem:[#allocation3 + $0x9a] sm:$0xff]
  %v1973 = vld [vmem:[#allocation3 + $0x12a] sm:$0xff]
  %v1974 = vld [vmem:[#allocation3 + $0x132] sm:$0xff]
  %v1975 = vld [vmem:[#allocation3 + $0x13a] sm:$0x3f]
  %1981 = vrot.lane.b32.xlu0 %v1066, 64
  %v1982 = vpop.permute.xlu0 %1981
  %1983 = vrot.lane.b32.xlu0 %v1067, 64
  %v1984 = vpop.permute.xlu0 %1983
  %1985 = vrot.lane.b32.xlu0 %v1068, 64
  %v1986 = vpop.permute.xlu0 %1985
  %1987 = vrot.lane.b32.xlu0 %v1069, 64
  %v1988 = vpop.permute.xlu0 %1987
  %1989 = vrot.lane.b32.xlu0 %v1070, 64
  %v1990 = vpop.permute.xlu0 %1989
  %1991 = vrot.lane.b32.xlu0 %v1071, 64
  %v1992 = vpop.permute.xlu0 %1991
  %1993 = vrot.lane.b32.xlu0 %v1072, 64
  %v1994 = vpop.permute.xlu0 %1993
  %1995 = vrot.lane.b32.xlu0 %v1073, 64
  %v1996 = vpop.permute.xlu0 %1995
  %1997 = vrot.lane.b32.xlu0 %v1074, 64
  %v1998 = vpop.permute.xlu0 %1997
  %1999 = vrot.lane.b32.xlu0 %v1075, 64
  %v2000 = vpop.permute.xlu0 %1999
  %2001 = vrot.lane.b32.xlu0 %v1076, 64
  %v2002 = vpop.permute.xlu0 %2001
  %2003 = vrot.lane.b32.xlu0 %v1077, 64
  %v2004 = vpop.permute.xlu0 %2003
  %2005 = vrot.lane.b32.xlu0 %v1557, 64
  %v2006 = vpop.permute.xlu0 %2005
  %2007 = vrot.lane.b32.xlu0 %v1558, 64
  %v2008 = vpop.permute.xlu0 %2007
  %2009 = vrot.lane.b32.xlu0 %v1971, 64
  %v2010 = vpop.permute.xlu0 %2009
  %2011 = vrot.lane.b32.xlu0 %v1972, 64
  %v2012 = vpop.permute.xlu0 %2011
  %2013 = vrot.lane.b32.xlu0 %v1082, 64
  %v2014 = vpop.permute.xlu0 %2013
  %2015 = vrot.lane.b32.xlu0 %v1083, 64
  %v2016 = vpop.permute.xlu0 %2015
  %2017 = vrot.lane.b32.xlu0 %v1084, 64
  %v2018 = vpop.permute.xlu0 %2017
  %2019 = vrot.lane.b32.xlu0 %v1085, 64
  %v2020 = vpop.permute.xlu0 %2019
  %2021 = vrot.lane.b32.xlu0 %v1086, 64
  %v2022 = vpop.permute.xlu0 %2021
  %2023 = vrot.lane.b32.xlu0 %v1087, 64
  %v2024 = vpop.permute.xlu0 %2023
  %2025 = vrot.lane.b32.xlu0 %v1088, 64
  %v2026 = vpop.permute.xlu0 %2025
  %2027 = vrot.lane.b32.xlu0 %v1089, 64
  %v2028 = vpop.permute.xlu0 %2027
  %2029 = vrot.lane.b32.xlu0 %v1090, 64
  %v2030 = vpop.permute.xlu0 %2029
  %2031 = vrot.lane.b32.xlu0 %v1091, 64
  %v2032 = vpop.permute.xlu0 %2031
  %2033 = vrot.lane.b32.xlu0 %v1092, 64
  %v2034 = vpop.permute.xlu0 %2033
  %2035 = vrot.lane.b32.xlu0 %v1559, 64
  %v2036 = vpop.permute.xlu0 %2035
  %2037 = vrot.lane.b32.xlu0 %v1560, 64
  %v2038 = vpop.permute.xlu0 %2037
  %2039 = vrot.lane.b32.xlu0 %v1973, 64
  %v2040 = vpop.permute.xlu0 %2039
  %2041 = vrot.lane.b32.xlu0 %v1974, 64
  %v2042 = vpop.permute.xlu0 %2041
  %2043 = vrot.lane.b32.xlu0 %v1975, 64
  %v2044 = vpop.permute.xlu0 %2043
  %v2077 = vadd.f32 %v1939, %v1982
  %v2078 = vadd.f32 %v1940, %v1984
  %v2079 = vadd.f32 %v1941, %v1986
  %v2080 = vadd.f32 %v1942, %v1988
  %v2081 = vadd.f32 %v1943, %v1990
  %v2082 = vadd.f32 %v1944, %v1992
  %v2083 = vadd.f32 %v1945, %v1994
  %v2084 = vadd.f32 %v1946, %v1996
  %v2085 = vadd.f32 %v1947, %v1998
  %v2086 = vadd.f32 %v1948, %v2000
  %v2087 = vadd.f32 %v1949, %v2002
  %v2088 = vadd.f32 %v1950, %v2004
  %v2089 = vadd.f32 %v1951, %v2006
  %v2090 = vadd.f32 %v1952, %v2008
  %v2091 = vadd.f32 %v1953, %v2010
  %v2092 = vadd.f32 %v1954, %v2012
  %v2093 = vadd.f32 %v1955, %v2014
  %v2094 = vadd.f32 %v1956, %v2016
  %v2095 = vadd.f32 %v1957, %v2018
  %v2096 = vadd.f32 %v1958, %v2020
  %v2097 = vadd.f32 %v1959, %v2022
  %v2098 = vadd.f32 %v1960, %v2024
  %v2099 = vadd.f32 %v1961, %v2026
  %v2100 = vadd.f32 %v1962, %v2028
  %v2101 = vadd.f32 %v1963, %v2030
  %v2102 = vadd.f32 %v1964, %v2032
  %v2103 = vadd.f32 %v1965, %v2034
  %v2104 = vadd.f32 %v1966, %v2036
  %v2105 = vadd.f32 %v1967, %v2038
  %v2106 = vadd.f32 %v1968, %v2040
  %v2107 = vadd.f32 %v1969, %v2042
  %v2108 = vadd.f32 %v1970, %v2044
  %v2109 = vld [vmem:[%s5] sm:$0x1]
  %v2111 = vlaneseq
  %v2112 = vshrl.u32 %v2111, 7
  %v2113 = vsub.s32 0, %v2112
  %v2114 = vrot.slane %v2109, %v2113
  %v2116 = vmul.f32 %v2077, %v2114
  %v2117 = vmul.f32 %v2078, %v2114
  %v2118 = vmul.f32 %v2079, %v2114
  %v2119 = vmul.f32 %v2080, %v2114
  %v2120 = vmul.f32 %v2081, %v2114
  %v2121 = vmul.f32 %v2082, %v2114
  %v2122 = vmul.f32 %v2083, %v2114
  %v2123 = vmul.f32 %v2084, %v2114
  %v2124 = vmul.f32 %v2085, %v2114
  %v2125 = vmul.f32 %v2086, %v2114
  %v2126 = vmul.f32 %v2087, %v2114
  %v2127 = vmul.f32 %v2088, %v2114
  %v2128 = vmul.f32 %v2089, %v2114
  %v2129 = vmul.f32 %v2090, %v2114
  %v2130 = vmul.f32 %v2091, %v2114
  %v2131 = vmul.f32 %v2092, %v2114
  %v2132 = vmul.f32 %v2093, %v2114
  %v2133 = vmul.f32 %v2094, %v2114
  %v2134 = vmul.f32 %v2095, %v2114
  %v2135 = vmul.f32 %v2096, %v2114
  %v2136 = vmul.f32 %v2097, %v2114
  %v2137 = vmul.f32 %v2098, %v2114
  %v2138 = vmul.f32 %v2099, %v2114
  %v2139 = vmul.f32 %v2100, %v2114
  %v2140 = vmul.f32 %v2101, %v2114
  %v2141 = vmul.f32 %v2102, %v2114
  %v2142 = vmul.f32 %v2103, %v2114
  %v2143 = vmul.f32 %v2104, %v2114
  %v2144 = vmul.f32 %v2105, %v2114
  %v2145 = vmul.f32 %v2106, %v2114
  %v2146 = vmul.f32 %v2107, %v2114
  %v2147 = vmul.f32 %v2108, %v2114
  %v2148 = vld [vmem:[%s6] sm:$0x1]
  %v2150 = vlaneseq
  %v2151 = vshrl.u32 %v2150, 7
  %v2152 = vsub.s32 0, %v2151
  %v2153 = vrot.slane %v2148, %v2152
  %v2155 = vadd.f32 %v2116, %v2153
  %v2156 = vadd.f32 %v2117, %v2153
  %v2157 = vadd.f32 %v2118, %v2153
  %v2158 = vadd.f32 %v2119, %v2153
  %v2159 = vadd.f32 %v2120, %v2153
  %v2160 = vadd.f32 %v2121, %v2153
  %v2161 = vadd.f32 %v2122, %v2153
  %v2162 = vadd.f32 %v2123, %v2153
  %v2163 = vadd.f32 %v2124, %v2153
  %v2164 = vadd.f32 %v2125, %v2153
  %v2165 = vadd.f32 %v2126, %v2153
  %v2166 = vadd.f32 %v2127, %v2153
  %v2167 = vadd.f32 %v2128, %v2153
  %v2168 = vadd.f32 %v2129, %v2153
  %v2169 = vadd.f32 %v2130, %v2153
  %v2170 = vadd.f32 %v2131, %v2153
  %v2171 = vadd.f32 %v2132, %v2153
  %v2172 = vadd.f32 %v2133, %v2153
  %v2173 = vadd.f32 %v2134, %v2153
  %v2174 = vadd.f32 %v2135, %v2153
  %v2175 = vadd.f32 %v2136, %v2153
  %v2176 = vadd.f32 %v2137, %v2153
  %v2177 = vadd.f32 %v2138, %v2153
  %v2178 = vadd.f32 %v2139, %v2153
  %v2179 = vadd.f32 %v2140, %v2153
  %v2180 = vadd.f32 %v2141, %v2153
  %v2181 = vadd.f32 %v2142, %v2153
  %v2182 = vadd.f32 %v2143, %v2153
  %v2183 = vadd.f32 %v2144, %v2153
  %v2184 = vadd.f32 %v2145, %v2153
  %v2185 = vadd.f32 %v2146, %v2153
  %v2186 = vadd.f32 %v2147, %v2153
  %v2187 = vmax.f32 %v2155, 0.0
  %v2188 = vmax.f32 %v2156, 0.0
  %v2189 = vmax.f32 %v2157, 0.0
  %v2190 = vmax.f32 %v2158, 0.0
  %v2191 = vmax.f32 %v2159, 0.0
  %v2192 = vmax.f32 %v2160, 0.0
  %v2193 = vmax.f32 %v2161, 0.0
  %v2194 = vmax.f32 %v2162, 0.0
  %v2195 = vmax.f32 %v2163, 0.0
  %v2196 = vmax.f32 %v2164, 0.0
  %v2197 = vmax.f32 %v2165, 0.0
  %v2198 = vmax.f32 %v2166, 0.0
  %v2199 = vmax.f32 %v2167, 0.0
  %v2200 = vmax.f32 %v2168, 0.0
  %v2201 = vmax.f32 %v2169, 0.0
  %v2202 = vmax.f32 %v2170, 0.0
  %v2203 = vmax.f32 %v2171, 0.0
  %v2204 = vmax.f32 %v2172, 0.0
  %v2205 = vmax.f32 %v2173, 0.0
  %v2206 = vmax.f32 %v2174, 0.0
  %v2207 = vmax.f32 %v2175, 0.0
  %v2208 = vmax.f32 %v2176, 0.0
  %v2209 = vmax.f32 %v2177, 0.0
  %v2210 = vmax.f32 %v2178, 0.0
  %v2211 = vmax.f32 %v2179, 0.0
  %v2212 = vmax.f32 %v2180, 0.0
  %v2213 = vmax.f32 %v2181, 0.0
  %v2214 = vmax.f32 %v2182, 0.0
  %v2215 = vmax.f32 %v2183, 0.0
  %v2216 = vmax.f32 %v2184, 0.0
  %v2217 = vmax.f32 %v2185, 0.0
  %v2218 = vmax.f32 %v2186, 0.0
  %v2219 = vpack.c.bf16 %v2188, %v2187
  %v2220 = vpack.c.bf16 %v2190, %v2189
  %v2221 = vpack.c.bf16 %v2192, %v2191
  %v2222 = vpack.c.bf16 %v2194, %v2193
  %v2223 = vpack.c.bf16 %v2196, %v2195
  %v2224 = vpack.c.bf16 %v2198, %v2197
  %v2225 = vpack.c.bf16 %v2200, %v2199
  %v2226 = vpack.c.bf16 %v2202, %v2201
  %v2227 = vpack.c.bf16 %v2204, %v2203
  %v2228 = vpack.c.bf16 %v2206, %v2205
  %v2229 = vpack.c.bf16 %v2208, %v2207
  %v2230 = vpack.c.bf16 %v2210, %v2209
  %v2231 = vpack.c.bf16 %v2212, %v2211
  %v2232 = vpack.c.bf16 %v2214, %v2213
  %v2233 = vpack.c.bf16 %v2216, %v2215
  %v2234 = vpack.c.bf16 %v2218, %v2217
  %v2236 = vunpack.c.l.b16 %v2219
  %v2237 = vpack.c.b16 %v2236, %v2236
  %2238 = vrot.lane.b32.xlu0 %v2237, 16
  %v2239 = vpop.permute.xlu0 %2238
  %vm2241 = vcmask 191616
  %2242 = vst.msk [vmem:[%s7] sm:$0xf] %vm2241, %v2239
  %v2244 = vunpack.c.l.b16 %v2220
  %v2245 = vpack.c.b16 %v2244, %v2244
  %2246 = vrot.lane.b32.xlu0 %v2245, 16
  %v2247 = vpop.permute.xlu0 %2246
  %2249 = vst.msk [vmem:[%s7 + $0x4] sm:$0xf] %vm2241, %v2247
  %v2251 = vunpack.c.l.b16 %v2221
  %v2252 = vpack.c.b16 %v2251, %v2251
  %2253 = vrot.lane.b32.xlu0 %v2252, 16
  %v2254 = vpop.permute.xlu0 %2253
  %2256 = vst.msk [vmem:[%s7 + $0x8] sm:$0xf] %vm2241, %v2254
  %v2258 = vunpack.c.l.b16 %v2222
  %v2259 = vpack.c.b16 %v2258, %v2258
  %2260 = vrot.lane.b32.xlu0 %v2259, 16
  %v2261 = vpop.permute.xlu0 %2260
  %2263 = vst.msk [vmem:[%s7 + $0xc] sm:$0xf] %vm2241, %v2261
  %v2265 = vunpack.c.l.b16 %v2223
  %v2266 = vpack.c.b16 %v2265, %v2265
  %2267 = vrot.lane.b32.xlu0 %v2266, 16
  %v2268 = vpop.permute.xlu0 %2267
  %2270 = vst.msk [vmem:[%s7 + $0x10] sm:$0xf] %vm2241, %v2268
  %v2272 = vunpack.c.l.b16 %v2224
  %v2273 = vpack.c.b16 %v2272, %v2272
  %2274 = vrot.lane.b32.xlu0 %v2273, 16
  %v2275 = vpop.permute.xlu0 %2274
  %2277 = vst.msk [vmem:[%s7 + $0x14] sm:$0xf] %vm2241, %v2275
  %v2279 = vunpack.c.l.b16 %v2225
  %v2280 = vpack.c.b16 %v2279, %v2279
  %2281 = vrot.lane.b32.xlu0 %v2280, 16
  %v2282 = vpop.permute.xlu0 %2281
  %2284 = vst.msk [vmem:[%s7 + $0x18] sm:$0xf] %vm2241, %v2282
  %v2286 = vunpack.c.l.b16 %v2226
  %v2287 = vpack.c.b16 %v2286, %v2286
  %2288 = vrot.lane.b32.xlu0 %v2287, 16
  %v2289 = vpop.permute.xlu0 %2288
  %2291 = vst.msk [vmem:[%s7 + $0x1c] sm:$0xf] %vm2241, %v2289
  %v2293 = vunpack.c.l.b16 %v2227
  %v2294 = vpack.c.b16 %v2293, %v2293
  %2295 = vrot.lane.b32.xlu0 %v2294, 16
  %v2296 = vpop.permute.xlu0 %2295
  %2298 = vst.msk [vmem:[%s7 + $0x20] sm:$0xf] %vm2241, %v2296
  %v2300 = vunpack.c.l.b16 %v2228
  %v2301 = vpack.c.b16 %v2300, %v2300
  %2302 = vrot.lane.b32.xlu0 %v2301, 16
  %v2303 = vpop.permute.xlu0 %2302
  %2305 = vst.msk [vmem:[%s7 + $0x24] sm:$0xf] %vm2241, %v2303
  %v2307 = vunpack.c.l.b16 %v2229
  %v2308 = vpack.c.b16 %v2307, %v2307
  %2309 = vrot.lane.b32.xlu0 %v2308, 16
  %v2310 = vpop.permute.xlu0 %2309
  %2312 = vst.msk [vmem:[%s7 + $0x28] sm:$0xf] %vm2241, %v2310
  %v2314 = vunpack.c.l.b16 %v2230
  %v2315 = vpack.c.b16 %v2314, %v2314
  %2316 = vrot.lane.b32.xlu0 %v2315, 16
  %v2317 = vpop.permute.xlu0 %2316
  %2319 = vst.msk [vmem:[%s7 + $0x2c] sm:$0xf] %vm2241, %v2317
  %v2321 = vunpack.c.l.b16 %v2231
  %v2322 = vpack.c.b16 %v2321, %v2321
  %2323 = vrot.lane.b32.xlu0 %v2322, 16
  %v2324 = vpop.permute.xlu0 %2323
  %2326 = vst.msk [vmem:[%s7 + $0x30] sm:$0xf] %vm2241, %v2324
  %v2328 = vunpack.c.l.b16 %v2232
  %v2329 = vpack.c.b16 %v2328, %v2328
  %2330 = vrot.lane.b32.xlu0 %v2329, 16
  %v2331 = vpop.permute.xlu0 %2330
  %2333 = vst.msk [vmem:[%s7 + $0x34] sm:$0xf] %vm2241, %v2331
  %v2335 = vunpack.c.l.b16 %v2233
  %v2336 = vpack.c.b16 %v2335, %v2335
  %2337 = vrot.lane.b32.xlu0 %v2336, 16
  %v2338 = vpop.permute.xlu0 %2337
  %2340 = vst.msk [vmem:[%s7 + $0x38] sm:$0xf] %vm2241, %v2338
  %v2342 = vunpack.c.l.b16 %v2234
  %v2343 = vpack.c.b16 %v2342, %v2342
  %2344 = vrot.lane.b32.xlu0 %v2343, 16
  %v2345 = vpop.permute.xlu0 %2344
  %2347 = vst.msk [vmem:[%s7 + $0x3c] sm:$0xf] %vm2241, %v2345
  %v2348 = vld [vmem:[%s7] sm:$0xf]
  %v2349 = vld [vmem:[%s7 + $0x4] sm:$0xf]
  %v2350 = vld [vmem:[%s7 + $0x8] sm:$0xf]
  %v2351 = vld [vmem:[%s7 + $0xc] sm:$0xf]
  %v2352 = vld [vmem:[%s7 + $0x10] sm:$0xf]
  %v2353 = vld [vmem:[%s7 + $0x14] sm:$0xf]
  %v2354 = vld [vmem:[%s7 + $0x18] sm:$0xf]
  %v2355 = vld [vmem:[%s7 + $0x1c] sm:$0xf]
  %v2356 = vld [vmem:[%s7 + $0x20] sm:$0xf]
  %v2357 = vld [vmem:[%s7 + $0x24] sm:$0xf]
  %v2358 = vld [vmem:[%s7 + $0x28] sm:$0xf]
  %v2359 = vld [vmem:[%s7 + $0x2c] sm:$0xf]
  %v2360 = vld [vmem:[%s7 + $0x30] sm:$0xf]
  %v2361 = vld [vmem:[%s7 + $0x34] sm:$0xf]
  %v2362 = vld [vmem:[%s7 + $0x38] sm:$0xf]
  %v2363 = vld [vmem:[%s7 + $0x3c] sm:$0xf]
  %s2364 = scalar_lea.vmem %s1, 16
  %v2365 = vld [vmem:[%s2364] sm:$0xf]
  %v2366 = vld [vmem:[%s2364 + $0x4] sm:$0xf]
  %v2367 = vld [vmem:[%s2364 + $0x8] sm:$0xf]
  %v2368 = vld [vmem:[%s2364 + $0xc] sm:$0xf]
  %v2385 = vunpack.c.l.b16 %v2348
  %v2386 = vunpack.c.l.b16 %v2349
  %v2387 = vunpack.c.l.b16 %v2350
  %v2388 = vunpack.c.l.b16 %v2351
  %v2389 = vunpack.c.l.b16 %v2352
  %v2390 = vunpack.c.l.b16 %v2353
  %v2391 = vunpack.c.l.b16 %v2354
  %v2392 = vunpack.c.l.b16 %v2355
  %v2393 = vunpack.c.l.b16 %v2356
  %v2394 = vunpack.c.l.b16 %v2357
  %v2395 = vunpack.c.l.b16 %v2358
  %v2396 = vunpack.c.l.b16 %v2359
  %v2397 = vunpack.c.l.b16 %v2360
  %v2398 = vunpack.c.l.b16 %v2361
  %v2399 = vunpack.c.l.b16 %v2362
  %v2400 = vunpack.c.l.b16 %v2363
  %v2401 = vpack.c.b16 %v2386, %v2385
  %v2402 = vpack.c.b16 %v2388, %v2387
  %v2403 = vpack.c.b16 %v2390, %v2389
  %v2404 = vpack.c.b16 %v2392, %v2391
  %v2405 = vpack.c.b16 %v2394, %v2393
  %v2406 = vpack.c.b16 %v2396, %v2395
  %v2407 = vpack.c.b16 %v2398, %v2397
  %v2408 = vpack.c.b16 %v2400, %v2399
  %v2413 = vunpack.c.l.b16 %v2365
  %v2414 = vunpack.c.l.b16 %v2366
  %v2415 = vunpack.c.l.b16 %v2367
  %v2416 = vunpack.c.l.b16 %v2368
  %v2417 = vpack.c.b16 %v2414, %v2413
  %v2418 = vpack.c.b16 %v2416, %v2415
  %v2422 = vsel %vm77, %v2401, 0
  %v2425 = vsel %vm77, %v2402, 0
  %v2428 = vsel %vm77, %v2403, 0
  %v2431 = vsel %vm77, %v2404, 0
  %v2434 = vsel %vm77, %v2405, 0
  %v2437 = vsel %vm77, %v2406, 0
  %v2440 = vsel %vm77, %v2407, 0
  %v2443 = vsel %vm77, %v2408, 0
  %2445 = vmatprep.subr.bf16.mxu0 0
  %2446 = vmatpush1.bf16.msra.mxu0 %v2417
  %2447 = vmatprep.subr.bf16.mxu0 0
  %2448 = vmatpush1.bf16.msra.mxu0 %v2418
  %2449 = vmatprep.subr.bf16.mxu0 0
  %2450 = vmatpush1.bf16.msra.mxu0 0
  %2451 = vmatprep.subr.bf16.mxu0 0
  %2452 = vmatpush1.bf16.msra.mxu0 0
  %2453 = vmatprep.subr.bf16.mxu0 0
  %2454 = vmatpush1.bf16.msra.mxu0 0
  %2455 = vmatprep.subr.bf16.mxu0 0
  %2456 = vmatpush1.bf16.msra.mxu0 0
  %2457 = vmatprep.subr.bf16.mxu0 0
  %2458 = vmatpush1.bf16.msra.mxu0 0
  %2459 = vmatprep.subr.bf16.mxu0 0
  %2460 = vmatpush1.bf16.msra.mxu0 0
  %2461 = vmatprep.subr.bf16.mxu0 0
  %2462 = vmatpush1.bf16.msra.mxu0 0
  %2463 = vmatprep.subr.bf16.mxu0 0
  %2464 = vmatpush1.bf16.msra.mxu0 0
  %2465 = vmatprep.subr.bf16.mxu0 0
  %2466 = vmatpush1.bf16.msra.mxu0 0
  %2467 = vmatprep.subr.bf16.mxu0 0
  %2468 = vmatpush1.bf16.msra.mxu0 0
  %2469 = vmatprep.subr.bf16.mxu0 0
  %2470 = vmatpush1.bf16.msra.mxu0 0
  %2471 = vmatprep.subr.bf16.mxu0 0
  %2472 = vmatpush1.bf16.msra.mxu0 0
  %2473 = vmatprep.subr.bf16.mxu0 0
  %2474 = vmatpush1.bf16.msra.mxu0 0
  %2475 = vmatprep.subr.bf16.mxu0 0
  %2476 = vmatpush1.bf16.msra.mxu0 0
  %2477 = vmatprep.mubr.bf16.mxu0 0
  %2478 = vmatmul.mubr.bf16.gmra.mrb[0].mxu0 %v2422
  %v2479 = vpop.f32.mrb[0].mxu0
  %v2480 = vadd.f32 0.0, %v2479
  %v2481 = vpop.f32.mrb[0].mxu0
  %v2482 = vpop.f32.mrb[0].mxu0
  %v2483 = vadd.f32 0.0, %v2482
  %v2484 = vpop.f32.mrb[0].mxu0
  %2485 = vmatprep.mubr.bf16.mxu0 0
  %2486 = vmatmul.mubr.bf16.gmra.mrb[0].mxu0 %v2425
  %v2487 = vpop.f32.mrb[0].mxu0
  %v2488 = vadd.f32 0.0, %v2487
  %v2489 = vpop.f32.mrb[0].mxu0
  %v2490 = vpop.f32.mrb[0].mxu0
  %v2491 = vadd.f32 0.0, %v2490
  %v2492 = vpop.f32.mrb[0].mxu0
  %2493 = vmatprep.mubr.bf16.mxu0 0
  %2494 = vmatmul.mubr.bf16.gmra.mrb[0].mxu0 %v2428
  %v2495 = vpop.f32.mrb[0].mxu0
  %v2496 = vadd.f32 0.0, %v2495
  %v2497 = vpop.f32.mrb[0].mxu0
  %v2498 = vpop.f32.mrb[0].mxu0
  %v2499 = vadd.f32 0.0, %v2498
  %v2500 = vpop.f32.mrb[0].mxu0
  %2501 = vmatprep.mubr.bf16.mxu0 0
  %2502 = vmatmul.mubr.bf16.gmra.mrb[0].mxu0 %v2431
  %v2503 = vpop.f32.mrb[0].mxu0
  %v2504 = vadd.f32 0.0, %v2503
  %v2505 = vpop.f32.mrb[0].mxu0
  %v2506 = vpop.f32.mrb[0].mxu0
  %v2507 = vadd.f32 0.0, %v2506
  %v2508 = vpop.f32.mrb[0].mxu0
  %2509 = vmatprep.mubr.bf16.mxu0 0
  %2510 = vmatmul.mubr.bf16.gmra.mrb[0].mxu0 %v2434
  %v2511 = vpop.f32.mrb[0].mxu0
  %v2512 = vadd.f32 0.0, %v2511
  %v2513 = vpop.f32.mrb[0].mxu0
  %v2514 = vpop.f32.mrb[0].mxu0
  %v2515 = vadd.f32 0.0, %v2514
  %v2516 = vpop.f32.mrb[0].mxu0
  %2517 = vmatprep.mubr.bf16.mxu0 0
  %2518 = vmatmul.mubr.bf16.gmra.mrb[0].mxu0 %v2437
  %v2519 = vpop.f32.mrb[0].mxu0
  %v2520 = vadd.f32 0.0, %v2519
  %v2521 = vpop.f32.mrb[0].mxu0
  %v2522 = vpop.f32.mrb[0].mxu0
  %v2523 = vadd.f32 0.0, %v2522
  %v2524 = vpop.f32.mrb[0].mxu0
  %2525 = vmatprep.mubr.bf16.mxu0 0
  %2526 = vmatmul.mubr.bf16.gmra.mrb[0].mxu0 %v2440
  %v2527 = vpop.f32.mrb[0].mxu0
  %v2528 = vadd.f32 0.0, %v2527
  %v2529 = vpop.f32.mrb[0].mxu0
  %v2530 = vpop.f32.mrb[0].mxu0
  %v2531 = vadd.f32 0.0, %v2530
  %v2532 = vpop.f32.mrb[0].mxu0
  %2533 = vmatprep.mubr.bf16.mxu0 0
  %2534 = vmatmul.mubr.bf16.gmra.mrb[0].mxu0 %v2443
  %v2535 = vpop.f32.mrb[0].mxu0
  %v2536 = vadd.f32 0.0, %v2535
  %v2537 = vpop.f32.mrb[0].mxu0
  %v2538 = vpop.f32.mrb[0].mxu0
  %v2539 = vadd.f32 0.0, %v2538
  %v2540 = vpop.f32.mrb[0].mxu0
  %2541 = vdwg.mxu0
  %s2542 = scalar_lea.vmem %s2, 1
  %v2543 = vld [vmem:[%s2542] sm:$0x1]
  %v2545 = vlaneseq
  %v2546 = vshrl.u32 %v2545, 7
  %v2547 = vsub.s32 0, %v2546
  %v2548 = vrot.slane %v2543, %v2547
  %v2550 = vmul.f32 %v2480, %v2548
  %v2551 = vmul.f32 %v2483, %v2548
  %v2552 = vmul.f32 %v2488, %v2548
  %v2553 = vmul.f32 %v2491, %v2548
  %v2554 = vmul.f32 %v2496, %v2548
  %v2555 = vmul.f32 %v2499, %v2548
  %v2556 = vmul.f32 %v2504, %v2548
  %v2557 = vmul.f32 %v2507, %v2548
  %v2558 = vmul.f32 %v2512, %v2548
  %v2559 = vmul.f32 %v2515, %v2548
  %v2560 = vmul.f32 %v2520, %v2548
  %v2561 = vmul.f32 %v2523, %v2548
  %v2562 = vmul.f32 %v2528, %v2548
  %v2563 = vmul.f32 %v2531, %v2548
  %v2564 = vmul.f32 %v2536, %v2548
  %v2565 = vmul.f32 %v2539, %v2548
  %s2566 = scalar_lea.vmem %s3, 1
  %v2567 = vld [vmem:[%s2566] sm:$0x1]
  %v2569 = vlaneseq
  %v2570 = vshrl.u32 %v2569, 7
  %v2571 = vsub.s32 0, %v2570
  %v2572 = vrot.slane %v2567, %v2571
  %v2574 = vadd.f32 %v2550, %v2572
  %v2575 = vadd.f32 %v2551, %v2572
  %v2576 = vadd.f32 %v2552, %v2572
  %v2577 = vadd.f32 %v2553, %v2572
  %v2578 = vadd.f32 %v2554, %v2572
  %v2579 = vadd.f32 %v2555, %v2572
  %v2580 = vadd.f32 %v2556, %v2572
  %v2581 = vadd.f32 %v2557, %v2572
  %v2582 = vadd.f32 %v2558, %v2572
  %v2583 = vadd.f32 %v2559, %v2572
  %v2584 = vadd.f32 %v2560, %v2572
  %v2585 = vadd.f32 %v2561, %v2572
  %v2586 = vadd.f32 %v2562, %v2572
  %v2587 = vadd.f32 %v2563, %v2572
  %v2588 = vadd.f32 %v2564, %v2572
  %v2589 = vadd.f32 %v2565, %v2572
  %v2590 = vmax.f32 %v2574, 0.0
  %v2591 = vmax.f32 %v2575, 0.0
  %v2592 = vmax.f32 %v2576, 0.0
  %v2593 = vmax.f32 %v2577, 0.0
  %v2594 = vmax.f32 %v2578, 0.0
  %v2595 = vmax.f32 %v2579, 0.0
  %v2596 = vmax.f32 %v2580, 0.0
  %v2597 = vmax.f32 %v2581, 0.0
  %v2598 = vmax.f32 %v2582, 0.0
  %v2599 = vmax.f32 %v2583, 0.0
  %v2600 = vmax.f32 %v2584, 0.0
  %v2601 = vmax.f32 %v2585, 0.0
  %v2602 = vmax.f32 %v2586, 0.0
  %v2603 = vmax.f32 %v2587, 0.0
  %v2604 = vmax.f32 %v2588, 0.0
  %v2605 = vmax.f32 %v2589, 0.0
  %v2606 = vpack.c.bf16 %v2591, %v2590
  %v2607 = vpack.c.bf16 %v2593, %v2592
  %v2608 = vpack.c.bf16 %v2595, %v2594
  %v2609 = vpack.c.bf16 %v2597, %v2596
  %v2610 = vpack.c.bf16 %v2599, %v2598
  %v2611 = vpack.c.bf16 %v2601, %v2600
  %v2612 = vpack.c.bf16 %v2603, %v2602
  %v2613 = vpack.c.bf16 %v2605, %v2604
  %v2615 = vshrl.u32 %v2606, 16
  %v2617 = vrot.slane %v2615, 7
  %v2618 = vshll.u32 %v2606, 16
  %v2620 = vor.u32 %v2617, %v2618
  %v2622 = vld [vmem:[#allocation2 + $0x8] sm:$0x1f]
  %v2623 = vsel %vm371, %v2620, %v2622
  %2624 = vst [vmem:[#allocation2 + $0x8] sm:$0x1f] %v2623
  %v2625 = vrot.slane %v2615, 3
  %v2626 = vrot.slane %v2618, 4
  %v2627 = vor.u32 %v2625, %v2626
  %v2629 = vld [vmem:[#allocation2 + $0x10] sm:$0x1f]
  %v2630 = vsel %vm371, %v2627, %v2629
  %2631 = vst [vmem:[#allocation2 + $0x10] sm:$0x1f] %v2630
  %v2633 = vshrl.u32 %v2607, 16
  %v2635 = vrot.slane %v2633, 7
  %v2636 = vshll.u32 %v2607, 16
  %v2638 = vor.u32 %v2635, %v2636
  %v2640 = vld [vmem:[#allocation2 + $0x18] sm:$0x1f]
  %v2641 = vsel %vm371, %v2638, %v2640
  %2642 = vst [vmem:[#allocation2 + $0x18] sm:$0x1f] %v2641
  %v2643 = vrot.slane %v2633, 3
  %v2644 = vrot.slane %v2636, 4
  %v2645 = vor.u32 %v2643, %v2644
  %v2647 = vld [vmem:[#allocation2 + $0x20] sm:$0x1f]
  %v2648 = vsel %vm371, %v2645, %v2647
  %2649 = vst [vmem:[#allocation2 + $0x20] sm:$0x1f] %v2648
  %v2651 = vshrl.u32 %v2608, 16
  %v2653 = vrot.slane %v2651, 7
  %v2654 = vshll.u32 %v2608, 16
  %v2656 = vor.u32 %v2653, %v2654
  %v2658 = vld [vmem:[#allocation2 + $0x28] sm:$0x1f]
  %v2659 = vsel %vm371, %v2656, %v2658
  %2660 = vst [vmem:[#allocation2 + $0x28] sm:$0x1f] %v2659
  %v2661 = vrot.slane %v2651, 3
  %v2662 = vrot.slane %v2654, 4
  %v2663 = vor.u32 %v2661, %v2662
  %v2665 = vld [vmem:[#allocation2 + $0x30] sm:$0x1f]
  %v2666 = vsel %vm371, %v2663, %v2665
  %2667 = vst [vmem:[#allocation2 + $0x30] sm:$0x1f] %v2666
  %v2669 = vshrl.u32 %v2609, 16
  %v2671 = vrot.slane %v2669, 7
  %v2672 = vshll.u32 %v2609, 16
  %v2674 = vor.u32 %v2671, %v2672
  %v2676 = vld [vmem:[#allocation2 + $0x38] sm:$0x1f]
  %v2677 = vsel %vm371, %v2674, %v2676
  %2678 = vst [vmem:[#allocation2 + $0x38] sm:$0x1f] %v2677
  %v2679 = vrot.slane %v2669, 3
  %v2680 = vrot.slane %v2672, 4
  %v2681 = vor.u32 %v2679, %v2680
  %v2683 = vld [vmem:[#allocation2 + $0x40] sm:$0x1f]
  %v2684 = vsel %vm371, %v2681, %v2683
  %2685 = vst [vmem:[#allocation2 + $0x40] sm:$0x1f] %v2684
  %v2687 = vshrl.u32 %v2610, 16
  %v2689 = vrot.slane %v2687, 7
  %v2690 = vshll.u32 %v2610, 16
  %v2692 = vor.u32 %v2689, %v2690
  %v2694 = vld [vmem:[#allocation2 + $0x58] sm:$0x1f]
  %v2695 = vsel %vm371, %v2692, %v2694
  %2696 = vst [vmem:[#allocation2 + $0x58] sm:$0x1f] %v2695
  %v2697 = vrot.slane %v2687, 3
  %v2698 = vrot.slane %v2690, 4
  %v2699 = vor.u32 %v2697, %v2698
  %v2701 = vld [vmem:[#allocation2 + $0x60] sm:$0x1f]
  %v2702 = vsel %vm371, %v2699, %v2701
  %2703 = vst [vmem:[#allocation2 + $0x60] sm:$0x1f] %v2702
  %v2705 = vshrl.u32 %v2611, 16
  %v2707 = vrot.slane %v2705, 7
  %v2708 = vshll.u32 %v2611, 16
  %v2710 = vor.u32 %v2707, %v2708
  %v2712 = vld [vmem:[#allocation2 + $0x68] sm:$0x1f]
  %v2713 = vsel %vm371, %v2710, %v2712
  %2714 = vst [vmem:[#allocation2 + $0x68] sm:$0x1f] %v2713
  %v2715 = vrot.slane %v2705, 3
  %v2716 = vrot.slane %v2708, 4
  %v2717 = vor.u32 %v2715, %v2716
  %v2719 = vld [vmem:[#allocation2 + $0x70] sm:$0x1f]
  %v2720 = vsel %vm371, %v2717, %v2719
  %2721 = vst [vmem:[#allocation2 + $0x70] sm:$0x1f] %v2720
  %v2723 = vshrl.u32 %v2612, 16
  %v2725 = vrot.slane %v2723, 7
  %v2726 = vshll.u32 %v2612, 16
  %v2728 = vor.u32 %v2725, %v2726
  %v2730 = vld [vmem:[#allocation2 + $0x78] sm:$0x1f]
  %v2731 = vsel %vm371, %v2728, %v2730
  %2732 = vst [vmem:[#allocation2 + $0x78] sm:$0x1f] %v2731
  %v2733 = vrot.slane %v2723, 3
  %v2734 = vrot.slane %v2726, 4
  %v2735 = vor.u32 %v2733, %v2734
  %v2737 = vld [vmem:[#allocation2 + $0x80] sm:$0x1f]
  %v2738 = vsel %vm371, %v2735, %v2737
  %2739 = vst [vmem:[#allocation2 + $0x80] sm:$0x1f] %v2738
  %v2741 = vshrl.u32 %v2613, 16
  %v2743 = vrot.slane %v2741, 7
  %v2744 = vshll.u32 %v2613, 16
  %v2746 = vor.u32 %v2743, %v2744
  %v2748 = vld [vmem:[#allocation2 + $0x88] sm:$0x1f]
  %v2749 = vsel %vm371, %v2746, %v2748
  %2750 = vst [vmem:[#allocation2 + $0x88] sm:$0x1f] %v2749
  %v2751 = vrot.slane %v2741, 3
  %v2752 = vrot.slane %v2744, 4
  %v2753 = vor.u32 %v2751, %v2752
  %v2755 = vld [vmem:[#allocation2 + $0x90] sm:$0x1f]
  %v2756 = vsel %vm371, %v2753, %v2755
  %2757 = vst [vmem:[#allocation2 + $0x90] sm:$0x1f] %v2756
  %v2758 = vld [vmem:[#allocation2] sm:$0xff]
  %v2759 = vld [vmem:[#allocation2 + $0x8] sm:$0xff]
  %v2760 = vld [vmem:[#allocation2 + $0x10] sm:$0xff]
  %v2761 = vld [vmem:[#allocation2 + $0x18] sm:$0xff]
  %v2762 = vld [vmem:[#allocation2 + $0x20] sm:$0xff]
  %v2763 = vld [vmem:[#allocation2 + $0x28] sm:$0xff]
  %v2764 = vld [vmem:[#allocation2 + $0x30] sm:$0xff]
  %v2765 = vld [vmem:[#allocation2 + $0x38] sm:$0xff]
  %v2766 = vld [vmem:[#allocation2 + $0x40] sm:$0xff]
  %v2767 = vld [vmem:[#allocation2 + $0x48] sm:$0xff]
  %v2768 = vld [vmem:[#allocation2 + $0x50] sm:$0xff]
  %v2769 = vld [vmem:[#allocation2 + $0x58] sm:$0xff]
  %v2770 = vld [vmem:[#allocation2 + $0x60] sm:$0xff]
  %v2771 = vld [vmem:[#allocation2 + $0x68] sm:$0xff]
  %v2772 = vld [vmem:[#allocation2 + $0x70] sm:$0xff]
  %v2773 = vld [vmem:[#allocation2 + $0x78] sm:$0xff]
  %v2774 = vld [vmem:[#allocation2 + $0x80] sm:$0xff]
  %v2775 = vld [vmem:[#allocation2 + $0x88] sm:$0xff]
  %v2776 = vld [vmem:[#allocation2 + $0x90] sm:$0xff]
  %v2777 = vld [vmem:[#allocation2 + $0x98] sm:$0xff]
  %s2778 = scalar_lea.vmem %s4, 16
  %v2779 = vld [vmem:[%s2778] sm:$0xf]
  %v2780 = vld [vmem:[%s2778 + $0x4] sm:$0xf]
  %v2781 = vld [vmem:[%s2778 + $0x8] sm:$0xf]
  %v2782 = vld [vmem:[%s2778 + $0xc] sm:$0xf]
  %v2787 = vunpack.c.l.b16 %v2779
  %v2788 = vunpack.c.l.b16 %v2780
  %v2789 = vunpack.c.l.b16 %v2781
  %v2790 = vunpack.c.l.b16 %v2782
  %v2791 = vpack.c.b16 %v2788, %v2787
  %v2792 = vpack.c.b16 %v2790, %v2789
  %v2796 = vsel %vm77, %v2758, 0
  %v2799 = vsel %vm77, %v2759, 0
  %v2802 = vsel %vm77, %v2760, 0
  %v2805 = vsel %vm77, %v2761, 0
  %v2808 = vsel %vm77, %v2762, 0
  %v2811 = vsel %vm77, %v2763, 0
  %v2814 = vsel %vm77, %v2764, 0
  %v2817 = vsel %vm77, %v2765, 0
  %v2820 = vsel %vm77, %v2766, 0
  %v2823 = vsel %vm77, %v2767, 0
  %v2826 = vsel %vm77, %v2768, 0
  %v2829 = vsel %vm77, %v2769, 0
  %v2832 = vsel %vm77, %v2770, 0
  %v2835 = vsel %vm77, %v2771, 0
  %v2838 = vsel %vm77, %v2772, 0
  %v2841 = vsel %vm77, %v2773, 0
  %v2844 = vsel %vm77, %v2774, 0
  %v2847 = vsel %vm77, %v2775, 0
  %v2850 = vsel %vm77, %v2776, 0
  %v2853 = vsel %vm77, %v2777, 0
  %2855 = vmatprep.subr.bf16.mxu0 0
  %2856 = vmatpush1.bf16.msra.mxu0 %v2791
  %2857 = vmatprep.subr.bf16.mxu0 0
  %2858 = vmatpush1.bf16.msra.mxu0 %v2792
  %2859 = vmatprep.subr.bf16.mxu0 0
  %2860 = vmatpush1.bf16.msra.mxu0 0
  %2861 = vmatprep.subr.bf16.mxu0 0
  %2862 = vmatpush1.bf16.msra.mxu0 0
  %2863 = vmatprep.subr.bf16.mxu0 0
  %2864 = vmatpush1.bf16.msra.mxu0 0
  %2865 = vmatprep.subr.bf16.mxu0 0
  %2866 = vmatpush1.bf16.msra.mxu0 0
  %2867 = vmatprep.subr.bf16.mxu0 0
  %2868 = vmatpush1.bf16.msra.mxu0 0
  %2869 = vmatprep.subr.bf16.mxu0 0
  %2870 = vmatpush1.bf16.msra.mxu0 0
  %2871 = vmatprep.subr.bf16.mxu0 0
  %2872 = vmatpush1.bf16.msra.mxu0 0
  %2873 = vmatprep.subr.bf16.mxu0 0
  %2874 = vmatpush1.bf16.msra.mxu0 0
  %2875 = vmatprep.subr.bf16.mxu0 0
  %2876 = vmatpush1.bf16.msra.mxu0 0
  %2877 = vmatprep.subr.bf16.mxu0 0
  %2878 = vmatpush1.bf16.msra.mxu0 0
  %2879 = vmatprep.subr.bf16.mxu0 0
  %2880 = vmatpush1.bf16.msra.mxu0 0
  %2881 = vmatprep.subr.bf16.mxu0 0
  %2882 = vmatpush1.bf16.msra.mxu0 0
  %2883 = vmatprep.subr.bf16.mxu0 0
  %2884 = vmatpush1.bf16.msra.mxu0 0
  %2885 = vmatprep.subr.bf16.mxu0 0
  %2886 = vmatpush1.bf16.msra.mxu0 0
  %2887 = vmatprep.mubr.bf16.mxu0 0
  %2888 = vmatmul.mubr.bf16.gmra.mrb[0].mxu0 %v2796
  %v2889 = vpop.f32.mrb[0].mxu0
  %v2890 = vadd.f32 0.0, %v2889
  %v2891 = vpop.f32.mrb[0].mxu0
  %v2892 = vpop.f32.mrb[0].mxu0
  %v2893 = vadd.f32 0.0, %v2892
  %v2894 = vpop.f32.mrb[0].mxu0
  %2895 = vmatprep.mubr.bf16.mxu0 0
  %2896 = vmatmul.mubr.bf16.gmra.mrb[0].mxu0 %v2799
  %v2897 = vpop.f32.mrb[0].mxu0
  %v2898 = vadd.f32 0.0, %v2897
  %v2899 = vpop.f32.mrb[0].mxu0
  %v2900 = vpop.f32.mrb[0].mxu0
  %v2901 = vadd.f32 0.0, %v2900
  %v2902 = vpop.f32.mrb[0].mxu0
  %2903 = vmatprep.mubr.bf16.mxu0 0
  %2904 = vmatmul.mubr.bf16.gmra.mrb[0].mxu0 %v2802
  %v2905 = vpop.f32.mrb[0].mxu0
  %v2906 = vadd.f32 0.0, %v2905
  %v2907 = vpop.f32.mrb[0].mxu0
  %v2908 = vpop.f32.mrb[0].mxu0
  %v2909 = vadd.f32 0.0, %v2908
  %v2910 = vpop.f32.mrb[0].mxu0
  %2911 = vmatprep.mubr.bf16.mxu0 0
  %2912 = vmatmul.mubr.bf16.gmra.mrb[0].mxu0 %v2805
  %v2913 = vpop.f32.mrb[0].mxu0
  %v2914 = vadd.f32 0.0, %v2913
  %v2915 = vpop.f32.mrb[0].mxu0
  %v2916 = vpop.f32.mrb[0].mxu0
  %v2917 = vadd.f32 0.0, %v2916
  %v2918 = vpop.f32.mrb[0].mxu0
  %2919 = vmatprep.mubr.bf16.mxu0 0
  %2920 = vmatmul.mubr.bf16.gmra.mrb[0].mxu0 %v2808
  %v2921 = vpop.f32.mrb[0].mxu0
  %v2922 = vadd.f32 0.0, %v2921
  %v2923 = vpop.f32.mrb[0].mxu0
  %v2924 = vpop.f32.mrb[0].mxu0
  %v2925 = vadd.f32 0.0, %v2924
  %v2926 = vpop.f32.mrb[0].mxu0
  %2927 = vmatprep.mubr.bf16.mxu0 0
  %2928 = vmatmul.mubr.bf16.gmra.mrb[0].mxu0 %v2811
  %v2929 = vpop.f32.mrb[0].mxu0
  %v2930 = vadd.f32 0.0, %v2929
  %v2931 = vpop.f32.mrb[0].mxu0
  %v2932 = vpop.f32.mrb[0].mxu0
  %v2933 = vadd.f32 0.0, %v2932
  %v2934 = vpop.f32.mrb[0].mxu0
  %2935 = vmatprep.mubr.bf16.mxu0 0
  %2936 = vmatmul.mubr.bf16.gmra.mrb[0].mxu0 %v2814
  %v2937 = vpop.f32.mrb[0].mxu0
  %v2938 = vadd.f32 0.0, %v2937
  %v2939 = vpop.f32.mrb[0].mxu0
  %v2940 = vpop.f32.mrb[0].mxu0
  %v2941 = vadd.f32 0.0, %v2940
  %v2942 = vpop.f32.mrb[0].mxu0
  %2943 = vmatprep.mubr.bf16.mxu0 0
  %2944 = vmatmul.mubr.bf16.gmra.mrb[0].mxu0 %v2817
  %v2945 = vpop.f32.mrb[0].mxu0
  %v2946 = vadd.f32 0.0, %v2945
  %v2947 = vpop.f32.mrb[0].mxu0
  %v2948 = vpop.f32.mrb[0].mxu0
  %v2949 = vadd.f32 0.0, %v2948
  %v2950 = vpop.f32.mrb[0].mxu0
  %2951 = vmatprep.mubr.bf16.mxu0 0
  %2952 = vmatmul.mubr.bf16.gmra.mrb[0].mxu0 %v2820
  %v2953 = vpop.f32.mrb[0].mxu0
  %v2954 = vadd.f32 0.0, %v2953
  %v2955 = vpop.f32.mrb[0].mxu0
  %v2956 = vpop.f32.mrb[0].mxu0
  %v2957 = vadd.f32 0.0, %v2956
  %v2958 = vpop.f32.mrb[0].mxu0
  %2959 = vmatprep.mubr.bf16.mxu0 0
  %2960 = vmatmul.mubr.bf16.gmra.mrb[0].mxu0 %v2823
  %v2961 = vpop.f32.mrb[0].mxu0
  %v2962 = vadd.f32 0.0, %v2961
  %v2963 = vpop.f32.mrb[0].mxu0
  %v2964 = vpop.f32.mrb[0].mxu0
  %v2965 = vadd.f32 0.0, %v2964
  %v2966 = vpop.f32.mrb[0].mxu0
  %2967 = vmatprep.mubr.bf16.mxu0 0
  %2968 = vmatmul.mubr.bf16.gmra.mrb[0].mxu0 %v2826
  %v2969 = vpop.f32.mrb[0].mxu0
  %v2970 = vadd.f32 0.0, %v2969
  %v2971 = vpop.f32.mrb[0].mxu0
  %v2972 = vpop.f32.mrb[0].mxu0
  %v2973 = vadd.f32 0.0, %v2972
  %v2974 = vpop.f32.mrb[0].mxu0
  %2975 = vmatprep.mubr.bf16.mxu0 0
  %2976 = vmatmul.mubr.bf16.gmra.mrb[0].mxu0 %v2829
  %v2977 = vpop.f32.mrb[0].mxu0
  %v2978 = vadd.f32 0.0, %v2977
  %v2979 = vpop.f32.mrb[0].mxu0
  %v2980 = vpop.f32.mrb[0].mxu0
  %v2981 = vadd.f32 0.0, %v2980
  %v2982 = vpop.f32.mrb[0].mxu0
  %2983 = vmatprep.mubr.bf16.mxu0 0
  %2984 = vmatmul.mubr.bf16.gmra.mrb[0].mxu0 %v2832
  %v2985 = vpop.f32.mrb[0].mxu0
  %v2986 = vadd.f32 0.0, %v2985
  %v2987 = vpop.f32.mrb[0].mxu0
  %v2988 = vpop.f32.mrb[0].mxu0
  %v2989 = vadd.f32 0.0, %v2988
  %v2990 = vpop.f32.mrb[0].mxu0
  %2991 = vmatprep.mubr.bf16.mxu0 0
  %2992 = vmatmul.mubr.bf16.gmra.mrb[0].mxu0 %v2835
  %v2993 = vpop.f32.mrb[0].mxu0
  %v2994 = vadd.f32 0.0, %v2993
  %v2995 = vpop.f32.mrb[0].mxu0
  %v2996 = vpop.f32.mrb[0].mxu0
  %v2997 = vadd.f32 0.0, %v2996
  %v2998 = vpop.f32.mrb[0].mxu0
  %2999 = vmatprep.mubr.bf16.mxu0 0
  %3000 = vmatmul.mubr.bf16.gmra.mrb[0].mxu0 %v2838
  %v3001 = vpop.f32.mrb[0].mxu0
  %v3002 = vadd.f32 0.0, %v3001
  %v3003 = vpop.f32.mrb[0].mxu0
  %v3004 = vpop.f32.mrb[0].mxu0
  %v3005 = vadd.f32 0.0, %v3004
  %v3006 = vpop.f32.mrb[0].mxu0
  %3007 = vmatprep.mubr.bf16.mxu0 0
  %3008 = vmatmul.mubr.bf16.gmra.mrb[0].mxu0 %v2841
  %v3009 = vpop.f32.mrb[0].mxu0
  %v3010 = vadd.f32 0.0, %v3009
  %v3011 = vpop.f32.mrb[0].mxu0
  %v3012 = vpop.f32.mrb[0].mxu0
  %v3013 = vadd.f32 0.0, %v3012
  %v3014 = vpop.f32.mrb[0].mxu0
  %3015 = vmatprep.mubr.bf16.mxu0 0
  %3016 = vmatmul.mubr.bf16.gmra.mrb[0].mxu0 %v2844
  %v3017 = vpop.f32.mrb[0].mxu0
  %v3018 = vadd.f32 0.0, %v3017
  %v3019 = vpop.f32.mrb[0].mxu0
  %v3020 = vpop.f32.mrb[0].mxu0
  %v3021 = vadd.f32 0.0, %v3020
  %v3022 = vpop.f32.mrb[0].mxu0
  %3023 = vmatprep.mubr.bf16.mxu0 0
  %3024 = vmatmul.mubr.bf16.gmra.mrb[0].mxu0 %v2847
  %v3025 = vpop.f32.mrb[0].mxu0
  %v3026 = vadd.f32 0.0, %v3025
  %v3027 = vpop.f32.mrb[0].mxu0
  %v3028 = vpop.f32.mrb[0].mxu0
  %v3029 = vadd.f32 0.0, %v3028
  %v3030 = vpop.f32.mrb[0].mxu0
  %3031 = vmatprep.mubr.bf16.mxu0 0
  %3032 = vmatmul.mubr.bf16.gmra.mrb[0].mxu0 %v2850
  %v3033 = vpop.f32.mrb[0].mxu0
  %v3034 = vadd.f32 0.0, %v3033
  %v3035 = vpop.f32.mrb[0].mxu0
  %v3036 = vpop.f32.mrb[0].mxu0
  %v3037 = vadd.f32 0.0, %v3036
  %v3038 = vpop.f32.mrb[0].mxu0
  %3039 = vmatprep.mubr.bf16.mxu0 0
  %3040 = vmatmul.mubr.bf16.gmra.mrb[0].mxu0 %v2853
  %v3041 = vpop.f32.mrb[0].mxu0
  %v3042 = vadd.f32 0.0, %v3041
  %v3043 = vpop.f32.mrb[0].mxu0
  %v3044 = vpop.f32.mrb[0].mxu0
  %v3045 = vadd.f32 0.0, %v3044
  %v3046 = vpop.f32.mrb[0].mxu0
  %3047 = vdwg.mxu0
  %3048 = vst.msk [vmem:[#allocation3] sm:$0xff] %vm797, %v2890
  %3049 = vst.msk [vmem:[#allocation3 + $0x8] sm:$0xff] %vm797, %v2893
  %3050 = vst.msk [vmem:[#allocation3 + $0x10] sm:$0xff] %vm797, %v2898
  %3051 = vst.msk [vmem:[#allocation3 + $0x18] sm:$0xff] %vm797, %v2901
  %3052 = vst.msk [vmem:[#allocation3 + $0x20] sm:$0xff] %vm797, %v2906
  %3053 = vst.msk [vmem:[#allocation3 + $0x28] sm:$0xff] %vm797, %v2909
  %3054 = vst.msk [vmem:[#allocation3 + $0x30] sm:$0xff] %vm797, %v2914
  %3055 = vst.msk [vmem:[#allocation3 + $0x38] sm:$0xff] %vm797, %v2917
  %3056 = vst.msk [vmem:[#allocation3 + $0x40] sm:$0xff] %vm797, %v2922
  %3057 = vst.msk [vmem:[#allocation3 + $0x48] sm:$0xff] %vm797, %v2925
  %3058 = vst.msk [vmem:[#allocation3 + $0x50] sm:$0xff] %vm797, %v2930
  %3059 = vst.msk [vmem:[#allocation3 + $0x58] sm:$0xff] %vm797, %v2933
  %3060 = vst.msk [vmem:[#allocation3 + $0x60] sm:$0xff] %vm797, %v2938
  %3061 = vst.msk [vmem:[#allocation3 + $0x68] sm:$0xff] %vm797, %v2941
  %3062 = vst.msk [vmem:[#allocation3 + $0x70] sm:$0xff] %vm797, %v2946
  %3063 = vst.msk [vmem:[#allocation3 + $0x78] sm:$0xff] %vm797, %v2949
  %3064 = vst.msk [vmem:[#allocation3 + $0x80] sm:$0xff] %vm797, %v2954
  %3065 = vst.msk [vmem:[#allocation3 + $0x88] sm:$0xff] %vm797, %v2957
  %3066 = vst.msk [vmem:[#allocation3 + $0x90] sm:$0xff] %vm797, %v2962
  %3067 = vst.msk [vmem:[#allocation3 + $0x98] sm:$0xff] %vm797, %v2965
  %3068 = vst.msk [vmem:[#allocation3 + $0xa0] sm:$0xff] %vm797, %v2970
  %3069 = vst.msk [vmem:[#allocation3 + $0xa8] sm:$0xff] %vm797, %v2973
  %3070 = vst.msk [vmem:[#allocation3 + $0xb0] sm:$0xff] %vm797, %v2978
  %3071 = vst.msk [vmem:[#allocation3 + $0xb8] sm:$0xff] %vm797, %v2981
  %3072 = vst.msk [vmem:[#allocation3 + $0xc0] sm:$0xff] %vm797, %v2986
  %3073 = vst.msk [vmem:[#allocation3 + $0xc8] sm:$0xff] %vm797, %v2989
  %3074 = vst.msk [vmem:[#allocation3 + $0xd0] sm:$0xff] %vm797, %v2994
  %3075 = vst.msk [vmem:[#allocation3 + $0xd8] sm:$0xff] %vm797, %v2997
  %3076 = vst.msk [vmem:[#allocation3 + $0xe0] sm:$0xff] %vm797, %v3002
  %3077 = vst.msk [vmem:[#allocation3 + $0xe8] sm:$0xff] %vm797, %v3005
  %3078 = vst.msk [vmem:[#allocation3 + $0xf0] sm:$0xff] %vm797, %v3010
  %3079 = vst.msk [vmem:[#allocation3 + $0xf8] sm:$0xff] %vm797, %v3013
  %3080 = vst.msk [vmem:[#allocation3 + $0x100] sm:$0xff] %vm797, %v3018
  %3081 = vst.msk [vmem:[#allocation3 + $0x108] sm:$0xff] %vm797, %v3021
  %3082 = vst.msk [vmem:[#allocation3 + $0x110] sm:$0xff] %vm797, %v3026
  %3083 = vst.msk [vmem:[#allocation3 + $0x118] sm:$0xff] %vm797, %v3029
  %3084 = vst.msk [vmem:[#allocation3 + $0x120] sm:$0xff] %vm797, %v3034
  %3085 = vst.msk [vmem:[#allocation3 + $0x128] sm:$0xff] %vm797, %v3037
  %3086 = vst.msk [vmem:[#allocation3 + $0x130] sm:$0xff] %vm797, %v3042
  %3087 = vst.msk [vmem:[#allocation3 + $0x138] sm:$0xff] %vm797, %v3045
  %v3088 = vld [vmem:[#allocation3] sm:$0xff]
  %v3089 = vld [vmem:[#allocation3 + $0x8] sm:$0xff]
  %v3090 = vld [vmem:[#allocation3 + $0x10] sm:$0xff]
  %v3091 = vld [vmem:[#allocation3 + $0x18] sm:$0xff]
  %v3092 = vld [vmem:[#allocation3 + $0x20] sm:$0xff]
  %v3093 = vld [vmem:[#allocation3 + $0x28] sm:$0xff]
  %v3094 = vld [vmem:[#allocation3 + $0x30] sm:$0xff]
  %v3095 = vld [vmem:[#allocation3 + $0x38] sm:$0xff]
  %v3096 = vld [vmem:[#allocation3 + $0x40] sm:$0xff]
  %v3097 = vld [vmem:[#allocation3 + $0x48] sm:$0xff]
  %v3098 = vld [vmem:[#allocation3 + $0x50] sm:$0xff]
  %v3099 = vld [vmem:[#allocation3 + $0x58] sm:$0xff]
  %v3100 = vld [vmem:[#allocation3 + $0x60] sm:$0xff]
  %v3101 = vld [vmem:[#allocation3 + $0x68] sm:$0xff]
  %v3102 = vld [vmem:[#allocation3 + $0x70] sm:$0xff]
  %v3103 = vld [vmem:[#allocation3 + $0x78] sm:$0xff]
  %v3104 = vld [vmem:[#allocation3 + $0xa0] sm:$0xff]
  %v3105 = vld [vmem:[#allocation3 + $0xa8] sm:$0xff]
  %v3106 = vld [vmem:[#allocation3 + $0xb0] sm:$0xff]
  %v3107 = vld [vmem:[#allocation3 + $0xb8] sm:$0xff]
  %v3108 = vld [vmem:[#allocation3 + $0xc0] sm:$0xff]
  %v3109 = vld [vmem:[#allocation3 + $0xc8] sm:$0xff]
  %v3110 = vld [vmem:[#allocation3 + $0xd0] sm:$0xff]
  %v3111 = vld [vmem:[#allocation3 + $0xd8] sm:$0xff]
  %v3112 = vld [vmem:[#allocation3 + $0xe0] sm:$0xff]
  %v3113 = vld [vmem:[#allocation3 + $0xe8] sm:$0xff]
  %v3114 = vld [vmem:[#allocation3 + $0xf0] sm:$0xff]
  %v3115 = vld [vmem:[#allocation3 + $0xf8] sm:$0xff]
  %v3116 = vld [vmem:[#allocation3 + $0x100] sm:$0xff]
  %v3117 = vld [vmem:[#allocation3 + $0x108] sm:$0xff]
  %v3118 = vld [vmem:[#allocation3 + $0x110] sm:$0xff]
  %v3119 = vld [vmem:[#allocation3 + $0x118] sm:$0x3f]
  %v3120 = vld [vmem:[#allocation3 + $0x1] sm:$0xff]
  %v3121 = vld [vmem:[#allocation3 + $0x9] sm:$0xff]
  %v3122 = vld [vmem:[#allocation3 + $0x11] sm:$0xff]
  %v3123 = vld [vmem:[#allocation3 + $0x19] sm:$0xff]
  %v3124 = vld [vmem:[#allocation3 + $0x21] sm:$0xff]
  %v3125 = vld [vmem:[#allocation3 + $0x29] sm:$0xff]
  %v3126 = vld [vmem:[#allocation3 + $0x31] sm:$0xff]
  %v3127 = vld [vmem:[#allocation3 + $0x39] sm:$0xff]
  %v3128 = vld [vmem:[#allocation3 + $0x41] sm:$0xff]
  %v3129 = vld [vmem:[#allocation3 + $0x49] sm:$0xff]
  %v3130 = vld [vmem:[#allocation3 + $0x51] sm:$0xff]
  %v3131 = vld [vmem:[#allocation3 + $0x59] sm:$0xff]
  %v3132 = vld [vmem:[#allocation3 + $0x61] sm:$0xff]
  %v3133 = vld [vmem:[#allocation3 + $0x69] sm:$0xff]
  %v3134 = vld [vmem:[#allocation3 + $0x71] sm:$0xff]
  %v3135 = vld [vmem:[#allocation3 + $0x79] sm:$0xff]
  %v3136 = vld [vmem:[#allocation3 + $0xa1] sm:$0xff]
  %v3137 = vld [vmem:[#allocation3 + $0xa9] sm:$0xff]
  %v3138 = vld [vmem:[#allocation3 + $0xb1] sm:$0xff]
  %v3139 = vld [vmem:[#allocation3 + $0xb9] sm:$0xff]
  %v3140 = vld [vmem:[#allocation3 + $0xc1] sm:$0xff]
  %v3141 = vld [vmem:[#allocation3 + $0xc9] sm:$0xff]
  %v3142 = vld [vmem:[#allocation3 + $0xd1] sm:$0xff]
  %v3143 = vld [vmem:[#allocation3 + $0xd9] sm:$0xff]
  %v3144 = vld [vmem:[#allocation3 + $0xe1] sm:$0xff]
  %v3145 = vld [vmem:[#allocation3 + $0xe9] sm:$0xff]
  %v3146 = vld [vmem:[#allocation3 + $0xf1] sm:$0xff]
  %v3147 = vld [vmem:[#allocation3 + $0xf9] sm:$0xff]
  %v3148 = vld [vmem:[#allocation3 + $0x101] sm:$0xff]
  %v3149 = vld [vmem:[#allocation3 + $0x109] sm:$0xff]
  %v3150 = vld [vmem:[#allocation3 + $0x111] sm:$0xff]
  %v3151 = vld [vmem:[#allocation3 + $0x119] sm:$0x3f]
  %3184 = vrot.lane.b32.xlu0 %v3120, 120
  %v3185 = vpop.permute.xlu0 %3184
  %3186 = vrot.lane.b32.xlu0 %v3121, 120
  %v3187 = vpop.permute.xlu0 %3186
  %3188 = vrot.lane.b32.xlu0 %v3122, 120
  %v3189 = vpop.permute.xlu0 %3188
  %3190 = vrot.lane.b32.xlu0 %v3123, 120
  %v3191 = vpop.permute.xlu0 %3190
  %3192 = vrot.lane.b32.xlu0 %v3124, 120
  %v3193 = vpop.permute.xlu0 %3192
  %3194 = vrot.lane.b32.xlu0 %v3125, 120
  %v3195 = vpop.permute.xlu0 %3194
  %3196 = vrot.lane.b32.xlu0 %v3126, 120
  %v3197 = vpop.permute.xlu0 %3196
  %3198 = vrot.lane.b32.xlu0 %v3127, 120
  %v3199 = vpop.permute.xlu0 %3198
  %3200 = vrot.lane.b32.xlu0 %v3128, 120
  %v3201 = vpop.permute.xlu0 %3200
  %3202 = vrot.lane.b32.xlu0 %v3129, 120
  %v3203 = vpop.permute.xlu0 %3202
  %3204 = vrot.lane.b32.xlu0 %v3130, 120
  %v3205 = vpop.permute.xlu0 %3204
  %3206 = vrot.lane.b32.xlu0 %v3131, 120
  %v3207 = vpop.permute.xlu0 %3206
  %3208 = vrot.lane.b32.xlu0 %v3132, 120
  %v3209 = vpop.permute.xlu0 %3208
  %3210 = vrot.lane.b32.xlu0 %v3133, 120
  %v3211 = vpop.permute.xlu0 %3210
  %3212 = vrot.lane.b32.xlu0 %v3134, 120
  %v3213 = vpop.permute.xlu0 %3212
  %3214 = vrot.lane.b32.xlu0 %v3135, 120
  %v3215 = vpop.permute.xlu0 %3214
  %3216 = vrot.lane.b32.xlu0 %v3136, 120
  %v3217 = vpop.permute.xlu0 %3216
  %3218 = vrot.lane.b32.xlu0 %v3137, 120
  %v3219 = vpop.permute.xlu0 %3218
  %3220 = vrot.lane.b32.xlu0 %v3138, 120
  %v3221 = vpop.permute.xlu0 %3220
  %3222 = vrot.lane.b32.xlu0 %v3139, 120
  %v3223 = vpop.permute.xlu0 %3222
  %3224 = vrot.lane.b32.xlu0 %v3140, 120
  %v3225 = vpop.permute.xlu0 %3224
  %3226 = vrot.lane.b32.xlu0 %v3141, 120
  %v3227 = vpop.permute.xlu0 %3226
  %3228 = vrot.lane.b32.xlu0 %v3142, 120
  %v3229 = vpop.permute.xlu0 %3228
  %3230 = vrot.lane.b32.xlu0 %v3143, 120
  %v3231 = vpop.permute.xlu0 %3230
  %3232 = vrot.lane.b32.xlu0 %v3144, 120
  %v3233 = vpop.permute.xlu0 %3232
  %3234 = vrot.lane.b32.xlu0 %v3145, 120
  %v3235 = vpop.permute.xlu0 %3234
  %3236 = vrot.lane.b32.xlu0 %v3146, 120
  %v3237 = vpop.permute.xlu0 %3236
  %3238 = vrot.lane.b32.xlu0 %v3147, 120
  %v3239 = vpop.permute.xlu0 %3238
  %3240 = vrot.lane.b32.xlu0 %v3148, 120
  %v3241 = vpop.permute.xlu0 %3240
  %3242 = vrot.lane.b32.xlu0 %v3149, 120
  %v3243 = vpop.permute.xlu0 %3242
  %3244 = vrot.lane.b32.xlu0 %v3150, 120
  %v3245 = vpop.permute.xlu0 %3244
  %3246 = vrot.lane.b32.xlu0 %v3151, 120
  %v3247 = vpop.permute.xlu0 %3246
  %v3280 = vadd.f32 %v3088, %v3185
  %v3281 = vadd.f32 %v3089, %v3187
  %v3282 = vadd.f32 %v3090, %v3189
  %v3283 = vadd.f32 %v3091, %v3191
  %v3284 = vadd.f32 %v3092, %v3193
  %v3285 = vadd.f32 %v3093, %v3195
  %v3286 = vadd.f32 %v3094, %v3197
  %v3287 = vadd.f32 %v3095, %v3199
  %v3288 = vadd.f32 %v3096, %v3201
  %v3289 = vadd.f32 %v3097, %v3203
  %v3290 = vadd.f32 %v3098, %v3205
  %v3291 = vadd.f32 %v3099, %v3207
  %v3292 = vadd.f32 %v3100, %v3209
  %v3293 = vadd.f32 %v3101, %v3211
  %v3294 = vadd.f32 %v3102, %v3213
  %v3295 = vadd.f32 %v3103, %v3215
  %v3296 = vadd.f32 %v3104, %v3217
  %v3297 = vadd.f32 %v3105, %v3219
  %v3298 = vadd.f32 %v3106, %v3221
  %v3299 = vadd.f32 %v3107, %v3223
  %v3300 = vadd.f32 %v3108, %v3225
  %v3301 = vadd.f32 %v3109, %v3227
  %v3302 = vadd.f32 %v3110, %v3229
  %v3303 = vadd.f32 %v3111, %v3231
  %v3304 = vadd.f32 %v3112, %v3233
  %v3305 = vadd.f32 %v3113, %v3235
  %v3306 = vadd.f32 %v3114, %v3237
  %v3307 = vadd.f32 %v3115, %v3239
  %v3308 = vadd.f32 %v3116, %v3241
  %v3309 = vadd.f32 %v3117, %v3243
  %v3310 = vadd.f32 %v3118, %v3245
  %v3311 = vadd.f32 %v3119, %v3247
  %v3312 = vld [vmem:[#allocation3 + $0x2] sm:$0xff]
  %v3313 = vld [vmem:[#allocation3 + $0xa] sm:$0xff]
  %v3314 = vld [vmem:[#allocation3 + $0x12] sm:$0xff]
  %v3315 = vld [vmem:[#allocation3 + $0x1a] sm:$0xff]
  %v3316 = vld [vmem:[#allocation3 + $0x22] sm:$0xff]
  %v3317 = vld [vmem:[#allocation3 + $0x2a] sm:$0xff]
  %v3318 = vld [vmem:[#allocation3 + $0x32] sm:$0xff]
  %v3319 = vld [vmem:[#allocation3 + $0x3a] sm:$0xff]
  %v3320 = vld [vmem:[#allocation3 + $0x42] sm:$0xff]
  %v3321 = vld [vmem:[#allocation3 + $0x4a] sm:$0xff]
  %v3322 = vld [vmem:[#allocation3 + $0x52] sm:$0xff]
  %v3323 = vld [vmem:[#allocation3 + $0x5a] sm:$0xff]
  %v3324 = vld [vmem:[#allocation3 + $0x62] sm:$0xff]
  %v3325 = vld [vmem:[#allocation3 + $0x6a] sm:$0xff]
  %v3326 = vld [vmem:[#allocation3 + $0x72] sm:$0xff]
  %v3327 = vld [vmem:[#allocation3 + $0x7a] sm:$0xff]
  %v3328 = vld [vmem:[#allocation3 + $0xa2] sm:$0xff]
  %v3329 = vld [vmem:[#allocation3 + $0xaa] sm:$0xff]
  %v3330 = vld [vmem:[#allocation3 + $0xb2] sm:$0xff]
  %v3331 = vld [vmem:[#allocation3 + $0xba] sm:$0xff]
  %v3332 = vld [vmem:[#allocation3 + $0xc2] sm:$0xff]
  %v3333 = vld [vmem:[#allocation3 + $0xca] sm:$0xff]
  %v3334 = vld [vmem:[#allocation3 + $0xd2] sm:$0xff]
  %v3335 = vld [vmem:[#allocation3 + $0xda] sm:$0xff]
  %v3336 = vld [vmem:[#allocation3 + $0xe2] sm:$0xff]
  %v3337 = vld [vmem:[#allocation3 + $0xea] sm:$0xff]
  %v3338 = vld [vmem:[#allocation3 + $0xf2] sm:$0xff]
  %v3339 = vld [vmem:[#allocation3 + $0xfa] sm:$0xff]
  %v3340 = vld [vmem:[#allocation3 + $0x102] sm:$0xff]
  %v3341 = vld [vmem:[#allocation3 + $0x10a] sm:$0xff]
  %v3342 = vld [vmem:[#allocation3 + $0x112] sm:$0xff]
  %v3343 = vld [vmem:[#allocation3 + $0x11a] sm:$0x3f]
  %3376 = vrot.lane.b32.xlu0 %v3312, 112
  %v3377 = vpop.permute.xlu0 %3376
  %3378 = vrot.lane.b32.xlu0 %v3313, 112
  %v3379 = vpop.permute.xlu0 %3378
  %3380 = vrot.lane.b32.xlu0 %v3314, 112
  %v3381 = vpop.permute.xlu0 %3380
  %3382 = vrot.lane.b32.xlu0 %v3315, 112
  %v3383 = vpop.permute.xlu0 %3382
  %3384 = vrot.lane.b32.xlu0 %v3316, 112
  %v3385 = vpop.permute.xlu0 %3384
  %3386 = vrot.lane.b32.xlu0 %v3317, 112
  %v3387 = vpop.permute.xlu0 %3386
  %3388 = vrot.lane.b32.xlu0 %v3318, 112
  %v3389 = vpop.permute.xlu0 %3388
  %3390 = vrot.lane.b32.xlu0 %v3319, 112
  %v3391 = vpop.permute.xlu0 %3390
  %3392 = vrot.lane.b32.xlu0 %v3320, 112
  %v3393 = vpop.permute.xlu0 %3392
  %3394 = vrot.lane.b32.xlu0 %v3321, 112
  %v3395 = vpop.permute.xlu0 %3394
  %3396 = vrot.lane.b32.xlu0 %v3322, 112
  %v3397 = vpop.permute.xlu0 %3396
  %3398 = vrot.lane.b32.xlu0 %v3323, 112
  %v3399 = vpop.permute.xlu0 %3398
  %3400 = vrot.lane.b32.xlu0 %v3324, 112
  %v3401 = vpop.permute.xlu0 %3400
  %3402 = vrot.lane.b32.xlu0 %v3325, 112
  %v3403 = vpop.permute.xlu0 %3402
  %3404 = vrot.lane.b32.xlu0 %v3326, 112
  %v3405 = vpop.permute.xlu0 %3404
  %3406 = vrot.lane.b32.xlu0 %v3327, 112
  %v3407 = vpop.permute.xlu0 %3406
  %3408 = vrot.lane.b32.xlu0 %v3328, 112
  %v3409 = vpop.permute.xlu0 %3408
  %3410 = vrot.lane.b32.xlu0 %v3329, 112
  %v3411 = vpop.permute.xlu0 %3410
  %3412 = vrot.lane.b32.xlu0 %v3330, 112
  %v3413 = vpop.permute.xlu0 %3412
  %3414 = vrot.lane.b32.xlu0 %v3331, 112
  %v3415 = vpop.permute.xlu0 %3414
  %3416 = vrot.lane.b32.xlu0 %v3332, 112
  %v3417 = vpop.permute.xlu0 %3416
  %3418 = vrot.lane.b32.xlu0 %v3333, 112
  %v3419 = vpop.permute.xlu0 %3418
  %3420 = vrot.lane.b32.xlu0 %v3334, 112
  %v3421 = vpop.permute.xlu0 %3420
  %3422 = vrot.lane.b32.xlu0 %v3335, 112
  %v3423 = vpop.permute.xlu0 %3422
  %3424 = vrot.lane.b32.xlu0 %v3336, 112
  %v3425 = vpop.permute.xlu0 %3424
  %3426 = vrot.lane.b32.xlu0 %v3337, 112
  %v3427 = vpop.permute.xlu0 %3426
  %3428 = vrot.lane.b32.xlu0 %v3338, 112
  %v3429 = vpop.permute.xlu0 %3428
  %3430 = vrot.lane.b32.xlu0 %v3339, 112
  %v3431 = vpop.permute.xlu0 %3430
  %3432 = vrot.lane.b32.xlu0 %v3340, 112
  %v3433 = vpop.permute.xlu0 %3432
  %3434 = vrot.lane.b32.xlu0 %v3341, 112
  %v3435 = vpop.permute.xlu0 %3434
  %3436 = vrot.lane.b32.xlu0 %v3342, 112
  %v3437 = vpop.permute.xlu0 %3436
  %3438 = vrot.lane.b32.xlu0 %v3343, 112
  %v3439 = vpop.permute.xlu0 %3438
  %v3472 = vadd.f32 %v3280, %v3377
  %v3473 = vadd.f32 %v3281, %v3379
  %v3474 = vadd.f32 %v3282, %v3381
  %v3475 = vadd.f32 %v3283, %v3383
  %v3476 = vadd.f32 %v3284, %v3385
  %v3477 = vadd.f32 %v3285, %v3387
  %v3478 = vadd.f32 %v3286, %v3389
  %v3479 = vadd.f32 %v3287, %v3391
  %v3480 = vadd.f32 %v3288, %v3393
  %v3481 = vadd.f32 %v3289, %v3395
  %v3482 = vadd.f32 %v3290, %v3397
  %v3483 = vadd.f32 %v3291, %v3399
  %v3484 = vadd.f32 %v3292, %v3401
  %v3485 = vadd.f32 %v3293, %v3403
  %v3486 = vadd.f32 %v3294, %v3405
  %v3487 = vadd.f32 %v3295, %v3407
  %v3488 = vadd.f32 %v3296, %v3409
  %v3489 = vadd.f32 %v3297, %v3411
  %v3490 = vadd.f32 %v3298, %v3413
  %v3491 = vadd.f32 %v3299, %v3415
  %v3492 = vadd.f32 %v3300, %v3417
  %v3493 = vadd.f32 %v3301, %v3419
  %v3494 = vadd.f32 %v3302, %v3421
  %v3495 = vadd.f32 %v3303, %v3423
  %v3496 = vadd.f32 %v3304, %v3425
  %v3497 = vadd.f32 %v3305, %v3427
  %v3498 = vadd.f32 %v3306, %v3429
  %v3499 = vadd.f32 %v3307, %v3431
  %v3500 = vadd.f32 %v3308, %v3433
  %v3501 = vadd.f32 %v3309, %v3435
  %v3502 = vadd.f32 %v3310, %v3437
  %v3503 = vadd.f32 %v3311, %v3439
  %v3504 = vld [vmem:[#allocation3 + $0x80] sm:$0xff]
  %v3505 = vld [vmem:[#allocation3 + $0x88] sm:$0xff]
  %v3506 = vld [vmem:[#allocation3 + $0x118] sm:$0xff]
  %v3507 = vld [vmem:[#allocation3 + $0x120] sm:$0xff]
  %v3508 = vld [vmem:[#allocation3 + $0x128] sm:$0x3f]
  %3541 = vrot.lane.b32.xlu0 %v3090, 104
  %v3542 = vpop.permute.xlu0 %3541
  %3543 = vrot.lane.b32.xlu0 %v3091, 104
  %v3544 = vpop.permute.xlu0 %3543
  %3545 = vrot.lane.b32.xlu0 %v3092, 104
  %v3546 = vpop.permute.xlu0 %3545
  %3547 = vrot.lane.b32.xlu0 %v3093, 104
  %v3548 = vpop.permute.xlu0 %3547
  %3549 = vrot.lane.b32.xlu0 %v3094, 104
  %v3550 = vpop.permute.xlu0 %3549
  %3551 = vrot.lane.b32.xlu0 %v3095, 104
  %v3552 = vpop.permute.xlu0 %3551
  %3553 = vrot.lane.b32.xlu0 %v3096, 104
  %v3554 = vpop.permute.xlu0 %3553
  %3555 = vrot.lane.b32.xlu0 %v3097, 104
  %v3556 = vpop.permute.xlu0 %3555
  %3557 = vrot.lane.b32.xlu0 %v3098, 104
  %v3558 = vpop.permute.xlu0 %3557
  %3559 = vrot.lane.b32.xlu0 %v3099, 104
  %v3560 = vpop.permute.xlu0 %3559
  %3561 = vrot.lane.b32.xlu0 %v3100, 104
  %v3562 = vpop.permute.xlu0 %3561
  %3563 = vrot.lane.b32.xlu0 %v3101, 104
  %v3564 = vpop.permute.xlu0 %3563
  %3565 = vrot.lane.b32.xlu0 %v3102, 104
  %v3566 = vpop.permute.xlu0 %3565
  %3567 = vrot.lane.b32.xlu0 %v3103, 104
  %v3568 = vpop.permute.xlu0 %3567
  %3569 = vrot.lane.b32.xlu0 %v3504, 104
  %v3570 = vpop.permute.xlu0 %3569
  %3571 = vrot.lane.b32.xlu0 %v3505, 104
  %v3572 = vpop.permute.xlu0 %3571
  %3573 = vrot.lane.b32.xlu0 %v3106, 104
  %v3574 = vpop.permute.xlu0 %3573
  %3575 = vrot.lane.b32.xlu0 %v3107, 104
  %v3576 = vpop.permute.xlu0 %3575
  %3577 = vrot.lane.b32.xlu0 %v3108, 104
  %v3578 = vpop.permute.xlu0 %3577
  %3579 = vrot.lane.b32.xlu0 %v3109, 104
  %v3580 = vpop.permute.xlu0 %3579
  %3581 = vrot.lane.b32.xlu0 %v3110, 104
  %v3582 = vpop.permute.xlu0 %3581
  %3583 = vrot.lane.b32.xlu0 %v3111, 104
  %v3584 = vpop.permute.xlu0 %3583
  %3585 = vrot.lane.b32.xlu0 %v3112, 104
  %v3586 = vpop.permute.xlu0 %3585
  %3587 = vrot.lane.b32.xlu0 %v3113, 104
  %v3588 = vpop.permute.xlu0 %3587
  %3589 = vrot.lane.b32.xlu0 %v3114, 104
  %v3590 = vpop.permute.xlu0 %3589
  %3591 = vrot.lane.b32.xlu0 %v3115, 104
  %v3592 = vpop.permute.xlu0 %3591
  %3593 = vrot.lane.b32.xlu0 %v3116, 104
  %v3594 = vpop.permute.xlu0 %3593
  %3595 = vrot.lane.b32.xlu0 %v3117, 104
  %v3596 = vpop.permute.xlu0 %3595
  %3597 = vrot.lane.b32.xlu0 %v3118, 104
  %v3598 = vpop.permute.xlu0 %3597
  %3599 = vrot.lane.b32.xlu0 %v3506, 104
  %v3600 = vpop.permute.xlu0 %3599
  %3601 = vrot.lane.b32.xlu0 %v3507, 104
  %v3602 = vpop.permute.xlu0 %3601
  %3603 = vrot.lane.b32.xlu0 %v3508, 104
  %v3604 = vpop.permute.xlu0 %3603
  %v3637 = vadd.f32 %v3472, %v3542
  %v3638 = vadd.f32 %v3473, %v3544
  %v3639 = vadd.f32 %v3474, %v3546
  %v3640 = vadd.f32 %v3475, %v3548
  %v3641 = vadd.f32 %v3476, %v3550
  %v3642 = vadd.f32 %v3477, %v3552
  %v3643 = vadd.f32 %v3478, %v3554
  %v3644 = vadd.f32 %v3479, %v3556
  %v3645 = vadd.f32 %v3480, %v3558
  %v3646 = vadd.f32 %v3481, %v3560
  %v3647 = vadd.f32 %v3482, %v3562
  %v3648 = vadd.f32 %v3483, %v3564
  %v3649 = vadd.f32 %v3484, %v3566
  %v3650 = vadd.f32 %v3485, %v3568
  %v3651 = vadd.f32 %v3486, %v3570
  %v3652 = vadd.f32 %v3487, %v3572
  %v3653 = vadd.f32 %v3488, %v3574
  %v3654 = vadd.f32 %v3489, %v3576
  %v3655 = vadd.f32 %v3490, %v3578
  %v3656 = vadd.f32 %v3491, %v3580
  %v3657 = vadd.f32 %v3492, %v3582
  %v3658 = vadd.f32 %v3493, %v3584
  %v3659 = vadd.f32 %v3494, %v3586
  %v3660 = vadd.f32 %v3495, %v3588
  %v3661 = vadd.f32 %v3496, %v3590
  %v3662 = vadd.f32 %v3497, %v3592
  %v3663 = vadd.f32 %v3498, %v3594
  %v3664 = vadd.f32 %v3499, %v3596
  %v3665 = vadd.f32 %v3500, %v3598
  %v3666 = vadd.f32 %v3501, %v3600
  %v3667 = vadd.f32 %v3502, %v3602
  %v3668 = vadd.f32 %v3503, %v3604
  %v3669 = vld [vmem:[#allocation3 + $0x81] sm:$0xff]
  %v3670 = vld [vmem:[#allocation3 + $0x89] sm:$0xff]
  %v3671 = vld [vmem:[#allocation3 + $0x119] sm:$0xff]
  %v3672 = vld [vmem:[#allocation3 + $0x121] sm:$0xff]
  %v3673 = vld [vmem:[#allocation3 + $0x129] sm:$0x3f]
  %3679 = vrot.lane.b32.xlu0 %v3122, 96
  %v3680 = vpop.permute.xlu0 %3679
  %3681 = vrot.lane.b32.xlu0 %v3123, 96
  %v3682 = vpop.permute.xlu0 %3681
  %3683 = vrot.lane.b32.xlu0 %v3124, 96
  %v3684 = vpop.permute.xlu0 %3683
  %3685 = vrot.lane.b32.xlu0 %v3125, 96
  %v3686 = vpop.permute.xlu0 %3685
  %3687 = vrot.lane.b32.xlu0 %v3126, 96
  %v3688 = vpop.permute.xlu0 %3687
  %3689 = vrot.lane.b32.xlu0 %v3127, 96
  %v3690 = vpop.permute.xlu0 %3689
  %3691 = vrot.lane.b32.xlu0 %v3128, 96
  %v3692 = vpop.permute.xlu0 %3691
  %3693 = vrot.lane.b32.xlu0 %v3129, 96
  %v3694 = vpop.permute.xlu0 %3693
  %3695 = vrot.lane.b32.xlu0 %v3130, 96
  %v3696 = vpop.permute.xlu0 %3695
  %3697 = vrot.lane.b32.xlu0 %v3131, 96
  %v3698 = vpop.permute.xlu0 %3697
  %3699 = vrot.lane.b32.xlu0 %v3132, 96
  %v3700 = vpop.permute.xlu0 %3699
  %3701 = vrot.lane.b32.xlu0 %v3133, 96
  %v3702 = vpop.permute.xlu0 %3701
  %3703 = vrot.lane.b32.xlu0 %v3134, 96
  %v3704 = vpop.permute.xlu0 %3703
  %3705 = vrot.lane.b32.xlu0 %v3135, 96
  %v3706 = vpop.permute.xlu0 %3705
  %3707 = vrot.lane.b32.xlu0 %v3669, 96
  %v3708 = vpop.permute.xlu0 %3707
  %3709 = vrot.lane.b32.xlu0 %v3670, 96
  %v3710 = vpop.permute.xlu0 %3709
  %3711 = vrot.lane.b32.xlu0 %v3138, 96
  %v3712 = vpop.permute.xlu0 %3711
  %3713 = vrot.lane.b32.xlu0 %v3139, 96
  %v3714 = vpop.permute.xlu0 %3713
  %3715 = vrot.lane.b32.xlu0 %v3140, 96
  %v3716 = vpop.permute.xlu0 %3715
  %3717 = vrot.lane.b32.xlu0 %v3141, 96
  %v3718 = vpop.permute.xlu0 %3717
  %3719 = vrot.lane.b32.xlu0 %v3142, 96
  %v3720 = vpop.permute.xlu0 %3719
  %3721 = vrot.lane.b32.xlu0 %v3143, 96
  %v3722 = vpop.permute.xlu0 %3721
  %3723 = vrot.lane.b32.xlu0 %v3144, 96
  %v3724 = vpop.permute.xlu0 %3723
  %3725 = vrot.lane.b32.xlu0 %v3145, 96
  %v3726 = vpop.permute.xlu0 %3725
  %3727 = vrot.lane.b32.xlu0 %v3146, 96
  %v3728 = vpop.permute.xlu0 %3727
  %3729 = vrot.lane.b32.xlu0 %v3147, 96
  %v3730 = vpop.permute.xlu0 %3729
  %3731 = vrot.lane.b32.xlu0 %v3148, 96
  %v3732 = vpop.permute.xlu0 %3731
  %3733 = vrot.lane.b32.xlu0 %v3149, 96
  %v3734 = vpop.permute.xlu0 %3733
  %3735 = vrot.lane.b32.xlu0 %v3150, 96
  %v3736 = vpop.permute.xlu0 %3735
  %3737 = vrot.lane.b32.xlu0 %v3671, 96
  %v3738 = vpop.permute.xlu0 %3737
  %3739 = vrot.lane.b32.xlu0 %v3672, 96
  %v3740 = vpop.permute.xlu0 %3739
  %3741 = vrot.lane.b32.xlu0 %v3673, 96
  %v3742 = vpop.permute.xlu0 %3741
  %v3775 = vadd.f32 %v3637, %v3680
  %v3776 = vadd.f32 %v3638, %v3682
  %v3777 = vadd.f32 %v3639, %v3684
  %v3778 = vadd.f32 %v3640, %v3686
  %v3779 = vadd.f32 %v3641, %v3688
  %v3780 = vadd.f32 %v3642, %v3690
  %v3781 = vadd.f32 %v3643, %v3692
  %v3782 = vadd.f32 %v3644, %v3694
  %v3783 = vadd.f32 %v3645, %v3696
  %v3784 = vadd.f32 %v3646, %v3698
  %v3785 = vadd.f32 %v3647, %v3700
  %v3786 = vadd.f32 %v3648, %v3702
  %v3787 = vadd.f32 %v3649, %v3704
  %v3788 = vadd.f32 %v3650, %v3706
  %v3789 = vadd.f32 %v3651, %v3708
  %v3790 = vadd.f32 %v3652, %v3710
  %v3791 = vadd.f32 %v3653, %v3712
  %v3792 = vadd.f32 %v3654, %v3714
  %v3793 = vadd.f32 %v3655, %v3716
  %v3794 = vadd.f32 %v3656, %v3718
  %v3795 = vadd.f32 %v3657, %v3720
  %v3796 = vadd.f32 %v3658, %v3722
  %v3797 = vadd.f32 %v3659, %v3724
  %v3798 = vadd.f32 %v3660, %v3726
  %v3799 = vadd.f32 %v3661, %v3728
  %v3800 = vadd.f32 %v3662, %v3730
  %v3801 = vadd.f32 %v3663, %v3732
  %v3802 = vadd.f32 %v3664, %v3734
  %v3803 = vadd.f32 %v3665, %v3736
  %v3804 = vadd.f32 %v3666, %v3738
  %v3805 = vadd.f32 %v3667, %v3740
  %v3806 = vadd.f32 %v3668, %v3742
  %v3807 = vld [vmem:[#allocation3 + $0x82] sm:$0xff]
  %v3808 = vld [vmem:[#allocation3 + $0x8a] sm:$0xff]
  %v3809 = vld [vmem:[#allocation3 + $0x11a] sm:$0xff]
  %v3810 = vld [vmem:[#allocation3 + $0x122] sm:$0xff]
  %v3811 = vld [vmem:[#allocation3 + $0x12a] sm:$0x3f]
  %3817 = vrot.lane.b32.xlu0 %v3314, 88
  %v3818 = vpop.permute.xlu0 %3817
  %3819 = vrot.lane.b32.xlu0 %v3315, 88
  %v3820 = vpop.permute.xlu0 %3819
  %3821 = vrot.lane.b32.xlu0 %v3316, 88
  %v3822 = vpop.permute.xlu0 %3821
  %3823 = vrot.lane.b32.xlu0 %v3317, 88
  %v3824 = vpop.permute.xlu0 %3823
  %3825 = vrot.lane.b32.xlu0 %v3318, 88
  %v3826 = vpop.permute.xlu0 %3825
  %3827 = vrot.lane.b32.xlu0 %v3319, 88
  %v3828 = vpop.permute.xlu0 %3827
  %3829 = vrot.lane.b32.xlu0 %v3320, 88
  %v3830 = vpop.permute.xlu0 %3829
  %3831 = vrot.lane.b32.xlu0 %v3321, 88
  %v3832 = vpop.permute.xlu0 %3831
  %3833 = vrot.lane.b32.xlu0 %v3322, 88
  %v3834 = vpop.permute.xlu0 %3833
  %3835 = vrot.lane.b32.xlu0 %v3323, 88
  %v3836 = vpop.permute.xlu0 %3835
  %3837 = vrot.lane.b32.xlu0 %v3324, 88
  %v3838 = vpop.permute.xlu0 %3837
  %3839 = vrot.lane.b32.xlu0 %v3325, 88
  %v3840 = vpop.permute.xlu0 %3839
  %3841 = vrot.lane.b32.xlu0 %v3326, 88
  %v3842 = vpop.permute.xlu0 %3841
  %3843 = vrot.lane.b32.xlu0 %v3327, 88
  %v3844 = vpop.permute.xlu0 %3843
  %3845 = vrot.lane.b32.xlu0 %v3807, 88
  %v3846 = vpop.permute.xlu0 %3845
  %3847 = vrot.lane.b32.xlu0 %v3808, 88
  %v3848 = vpop.permute.xlu0 %3847
  %3849 = vrot.lane.b32.xlu0 %v3330, 88
  %v3850 = vpop.permute.xlu0 %3849
  %3851 = vrot.lane.b32.xlu0 %v3331, 88
  %v3852 = vpop.permute.xlu0 %3851
  %3853 = vrot.lane.b32.xlu0 %v3332, 88
  %v3854 = vpop.permute.xlu0 %3853
  %3855 = vrot.lane.b32.xlu0 %v3333, 88
  %v3856 = vpop.permute.xlu0 %3855
  %3857 = vrot.lane.b32.xlu0 %v3334, 88
  %v3858 = vpop.permute.xlu0 %3857
  %3859 = vrot.lane.b32.xlu0 %v3335, 88
  %v3860 = vpop.permute.xlu0 %3859
  %3861 = vrot.lane.b32.xlu0 %v3336, 88
  %v3862 = vpop.permute.xlu0 %3861
  %3863 = vrot.lane.b32.xlu0 %v3337, 88
  %v3864 = vpop.permute.xlu0 %3863
  %3865 = vrot.lane.b32.xlu0 %v3338, 88
  %v3866 = vpop.permute.xlu0 %3865
  %3867 = vrot.lane.b32.xlu0 %v3339, 88
  %v3868 = vpop.permute.xlu0 %3867
  %3869 = vrot.lane.b32.xlu0 %v3340, 88
  %v3870 = vpop.permute.xlu0 %3869
  %3871 = vrot.lane.b32.xlu0 %v3341, 88
  %v3872 = vpop.permute.xlu0 %3871
  %3873 = vrot.lane.b32.xlu0 %v3342, 88
  %v3874 = vpop.permute.xlu0 %3873
  %3875 = vrot.lane.b32.xlu0 %v3809, 88
  %v3876 = vpop.permute.xlu0 %3875
  %3877 = vrot.lane.b32.xlu0 %v3810, 88
  %v3878 = vpop.permute.xlu0 %3877
  %3879 = vrot.lane.b32.xlu0 %v3811, 88
  %v3880 = vpop.permute.xlu0 %3879
  %v3913 = vadd.f32 %v3775, %v3818
  %v3914 = vadd.f32 %v3776, %v3820
  %v3915 = vadd.f32 %v3777, %v3822
  %v3916 = vadd.f32 %v3778, %v3824
  %v3917 = vadd.f32 %v3779, %v3826
  %v3918 = vadd.f32 %v3780, %v3828
  %v3919 = vadd.f32 %v3781, %v3830
  %v3920 = vadd.f32 %v3782, %v3832
  %v3921 = vadd.f32 %v3783, %v3834
  %v3922 = vadd.f32 %v3784, %v3836
  %v3923 = vadd.f32 %v3785, %v3838
  %v3924 = vadd.f32 %v3786, %v3840
  %v3925 = vadd.f32 %v3787, %v3842
  %v3926 = vadd.f32 %v3788, %v3844
  %v3927 = vadd.f32 %v3789, %v3846
  %v3928 = vadd.f32 %v3790, %v3848
  %v3929 = vadd.f32 %v3791, %v3850
  %v3930 = vadd.f32 %v3792, %v3852
  %v3931 = vadd.f32 %v3793, %v3854
  %v3932 = vadd.f32 %v3794, %v3856
  %v3933 = vadd.f32 %v3795, %v3858
  %v3934 = vadd.f32 %v3796, %v3860
  %v3935 = vadd.f32 %v3797, %v3862
  %v3936 = vadd.f32 %v3798, %v3864
  %v3937 = vadd.f32 %v3799, %v3866
  %v3938 = vadd.f32 %v3800, %v3868
  %v3939 = vadd.f32 %v3801, %v3870
  %v3940 = vadd.f32 %v3802, %v3872
  %v3941 = vadd.f32 %v3803, %v3874
  %v3942 = vadd.f32 %v3804, %v3876
  %v3943 = vadd.f32 %v3805, %v3878
  %v3944 = vadd.f32 %v3806, %v3880
  %v3945 = vld [vmem:[#allocation3 + $0x90] sm:$0xff]
  %v3946 = vld [vmem:[#allocation3 + $0x98] sm:$0xff]
  %v3947 = vld [vmem:[#allocation3 + $0x128] sm:$0xff]
  %v3948 = vld [vmem:[#allocation3 + $0x130] sm:$0xff]
  %v3949 = vld [vmem:[#allocation3 + $0x138] sm:$0x3f]
  %3955 = vrot.lane.b32.xlu0 %v3092, 80
  %v3956 = vpop.permute.xlu0 %3955
  %3957 = vrot.lane.b32.xlu0 %v3093, 80
  %v3958 = vpop.permute.xlu0 %3957
  %3959 = vrot.lane.b32.xlu0 %v3094, 80
  %v3960 = vpop.permute.xlu0 %3959
  %3961 = vrot.lane.b32.xlu0 %v3095, 80
  %v3962 = vpop.permute.xlu0 %3961
  %3963 = vrot.lane.b32.xlu0 %v3096, 80
  %v3964 = vpop.permute.xlu0 %3963
  %3965 = vrot.lane.b32.xlu0 %v3097, 80
  %v3966 = vpop.permute.xlu0 %3965
  %3967 = vrot.lane.b32.xlu0 %v3098, 80
  %v3968 = vpop.permute.xlu0 %3967
  %3969 = vrot.lane.b32.xlu0 %v3099, 80
  %v3970 = vpop.permute.xlu0 %3969
  %3971 = vrot.lane.b32.xlu0 %v3100, 80
  %v3972 = vpop.permute.xlu0 %3971
  %3973 = vrot.lane.b32.xlu0 %v3101, 80
  %v3974 = vpop.permute.xlu0 %3973
  %3975 = vrot.lane.b32.xlu0 %v3102, 80
  %v3976 = vpop.permute.xlu0 %3975
  %3977 = vrot.lane.b32.xlu0 %v3103, 80
  %v3978 = vpop.permute.xlu0 %3977
  %3979 = vrot.lane.b32.xlu0 %v3504, 80
  %v3980 = vpop.permute.xlu0 %3979
  %3981 = vrot.lane.b32.xlu0 %v3505, 80
  %v3982 = vpop.permute.xlu0 %3981
  %3983 = vrot.lane.b32.xlu0 %v3945, 80
  %v3984 = vpop.permute.xlu0 %3983
  %3985 = vrot.lane.b32.xlu0 %v3946, 80
  %v3986 = vpop.permute.xlu0 %3985
  %3987 = vrot.lane.b32.xlu0 %v3108, 80
  %v3988 = vpop.permute.xlu0 %3987
  %3989 = vrot.lane.b32.xlu0 %v3109, 80
  %v3990 = vpop.permute.xlu0 %3989
  %3991 = vrot.lane.b32.xlu0 %v3110, 80
  %v3992 = vpop.permute.xlu0 %3991
  %3993 = vrot.lane.b32.xlu0 %v3111, 80
  %v3994 = vpop.permute.xlu0 %3993
  %3995 = vrot.lane.b32.xlu0 %v3112, 80
  %v3996 = vpop.permute.xlu0 %3995
  %3997 = vrot.lane.b32.xlu0 %v3113, 80
  %v3998 = vpop.permute.xlu0 %3997
  %3999 = vrot.lane.b32.xlu0 %v3114, 80
  %v4000 = vpop.permute.xlu0 %3999
  %4001 = vrot.lane.b32.xlu0 %v3115, 80
  %v4002 = vpop.permute.xlu0 %4001
  %4003 = vrot.lane.b32.xlu0 %v3116, 80
  %v4004 = vpop.permute.xlu0 %4003
  %4005 = vrot.lane.b32.xlu0 %v3117, 80
  %v4006 = vpop.permute.xlu0 %4005
  %4007 = vrot.lane.b32.xlu0 %v3118, 80
  %v4008 = vpop.permute.xlu0 %4007
  %4009 = vrot.lane.b32.xlu0 %v3506, 80
  %v4010 = vpop.permute.xlu0 %4009
  %4011 = vrot.lane.b32.xlu0 %v3507, 80
  %v4012 = vpop.permute.xlu0 %4011
  %4013 = vrot.lane.b32.xlu0 %v3947, 80
  %v4014 = vpop.permute.xlu0 %4013
  %4015 = vrot.lane.b32.xlu0 %v3948, 80
  %v4016 = vpop.permute.xlu0 %4015
  %4017 = vrot.lane.b32.xlu0 %v3949, 80
  %v4018 = vpop.permute.xlu0 %4017
  %v4051 = vadd.f32 %v3913, %v3956
  %v4052 = vadd.f32 %v3914, %v3958
  %v4053 = vadd.f32 %v3915, %v3960
  %v4054 = vadd.f32 %v3916, %v3962
  %v4055 = vadd.f32 %v3917, %v3964
  %v4056 = vadd.f32 %v3918, %v3966
  %v4057 = vadd.f32 %v3919, %v3968
  %v4058 = vadd.f32 %v3920, %v3970
  %v4059 = vadd.f32 %v3921, %v3972
  %v4060 = vadd.f32 %v3922, %v3974
  %v4061 = vadd.f32 %v3923, %v3976
  %v4062 = vadd.f32 %v3924, %v3978
  %v4063 = vadd.f32 %v3925, %v3980
  %v4064 = vadd.f32 %v3926, %v3982
  %v4065 = vadd.f32 %v3927, %v3984
  %v4066 = vadd.f32 %v3928, %v3986
  %v4067 = vadd.f32 %v3929, %v3988
  %v4068 = vadd.f32 %v3930, %v3990
  %v4069 = vadd.f32 %v3931, %v3992
  %v4070 = vadd.f32 %v3932, %v3994
  %v4071 = vadd.f32 %v3933, %v3996
  %v4072 = vadd.f32 %v3934, %v3998
  %v4073 = vadd.f32 %v3935, %v4000
  %v4074 = vadd.f32 %v3936, %v4002
  %v4075 = vadd.f32 %v3937, %v4004
  %v4076 = vadd.f32 %v3938, %v4006
  %v4077 = vadd.f32 %v3939, %v4008
  %v4078 = vadd.f32 %v3940, %v4010
  %v4079 = vadd.f32 %v3941, %v4012
  %v4080 = vadd.f32 %v3942, %v4014
  %v4081 = vadd.f32 %v3943, %v4016
  %v4082 = vadd.f32 %v3944, %v4018
  %v4083 = vld [vmem:[#allocation3 + $0x91] sm:$0xff]
  %v4084 = vld [vmem:[#allocation3 + $0x99] sm:$0xff]
  %v4085 = vld [vmem:[#allocation3 + $0x129] sm:$0xff]
  %v4086 = vld [vmem:[#allocation3 + $0x131] sm:$0xff]
  %v4087 = vld [vmem:[#allocation3 + $0x139] sm:$0x3f]
  %4093 = vrot.lane.b32.xlu0 %v3124, 72
  %v4094 = vpop.permute.xlu0 %4093
  %4095 = vrot.lane.b32.xlu0 %v3125, 72
  %v4096 = vpop.permute.xlu0 %4095
  %4097 = vrot.lane.b32.xlu0 %v3126, 72
  %v4098 = vpop.permute.xlu0 %4097
  %4099 = vrot.lane.b32.xlu0 %v3127, 72
  %v4100 = vpop.permute.xlu0 %4099
  %4101 = vrot.lane.b32.xlu0 %v3128, 72
  %v4102 = vpop.permute.xlu0 %4101
  %4103 = vrot.lane.b32.xlu0 %v3129, 72
  %v4104 = vpop.permute.xlu0 %4103
  %4105 = vrot.lane.b32.xlu0 %v3130, 72
  %v4106 = vpop.permute.xlu0 %4105
  %4107 = vrot.lane.b32.xlu0 %v3131, 72
  %v4108 = vpop.permute.xlu0 %4107
  %4109 = vrot.lane.b32.xlu0 %v3132, 72
  %v4110 = vpop.permute.xlu0 %4109
  %4111 = vrot.lane.b32.xlu0 %v3133, 72
  %v4112 = vpop.permute.xlu0 %4111
  %4113 = vrot.lane.b32.xlu0 %v3134, 72
  %v4114 = vpop.permute.xlu0 %4113
  %4115 = vrot.lane.b32.xlu0 %v3135, 72
  %v4116 = vpop.permute.xlu0 %4115
  %4117 = vrot.lane.b32.xlu0 %v3669, 72
  %v4118 = vpop.permute.xlu0 %4117
  %4119 = vrot.lane.b32.xlu0 %v3670, 72
  %v4120 = vpop.permute.xlu0 %4119
  %4121 = vrot.lane.b32.xlu0 %v4083, 72
  %v4122 = vpop.permute.xlu0 %4121
  %4123 = vrot.lane.b32.xlu0 %v4084, 72
  %v4124 = vpop.permute.xlu0 %4123
  %4125 = vrot.lane.b32.xlu0 %v3140, 72
  %v4126 = vpop.permute.xlu0 %4125
  %4127 = vrot.lane.b32.xlu0 %v3141, 72
  %v4128 = vpop.permute.xlu0 %4127
  %4129 = vrot.lane.b32.xlu0 %v3142, 72
  %v4130 = vpop.permute.xlu0 %4129
  %4131 = vrot.lane.b32.xlu0 %v3143, 72
  %v4132 = vpop.permute.xlu0 %4131
  %4133 = vrot.lane.b32.xlu0 %v3144, 72
  %v4134 = vpop.permute.xlu0 %4133
  %4135 = vrot.lane.b32.xlu0 %v3145, 72
  %v4136 = vpop.permute.xlu0 %4135
  %4137 = vrot.lane.b32.xlu0 %v3146, 72
  %v4138 = vpop.permute.xlu0 %4137
  %4139 = vrot.lane.b32.xlu0 %v3147, 72
  %v4140 = vpop.permute.xlu0 %4139
  %4141 = vrot.lane.b32.xlu0 %v3148, 72
  %v4142 = vpop.permute.xlu0 %4141
  %4143 = vrot.lane.b32.xlu0 %v3149, 72
  %v4144 = vpop.permute.xlu0 %4143
  %4145 = vrot.lane.b32.xlu0 %v3150, 72
  %v4146 = vpop.permute.xlu0 %4145
  %4147 = vrot.lane.b32.xlu0 %v3671, 72
  %v4148 = vpop.permute.xlu0 %4147
  %4149 = vrot.lane.b32.xlu0 %v3672, 72
  %v4150 = vpop.permute.xlu0 %4149
  %4151 = vrot.lane.b32.xlu0 %v4085, 72
  %v4152 = vpop.permute.xlu0 %4151
  %4153 = vrot.lane.b32.xlu0 %v4086, 72
  %v4154 = vpop.permute.xlu0 %4153
  %4155 = vrot.lane.b32.xlu0 %v4087, 72
  %v4156 = vpop.permute.xlu0 %4155
  %v4189 = vadd.f32 %v4051, %v4094
  %v4190 = vadd.f32 %v4052, %v4096
  %v4191 = vadd.f32 %v4053, %v4098
  %v4192 = vadd.f32 %v4054, %v4100
  %v4193 = vadd.f32 %v4055, %v4102
  %v4194 = vadd.f32 %v4056, %v4104
  %v4195 = vadd.f32 %v4057, %v4106
  %v4196 = vadd.f32 %v4058, %v4108
  %v4197 = vadd.f32 %v4059, %v4110
  %v4198 = vadd.f32 %v4060, %v4112
  %v4199 = vadd.f32 %v4061, %v4114
  %v4200 = vadd.f32 %v4062, %v4116
  %v4201 = vadd.f32 %v4063, %v4118
  %v4202 = vadd.f32 %v4064, %v4120
  %v4203 = vadd.f32 %v4065, %v4122
  %v4204 = vadd.f32 %v4066, %v4124
  %v4205 = vadd.f32 %v4067, %v4126
  %v4206 = vadd.f32 %v4068, %v4128
  %v4207 = vadd.f32 %v4069, %v4130
  %v4208 = vadd.f32 %v4070, %v4132
  %v4209 = vadd.f32 %v4071, %v4134
  %v4210 = vadd.f32 %v4072, %v4136
  %v4211 = vadd.f32 %v4073, %v4138
  %v4212 = vadd.f32 %v4074, %v4140
  %v4213 = vadd.f32 %v4075, %v4142
  %v4214 = vadd.f32 %v4076, %v4144
  %v4215 = vadd.f32 %v4077, %v4146
  %v4216 = vadd.f32 %v4078, %v4148
  %v4217 = vadd.f32 %v4079, %v4150
  %v4218 = vadd.f32 %v4080, %v4152
  %v4219 = vadd.f32 %v4081, %v4154
  %v4220 = vadd.f32 %v4082, %v4156
  %v4221 = vld [vmem:[#allocation3 + $0x92] sm:$0xff]
  %v4222 = vld [vmem:[#allocation3 + $0x9a] sm:$0xff]
  %v4223 = vld [vmem:[#allocation3 + $0x12a] sm:$0xff]
  %v4224 = vld [vmem:[#allocation3 + $0x132] sm:$0xff]
  %v4225 = vld [vmem:[#allocation3 + $0x13a] sm:$0x3f]
  %4231 = vrot.lane.b32.xlu0 %v3316, 64
  %v4232 = vpop.permute.xlu0 %4231
  %4233 = vrot.lane.b32.xlu0 %v3317, 64
  %v4234 = vpop.permute.xlu0 %4233
  %4235 = vrot.lane.b32.xlu0 %v3318, 64
  %v4236 = vpop.permute.xlu0 %4235
  %4237 = vrot.lane.b32.xlu0 %v3319, 64
  %v4238 = vpop.permute.xlu0 %4237
  %4239 = vrot.lane.b32.xlu0 %v3320, 64
  %v4240 = vpop.permute.xlu0 %4239
  %4241 = vrot.lane.b32.xlu0 %v3321, 64
  %v4242 = vpop.permute.xlu0 %4241
  %4243 = vrot.lane.b32.xlu0 %v3322, 64
  %v4244 = vpop.permute.xlu0 %4243
  %4245 = vrot.lane.b32.xlu0 %v3323, 64
  %v4246 = vpop.permute.xlu0 %4245
  %4247 = vrot.lane.b32.xlu0 %v3324, 64
  %v4248 = vpop.permute.xlu0 %4247
  %4249 = vrot.lane.b32.xlu0 %v3325, 64
  %v4250 = vpop.permute.xlu0 %4249
  %4251 = vrot.lane.b32.xlu0 %v3326, 64
  %v4252 = vpop.permute.xlu0 %4251
  %4253 = vrot.lane.b32.xlu0 %v3327, 64
  %v4254 = vpop.permute.xlu0 %4253
  %4255 = vrot.lane.b32.xlu0 %v3807, 64
  %v4256 = vpop.permute.xlu0 %4255
  %4257 = vrot.lane.b32.xlu0 %v3808, 64
  %v4258 = vpop.permute.xlu0 %4257
  %4259 = vrot.lane.b32.xlu0 %v4221, 64
  %v4260 = vpop.permute.xlu0 %4259
  %4261 = vrot.lane.b32.xlu0 %v4222, 64
  %v4262 = vpop.permute.xlu0 %4261
  %4263 = vrot.lane.b32.xlu0 %v3332, 64
  %v4264 = vpop.permute.xlu0 %4263
  %4265 = vrot.lane.b32.xlu0 %v3333, 64
  %v4266 = vpop.permute.xlu0 %4265
  %4267 = vrot.lane.b32.xlu0 %v3334, 64
  %v4268 = vpop.permute.xlu0 %4267
  %4269 = vrot.lane.b32.xlu0 %v3335, 64
  %v4270 = vpop.permute.xlu0 %4269
  %4271 = vrot.lane.b32.xlu0 %v3336, 64
  %v4272 = vpop.permute.xlu0 %4271
  %4273 = vrot.lane.b32.xlu0 %v3337, 64
  %v4274 = vpop.permute.xlu0 %4273
  %4275 = vrot.lane.b32.xlu0 %v3338, 64
  %v4276 = vpop.permute.xlu0 %4275
  %4277 = vrot.lane.b32.xlu0 %v3339, 64
  %v4278 = vpop.permute.xlu0 %4277
  %4279 = vrot.lane.b32.xlu0 %v3340, 64
  %v4280 = vpop.permute.xlu0 %4279
  %4281 = vrot.lane.b32.xlu0 %v3341, 64
  %v4282 = vpop.permute.xlu0 %4281
  %4283 = vrot.lane.b32.xlu0 %v3342, 64
  %v4284 = vpop.permute.xlu0 %4283
  %4285 = vrot.lane.b32.xlu0 %v3809, 64
  %v4286 = vpop.permute.xlu0 %4285
  %4287 = vrot.lane.b32.xlu0 %v3810, 64
  %v4288 = vpop.permute.xlu0 %4287
  %4289 = vrot.lane.b32.xlu0 %v4223, 64
  %v4290 = vpop.permute.xlu0 %4289
  %4291 = vrot.lane.b32.xlu0 %v4224, 64
  %v4292 = vpop.permute.xlu0 %4291
  %4293 = vrot.lane.b32.xlu0 %v4225, 64
  %v4294 = vpop.permute.xlu0 %4293
  %v4327 = vadd.f32 %v4189, %v4232
  %v4328 = vadd.f32 %v4190, %v4234
  %v4329 = vadd.f32 %v4191, %v4236
  %v4330 = vadd.f32 %v4192, %v4238
  %v4331 = vadd.f32 %v4193, %v4240
  %v4332 = vadd.f32 %v4194, %v4242
  %v4333 = vadd.f32 %v4195, %v4244
  %v4334 = vadd.f32 %v4196, %v4246
  %v4335 = vadd.f32 %v4197, %v4248
  %v4336 = vadd.f32 %v4198, %v4250
  %v4337 = vadd.f32 %v4199, %v4252
  %v4338 = vadd.f32 %v4200, %v4254
  %v4339 = vadd.f32 %v4201, %v4256
  %v4340 = vadd.f32 %v4202, %v4258
  %v4341 = vadd.f32 %v4203, %v4260
  %v4342 = vadd.f32 %v4204, %v4262
  %v4343 = vadd.f32 %v4205, %v4264
  %v4344 = vadd.f32 %v4206, %v4266
  %v4345 = vadd.f32 %v4207, %v4268
  %v4346 = vadd.f32 %v4208, %v4270
  %v4347 = vadd.f32 %v4209, %v4272
  %v4348 = vadd.f32 %v4210, %v4274
  %v4349 = vadd.f32 %v4211, %v4276
  %v4350 = vadd.f32 %v4212, %v4278
  %v4351 = vadd.f32 %v4213, %v4280
  %v4352 = vadd.f32 %v4214, %v4282
  %v4353 = vadd.f32 %v4215, %v4284
  %v4354 = vadd.f32 %v4216, %v4286
  %v4355 = vadd.f32 %v4217, %v4288
  %v4356 = vadd.f32 %v4218, %v4290
  %v4357 = vadd.f32 %v4219, %v4292
  %v4358 = vadd.f32 %v4220, %v4294
  %s4359 = scalar_lea.vmem %s5, 1
  %v4360 = vld [vmem:[%s4359] sm:$0x1]
  %v4362 = vlaneseq
  %v4363 = vshrl.u32 %v4362, 7
  %v4364 = vsub.s32 0, %v4363
  %v4365 = vrot.slane %v4360, %v4364
  %v4367 = vmul.f32 %v4327, %v4365
  %v4368 = vmul.f32 %v4328, %v4365
  %v4369 = vmul.f32 %v4329, %v4365
  %v4370 = vmul.f32 %v4330, %v4365
  %v4371 = vmul.f32 %v4331, %v4365
  %v4372 = vmul.f32 %v4332, %v4365
  %v4373 = vmul.f32 %v4333, %v4365
  %v4374 = vmul.f32 %v4334, %v4365
  %v4375 = vmul.f32 %v4335, %v4365
  %v4376 = vmul.f32 %v4336, %v4365
  %v4377 = vmul.f32 %v4337, %v4365
  %v4378 = vmul.f32 %v4338, %v4365
  %v4379 = vmul.f32 %v4339, %v4365
  %v4380 = vmul.f32 %v4340, %v4365
  %v4381 = vmul.f32 %v4341, %v4365
  %v4382 = vmul.f32 %v4342, %v4365
  %v4383 = vmul.f32 %v4343, %v4365
  %v4384 = vmul.f32 %v4344, %v4365
  %v4385 = vmul.f32 %v4345, %v4365
  %v4386 = vmul.f32 %v4346, %v4365
  %v4387 = vmul.f32 %v4347, %v4365
  %v4388 = vmul.f32 %v4348, %v4365
  %v4389 = vmul.f32 %v4349, %v4365
  %v4390 = vmul.f32 %v4350, %v4365
  %v4391 = vmul.f32 %v4351, %v4365
  %v4392 = vmul.f32 %v4352, %v4365
  %v4393 = vmul.f32 %v4353, %v4365
  %v4394 = vmul.f32 %v4354, %v4365
  %v4395 = vmul.f32 %v4355, %v4365
  %v4396 = vmul.f32 %v4356, %v4365
  %v4397 = vmul.f32 %v4357, %v4365
  %v4398 = vmul.f32 %v4358, %v4365
  %s4399 = scalar_lea.vmem %s6, 1
  %v4400 = vld [vmem:[%s4399] sm:$0x1]
  %v4402 = vlaneseq
  %v4403 = vshrl.u32 %v4402, 7
  %v4404 = vsub.s32 0, %v4403
  %v4405 = vrot.slane %v4400, %v4404
  %v4407 = vadd.f32 %v4367, %v4405
  %v4408 = vadd.f32 %v4368, %v4405
  %v4409 = vadd.f32 %v4369, %v4405
  %v4410 = vadd.f32 %v4370, %v4405
  %v4411 = vadd.f32 %v4371, %v4405
  %v4412 = vadd.f32 %v4372, %v4405
  %v4413 = vadd.f32 %v4373, %v4405
  %v4414 = vadd.f32 %v4374, %v4405
  %v4415 = vadd.f32 %v4375, %v4405
  %v4416 = vadd.f32 %v4376, %v4405
  %v4417 = vadd.f32 %v4377, %v4405
  %v4418 = vadd.f32 %v4378, %v4405
  %v4419 = vadd.f32 %v4379, %v4405
  %v4420 = vadd.f32 %v4380, %v4405
  %v4421 = vadd.f32 %v4381, %v4405
  %v4422 = vadd.f32 %v4382, %v4405
  %v4423 = vadd.f32 %v4383, %v4405
  %v4424 = vadd.f32 %v4384, %v4405
  %v4425 = vadd.f32 %v4385, %v4405
  %v4426 = vadd.f32 %v4386, %v4405
  %v4427 = vadd.f32 %v4387, %v4405
  %v4428 = vadd.f32 %v4388, %v4405
  %v4429 = vadd.f32 %v4389, %v4405
  %v4430 = vadd.f32 %v4390, %v4405
  %v4431 = vadd.f32 %v4391, %v4405
  %v4432 = vadd.f32 %v4392, %v4405
  %v4433 = vadd.f32 %v4393, %v4405
  %v4434 = vadd.f32 %v4394, %v4405
  %v4435 = vadd.f32 %v4395, %v4405
  %v4436 = vadd.f32 %v4396, %v4405
  %v4437 = vadd.f32 %v4397, %v4405
  %v4438 = vadd.f32 %v4398, %v4405
  %v4439 = vmax.f32 %v4407, 0.0
  %v4440 = vmax.f32 %v4408, 0.0
  %v4441 = vmax.f32 %v4409, 0.0
  %v4442 = vmax.f32 %v4410, 0.0
  %v4443 = vmax.f32 %v4411, 0.0
  %v4444 = vmax.f32 %v4412, 0.0
  %v4445 = vmax.f32 %v4413, 0.0
  %v4446 = vmax.f32 %v4414, 0.0
  %v4447 = vmax.f32 %v4415, 0.0
  %v4448 = vmax.f32 %v4416, 0.0
  %v4449 = vmax.f32 %v4417, 0.0
  %v4450 = vmax.f32 %v4418, 0.0
  %v4451 = vmax.f32 %v4419, 0.0
  %v4452 = vmax.f32 %v4420, 0.0
  %v4453 = vmax.f32 %v4421, 0.0
  %v4454 = vmax.f32 %v4422, 0.0
  %v4455 = vmax.f32 %v4423, 0.0
  %v4456 = vmax.f32 %v4424, 0.0
  %v4457 = vmax.f32 %v4425, 0.0
  %v4458 = vmax.f32 %v4426, 0.0
  %v4459 = vmax.f32 %v4427, 0.0
  %v4460 = vmax.f32 %v4428, 0.0
  %v4461 = vmax.f32 %v4429, 0.0
  %v4462 = vmax.f32 %v4430, 0.0
  %v4463 = vmax.f32 %v4431, 0.0
  %v4464 = vmax.f32 %v4432, 0.0
  %v4465 = vmax.f32 %v4433, 0.0
  %v4466 = vmax.f32 %v4434, 0.0
  %v4467 = vmax.f32 %v4435, 0.0
  %v4468 = vmax.f32 %v4436, 0.0
  %v4469 = vmax.f32 %v4437, 0.0
  %v4470 = vmax.f32 %v4438, 0.0
  %v4471 = vpack.c.bf16 %v4440, %v4439
  %v4472 = vpack.c.bf16 %v4442, %v4441
  %v4473 = vpack.c.bf16 %v4444, %v4443
  %v4474 = vpack.c.bf16 %v4446, %v4445
  %v4475 = vpack.c.bf16 %v4448, %v4447
  %v4476 = vpack.c.bf16 %v4450, %v4449
  %v4477 = vpack.c.bf16 %v4452, %v4451
  %v4478 = vpack.c.bf16 %v4454, %v4453
  %v4479 = vpack.c.bf16 %v4456, %v4455
  %v4480 = vpack.c.bf16 %v4458, %v4457
  %v4481 = vpack.c.bf16 %v4460, %v4459
  %v4482 = vpack.c.bf16 %v4462, %v4461
  %v4483 = vpack.c.bf16 %v4464, %v4463
  %v4484 = vpack.c.bf16 %v4466, %v4465
  %v4485 = vpack.c.bf16 %v4468, %v4467
  %v4486 = vpack.c.bf16 %v4470, %v4469
  %v4488 = vunpack.c.l.b16 %v4471
  %v4489 = vpack.c.b16 %v4488, %v4488
  %4490 = vrot.lane.b32.xlu0 %v4489, 24
  %v4491 = vpop.permute.xlu0 %4490
  %vm4493 = vcmask 257216
  %4494 = vst.msk [vmem:[%s7] sm:$0xf] %vm4493, %v4491
  %v4496 = vunpack.c.l.b16 %v4472
  %v4497 = vpack.c.b16 %v4496, %v4496
  %4498 = vrot.lane.b32.xlu0 %v4497, 24
  %v4499 = vpop.permute.xlu0 %4498
  %4501 = vst.msk [vmem:[%s7 + $0x4] sm:$0xf] %vm4493, %v4499
  %v4503 = vunpack.c.l.b16 %v4473
  %v4504 = vpack.c.b16 %v4503, %v4503
  %4505 = vrot.lane.b32.xlu0 %v4504, 24
  %v4506 = vpop.permute.xlu0 %4505
  %4508 = vst.msk [vmem:[%s7 + $0x8] sm:$0xf] %vm4493, %v4506
  %v4510 = vunpack.c.l.b16 %v4474
  %v4511 = vpack.c.b16 %v4510, %v4510
  %4512 = vrot.lane.b32.xlu0 %v4511, 24
  %v4513 = vpop.permute.xlu0 %4512
  %4515 = vst.msk [vmem:[%s7 + $0xc] sm:$0xf] %vm4493, %v4513
  %v4517 = vunpack.c.l.b16 %v4475
  %v4518 = vpack.c.b16 %v4517, %v4517
  %4519 = vrot.lane.b32.xlu0 %v4518, 24
  %v4520 = vpop.permute.xlu0 %4519
  %4522 = vst.msk [vmem:[%s7 + $0x10] sm:$0xf] %vm4493, %v4520
  %v4524 = vunpack.c.l.b16 %v4476
  %v4525 = vpack.c.b16 %v4524, %v4524
  %4526 = vrot.lane.b32.xlu0 %v4525, 24
  %v4527 = vpop.permute.xlu0 %4526
  %4529 = vst.msk [vmem:[%s7 + $0x14] sm:$0xf] %vm4493, %v4527
  %v4531 = vunpack.c.l.b16 %v4477
  %v4532 = vpack.c.b16 %v4531, %v4531
  %4533 = vrot.lane.b32.xlu0 %v4532, 24
  %v4534 = vpop.permute.xlu0 %4533
  %4536 = vst.msk [vmem:[%s7 + $0x18] sm:$0xf] %vm4493, %v4534
  %v4538 = vunpack.c.l.b16 %v4478
  %v4539 = vpack.c.b16 %v4538, %v4538
  %4540 = vrot.lane.b32.xlu0 %v4539, 24
  %v4541 = vpop.permute.xlu0 %4540
  %4543 = vst.msk [vmem:[%s7 + $0x1c] sm:$0xf] %vm4493, %v4541
  %v4545 = vunpack.c.l.b16 %v4479
  %v4546 = vpack.c.b16 %v4545, %v4545
  %4547 = vrot.lane.b32.xlu0 %v4546, 24
  %v4548 = vpop.permute.xlu0 %4547
  %4550 = vst.msk [vmem:[%s7 + $0x20] sm:$0xf] %vm4493, %v4548
  %v4552 = vunpack.c.l.b16 %v4480
  %v4553 = vpack.c.b16 %v4552, %v4552
  %4554 = vrot.lane.b32.xlu0 %v4553, 24
  %v4555 = vpop.permute.xlu0 %4554
  %4557 = vst.msk [vmem:[%s7 + $0x24] sm:$0xf] %vm4493, %v4555
  %v4559 = vunpack.c.l.b16 %v4481
  %v4560 = vpack.c.b16 %v4559, %v4559
  %4561 = vrot.lane.b32.xlu0 %v4560, 24
  %v4562 = vpop.permute.xlu0 %4561
  %4564 = vst.msk [vmem:[%s7 + $0x28] sm:$0xf] %vm4493, %v4562
  %v4566 = vunpack.c.l.b16 %v4482
  %v4567 = vpack.c.b16 %v4566, %v4566
  %4568 = vrot.lane.b32.xlu0 %v4567, 24
  %v4569 = vpop.permute.xlu0 %4568
  %4571 = vst.msk [vmem:[%s7 + $0x2c] sm:$0xf] %vm4493, %v4569
  %v4573 = vunpack.c.l.b16 %v4483
  %v4574 = vpack.c.b16 %v4573, %v4573
  %4575 = vrot.lane.b32.xlu0 %v4574, 24
  %v4576 = vpop.permute.xlu0 %4575
  %4578 = vst.msk [vmem:[%s7 + $0x30] sm:$0xf] %vm4493, %v4576
  %v4580 = vunpack.c.l.b16 %v4484
  %v4581 = vpack.c.b16 %v4580, %v4580
  %4582 = vrot.lane.b32.xlu0 %v4581, 24
  %v4583 = vpop.permute.xlu0 %4582
  %4585 = vst.msk [vmem:[%s7 + $0x34] sm:$0xf] %vm4493, %v4583
  %v4587 = vunpack.c.l.b16 %v4485
  %v4588 = vpack.c.b16 %v4587, %v4587
  %4589 = vrot.lane.b32.xlu0 %v4588, 24
  %v4590 = vpop.permute.xlu0 %4589
  %4592 = vst.msk [vmem:[%s7 + $0x38] sm:$0xf] %vm4493, %v4590
  %v4594 = vunpack.c.l.b16 %v4486
  %v4595 = vpack.c.b16 %v4594, %v4594
  %4596 = vrot.lane.b32.xlu0 %v4595, 24
  %v4597 = vpop.permute.xlu0 %4596
  %4599 = vst.msk [vmem:[%s7 + $0x3c] sm:$0xf] %vm4493, %v4597
  // Predicated region
  $region30: #{_lambda_.10} parent=0 // pred_check
    _
  $region31: #{_lambda_.10} parent=0 // pred_check_branch
    %4601 = sbr.rel (0) target = $region33
  $region32: #{_lambda_.10} parent=0 // pred_region
    _
  $region33: #{_lambda_.10} parent=0 // pred_fallthru
    _
  // Predicated region
  $region34: #{_lambda_.10} parent=0 // pred_check
    _
  $region35: #{_lambda_.10} parent=0 // pred_check_branch
    %4603 = sbr.rel (0) target = $region37
  $region36: #{_lambda_.10} parent=0 // pred_region
    _
  $region37: #{_lambda_.10} parent=0 // pred_fallthru
    _

</llo_original>
